<compile_context>
chip_gen: v6e
topology: v6e:2x2x1
jax: 0.10.0
libtpu: 0.0.40
codegen_flags: <defaults>
</compile_context>

<pallas_src>
import numpy as np
import jax
import jax.numpy as jnp
from jax import lax
from jax.experimental import pallas as pl
from jax.experimental.pallas import tpu as pltpu

# Raise past the 16 MiB (v5e) / 32 MiB (v6e, v7x) scoped-VMEM defaults.
_VMEM_LIMIT = 64 * 1024 * 1024


def _round_up(x, m):
    return (x + m - 1) // m * m


def _pick_tile(dim, cap, quantum):
    """Largest multiple of `quantum` that divides `dim` and is <= cap (else full dim)."""
    if dim <= cap:
        return dim
    t = cap - cap % quantum
    while t >= quantum and dim % t:
        t -= quantum
    return t if t >= quantum and dim % t == 0 else dim


# ---------------------------------------------------------------------------
# Pass 1: serial recurrence — batch-chunk grid, time loop unrolled in-kernel.
# ---------------------------------------------------------------------------
def lrcn_recurrent_kernel(img_ref, x_ref,
                          w1_ref, b1_ref,
                          wih1_ref, whh1_ref, bias1_ref,
                          wih2i_ref, w2f_ref, bias2_ref,
                          h2_out_ref,
                          xproj_ref, g2img_ref):
    T, Bc, E = x_ref.shape
    Hg = w1_ref.shape[1]                    # hidden size padded to a 128-lane multiple

    # ----- time-invariant pre-projections (hoisted off the serial path) -----
    # linear1 + ReLU on image features (dropout = identity in eval mode)
    feat = jnp.maximum(
        jnp.dot(img_ref[...], w1_ref[...], preferred_element_type=jnp.float32)
        + b1_ref[...], 0.0)
    # image half of LSTM2's input projection (+ bias2 folded in), computed once
    g2img_ref[...] = (jnp.dot(feat.astype(jnp.bfloat16), wih2i_ref[...],
                              preferred_element_type=jnp.float32)
                      + bias2_ref[...])
    # LSTM1 input projection for ALL timesteps as one bf16 matmul (+ bias1)
    xproj_ref[...] = (jnp.dot(x_ref[...].reshape(T * Bc, E), wih1_ref[...],
                              preferred_element_type=jnp.float32)
                      + bias1_ref[...])

    def sigm(v):
        # sigmoid via tanh: one EUP push per gate instead of two (exp + recip)
        return 0.5 * jnp.tanh(0.5 * v) + 0.5

    def step(t, carry):
        h1, c1, h2, c2 = carry
        off = pl.multiple_of(t * Bc, Bc)

        # -------- LSTM1 step (only the recurrent matmul on the serial path) --
        gates1 = xproj_ref[pl.ds(off, Bc), :] + jnp.dot(
            h1.astype(jnp.bfloat16), whh1_ref[...],
            preferred_element_type=jnp.float32)
        i1 = sigm(gates1[:, 0:Hg])
        f1 = sigm(gates1[:, Hg:2 * Hg])
        g1 = jnp.tanh(gates1[:, 2 * Hg:3 * Hg])
        o1 = sigm(gates1[:, 3 * Hg:4 * Hg])
        c1n = f1 * c1 + i1 * g1
        h1n = o1 * jnp.tanh(c1n)

        # -------- LSTM2 step: single fused matmul over concat([h1_new, h2]) --
        h12 = jnp.concatenate([h1n, h2], axis=1).astype(jnp.bfloat16)
        gates2 = g2img_ref[...] + jnp.dot(h12, w2f_ref[...],
                                          preferred_element_type=jnp.float32)
        i2 = sigm(gates2[:, 0:Hg])
        f2 = sigm(gates2[:, Hg:2 * Hg])
        g2 = jnp.tanh(gates2[:, 2 * Hg:3 * Hg])
        o2 = sigm(gates2[:, 3 * Hg:4 * Hg])
        c2n = f2 * c2 + i2 * g2
        h2n = o2 * jnp.tanh(c2n)

        h2_out_ref[t] = h2n.astype(h2_out_ref.dtype)     # lane-dense bf16 store
        return (h1n, c1n, h2n, c2n)

    z = jnp.zeros((Bc, Hg), jnp.float32)
    lax.fori_loop(0, T, step, (z, z, z, z), unroll=True)


# ---------------------------------------------------------------------------
# Pass 2: vocab projection — fully parallel tiled matmul (T*Bp, Hg) @ (Hg, Vp).
# ---------------------------------------------------------------------------
def vocab_proj_kernel(h2_ref, w2_ref, b2_ref, out_ref):
    out_ref[...] = (jnp.dot(h2_ref[...], w2_ref[...],
                            preferred_element_type=jnp.float32)
                    + b2_ref[...])


def _pad_gates(w, H, Hg, rows=None):
    """(In, 4H) -> (rows or In, 4Hg): each [i,f,g,o] gate block is moved to a
    128-lane-aligned slot; extra rows/cols are zero (so padded hidden columns
    stay exactly zero through the recurrence)."""
    In = w.shape[0]
    R = In if rows is None else rows
    out = jnp.zeros((R, 4 * Hg), jnp.float32)
    for k in range(4):
        out = out.at[:In, k * Hg:k * Hg + H].set(w[:, k * H:(k + 1) * H])
    return out


def lrcn_forward_pallas(image_inputs, emb_tbf, params, batch_chunks=1):
    """Full LRCN forward: recurrent kernel + parallel vocab-projection kernel."""
    T, B, E = emb_tbf.shape
    F_img = image_inputs.shape[1]
    H = params["w1"].shape[1]
    V = params["w2"].shape[1]

    Hg = _round_up(H, 128)                 # lane-dense hidden / aligned gate slices
    Vp = _round_up(V, 128)                 # lane-dense vocab output
    # TODO(synk): on v7x set batch_chunks=2 so the independent per-row
    # recurrences split across both TensorCores ("parallel" leading grid axis).
    if batch_chunks > 1:
        Bp = _round_up(B, 16 * batch_chunks)   # bf16 sublane tile per chunk
    else:
        Bp = _round_up(B, 8)
    Bc = Bp // batch_chunks
    R = T * Bp

    f32, bf16 = jnp.float32, jnp.bfloat16
    img_p = jnp.zeros((Bp, F_img), f32).at[:B].set(image_inputs)
    x_p = jnp.zeros((T, Bp, E), bf16).at[:, :B].set(emb_tbf.astype(bf16))

    # linear1 (columns padded H -> Hg)
    w1_p = jnp.zeros((F_img, Hg), f32).at[:, :H].set(params["w1"])
    b1_p = jnp.zeros((1, Hg), f32).at[:, :H].set(params["b1"])

    # LSTM1 (gate blocks re-laid-out to 128-lane slots; recurrent rows padded)
    wih1_p = _pad_gates(params["wih1"], H, Hg).astype(bf16)             # (E, 4Hg)
    whh1_p = _pad_gates(params["whh1"], H, Hg, rows=Hg).astype(bf16)    # (Hg, 4Hg)
    bias1_p = _pad_gates(params["bias1"], H, Hg)                        # (1, 4Hg)

    # LSTM2: split wih2 into image / h1 halves; fuse the two per-step
    # recurrent matmuls into one stacked (2Hg, 4Hg) bf16 weight.
    wih2i_p = _pad_gates(params["wih2"][:H], H, Hg, rows=Hg).astype(bf16)
    wih2h_p = _pad_gates(params["wih2"][H:], H, Hg, rows=Hg)
    whh2_p = _pad_gates(params["whh2"], H, Hg, rows=Hg)
    w2f_p = jnp.concatenate([wih2h_p, whh2_p], axis=0).astype(bf16)     # (2Hg, 4Hg)
    bias2_p = _pad_gates(params["bias2"], H, Hg)                        # (1, 4Hg)

    # linear2 (rows padded H -> Hg, cols V -> Vp), bf16 MXU operand
    w2_p = jnp.zeros((Hg, Vp), f32).at[:H, :V].set(params["w2"]).astype(bf16)
    b2_p = jnp.zeros((1, Vp), f32).at[:, :V].set(params["b2"])

    full = lambda shape: pl.BlockSpec(shape, lambda b: tuple(0 for _ in shape))

    # -------------------- pass 1: serial recurrence -------------------------
    h2_tbh = pl.pallas_call(
        lrcn_recurrent_kernel,
        out_shape=jax.ShapeDtypeStruct((T, Bp, Hg), bf16),
        grid_spec=pltpu.PrefetchScalarGridSpec(
            num_scalar_prefetch=0,
            grid=(batch_chunks,),
            in_specs=[
                pl.BlockSpec((Bc, F_img), lambda b: (b, 0)),            # image
                pl.BlockSpec((T, Bc, E), lambda b: (0, b, 0)),          # embeddings
                full((F_img, Hg)), full((1, Hg)),                       # linear1
                full((E, 4 * Hg)), full((Hg, 4 * Hg)), full((1, 4 * Hg)),       # lstm1
                full((Hg, 4 * Hg)), full((2 * Hg, 4 * Hg)), full((1, 4 * Hg)),  # lstm2
            ],
            out_specs=pl.BlockSpec((T, Bc, Hg), lambda b: (0, b, 0)),
            scratch_shapes=[
                # TODO(synk): at production T*Bc, store xproj in bf16 (or stream
                # per-step slices) to fit v7x's 64 MiB VMEM budget.
                pltpu.VMEM((T * Bc, 4 * Hg), jnp.float32),   # hoisted xproj
                pltpu.VMEM((Bc, 4 * Hg), jnp.float32),       # image half of gates2
            ],
        ),
        compiler_params=pltpu.CompilerParams(
            dimension_semantics=("parallel",),
            vmem_limit_bytes=_VMEM_LIMIT),
    )(img_p, x_p,
      w1_p, b1_p, wih1_p, whh1_p, bias1_p, wih2i_p, w2f_p, bias2_p)

    # -------------------- pass 2: parallel vocab projection ------------------
    h2_flat = h2_tbh.reshape(R, Hg)                       # bf16, lane-dense
    tr = _pick_tile(R, 512, 16)
    tv = _pick_tile(Vp, 1024, 128)
    logits_p = pl.pallas_call(
        vocab_proj_kernel,
        out_shape=jax.ShapeDtypeStruct((R, Vp), jnp.float32),
        grid_spec=pltpu.PrefetchScalarGridSpec(
            num_scalar_prefetch=0,
            # r innermost: each (Hg, tv) w2 tile is DMA'd from HBM exactly once.
            grid=(Vp // tv, R // tr),
            in_specs=[
                pl.BlockSpec((tr, Hg), lambda v, r: (r, 0)),
                pl.BlockSpec((Hg, tv), lambda v, r: (0, v)),
                pl.BlockSpec((1, tv), lambda v, r: (0, v)),
            ],
            out_specs=pl.BlockSpec((tr, tv), lambda v, r: (r, v)),
        ),
        compiler_params=pltpu.CompilerParams(
            dimension_semantics=("parallel", "parallel"),
            vmem_limit_bytes=_VMEM_LIMIT),
    )(h2_flat, w2_p, b2_p)

    # Strip batch / vocab padding in JAX glue.
    logits = logits_p.reshape(T, Bp, Vp)[:, :B, :V]
    return logits  # (T, B, V) f32


def lrcn_forward_ref(image_inputs, emb_tbf, params):
    """Pure-JAX f32 reference (same math) for correctness checking."""
    T, B, E = emb_tbf.shape
    H = params["w1"].shape[1]
    feat = jnp.maximum(image_inputs @ params["w1"] + params["b1"], 0.0)

    def lstm_step(h, c, x, wih, whh, bias):
        g = x @ wih + h @ whh + bias
        i = jax.nn.sigmoid(g[:, 0:H])
        f = jax.nn.sigmoid(g[:, H:2 * H])
        gg = jnp.tanh(g[:, 2 * H:3 * H])
        o = jax.nn.sigmoid(g[:, 3 * H:4 * H])
        c_new = f * c + i * gg
        h_new = o * jnp.tanh(c_new)
        return h_new, c_new

    def scan_fn(carry, x_t):
        h1, c1, h2, c2 = carry
        h1, c1 = lstm_step(h1, c1, x_t, params["wih1"], params["whh1"], params["bias1"])
        x2 = jnp.concatenate([feat, h1], axis=1)
        h2, c2 = lstm_step(h2, c2, x2, params["wih2"], params["whh2"], params["bias2"])
        out_t = h2 @ params["w2"] + params["b2"]
        return (h1, c1, h2, c2), out_t

    init = tuple(jnp.zeros((B, H), jnp.float32) for _ in range(4))
    _, outs = jax.lax.scan(scan_fn, init, emb_tbf)
    return outs  # (T, B, V)


def packed_indices(lengths, T):
    """pack_padded_sequence ordering (batch_first=True, sorted descending lengths)."""
    t_idx, b_idx = [], []
    for t in range(T):
        for b in range(len(lengths)):
            if lengths[b] > t:
                t_idx.append(t)
                b_idx.append(b)
    return np.array(t_idx), np.array(b_idx)


if __name__ == "__main__":
    # Small shapes consistent with the module (input = int path, no vision model).
    B, T = 2, 8
    F_IMG = 16            # img_feat_size  (the int `input`)
    E = 32                # word_embed_size
    H = 32                # hidden_size
    V = 48                # vocab_size
    lengths = [8, 5]      # sorted descending, max == T

    key = jax.random.PRNGKey(0)
    ks = jax.random.split(key, 12)
    u = lambda k, shape, a: jax.random.uniform(k, shape, jnp.float32, -a, a)
    s = 1.0 / np.sqrt(H)

    params = {
        # linear1 / linear2: uniform(-0.1, 0.1) weights, zero bias (as in init_weights)
        "w1": u(ks[0], (F_IMG, H), 0.1), "b1": jnp.zeros((1, H), jnp.float32),
        "w2": u(ks[1], (H, V), 0.1),     "b2": jnp.zeros((1, V), jnp.float32),
        # LSTM weights: PyTorch-default-style uniform(-1/sqrt(H), 1/sqrt(H)),
        # bias = b_ih + b_hh folded into a single vector.
        "wih1": u(ks[2], (E, 4 * H), s), "whh1": u(ks[3], (H, 4 * H), s),
        "bias1": u(ks[4], (1, 4 * H), s),
        "wih2": u(ks[5], (2 * H, 4 * H), s), "whh2": u(ks[6], (H, 4 * H), s),
        "bias2": u(ks[7], (1, 4 * H), s),
    }
    embed_table = u(ks[8], (V, E), 0.1)
    embed_table = embed_table.at[0].set(0.0)   # padding_idx=0 like nn.Embedding

    image_inputs = jax.random.normal(ks[9], (B, F_IMG), jnp.float32)
    captions = jax.random.randint(ks[10], (B, T), 0, V, jnp.int32)
    # Zero out caption ids past each sequence's length (padding).
    mask = np.arange(T)[None, :] < np.array(lengths)[:, None]
    captions = captions * jnp.asarray(mask, jnp.int32)

    # Glue: embedding lookup (gather) + transpose to time-major. Dropout = identity (eval).
    embeddings = embed_table[captions]                      # (B, T, E)
    emb_tbf = jnp.transpose(embeddings, (1, 0, 2))          # (T, B, E)

    out_full = lrcn_forward_pallas(image_inputs, emb_tbf, params)
    out_full = jax.block_until_ready(out_full)

    # Verify against pure-JAX f32 reference (bf16 MXU operands -> looser tolerance).
    ref_full = lrcn_forward_ref(image_inputs, emb_tbf, params)
    np.testing.assert_allclose(np.asarray(out_full), np.asarray(ref_full),
                               rtol=2e-2, atol=2e-2)

    # Glue: emulate pack_padded_sequence -> logits over packed tokens (sum(lengths), V),
    # exactly like the PyTorch module's return value.
    ti, bi = packed_indices(lengths, T)
    outputs_packed = out_full[ti, bi]
    assert outputs_packed.shape == (sum(lengths), V)

    print("KERNEL_OK")
</pallas_src>

<mosaic_0001>
module attributes {stable_mosaic.version = 11 : i64} {
  func.func @lrcn_recurrent_kernel(%arg0: i32, %arg1: memref<8x16xf32, #tpu.memory_space<vmem>>, %arg2: memref<8x8x32xbf16, #tpu.memory_space<vmem>>, %arg3: memref<16x128xf32, #tpu.memory_space<vmem>>, %arg4: memref<1x128xf32, #tpu.memory_space<vmem>>, %arg5: memref<32x512xbf16, #tpu.memory_space<vmem>>, %arg6: memref<128x512xbf16, #tpu.memory_space<vmem>>, %arg7: memref<1x512xf32, #tpu.memory_space<vmem>>, %arg8: memref<128x512xbf16, #tpu.memory_space<vmem>>, %arg9: memref<256x512xbf16, #tpu.memory_space<vmem>>, %arg10: memref<1x512xf32, #tpu.memory_space<vmem>>, %arg11: memref<8x8x128xbf16, #tpu.memory_space<vmem>>, %arg12: memref<64x512xf32, #tpu.memory_space<vmem>>, %arg13: memref<8x512xf32, #tpu.memory_space<vmem>>) attributes {dimension_semantics = [#tpu.dimension_semantics<parallel>], iteration_bounds = array<i64: 1>, scalar_prefetch = 0 : i64, scratch_operands = 2 : i64, tpu.core_type = #tpu.core_type<tc>, window_params = [{transform_indices = @transform_0, window_bounds = array<i64: 8, 16>}, {transform_indices = @transform_1, window_bounds = array<i64: 8, 8, 32>}, {pipeline_mode = #tpu.pipeline_mode<synchronous>, transform_indices = @transform_2, window_bounds = array<i64: 16, 128>}, {pipeline_mode = #tpu.pipeline_mode<synchronous>, transform_indices = @transform_3, window_bounds = array<i64: 1, 128>}, {pipeline_mode = #tpu.pipeline_mode<synchronous>, transform_indices = @transform_4, window_bounds = array<i64: 32, 512>}, {pipeline_mode = #tpu.pipeline_mode<synchronous>, transform_indices = @transform_5, window_bounds = array<i64: 128, 512>}, {pipeline_mode = #tpu.pipeline_mode<synchronous>, transform_indices = @transform_6, window_bounds = array<i64: 1, 512>}, {pipeline_mode = #tpu.pipeline_mode<synchronous>, transform_indices = @transform_7, window_bounds = array<i64: 128, 512>}, {pipeline_mode = #tpu.pipeline_mode<synchronous>, transform_indices = @transform_8, window_bounds = array<i64: 256, 512>}, {pipeline_mode = #tpu.pipeline_mode<synchronous>, transform_indices = @transform_9, window_bounds = array<i64: 1, 512>}, {transform_indices = @transform_10, window_bounds = array<i64: 8, 8, 128>}]} {
    %c0 = arith.constant 0 : index
    %c0_0 = arith.constant 0 : index
    %0 = vector.load %arg1[%c0, %c0_0] : memref<8x16xf32, #tpu.memory_space<vmem>>, vector<8x16xf32>
    %c0_1 = arith.constant 0 : index
    %c0_2 = arith.constant 0 : index
    %1 = vector.load %arg3[%c0_1, %c0_2] : memref<16x128xf32, #tpu.memory_space<vmem>>, vector<16x128xf32>
    %cst = arith.constant dense<0.000000e+00> : vector<8x128xf32>
    %2 = tpu.matmul %0, %1, %cst {dimension_numbers = #tpu.dot_dimension_numbers<[1], [0], [0], [1], [0, 0, 1, 1], [], []>} : vector<8x16xf32>, vector<16x128xf32>, vector<8x128xf32> -> vector<8x128xf32>
    %c0_3 = arith.constant 0 : index
    %c0_4 = arith.constant 0 : index
    %3 = vector.load %arg4[%c0_3, %c0_4] : memref<1x128xf32, #tpu.memory_space<vmem>>, vector<1x128xf32>
    %4 = vector.broadcast %3 : vector<1x128xf32> to vector<8x128xf32>
    %5 = arith.addf %2, %4 : vector<8x128xf32>
    %cst_5 = arith.constant 0.000000e+00 : f32
    %6 = vector.broadcast %cst_5 : f32 to vector<8x128xf32>
    %7 = arith.maximumf %5, %6 : vector<8x128xf32>
    %8 = arith.truncf %7 : vector<8x128xf32> to vector<8x128xbf16>
    %c0_6 = arith.constant 0 : index
    %c0_7 = arith.constant 0 : index
    %9 = vector.load %arg8[%c0_6, %c0_7] : memref<128x512xbf16, #tpu.memory_space<vmem>>, vector<128x512xbf16>
    %cst_8 = arith.constant dense<0.000000e+00> : vector<8x512xf32>
    %10 = tpu.matmul %8, %9, %cst_8 {dimension_numbers = #tpu.dot_dimension_numbers<[1], [0], [0], [1], [0, 0, 1, 1], [], []>} : vector<8x128xbf16>, vector<128x512xbf16>, vector<8x512xf32> -> vector<8x512xf32>
    %c0_9 = arith.constant 0 : index
    %c0_10 = arith.constant 0 : index
    %11 = vector.load %arg10[%c0_9, %c0_10] : memref<1x512xf32, #tpu.memory_space<vmem>>, vector<1x512xf32>
    %12 = vector.broadcast %11 : vector<1x512xf32> to vector<8x512xf32>
    %13 = arith.addf %10, %12 : vector<8x512xf32>
    %c0_11 = arith.constant 0 : index
    %c0_12 = arith.constant 0 : index
    %14 = vector.load %arg13[%c0_11, %c0_12] : memref<8x512xf32, #tpu.memory_space<vmem>>, vector<8x512xf32>
    tpu.vector_store %arg13[%c0_11, %c0_12], %13 {strides = array<i32>} : memref<8x512xf32, #tpu.memory_space<vmem>>, vector<8x512xf32>,
    %c0_13 = arith.constant 0 : index
    %c0_14 = arith.constant 0 : index
    %c0_15 = arith.constant 0 : index
    %15 = vector.load %arg2[%c0_13, %c0_14, %c0_15] : memref<8x8x32xbf16, #tpu.memory_space<vmem>>, vector<8x8x32xbf16>
    %16 = vector.shape_cast %15 : vector<8x8x32xbf16> to vector<64x32xbf16>
    %c0_16 = arith.constant 0 : index
    %c0_17 = arith.constant 0 : index
    %17 = vector.load %arg5[%c0_16, %c0_17] : memref<32x512xbf16, #tpu.memory_space<vmem>>, vector<32x512xbf16>
    %cst_18 = arith.constant dense<0.000000e+00> : vector<64x512xf32>
    %18 = tpu.matmul %16, %17, %cst_18 {dimension_numbers = #tpu.dot_dimension_numbers<[1], [0], [0], [1], [0, 0, 1, 1], [], []>} : vector<64x32xbf16>, vector<32x512xbf16>, vector<64x512xf32> -> vector<64x512xf32>
    %c0_19 = arith.constant 0 : index
    %c0_20 = arith.constant 0 : index
    %19 = vector.load %arg7[%c0_19, %c0_20] : memref<1x512xf32, #tpu.memory_space<vmem>>, vector<1x512xf32>
    %20 = vector.broadcast %19 : vector<1x512xf32> to vector<64x512xf32>
    %21 = arith.addf %18, %20 : vector<64x512xf32>
    %c0_21 = arith.constant 0 : index
    %c0_22 = arith.constant 0 : index
    %22 = vector.load %arg12[%c0_21, %c0_22] : memref<64x512xf32, #tpu.memory_space<vmem>>, vector<64x512xf32>
    tpu.vector_store %arg12[%c0_21, %c0_22], %21 {strides = array<i32>} : memref<64x512xf32, #tpu.memory_space<vmem>>, vector<64x512xf32>,
    %cst_23 = arith.constant 0.000000e+00 : f32
    %23 = vector.broadcast %cst_23 : f32 to vector<8x128xf32>
    %c0_i32 = arith.constant 0 : i32
    %c8_i32 = arith.constant 8 : i32
    %24 = arith.muli %c0_i32, %c8_i32 : i32
    %25 = tpu.assume_multiple %24, 8 : i32
    %26 = arith.index_cast %25 : i32 to index
    %c0_24 = arith.constant 0 : index
    %27 = vector.load %arg12[%26, %c0_24] : memref<64x512xf32, #tpu.memory_space<vmem>>, vector<8x512xf32>
    %28 = arith.truncf %23 : vector<8x128xf32> to vector<8x128xbf16>
    %c0_25 = arith.constant 0 : index
    %c0_26 = arith.constant 0 : index
    %29 = vector.load %arg6[%c0_25, %c0_26] : memref<128x512xbf16, #tpu.memory_space<vmem>>, vector<128x512xbf16>
    %cst_27 = arith.constant dense<0.000000e+00> : vector<8x512xf32>
    %30 = tpu.matmul %28, %29, %cst_27 {dimension_numbers = #tpu.dot_dimension_numbers<[1], [0], [0], [1], [0, 0, 1, 1], [], []>} : vector<8x128xbf16>, vector<128x512xbf16>, vector<8x512xf32> -> vector<8x512xf32>
    %31 = arith.addf %27, %30 : vector<8x512xf32>
    %32 = vector.extract_strided_slice %31 {offsets = [0, 0], sizes = [8, 128], strides = [1, 1]} : vector<8x512xf32> to vector<8x128xf32>
    %cst_28 = arith.constant 5.000000e-01 : f32
    %33 = vector.broadcast %cst_28 : f32 to vector<8x128xf32>
    %34 = arith.mulf %33, %32 : vector<8x128xf32>
    %35 = math.tanh %34 : vector<8x128xf32>
    %cst_29 = arith.constant 5.000000e-01 : f32
    %36 = vector.broadcast %cst_29 : f32 to vector<8x128xf32>
    %37 = arith.mulf %36, %35 : vector<8x128xf32>
    %cst_30 = arith.constant 5.000000e-01 : f32
    %38 = vector.broadcast %cst_30 : f32 to vector<8x128xf32>
    %39 = arith.addf %37, %38 : vector<8x128xf32>
    %40 = vector.extract_strided_slice %31 {offsets = [0, 128], sizes = [8, 128], strides = [1, 1]} : vector<8x512xf32> to vector<8x128xf32>
    %cst_31 = arith.constant 5.000000e-01 : f32
    %41 = vector.broadcast %cst_31 : f32 to vector<8x128xf32>
    %42 = arith.mulf %41, %40 : vector<8x128xf32>
    %43 = math.tanh %42 : vector<8x128xf32>
    %cst_32 = arith.constant 5.000000e-01 : f32
    %44 = vector.broadcast %cst_32 : f32 to vector<8x128xf32>
    %45 = arith.mulf %44, %43 : vector<8x128xf32>
    %cst_33 = arith.constant 5.000000e-01 : f32
    %46 = vector.broadcast %cst_33 : f32 to vector<8x128xf32>
    %47 = arith.addf %45, %46 : vector<8x128xf32>
    %48 = vector.extract_strided_slice %31 {offsets = [0, 256], sizes = [8, 128], strides = [1, 1]} : vector<8x512xf32> to vector<8x128xf32>
    %49 = math.tanh %48 : vector<8x128xf32>
    %50 = vector.extract_strided_slice %31 {offsets = [0, 384], sizes = [8, 128], strides = [1, 1]} : vector<8x512xf32> to vector<8x128xf32>
    %cst_34 = arith.constant 5.000000e-01 : f32
    %51 = vector.broadcast %cst_34 : f32 to vector<8x128xf32>
    %52 = arith.mulf %51, %50 : vector<8x128xf32>
    %53 = math.tanh %52 : vector<8x128xf32>
    %cst_35 = arith.constant 5.000000e-01 : f32
    %54 = vector.broadcast %cst_35 : f32 to vector<8x128xf32>
    %55 = arith.mulf %54, %53 : vector<8x128xf32>
    %cst_36 = arith.constant 5.000000e-01 : f32
    %56 = vector.broadcast %cst_36 : f32 to vector<8x128xf32>
    %57 = arith.addf %55, %56 : vector<8x128xf32>
    %58 = arith.mulf %47, %23 : vector<8x128xf32>
    %59 = arith.mulf %39, %49 : vector<8x128xf32>
    %60 = arith.addf %58, %59 : vector<8x128xf32>
    %61 = math.tanh %60 : vector<8x128xf32>
    %62 = arith.mulf %57, %61 : vector<8x128xf32>
    %63 = tpu.concatenate %62, %23 in 1 : vector<8x128xf32>, vector<8x128xf32> -> vector<8x256xf32>
    %64 = arith.truncf %63 : vector<8x256xf32> to vector<8x256xbf16>
    %c0_37 = arith.constant 0 : index
    %c0_38 = arith.constant 0 : index
    %65 = vector.load %arg13[%c0_37, %c0_38] : memref<8x512xf32, #tpu.memory_space<vmem>>, vector<8x512xf32>
    %c0_39 = arith.constant 0 : index
    %c0_40 = arith.constant 0 : index
    %66 = vector.load %arg9[%c0_39, %c0_40] : memref<256x512xbf16, #tpu.memory_space<vmem>>, vector<256x512xbf16>
    %cst_41 = arith.constant dense<0.000000e+00> : vector<8x512xf32>
    %67 = tpu.matmul %64, %66, %cst_41 {dimension_numbers = #tpu.dot_dimension_numbers<[1], [0], [0], [1], [0, 0, 1, 1], [], []>} : vector<8x256xbf16>, vector<256x512xbf16>, vector<8x512xf32> -> vector<8x512xf32>
    %68 = arith.addf %65, %67 : vector<8x512xf32>
    %69 = vector.extract_strided_slice %68 {offsets = [0, 0], sizes = [8, 128], strides = [1, 1]} : vector<8x512xf32> to vector<8x128xf32>
    %cst_42 = arith.constant 5.000000e-01 : f32
    %70 = vector.broadcast %cst_42 : f32 to vector<8x128xf32>
    %71 = arith.mulf %70, %69 : vector<8x128xf32>
    %72 = math.tanh %71 : vector<8x128xf32>
    %cst_43 = arith.constant 5.000000e-01 : f32
    %73 = vector.broadcast %cst_43 : f32 to vector<8x128xf32>
    %74 = arith.mulf %73, %72 : vector<8x128xf32>
    %cst_44 = arith.constant 5.000000e-01 : f32
    %75 = vector.broadcast %cst_44 : f32 to vector<8x128xf32>
    %76 = arith.addf %74, %75 : vector<8x128xf32>
    %77 = vector.extract_strided_slice %68 {offsets = [0, 128], sizes = [8, 128], strides = [1, 1]} : vector<8x512xf32> to vector<8x128xf32>
    %cst_45 = arith.constant 5.000000e-01 : f32
    %78 = vector.broadcast %cst_45 : f32 to vector<8x128xf32>
    %79 = arith.mulf %78, %77 : vector<8x128xf32>
    %80 = math.tanh %79 : vector<8x128xf32>
    %cst_46 = arith.constant 5.000000e-01 : f32
    %81 = vector.broadcast %cst_46 : f32 to vector<8x128xf32>
    %82 = arith.mulf %81, %80 : vector<8x128xf32>
    %cst_47 = arith.constant 5.000000e-01 : f32
    %83 = vector.broadcast %cst_47 : f32 to vector<8x128xf32>
    %84 = arith.addf %82, %83 : vector<8x128xf32>
    %85 = vector.extract_strided_slice %68 {offsets = [0, 256], sizes = [8, 128], strides = [1, 1]} : vector<8x512xf32> to vector<8x128xf32>
    %86 = math.tanh %85 : vector<8x128xf32>
    %87 = vector.extract_strided_slice %68 {offsets = [0, 384], sizes = [8, 128], strides = [1, 1]} : vector<8x512xf32> to vector<8x128xf32>
    %cst_48 = arith.constant 5.000000e-01 : f32
    %88 = vector.broadcast %cst_48 : f32 to vector<8x128xf32>
    %89 = arith.mulf %88, %87 : vector<8x128xf32>
    %90 = math.tanh %89 : vector<8x128xf32>
    %cst_49 = arith.constant 5.000000e-01 : f32
    %91 = vector.broadcast %cst_49 : f32 to vector<8x128xf32>
    %92 = arith.mulf %91, %90 : vector<8x128xf32>
    %cst_50 = arith.constant 5.000000e-01 : f32
    %93 = vector.broadcast %cst_50 : f32 to vector<8x128xf32>
    %94 = arith.addf %92, %93 : vector<8x128xf32>
    %95 = arith.mulf %84, %23 : vector<8x128xf32>
    %96 = arith.mulf %76, %86 : vector<8x128xf32>
    %97 = arith.addf %95, %96 : vector<8x128xf32>
    %98 = math.tanh %97 : vector<8x128xf32>
    %99 = arith.mulf %94, %98 : vector<8x128xf32>
    %100 = arith.truncf %99 : vector<8x128xf32> to vector<8x128xbf16>
    %101 = arith.index_cast %c0_i32 : i32 to index
    %c0_51 = arith.constant 0 : index
    %c0_52 = arith.constant 0 : index
    %102 = vector.load %arg11[%101, %c0_51, %c0_52] : memref<8x8x128xbf16, #tpu.memory_space<vmem>>, vector<1x8x128xbf16>
    %103 = vector.shape_cast %102 : vector<1x8x128xbf16> to vector<8x128xbf16>
    %104 = vector.shape_cast %100 : vector<8x128xbf16> to vector<1x8x128xbf16>
    tpu.vector_store %arg11[%101, %c0_51, %c0_52], %104 {strides = array<i32>} : memref<8x8x128xbf16, #tpu.memory_space<vmem>>, vector<1x8x128xbf16>,
    %c1_i32 = arith.constant 1 : i32
    %c8_i32_53 = arith.constant 8 : i32
    %105 = arith.muli %c1_i32, %c8_i32_53 : i32
    %106 = tpu.assume_multiple %105, 8 : i32
    %107 = arith.index_cast %106 : i32 to index
    %c0_54 = arith.constant 0 : index
    %108 = vector.load %arg12[%107, %c0_54] : memref<64x512xf32, #tpu.memory_space<vmem>>, vector<8x512xf32>
    %109 = arith.truncf %62 : vector<8x128xf32> to vector<8x128xbf16>
    %c0_55 = arith.constant 0 : index
    %c0_56 = arith.constant 0 : index
    %110 = vector.load %arg6[%c0_55, %c0_56] : memref<128x512xbf16, #tpu.memory_space<vmem>>, vector<128x512xbf16>
    %cst_57 = arith.constant dense<0.000000e+00> : vector<8x512xf32>
    %111 = tpu.matmul %109, %110, %cst_57 {dimension_numbers = #tpu.dot_dimension_numbers<[1], [0], [0], [1], [0, 0, 1, 1], [], []>} : vector<8x128xbf16>, vector<128x512xbf16>, vector<8x512xf32> -> vector<8x512xf32>
    %112 = arith.addf %108, %111 : vector<8x512xf32>
    %113 = vector.extract_strided_slice %112 {offsets = [0, 0], sizes = [8, 128], strides = [1, 1]} : vector<8x512xf32> to vector<8x128xf32>
    %cst_58 = arith.constant 5.000000e-01 : f32
    %114 = vector.broadcast %cst_58 : f32 to vector<8x128xf32>
    %115 = arith.mulf %114, %113 : vector<8x128xf32>
    %116 = math.tanh %115 : vector<8x128xf32>
    %cst_59 = arith.constant 5.000000e-01 : f32
    %117 = vector.broadcast %cst_59 : f32 to vector<8x128xf32>
    %118 = arith.mulf %117, %116 : vector<8x128xf32>
    %cst_60 = arith.constant 5.000000e-01 : f32
    %119 = vector.broadcast %cst_60 : f32 to vector<8x128xf32>
    %120 = arith.addf %118, %119 : vector<8x128xf32>
    %121 = vector.extract_strided_slice %112 {offsets = [0, 128], sizes = [8, 128], strides = [1, 1]} : vector<8x512xf32> to vector<8x128xf32>
    %cst_61 = arith.constant 5.000000e-01 : f32
    %122 = vector.broadcast %cst_61 : f32 to vector<8x128xf32>
    %123 = arith.mulf %122, %121 : vector<8x128xf32>
    %124 = math.tanh %123 : vector<8x128xf32>
    %cst_62 = arith.constant 5.000000e-01 : f32
    %125 = vector.broadcast %cst_62 : f32 to vector<8x128xf32>
    %126 = arith.mulf %125, %124 : vector<8x128xf32>
    %cst_63 = arith.constant 5.000000e-01 : f32
    %127 = vector.broadcast %cst_63 : f32 to vector<8x128xf32>
    %128 = arith.addf %126, %127 : vector<8x128xf32>
    %129 = vector.extract_strided_slice %112 {offsets = [0, 256], sizes = [8, 128], strides = [1, 1]} : vector<8x512xf32> to vector<8x128xf32>
    %130 = math.tanh %129 : vector<8x128xf32>
    %131 = vector.extract_strided_slice %112 {offsets = [0, 384], sizes = [8, 128], strides = [1, 1]} : vector<8x512xf32> to vector<8x128xf32>
    %cst_64 = arith.constant 5.000000e-01 : f32
    %132 = vector.broadcast %cst_64 : f32 to vector<8x128xf32>
    %133 = arith.mulf %132, %131 : vector<8x128xf32>
    %134 = math.tanh %133 : vector<8x128xf32>
    %cst_65 = arith.constant 5.000000e-01 : f32
    %135 = vector.broadcast %cst_65 : f32 to vector<8x128xf32>
    %136 = arith.mulf %135, %134 : vector<8x128xf32>
    %cst_66 = arith.constant 5.000000e-01 : f32
    %137 = vector.broadcast %cst_66 : f32 to vector<8x128xf32>
    %138 = arith.addf %136, %137 : vector<8x128xf32>
    %139 = arith.mulf %128, %60 : vector<8x128xf32>
    %140 = arith.mulf %120, %130 : vector<8x128xf32>
    %141 = arith.addf %139, %140 : vector<8x128xf32>
    %142 = math.tanh %141 : vector<8x128xf32>
    %143 = arith.mulf %138, %142 : vector<8x128xf32>
    %144 = tpu.concatenate %143, %99 in 1 : vector<8x128xf32>, vector<8x128xf32> -> vector<8x256xf32>
    %145 = arith.truncf %144 : vector<8x256xf32> to vector<8x256xbf16>
    %c0_67 = arith.constant 0 : index
    %c0_68 = arith.constant 0 : index
    %146 = vector.load %arg13[%c0_67, %c0_68] : memref<8x512xf32, #tpu.memory_space<vmem>>, vector<8x512xf32>
    %c0_69 = arith.constant 0 : index
    %c0_70 = arith.constant 0 : index
    %147 = vector.load %arg9[%c0_69, %c0_70] : memref<256x512xbf16, #tpu.memory_space<vmem>>, vector<256x512xbf16>
    %cst_71 = arith.constant dense<0.000000e+00> : vector<8x512xf32>
    %148 = tpu.matmul %145, %147, %cst_71 {dimension_numbers = #tpu.dot_dimension_numbers<[1], [0], [0], [1], [0, 0, 1, 1], [], []>} : vector<8x256xbf16>, vector<256x512xbf16>, vector<8x512xf32> -> vector<8x512xf32>
    %149 = arith.addf %146, %148 : vector<8x512xf32>
    %150 = vector.extract_strided_slice %149 {offsets = [0, 0], sizes = [8, 128], strides = [1, 1]} : vector<8x512xf32> to vector<8x128xf32>
    %cst_72 = arith.constant 5.000000e-01 : f32
    %151 = vector.broadcast %cst_72 : f32 to vector<8x128xf32>
    %152 = arith.mulf %151, %150 : vector<8x128xf32>
    %153 = math.tanh %152 : vector<8x128xf32>
    %cst_73 = arith.constant 5.000000e-01 : f32
    %154 = vector.broadcast %cst_73 : f32 to vector<8x128xf32>
    %155 = arith.mulf %154, %153 : vector<8x128xf32>
    %cst_74 = arith.constant 5.000000e-01 : f32
    %156 = vector.broadcast %cst_74 : f32 to vector<8x128xf32>
    %157 = arith.addf %155, %156 : vector<8x128xf32>
    %158 = vector.extract_strided_slice %149 {offsets = [0, 128], sizes = [8, 128], strides = [1, 1]} : vector<8x512xf32> to vector<8x128xf32>
    %cst_75 = arith.constant 5.000000e-01 : f32
    %159 = vector.broadcast %cst_75 : f32 to vector<8x128xf32>
    %160 = arith.mulf %159, %158 : vector<8x128xf32>
    %161 = math.tanh %160 : vector<8x128xf32>
    %cst_76 = arith.constant 5.000000e-01 : f32
    %162 = vector.broadcast %cst_76 : f32 to vector<8x128xf32>
    %163 = arith.mulf %162, %161 : vector<8x128xf32>
    %cst_77 = arith.constant 5.000000e-01 : f32
    %164 = vector.broadcast %cst_77 : f32 to vector<8x128xf32>
    %165 = arith.addf %163, %164 : vector<8x128xf32>
    %166 = vector.extract_strided_slice %149 {offsets = [0, 256], sizes = [8, 128], strides = [1, 1]} : vector<8x512xf32> to vector<8x128xf32>
    %167 = math.tanh %166 : vector<8x128xf32>
    %168 = vector.extract_strided_slice %149 {offsets = [0, 384], sizes = [8, 128], strides = [1, 1]} : vector<8x512xf32> to vector<8x128xf32>
    %cst_78 = arith.constant 5.000000e-01 : f32
    %169 = vector.broadcast %cst_78 : f32 to vector<8x128xf32>
    %170 = arith.mulf %169, %168 : vector<8x128xf32>
    %171 = math.tanh %170 : vector<8x128xf32>
    %cst_79 = arith.constant 5.000000e-01 : f32
    %172 = vector.broadcast %cst_79 : f32 to vector<8x128xf32>
    %173 = arith.mulf %172, %171 : vector<8x128xf32>
    %cst_80 = arith.constant 5.000000e-01 : f32
    %174 = vector.broadcast %cst_80 : f32 to vector<8x128xf32>
    %175 = arith.addf %173, %174 : vector<8x128xf32>
    %176 = arith.mulf %165, %97 : vector<8x128xf32>
    %177 = arith.mulf %157, %167 : vector<8x128xf32>
    %178 = arith.addf %176, %177 : vector<8x128xf32>
    %179 = math.tanh %178 : vector<8x128xf32>
    %180 = arith.mulf %175, %179 : vector<8x128xf32>
    %181 = arith.truncf %180 : vector<8x128xf32> to vector<8x128xbf16>
    %182 = arith.index_cast %c1_i32 : i32 to index
    %c0_81 = arith.constant 0 : index
    %c0_82 = arith.constant 0 : index
    %183 = vector.load %arg11[%182, %c0_81, %c0_82] : memref<8x8x128xbf16, #tpu.memory_space<vmem>>, vector<1x8x128xbf16>
    %184 = vector.shape_cast %183 : vector<1x8x128xbf16> to vector<8x128xbf16>
    %185 = vector.shape_cast %181 : vector<8x128xbf16> to vector<1x8x128xbf16>
    tpu.vector_store %arg11[%182, %c0_81, %c0_82], %185 {strides = array<i32>} : memref<8x8x128xbf16, #tpu.memory_space<vmem>>, vector<1x8x128xbf16>,
    %c2_i32 = arith.constant 2 : i32
    %c8_i32_83 = arith.constant 8 : i32
    %186 = arith.muli %c2_i32, %c8_i32_83 : i32
    %187 = tpu.assume_multiple %186, 8 : i32
    %188 = arith.index_cast %187 : i32 to index
    %c0_84 = arith.constant 0 : index
    %189 = vector.load %arg12[%188, %c0_84] : memref<64x512xf32, #tpu.memory_space<vmem>>, vector<8x512xf32>
    %190 = arith.truncf %143 : vector<8x128xf32> to vector<8x128xbf16>
    %c0_85 = arith.constant 0 : index
    %c0_86 = arith.constant 0 : index
    %191 = vector.load %arg6[%c0_85, %c0_86] : memref<128x512xbf16, #tpu.memory_space<vmem>>, vector<128x512xbf16>
    %cst_87 = arith.constant dense<0.000000e+00> : vector<8x512xf32>
    %192 = tpu.matmul %190, %191, %cst_87 {dimension_numbers = #tpu.dot_dimension_numbers<[1], [0], [0], [1], [0, 0, 1, 1], [], []>} : vector<8x128xbf16>, vector<128x512xbf16>, vector<8x512xf32> -> vector<8x512xf32>
    %193 = arith.addf %189, %192 : vector<8x512xf32>
    %194 = vector.extract_strided_slice %193 {offsets = [0, 0], sizes = [8, 128], strides = [1, 1]} : vector<8x512xf32> to vector<8x128xf32>
    %cst_88 = arith.constant 5.000000e-01 : f32
    %195 = vector.broadcast %cst_88 : f32 to vector<8x128xf32>
    %196 = arith.mulf %195, %194 : vector<8x128xf32>
    %197 = math.tanh %196 : vector<8x128xf32>
    %cst_89 = arith.constant 5.000000e-01 : f32
    %198 = vector.broadcast %cst_89 : f32 to vector<8x128xf32>
    %199 = arith.mulf %198, %197 : vector<8x128xf32>
    %cst_90 = arith.constant 5.000000e-01 : f32
    %200 = vector.broadcast %cst_90 : f32 to vector<8x128xf32>
    %201 = arith.addf %199, %200 : vector<8x128xf32>
    %202 = vector.extract_strided_slice %193 {offsets = [0, 128], sizes = [8, 128], strides = [1, 1]} : vector<8x512xf32> to vector<8x128xf32>
    %cst_91 = arith.constant 5.000000e-01 : f32
    %203 = vector.broadcast %cst_91 : f32 to vector<8x128xf32>
    %204 = arith.mulf %203, %202 : vector<8x128xf32>
    %205 = math.tanh %204 : vector<8x128xf32>
    %cst_92 = arith.constant 5.000000e-01 : f32
    %206 = vector.broadcast %cst_92 : f32 to vector<8x128xf32>
    %207 = arith.mulf %206, %205 : vector<8x128xf32>
    %cst_93 = arith.constant 5.000000e-01 : f32
    %208 = vector.broadcast %cst_93 : f32 to vector<8x128xf32>
    %209 = arith.addf %207, %208 : vector<8x128xf32>
    %210 = vector.extract_strided_slice %193 {offsets = [0, 256], sizes = [8, 128], strides = [1, 1]} : vector<8x512xf32> to vector<8x128xf32>
    %211 = math.tanh %210 : vector<8x128xf32>
    %212 = vector.extract_strided_slice %193 {offsets = [0, 384], sizes = [8, 128], strides = [1, 1]} : vector<8x512xf32> to vector<8x128xf32>
    %cst_94 = arith.constant 5.000000e-01 : f32
    %213 = vector.broadcast %cst_94 : f32 to vector<8x128xf32>
    %214 = arith.mulf %213, %212 : vector<8x128xf32>
    %215 = math.tanh %214 : vector<8x128xf32>
    %cst_95 = arith.constant 5.000000e-01 : f32
    %216 = vector.broadcast %cst_95 : f32 to vector<8x128xf32>
    %217 = arith.mulf %216, %215 : vector<8x128xf32>
    %cst_96 = arith.constant 5.000000e-01 : f32
    %218 = vector.broadcast %cst_96 : f32 to vector<8x128xf32>
    %219 = arith.addf %217, %218 : vector<8x128xf32>
    %220 = arith.mulf %209, %141 : vector<8x128xf32>
    %221 = arith.mulf %201, %211 : vector<8x128xf32>
    %222 = arith.addf %220, %221 : vector<8x128xf32>
    %223 = math.tanh %222 : vector<8x128xf32>
    %224 = arith.mulf %219, %223 : vector<8x128xf32>
    %225 = tpu.concatenate %224, %180 in 1 : vector<8x128xf32>, vector<8x128xf32> -> vector<8x256xf32>
    %226 = arith.truncf %225 : vector<8x256xf32> to vector<8x256xbf16>
    %c0_97 = arith.constant 0 : index
    %c0_98 = arith.constant 0 : index
    %227 = vector.load %arg13[%c0_97, %c0_98] : memref<8x512xf32, #tpu.memory_space<vmem>>, vector<8x512xf32>
    %c0_99 = arith.constant 0 : index
    %c0_100 = arith.constant 0 : index
    %228 = vector.load %arg9[%c0_99, %c0_100] : memref<256x512xbf16, #tpu.memory_space<vmem>>, vector<256x512xbf16>
    %cst_101 = arith.constant dense<0.000000e+00> : vector<8x512xf32>
    %229 = tpu.matmul %226, %228, %cst_101 {dimension_numbers = #tpu.dot_dimension_numbers<[1], [0], [0], [1], [0, 0, 1, 1], [], []>} : vector<8x256xbf16>, vector<256x512xbf16>, vector<8x512xf32> -> vector<8x512xf32>
    %230 = arith.addf %227, %229 : vector<8x512xf32>
    %231 = vector.extract_strided_slice %230 {offsets = [0, 0], sizes = [8, 128], strides = [1, 1]} : vector<8x512xf32> to vector<8x128xf32>
    %cst_102 = arith.constant 5.000000e-01 : f32
    %232 = vector.broadcast %cst_102 : f32 to vector<8x128xf32>
    %233 = arith.mulf %232, %231 : vector<8x128xf32>
    %234 = math.tanh %233 : vector<8x128xf32>
    %cst_103 = arith.constant 5.000000e-01 : f32
    %235 = vector.broadcast %cst_103 : f32 to vector<8x128xf32>
    %236 = arith.mulf %235, %234 : vector<8x128xf32>
    %cst_104 = arith.constant 5.000000e-01 : f32
    %237 = vector.broadcast %cst_104 : f32 to vector<8x128xf32>
    %238 = arith.addf %236, %237 : vector<8x128xf32>
    %239 = vector.extract_strided_slice %230 {offsets = [0, 128], sizes = [8, 128], strides = [1, 1]} : vector<8x512xf32> to vector<8x128xf32>
    %cst_105 = arith.constant 5.000000e-01 : f32
    %240 = vector.broadcast %cst_105 : f32 to vector<8x128xf32>
    %241 = arith.mulf %240, %239 : vector<8x128xf32>
    %242 = math.tanh %241 : vector<8x128xf32>
    %cst_106 = arith.constant 5.000000e-01 : f32
    %243 = vector.broadcast %cst_106 : f32 to vector<8x128xf32>
    %244 = arith.mulf %243, %242 : vector<8x128xf32>
    %cst_107 = arith.constant 5.000000e-01 : f32
    %245 = vector.broadcast %cst_107 : f32 to vector<8x128xf32>
    %246 = arith.addf %244, %245 : vector<8x128xf32>
    %247 = vector.extract_strided_slice %230 {offsets = [0, 256], sizes = [8, 128], strides = [1, 1]} : vector<8x512xf32> to vector<8x128xf32>
    %248 = math.tanh %247 : vector<8x128xf32>
    %249 = vector.extract_strided_slice %230 {offsets = [0, 384], sizes = [8, 128], strides = [1, 1]} : vector<8x512xf32> to vector<8x128xf32>
    %cst_108 = arith.constant 5.000000e-01 : f32
    %250 = vector.broadcast %cst_108 : f32 to vector<8x128xf32>
    %251 = arith.mulf %250, %249 : vector<8x128xf32>
    %252 = math.tanh %251 : vector<8x128xf32>
    %cst_109 = arith.constant 5.000000e-01 : f32
    %253 = vector.broadcast %cst_109 : f32 to vector<8x128xf32>
    %254 = arith.mulf %253, %252 : vector<8x128xf32>
    %cst_110 = arith.constant 5.000000e-01 : f32
    %255 = vector.broadcast %cst_110 : f32 to vector<8x128xf32>
    %256 = arith.addf %254, %255 : vector<8x128xf32>
    %257 = arith.mulf %246, %178 : vector<8x128xf32>
    %258 = arith.mulf %238, %248 : vector<8x128xf32>
    %259 = arith.addf %257, %258 : vector<8x128xf32>
    %260 = math.tanh %259 : vector<8x128xf32>
    %261 = arith.mulf %256, %260 : vector<8x128xf32>
    %262 = arith.truncf %261 : vector<8x128xf32> to vector<8x128xbf16>
    %263 = arith.index_cast %c2_i32 : i32 to index
    %c0_111 = arith.constant 0 : index
    %c0_112 = arith.constant 0 : index
    %264 = vector.load %arg11[%263, %c0_111, %c0_112] : memref<8x8x128xbf16, #tpu.memory_space<vmem>>, vector<1x8x128xbf16>
    %265 = vector.shape_cast %264 : vector<1x8x128xbf16> to vector<8x128xbf16>
    %266 = vector.shape_cast %262 : vector<8x128xbf16> to vector<1x8x128xbf16>
    tpu.vector_store %arg11[%263, %c0_111, %c0_112], %266 {strides = array<i32>} : memref<8x8x128xbf16, #tpu.memory_space<vmem>>, vector<1x8x128xbf16>,
    %c3_i32 = arith.constant 3 : i32
    %c8_i32_113 = arith.constant 8 : i32
    %267 = arith.muli %c3_i32, %c8_i32_113 : i32
    %268 = tpu.assume_multiple %267, 8 : i32
    %269 = arith.index_cast %268 : i32 to index
    %c0_114 = arith.constant 0 : index
    %270 = vector.load %arg12[%269, %c0_114] : memref<64x512xf32, #tpu.memory_space<vmem>>, vector<8x512xf32>
    %271 = arith.truncf %224 : vector<8x128xf32> to vector<8x128xbf16>
    %c0_115 = arith.constant 0 : index
    %c0_116 = arith.constant 0 : index
    %272 = vector.load %arg6[%c0_115, %c0_116] : memref<128x512xbf16, #tpu.memory_space<vmem>>, vector<128x512xbf16>
    %cst_117 = arith.constant dense<0.000000e+00> : vector<8x512xf32>
    %273 = tpu.matmul %271, %272, %cst_117 {dimension_numbers = #tpu.dot_dimension_numbers<[1], [0], [0], [1], [0, 0, 1, 1], [], []>} : vector<8x128xbf16>, vector<128x512xbf16>, vector<8x512xf32> -> vector<8x512xf32>
    %274 = arith.addf %270, %273 : vector<8x512xf32>
    %275 = vector.extract_strided_slice %274 {offsets = [0, 0], sizes = [8, 128], strides = [1, 1]} : vector<8x512xf32> to vector<8x128xf32>
    %cst_118 = arith.constant 5.000000e-01 : f32
    %276 = vector.broadcast %cst_118 : f32 to vector<8x128xf32>
    %277 = arith.mulf %276, %275 : vector<8x128xf32>
    %278 = math.tanh %277 : vector<8x128xf32>
    %cst_119 = arith.constant 5.000000e-01 : f32
    %279 = vector.broadcast %cst_119 : f32 to vector<8x128xf32>
    %280 = arith.mulf %279, %278 : vector<8x128xf32>
    %cst_120 = arith.constant 5.000000e-01 : f32
    %281 = vector.broadcast %cst_120 : f32 to vector<8x128xf32>
    %282 = arith.addf %280, %281 : vector<8x128xf32>
    %283 = vector.extract_strided_slice %274 {offsets = [0, 128], sizes = [8, 128], strides = [1, 1]} : vector<8x512xf32> to vector<8x128xf32>
    %cst_121 = arith.constant 5.000000e-01 : f32
    %284 = vector.broadcast %cst_121 : f32 to vector<8x128xf32>
    %285 = arith.mulf %284, %283 : vector<8x128xf32>
    %286 = math.tanh %285 : vector<8x128xf32>
    %cst_122 = arith.constant 5.000000e-01 : f32
    %287 = vector.broadcast %cst_122 : f32 to vector<8x128xf32>
    %288 = arith.mulf %287, %286 : vector<8x128xf32>
    %cst_123 = arith.constant 5.000000e-01 : f32
    %289 = vector.broadcast %cst_123 : f32 to vector<8x128xf32>
    %290 = arith.addf %288, %289 : vector<8x128xf32>
    %291 = vector.extract_strided_slice %274 {offsets = [0, 256], sizes = [8, 128], strides = [1, 1]} : vector<8x512xf32> to vector<8x128xf32>
    %292 = math.tanh %291 : vector<8x128xf32>
    %293 = vector.extract_strided_slice %274 {offsets = [0, 384], sizes = [8, 128], strides = [1, 1]} : vector<8x512xf32> to vector<8x128xf32>
    %cst_124 = arith.constant 5.000000e-01 : f32
    %294 = vector.broadcast %cst_124 : f32 to vector<8x128xf32>
    %295 = arith.mulf %294, %293 : vector<8x128xf32>
    %296 = math.tanh %295 : vector<8x128xf32>
    %cst_125 = arith.constant 5.000000e-01 : f32
    %297 = vector.broadcast %cst_125 : f32 to vector<8x128xf32>
    %298 = arith.mulf %297, %296 : vector<8x128xf32>
    %cst_126 = arith.constant 5.000000e-01 : f32
    %299 = vector.broadcast %cst_126 : f32 to vector<8x128xf32>
    %300 = arith.addf %298, %299 : vector<8x128xf32>
    %301 = arith.mulf %290, %222 : vector<8x128xf32>
    %302 = arith.mulf %282, %292 : vector<8x128xf32>
    %303 = arith.addf %301, %302 : vector<8x128xf32>
    %304 = math.tanh %303 : vector<8x128xf32>
    %305 = arith.mulf %300, %304 : vector<8x128xf32>
    %306 = tpu.concatenate %305, %261 in 1 : vector<8x128xf32>, vector<8x128xf32> -> vector<8x256xf32>
    %307 = arith.truncf %306 : vector<8x256xf32> to vector<8x256xbf16>
    %c0_127 = arith.constant 0 : index
    %c0_128 = arith.constant 0 : index
    %308 = vector.load %arg13[%c0_127, %c0_128] : memref<8x512xf32, #tpu.memory_space<vmem>>, vector<8x512xf32>
    %c0_129 = arith.constant 0 : index
    %c0_130 = arith.constant 0 : index
    %309 = vector.load %arg9[%c0_129, %c0_130] : memref<256x512xbf16, #tpu.memory_space<vmem>>, vector<256x512xbf16>
    %cst_131 = arith.constant dense<0.000000e+00> : vector<8x512xf32>
    %310 = tpu.matmul %307, %309, %cst_131 {dimension_numbers = #tpu.dot_dimension_numbers<[1], [0], [0], [1], [0, 0, 1, 1], [], []>} : vector<8x256xbf16>, vector<256x512xbf16>, vector<8x512xf32> -> vector<8x512xf32>
    %311 = arith.addf %308, %310 : vector<8x512xf32>
    %312 = vector.extract_strided_slice %311 {offsets = [0, 0], sizes = [8, 128], strides = [1, 1]} : vector<8x512xf32> to vector<8x128xf32>
    %cst_132 = arith.constant 5.000000e-01 : f32
    %313 = vector.broadcast %cst_132 : f32 to vector<8x128xf32>
    %314 = arith.mulf %313, %312 : vector<8x128xf32>
    %315 = math.tanh %314 : vector<8x128xf32>
    %cst_133 = arith.constant 5.000000e-01 : f32
    %316 = vector.broadcast %cst_133 : f32 to vector<8x128xf32>
    %317 = arith.mulf %316, %315 : vector<8x128xf32>
    %cst_134 = arith.constant 5.000000e-01 : f32
    %318 = vector.broadcast %cst_134 : f32 to vector<8x128xf32>
    %319 = arith.addf %317, %318 : vector<8x128xf32>
    %320 = vector.extract_strided_slice %311 {offsets = [0, 128], sizes = [8, 128], strides = [1, 1]} : vector<8x512xf32> to vector<8x128xf32>
    %cst_135 = arith.constant 5.000000e-01 : f32
    %321 = vector.broadcast %cst_135 : f32 to vector<8x128xf32>
    %322 = arith.mulf %321, %320 : vector<8x128xf32>
    %323 = math.tanh %322 : vector<8x128xf32>
    %cst_136 = arith.constant 5.000000e-01 : f32
    %324 = vector.broadcast %cst_136 : f32 to vector<8x128xf32>
    %325 = arith.mulf %324, %323 : vector<8x128xf32>
    %cst_137 = arith.constant 5.000000e-01 : f32
    %326 = vector.broadcast %cst_137 : f32 to vector<8x128xf32>
    %327 = arith.addf %325, %326 : vector<8x128xf32>
    %328 = vector.extract_strided_slice %311 {offsets = [0, 256], sizes = [8, 128], strides = [1, 1]} : vector<8x512xf32> to vector<8x128xf32>
    %329 = math.tanh %328 : vector<8x128xf32>
    %330 = vector.extract_strided_slice %311 {offsets = [0, 384], sizes = [8, 128], strides = [1, 1]} : vector<8x512xf32> to vector<8x128xf32>
    %cst_138 = arith.constant 5.000000e-01 : f32
    %331 = vector.broadcast %cst_138 : f32 to vector<8x128xf32>
    %332 = arith.mulf %331, %330 : vector<8x128xf32>
    %333 = math.tanh %332 : vector<8x128xf32>
    %cst_139 = arith.constant 5.000000e-01 : f32
    %334 = vector.broadcast %cst_139 : f32 to vector<8x128xf32>
    %335 = arith.mulf %334, %333 : vector<8x128xf32>
    %cst_140 = arith.constant 5.000000e-01 : f32
    %336 = vector.broadcast %cst_140 : f32 to vector<8x128xf32>
    %337 = arith.addf %335, %336 : vector<8x128xf32>
    %338 = arith.mulf %327, %259 : vector<8x128xf32>
    %339 = arith.mulf %319, %329 : vector<8x128xf32>
    %340 = arith.addf %338, %339 : vector<8x128xf32>
    %341 = math.tanh %340 : vector<8x128xf32>
    %342 = arith.mulf %337, %341 : vector<8x128xf32>
    %343 = arith.truncf %342 : vector<8x128xf32> to vector<8x128xbf16>
    %344 = arith.index_cast %c3_i32 : i32 to index
    %c0_141 = arith.constant 0 : index
    %c0_142 = arith.constant 0 : index
    %345 = vector.load %arg11[%344, %c0_141, %c0_142] : memref<8x8x128xbf16, #tpu.memory_space<vmem>>, vector<1x8x128xbf16>
    %346 = vector.shape_cast %345 : vector<1x8x128xbf16> to vector<8x128xbf16>
    %347 = vector.shape_cast %343 : vector<8x128xbf16> to vector<1x8x128xbf16>
    tpu.vector_store %arg11[%344, %c0_141, %c0_142], %347 {strides = array<i32>} : memref<8x8x128xbf16, #tpu.memory_space<vmem>>, vector<1x8x128xbf16>,
    %c4_i32 = arith.constant 4 : i32
    %c8_i32_143 = arith.constant 8 : i32
    %348 = arith.muli %c4_i32, %c8_i32_143 : i32
    %349 = tpu.assume_multiple %348, 8 : i32
    %350 = arith.index_cast %349 : i32 to index
    %c0_144 = arith.constant 0 : index
    %351 = vector.load %arg12[%350, %c0_144] : memref<64x512xf32, #tpu.memory_space<vmem>>, vector<8x512xf32>
    %352 = arith.truncf %305 : vector<8x128xf32> to vector<8x128xbf16>
    %c0_145 = arith.constant 0 : index
    %c0_146 = arith.constant 0 : index
    %353 = vector.load %arg6[%c0_145, %c0_146] : memref<128x512xbf16, #tpu.memory_space<vmem>>, vector<128x512xbf16>
    %cst_147 = arith.constant dense<0.000000e+00> : vector<8x512xf32>
    %354 = tpu.matmul %352, %353, %cst_147 {dimension_numbers = #tpu.dot_dimension_numbers<[1], [0], [0], [1], [0, 0, 1, 1], [], []>} : vector<8x128xbf16>, vector<128x512xbf16>, vector<8x512xf32> -> vector<8x512xf32>
    %355 = arith.addf %351, %354 : vector<8x512xf32>
    %356 = vector.extract_strided_slice %355 {offsets = [0, 0], sizes = [8, 128], strides = [1, 1]} : vector<8x512xf32> to vector<8x128xf32>
    %cst_148 = arith.constant 5.000000e-01 : f32
    %357 = vector.broadcast %cst_148 : f32 to vector<8x128xf32>
    %358 = arith.mulf %357, %356 : vector<8x128xf32>
    %359 = math.tanh %358 : vector<8x128xf32>
    %cst_149 = arith.constant 5.000000e-01 : f32
    %360 = vector.broadcast %cst_149 : f32 to vector<8x128xf32>
    %361 = arith.mulf %360, %359 : vector<8x128xf32>
    %cst_150 = arith.constant 5.000000e-01 : f32
    %362 = vector.broadcast %cst_150 : f32 to vector<8x128xf32>
    %363 = arith.addf %361, %362 : vector<8x128xf32>
    %364 = vector.extract_strided_slice %355 {offsets = [0, 128], sizes = [8, 128], strides = [1, 1]} : vector<8x512xf32> to vector<8x128xf32>
    %cst_151 = arith.constant 5.000000e-01 : f32
    %365 = vector.broadcast %cst_151 : f32 to vector<8x128xf32>
    %366 = arith.mulf %365, %364 : vector<8x128xf32>
    %367 = math.tanh %366 : vector<8x128xf32>
    %cst_152 = arith.constant 5.000000e-01 : f32
    %368 = vector.broadcast %cst_152 : f32 to vector<8x128xf32>
    %369 = arith.mulf %368, %367 : vector<8x128xf32>
    %cst_153 = arith.constant 5.000000e-01 : f32
    %370 = vector.broadcast %cst_153 : f32 to vector<8x128xf32>
    %371 = arith.addf %369, %370 : vector<8x128xf32>
    %372 = vector.extract_strided_slice %355 {offsets = [0, 256], sizes = [8, 128], strides = [1, 1]} : vector<8x512xf32> to vector<8x128xf32>
    %373 = math.tanh %372 : vector<8x128xf32>
    %374 = vector.extract_strided_slice %355 {offsets = [0, 384], sizes = [8, 128], strides = [1, 1]} : vector<8x512xf32> to vector<8x128xf32>
    %cst_154 = arith.constant 5.000000e-01 : f32
    %375 = vector.broadcast %cst_154 : f32 to vector<8x128xf32>
    %376 = arith.mulf %375, %374 : vector<8x128xf32>
    %377 = math.tanh %376 : vector<8x128xf32>
    %cst_155 = arith.constant 5.000000e-01 : f32
    %378 = vector.broadcast %cst_155 : f32 to vector<8x128xf32>
    %379 = arith.mulf %378, %377 : vector<8x128xf32>
    %cst_156 = arith.constant 5.000000e-01 : f32
    %380 = vector.broadcast %cst_156 : f32 to vector<8x128xf32>
    %381 = arith.addf %379, %380 : vector<8x128xf32>
    %382 = arith.mulf %371, %303 : vector<8x128xf32>
    %383 = arith.mulf %363, %373 : vector<8x128xf32>
    %384 = arith.addf %382, %383 : vector<8x128xf32>
    %385 = math.tanh %384 : vector<8x128xf32>
    %386 = arith.mulf %381, %385 : vector<8x128xf32>
    %387 = tpu.concatenate %386, %342 in 1 : vector<8x128xf32>, vector<8x128xf32> -> vector<8x256xf32>
    %388 = arith.truncf %387 : vector<8x256xf32> to vector<8x256xbf16>
    %c0_157 = arith.constant 0 : index
    %c0_158 = arith.constant 0 : index
    %389 = vector.load %arg13[%c0_157, %c0_158] : memref<8x512xf32, #tpu.memory_space<vmem>>, vector<8x512xf32>
    %c0_159 = arith.constant 0 : index
    %c0_160 = arith.constant 0 : index
    %390 = vector.load %arg9[%c0_159, %c0_160] : memref<256x512xbf16, #tpu.memory_space<vmem>>, vector<256x512xbf16>
    %cst_161 = arith.constant dense<0.000000e+00> : vector<8x512xf32>
    %391 = tpu.matmul %388, %390, %cst_161 {dimension_numbers = #tpu.dot_dimension_numbers<[1], [0], [0], [1], [0, 0, 1, 1], [], []>} : vector<8x256xbf16>, vector<256x512xbf16>, vector<8x512xf32> -> vector<8x512xf32>
    %392 = arith.addf %389, %391 : vector<8x512xf32>
    %393 = vector.extract_strided_slice %392 {offsets = [0, 0], sizes = [8, 128], strides = [1, 1]} : vector<8x512xf32> to vector<8x128xf32>
    %cst_162 = arith.constant 5.000000e-01 : f32
    %394 = vector.broadcast %cst_162 : f32 to vector<8x128xf32>
    %395 = arith.mulf %394, %393 : vector<8x128xf32>
    %396 = math.tanh %395 : vector<8x128xf32>
    %cst_163 = arith.constant 5.000000e-01 : f32
    %397 = vector.broadcast %cst_163 : f32 to vector<8x128xf32>
    %398 = arith.mulf %397, %396 : vector<8x128xf32>
    %cst_164 = arith.constant 5.000000e-01 : f32
    %399 = vector.broadcast %cst_164 : f32 to vector<8x128xf32>
    %400 = arith.addf %398, %399 : vector<8x128xf32>
    %401 = vector.extract_strided_slice %392 {offsets = [0, 128], sizes = [8, 128], strides = [1, 1]} : vector<8x512xf32> to vector<8x128xf32>
    %cst_165 = arith.constant 5.000000e-01 : f32
    %402 = vector.broadcast %cst_165 : f32 to vector<8x128xf32>
    %403 = arith.mulf %402, %401 : vector<8x128xf32>
    %404 = math.tanh %403 : vector<8x128xf32>
    %cst_166 = arith.constant 5.000000e-01 : f32
    %405 = vector.broadcast %cst_166 : f32 to vector<8x128xf32>
    %406 = arith.mulf %405, %404 : vector<8x128xf32>
    %cst_167 = arith.constant 5.000000e-01 : f32
    %407 = vector.broadcast %cst_167 : f32 to vector<8x128xf32>
    %408 = arith.addf %406, %407 : vector<8x128xf32>
    %409 = vector.extract_strided_slice %392 {offsets = [0, 256], sizes = [8, 128], strides = [1, 1]} : vector<8x512xf32> to vector<8x128xf32>
    %410 = math.tanh %409 : vector<8x128xf32>
    %411 = vector.extract_strided_slice %392 {offsets = [0, 384], sizes = [8, 128], strides = [1, 1]} : vector<8x512xf32> to vector<8x128xf32>
    %cst_168 = arith.constant 5.000000e-01 : f32
    %412 = vector.broadcast %cst_168 : f32 to vector<8x128xf32>
    %413 = arith.mulf %412, %411 : vector<8x128xf32>
    %414 = math.tanh %413 : vector<8x128xf32>
    %cst_169 = arith.constant 5.000000e-01 : f32
    %415 = vector.broadcast %cst_169 : f32 to vector<8x128xf32>
    %416 = arith.mulf %415, %414 : vector<8x128xf32>
    %cst_170 = arith.constant 5.000000e-01 : f32
    %417 = vector.broadcast %cst_170 : f32 to vector<8x128xf32>
    %418 = arith.addf %416, %417 : vector<8x128xf32>
    %419 = arith.mulf %408, %340 : vector<8x128xf32>
    %420 = arith.mulf %400, %410 : vector<8x128xf32>
    %421 = arith.addf %419, %420 : vector<8x128xf32>
    %422 = math.tanh %421 : vector<8x128xf32>
    %423 = arith.mulf %418, %422 : vector<8x128xf32>
    %424 = arith.truncf %423 : vector<8x128xf32> to vector<8x128xbf16>
    %425 = arith.index_cast %c4_i32 : i32 to index
    %c0_171 = arith.constant 0 : index
    %c0_172 = arith.constant 0 : index
    %426 = vector.load %arg11[%425, %c0_171, %c0_172] : memref<8x8x128xbf16, #tpu.memory_space<vmem>>, vector<1x8x128xbf16>
    %427 = vector.shape_cast %426 : vector<1x8x128xbf16> to vector<8x128xbf16>
    %428 = vector.shape_cast %424 : vector<8x128xbf16> to vector<1x8x128xbf16>
    tpu.vector_store %arg11[%425, %c0_171, %c0_172], %428 {strides = array<i32>} : memref<8x8x128xbf16, #tpu.memory_space<vmem>>, vector<1x8x128xbf16>,
    %c5_i32 = arith.constant 5 : i32
    %c8_i32_173 = arith.constant 8 : i32
    %429 = arith.muli %c5_i32, %c8_i32_173 : i32
    %430 = tpu.assume_multiple %429, 8 : i32
    %431 = arith.index_cast %430 : i32 to index
    %c0_174 = arith.constant 0 : index
    %432 = vector.load %arg12[%431, %c0_174] : memref<64x512xf32, #tpu.memory_space<vmem>>, vector<8x512xf32>
    %433 = arith.truncf %386 : vector<8x128xf32> to vector<8x128xbf16>
    %c0_175 = arith.constant 0 : index
    %c0_176 = arith.constant 0 : index
    %434 = vector.load %arg6[%c0_175, %c0_176] : memref<128x512xbf16, #tpu.memory_space<vmem>>, vector<128x512xbf16>
    %cst_177 = arith.constant dense<0.000000e+00> : vector<8x512xf32>
    %435 = tpu.matmul %433, %434, %cst_177 {dimension_numbers = #tpu.dot_dimension_numbers<[1], [0], [0], [1], [0, 0, 1, 1], [], []>} : vector<8x128xbf16>, vector<128x512xbf16>, vector<8x512xf32> -> vector<8x512xf32>
    %436 = arith.addf %432, %435 : vector<8x512xf32>
    %437 = vector.extract_strided_slice %436 {offsets = [0, 0], sizes = [8, 128], strides = [1, 1]} : vector<8x512xf32> to vector<8x128xf32>
    %cst_178 = arith.constant 5.000000e-01 : f32
    %438 = vector.broadcast %cst_178 : f32 to vector<8x128xf32>
    %439 = arith.mulf %438, %437 : vector<8x128xf32>
    %440 = math.tanh %439 : vector<8x128xf32>
    %cst_179 = arith.constant 5.000000e-01 : f32
    %441 = vector.broadcast %cst_179 : f32 to vector<8x128xf32>
    %442 = arith.mulf %441, %440 : vector<8x128xf32>
    %cst_180 = arith.constant 5.000000e-01 : f32
    %443 = vector.broadcast %cst_180 : f32 to vector<8x128xf32>
    %444 = arith.addf %442, %443 : vector<8x128xf32>
    %445 = vector.extract_strided_slice %436 {offsets = [0, 128], sizes = [8, 128], strides = [1, 1]} : vector<8x512xf32> to vector<8x128xf32>
    %cst_181 = arith.constant 5.000000e-01 : f32
    %446 = vector.broadcast %cst_181 : f32 to vector<8x128xf32>
    %447 = arith.mulf %446, %445 : vector<8x128xf32>
    %448 = math.tanh %447 : vector<8x128xf32>
    %cst_182 = arith.constant 5.000000e-01 : f32
    %449 = vector.broadcast %cst_182 : f32 to vector<8x128xf32>
    %450 = arith.mulf %449, %448 : vector<8x128xf32>
    %cst_183 = arith.constant 5.000000e-01 : f32
    %451 = vector.broadcast %cst_183 : f32 to vector<8x128xf32>
    %452 = arith.addf %450, %451 : vector<8x128xf32>
    %453 = vector.extract_strided_slice %436 {offsets = [0, 256], sizes = [8, 128], strides = [1, 1]} : vector<8x512xf32> to vector<8x128xf32>
    %454 = math.tanh %453 : vector<8x128xf32>
    %455 = vector.extract_strided_slice %436 {offsets = [0, 384], sizes = [8, 128], strides = [1, 1]} : vector<8x512xf32> to vector<8x128xf32>
    %cst_184 = arith.constant 5.000000e-01 : f32
    %456 = vector.broadcast %cst_184 : f32 to vector<8x128xf32>
    %457 = arith.mulf %456, %455 : vector<8x128xf32>
    %458 = math.tanh %457 : vector<8x128xf32>
    %cst_185 = arith.constant 5.000000e-01 : f32
    %459 = vector.broadcast %cst_185 : f32 to vector<8x128xf32>
    %460 = arith.mulf %459, %458 : vector<8x128xf32>
    %cst_186 = arith.constant 5.000000e-01 : f32
    %461 = vector.broadcast %cst_186 : f32 to vector<8x128xf32>
    %462 = arith.addf %460, %461 : vector<8x128xf32>
    %463 = arith.mulf %452, %384 : vector<8x128xf32>
    %464 = arith.mulf %444, %454 : vector<8x128xf32>
    %465 = arith.addf %463, %464 : vector<8x128xf32>
    %466 = math.tanh %465 : vector<8x128xf32>
    %467 = arith.mulf %462, %466 : vector<8x128xf32>
    %468 = tpu.concatenate %467, %423 in 1 : vector<8x128xf32>, vector<8x128xf32> -> vector<8x256xf32>
    %469 = arith.truncf %468 : vector<8x256xf32> to vector<8x256xbf16>
    %c0_187 = arith.constant 0 : index
    %c0_188 = arith.constant 0 : index
    %470 = vector.load %arg13[%c0_187, %c0_188] : memref<8x512xf32, #tpu.memory_space<vmem>>, vector<8x512xf32>
    %c0_189 = arith.constant 0 : index
    %c0_190 = arith.constant 0 : index
    %471 = vector.load %arg9[%c0_189, %c0_190] : memref<256x512xbf16, #tpu.memory_space<vmem>>, vector<256x512xbf16>
    %cst_191 = arith.constant dense<0.000000e+00> : vector<8x512xf32>
    %472 = tpu.matmul %469, %471, %cst_191 {dimension_numbers = #tpu.dot_dimension_numbers<[1], [0], [0], [1], [0, 0, 1, 1], [], []>} : vector<8x256xbf16>, vector<256x512xbf16>, vector<8x512xf32> -> vector<8x512xf32>
    %473 = arith.addf %470, %472 : vector<8x512xf32>
    %474 = vector.extract_strided_slice %473 {offsets = [0, 0], sizes = [8, 128], strides = [1, 1]} : vector<8x512xf32> to vector<8x128xf32>
    %cst_192 = arith.constant 5.000000e-01 : f32
    %475 = vector.broadcast %cst_192 : f32 to vector<8x128xf32>
    %476 = arith.mulf %475, %474 : vector<8x128xf32>
    %477 = math.tanh %476 : vector<8x128xf32>
    %cst_193 = arith.constant 5.000000e-01 : f32
    %478 = vector.broadcast %cst_193 : f32 to vector<8x128xf32>
    %479 = arith.mulf %478, %477 : vector<8x128xf32>
    %cst_194 = arith.constant 5.000000e-01 : f32
    %480 = vector.broadcast %cst_194 : f32 to vector<8x128xf32>
    %481 = arith.addf %479, %480 : vector<8x128xf32>
    %482 = vector.extract_strided_slice %473 {offsets = [0, 128], sizes = [8, 128], strides = [1, 1]} : vector<8x512xf32> to vector<8x128xf32>
    %cst_195 = arith.constant 5.000000e-01 : f32
    %483 = vector.broadcast %cst_195 : f32 to vector<8x128xf32>
    %484 = arith.mulf %483, %482 : vector<8x128xf32>
    %485 = math.tanh %484 : vector<8x128xf32>
    %cst_196 = arith.constant 5.000000e-01 : f32
    %486 = vector.broadcast %cst_196 : f32 to vector<8x128xf32>
    %487 = arith.mulf %486, %485 : vector<8x128xf32>
    %cst_197 = arith.constant 5.000000e-01 : f32
    %488 = vector.broadcast %cst_197 : f32 to vector<8x128xf32>
    %489 = arith.addf %487, %488 : vector<8x128xf32>
    %490 = vector.extract_strided_slice %473 {offsets = [0, 256], sizes = [8, 128], strides = [1, 1]} : vector<8x512xf32> to vector<8x128xf32>
    %491 = math.tanh %490 : vector<8x128xf32>
    %492 = vector.extract_strided_slice %473 {offsets = [0, 384], sizes = [8, 128], strides = [1, 1]} : vector<8x512xf32> to vector<8x128xf32>
    %cst_198 = arith.constant 5.000000e-01 : f32
    %493 = vector.broadcast %cst_198 : f32 to vector<8x128xf32>
    %494 = arith.mulf %493, %492 : vector<8x128xf32>
    %495 = math.tanh %494 : vector<8x128xf32>
    %cst_199 = arith.constant 5.000000e-01 : f32
    %496 = vector.broadcast %cst_199 : f32 to vector<8x128xf32>
    %497 = arith.mulf %496, %495 : vector<8x128xf32>
    %cst_200 = arith.constant 5.000000e-01 : f32
    %498 = vector.broadcast %cst_200 : f32 to vector<8x128xf32>
    %499 = arith.addf %497, %498 : vector<8x128xf32>
    %500 = arith.mulf %489, %421 : vector<8x128xf32>
    %501 = arith.mulf %481, %491 : vector<8x128xf32>
    %502 = arith.addf %500, %501 : vector<8x128xf32>
    %503 = math.tanh %502 : vector<8x128xf32>
    %504 = arith.mulf %499, %503 : vector<8x128xf32>
    %505 = arith.truncf %504 : vector<8x128xf32> to vector<8x128xbf16>
    %506 = arith.index_cast %c5_i32 : i32 to index
    %c0_201 = arith.constant 0 : index
    %c0_202 = arith.constant 0 : index
    %507 = vector.load %arg11[%506, %c0_201, %c0_202] : memref<8x8x128xbf16, #tpu.memory_space<vmem>>, vector<1x8x128xbf16>
    %508 = vector.shape_cast %507 : vector<1x8x128xbf16> to vector<8x128xbf16>
    %509 = vector.shape_cast %505 : vector<8x128xbf16> to vector<1x8x128xbf16>
    tpu.vector_store %arg11[%506, %c0_201, %c0_202], %509 {strides = array<i32>} : memref<8x8x128xbf16, #tpu.memory_space<vmem>>, vector<1x8x128xbf16>,
    %c6_i32 = arith.constant 6 : i32
    %c8_i32_203 = arith.constant 8 : i32
    %510 = arith.muli %c6_i32, %c8_i32_203 : i32
    %511 = tpu.assume_multiple %510, 8 : i32
    %512 = arith.index_cast %511 : i32 to index
    %c0_204 = arith.constant 0 : index
    %513 = vector.load %arg12[%512, %c0_204] : memref<64x512xf32, #tpu.memory_space<vmem>>, vector<8x512xf32>
    %514 = arith.truncf %467 : vector<8x128xf32> to vector<8x128xbf16>
    %c0_205 = arith.constant 0 : index
    %c0_206 = arith.constant 0 : index
    %515 = vector.load %arg6[%c0_205, %c0_206] : memref<128x512xbf16, #tpu.memory_space<vmem>>, vector<128x512xbf16>
    %cst_207 = arith.constant dense<0.000000e+00> : vector<8x512xf32>
    %516 = tpu.matmul %514, %515, %cst_207 {dimension_numbers = #tpu.dot_dimension_numbers<[1], [0], [0], [1], [0, 0, 1, 1], [], []>} : vector<8x128xbf16>, vector<128x512xbf16>, vector<8x512xf32> -> vector<8x512xf32>
    %517 = arith.addf %513, %516 : vector<8x512xf32>
    %518 = vector.extract_strided_slice %517 {offsets = [0, 0], sizes = [8, 128], strides = [1, 1]} : vector<8x512xf32> to vector<8x128xf32>
    %cst_208 = arith.constant 5.000000e-01 : f32
    %519 = vector.broadcast %cst_208 : f32 to vector<8x128xf32>
    %520 = arith.mulf %519, %518 : vector<8x128xf32>
    %521 = math.tanh %520 : vector<8x128xf32>
    %cst_209 = arith.constant 5.000000e-01 : f32
    %522 = vector.broadcast %cst_209 : f32 to vector<8x128xf32>
    %523 = arith.mulf %522, %521 : vector<8x128xf32>
    %cst_210 = arith.constant 5.000000e-01 : f32
    %524 = vector.broadcast %cst_210 : f32 to vector<8x128xf32>
    %525 = arith.addf %523, %524 : vector<8x128xf32>
    %526 = vector.extract_strided_slice %517 {offsets = [0, 128], sizes = [8, 128], strides = [1, 1]} : vector<8x512xf32> to vector<8x128xf32>
    %cst_211 = arith.constant 5.000000e-01 : f32
    %527 = vector.broadcast %cst_211 : f32 to vector<8x128xf32>
    %528 = arith.mulf %527, %526 : vector<8x128xf32>
    %529 = math.tanh %528 : vector<8x128xf32>
    %cst_212 = arith.constant 5.000000e-01 : f32
    %530 = vector.broadcast %cst_212 : f32 to vector<8x128xf32>
    %531 = arith.mulf %530, %529 : vector<8x128xf32>
    %cst_213 = arith.constant 5.000000e-01 : f32
    %532 = vector.broadcast %cst_213 : f32 to vector<8x128xf32>
    %533 = arith.addf %531, %532 : vector<8x128xf32>
    %534 = vector.extract_strided_slice %517 {offsets = [0, 256], sizes = [8, 128], strides = [1, 1]} : vector<8x512xf32> to vector<8x128xf32>
    %535 = math.tanh %534 : vector<8x128xf32>
    %536 = vector.extract_strided_slice %517 {offsets = [0, 384], sizes = [8, 128], strides = [1, 1]} : vector<8x512xf32> to vector<8x128xf32>
    %cst_214 = arith.constant 5.000000e-01 : f32
    %537 = vector.broadcast %cst_214 : f32 to vector<8x128xf32>
    %538 = arith.mulf %537, %536 : vector<8x128xf32>
    %539 = math.tanh %538 : vector<8x128xf32>
    %cst_215 = arith.constant 5.000000e-01 : f32
    %540 = vector.broadcast %cst_215 : f32 to vector<8x128xf32>
    %541 = arith.mulf %540, %539 : vector<8x128xf32>
    %cst_216 = arith.constant 5.000000e-01 : f32
    %542 = vector.broadcast %cst_216 : f32 to vector<8x128xf32>
    %543 = arith.addf %541, %542 : vector<8x128xf32>
    %544 = arith.mulf %533, %465 : vector<8x128xf32>
    %545 = arith.mulf %525, %535 : vector<8x128xf32>
    %546 = arith.addf %544, %545 : vector<8x128xf32>
    %547 = math.tanh %546 : vector<8x128xf32>
    %548 = arith.mulf %543, %547 : vector<8x128xf32>
    %549 = tpu.concatenate %548, %504 in 1 : vector<8x128xf32>, vector<8x128xf32> -> vector<8x256xf32>
    %550 = arith.truncf %549 : vector<8x256xf32> to vector<8x256xbf16>
    %c0_217 = arith.constant 0 : index
    %c0_218 = arith.constant 0 : index
    %551 = vector.load %arg13[%c0_217, %c0_218] : memref<8x512xf32, #tpu.memory_space<vmem>>, vector<8x512xf32>
    %c0_219 = arith.constant 0 : index
    %c0_220 = arith.constant 0 : index
    %552 = vector.load %arg9[%c0_219, %c0_220] : memref<256x512xbf16, #tpu.memory_space<vmem>>, vector<256x512xbf16>
    %cst_221 = arith.constant dense<0.000000e+00> : vector<8x512xf32>
    %553 = tpu.matmul %550, %552, %cst_221 {dimension_numbers = #tpu.dot_dimension_numbers<[1], [0], [0], [1], [0, 0, 1, 1], [], []>} : vector<8x256xbf16>, vector<256x512xbf16>, vector<8x512xf32> -> vector<8x512xf32>
    %554 = arith.addf %551, %553 : vector<8x512xf32>
    %555 = vector.extract_strided_slice %554 {offsets = [0, 0], sizes = [8, 128], strides = [1, 1]} : vector<8x512xf32> to vector<8x128xf32>
    %cst_222 = arith.constant 5.000000e-01 : f32
    %556 = vector.broadcast %cst_222 : f32 to vector<8x128xf32>
    %557 = arith.mulf %556, %555 : vector<8x128xf32>
    %558 = math.tanh %557 : vector<8x128xf32>
    %cst_223 = arith.constant 5.000000e-01 : f32
    %559 = vector.broadcast %cst_223 : f32 to vector<8x128xf32>
    %560 = arith.mulf %559, %558 : vector<8x128xf32>
    %cst_224 = arith.constant 5.000000e-01 : f32
    %561 = vector.broadcast %cst_224 : f32 to vector<8x128xf32>
    %562 = arith.addf %560, %561 : vector<8x128xf32>
    %563 = vector.extract_strided_slice %554 {offsets = [0, 128], sizes = [8, 128], strides = [1, 1]} : vector<8x512xf32> to vector<8x128xf32>
    %cst_225 = arith.constant 5.000000e-01 : f32
    %564 = vector.broadcast %cst_225 : f32 to vector<8x128xf32>
    %565 = arith.mulf %564, %563 : vector<8x128xf32>
    %566 = math.tanh %565 : vector<8x128xf32>
    %cst_226 = arith.constant 5.000000e-01 : f32
    %567 = vector.broadcast %cst_226 : f32 to vector<8x128xf32>
    %568 = arith.mulf %567, %566 : vector<8x128xf32>
    %cst_227 = arith.constant 5.000000e-01 : f32
    %569 = vector.broadcast %cst_227 : f32 to vector<8x128xf32>
    %570 = arith.addf %568, %569 : vector<8x128xf32>
    %571 = vector.extract_strided_slice %554 {offsets = [0, 256], sizes = [8, 128], strides = [1, 1]} : vector<8x512xf32> to vector<8x128xf32>
    %572 = math.tanh %571 : vector<8x128xf32>
    %573 = vector.extract_strided_slice %554 {offsets = [0, 384], sizes = [8, 128], strides = [1, 1]} : vector<8x512xf32> to vector<8x128xf32>
    %cst_228 = arith.constant 5.000000e-01 : f32
    %574 = vector.broadcast %cst_228 : f32 to vector<8x128xf32>
    %575 = arith.mulf %574, %573 : vector<8x128xf32>
    %576 = math.tanh %575 : vector<8x128xf32>
    %cst_229 = arith.constant 5.000000e-01 : f32
    %577 = vector.broadcast %cst_229 : f32 to vector<8x128xf32>
    %578 = arith.mulf %577, %576 : vector<8x128xf32>
    %cst_230 = arith.constant 5.000000e-01 : f32
    %579 = vector.broadcast %cst_230 : f32 to vector<8x128xf32>
    %580 = arith.addf %578, %579 : vector<8x128xf32>
    %581 = arith.mulf %570, %502 : vector<8x128xf32>
    %582 = arith.mulf %562, %572 : vector<8x128xf32>
    %583 = arith.addf %581, %582 : vector<8x128xf32>
    %584 = math.tanh %583 : vector<8x128xf32>
    %585 = arith.mulf %580, %584 : vector<8x128xf32>
    %586 = arith.truncf %585 : vector<8x128xf32> to vector<8x128xbf16>
    %587 = arith.index_cast %c6_i32 : i32 to index
    %c0_231 = arith.constant 0 : index
    %c0_232 = arith.constant 0 : index
    %588 = vector.load %arg11[%587, %c0_231, %c0_232] : memref<8x8x128xbf16, #tpu.memory_space<vmem>>, vector<1x8x128xbf16>
    %589 = vector.shape_cast %588 : vector<1x8x128xbf16> to vector<8x128xbf16>
    %590 = vector.shape_cast %586 : vector<8x128xbf16> to vector<1x8x128xbf16>
    tpu.vector_store %arg11[%587, %c0_231, %c0_232], %590 {strides = array<i32>} : memref<8x8x128xbf16, #tpu.memory_space<vmem>>, vector<1x8x128xbf16>,
    %c7_i32 = arith.constant 7 : i32
    %c8_i32_233 = arith.constant 8 : i32
    %591 = arith.muli %c7_i32, %c8_i32_233 : i32
    %592 = tpu.assume_multiple %591, 8 : i32
    %593 = arith.index_cast %592 : i32 to index
    %c0_234 = arith.constant 0 : index
    %594 = vector.load %arg12[%593, %c0_234] : memref<64x512xf32, #tpu.memory_space<vmem>>, vector<8x512xf32>
    %595 = arith.truncf %548 : vector<8x128xf32> to vector<8x128xbf16>
    %c0_235 = arith.constant 0 : index
    %c0_236 = arith.constant 0 : index
    %596 = vector.load %arg6[%c0_235, %c0_236] : memref<128x512xbf16, #tpu.memory_space<vmem>>, vector<128x512xbf16>
    %cst_237 = arith.constant dense<0.000000e+00> : vector<8x512xf32>
    %597 = tpu.matmul %595, %596, %cst_237 {dimension_numbers = #tpu.dot_dimension_numbers<[1], [0], [0], [1], [0, 0, 1, 1], [], []>} : vector<8x128xbf16>, vector<128x512xbf16>, vector<8x512xf32> -> vector<8x512xf32>
    %598 = arith.addf %594, %597 : vector<8x512xf32>
    %599 = vector.extract_strided_slice %598 {offsets = [0, 0], sizes = [8, 128], strides = [1, 1]} : vector<8x512xf32> to vector<8x128xf32>
    %cst_238 = arith.constant 5.000000e-01 : f32
    %600 = vector.broadcast %cst_238 : f32 to vector<8x128xf32>
    %601 = arith.mulf %600, %599 : vector<8x128xf32>
    %602 = math.tanh %601 : vector<8x128xf32>
    %cst_239 = arith.constant 5.000000e-01 : f32
    %603 = vector.broadcast %cst_239 : f32 to vector<8x128xf32>
    %604 = arith.mulf %603, %602 : vector<8x128xf32>
    %cst_240 = arith.constant 5.000000e-01 : f32
    %605 = vector.broadcast %cst_240 : f32 to vector<8x128xf32>
    %606 = arith.addf %604, %605 : vector<8x128xf32>
    %607 = vector.extract_strided_slice %598 {offsets = [0, 128], sizes = [8, 128], strides = [1, 1]} : vector<8x512xf32> to vector<8x128xf32>
    %cst_241 = arith.constant 5.000000e-01 : f32
    %608 = vector.broadcast %cst_241 : f32 to vector<8x128xf32>
    %609 = arith.mulf %608, %607 : vector<8x128xf32>
    %610 = math.tanh %609 : vector<8x128xf32>
    %cst_242 = arith.constant 5.000000e-01 : f32
    %611 = vector.broadcast %cst_242 : f32 to vector<8x128xf32>
    %612 = arith.mulf %611, %610 : vector<8x128xf32>
    %cst_243 = arith.constant 5.000000e-01 : f32
    %613 = vector.broadcast %cst_243 : f32 to vector<8x128xf32>
    %614 = arith.addf %612, %613 : vector<8x128xf32>
    %615 = vector.extract_strided_slice %598 {offsets = [0, 256], sizes = [8, 128], strides = [1, 1]} : vector<8x512xf32> to vector<8x128xf32>
    %616 = math.tanh %615 : vector<8x128xf32>
    %617 = vector.extract_strided_slice %598 {offsets = [0, 384], sizes = [8, 128], strides = [1, 1]} : vector<8x512xf32> to vector<8x128xf32>
    %cst_244 = arith.constant 5.000000e-01 : f32
    %618 = vector.broadcast %cst_244 : f32 to vector<8x128xf32>
    %619 = arith.mulf %618, %617 : vector<8x128xf32>
    %620 = math.tanh %619 : vector<8x128xf32>
    %cst_245 = arith.constant 5.000000e-01 : f32
    %621 = vector.broadcast %cst_245 : f32 to vector<8x128xf32>
    %622 = arith.mulf %621, %620 : vector<8x128xf32>
    %cst_246 = arith.constant 5.000000e-01 : f32
    %623 = vector.broadcast %cst_246 : f32 to vector<8x128xf32>
    %624 = arith.addf %622, %623 : vector<8x128xf32>
    %625 = arith.mulf %614, %546 : vector<8x128xf32>
    %626 = arith.mulf %606, %616 : vector<8x128xf32>
    %627 = arith.addf %625, %626 : vector<8x128xf32>
    %628 = math.tanh %627 : vector<8x128xf32>
    %629 = arith.mulf %624, %628 : vector<8x128xf32>
    %630 = tpu.concatenate %629, %585 in 1 : vector<8x128xf32>, vector<8x128xf32> -> vector<8x256xf32>
    %631 = arith.truncf %630 : vector<8x256xf32> to vector<8x256xbf16>
    %c0_247 = arith.constant 0 : index
    %c0_248 = arith.constant 0 : index
    %632 = vector.load %arg13[%c0_247, %c0_248] : memref<8x512xf32, #tpu.memory_space<vmem>>, vector<8x512xf32>
    %c0_249 = arith.constant 0 : index
    %c0_250 = arith.constant 0 : index
    %633 = vector.load %arg9[%c0_249, %c0_250] : memref<256x512xbf16, #tpu.memory_space<vmem>>, vector<256x512xbf16>
    %cst_251 = arith.constant dense<0.000000e+00> : vector<8x512xf32>
    %634 = tpu.matmul %631, %633, %cst_251 {dimension_numbers = #tpu.dot_dimension_numbers<[1], [0], [0], [1], [0, 0, 1, 1], [], []>} : vector<8x256xbf16>, vector<256x512xbf16>, vector<8x512xf32> -> vector<8x512xf32>
    %635 = arith.addf %632, %634 : vector<8x512xf32>
    %636 = vector.extract_strided_slice %635 {offsets = [0, 0], sizes = [8, 128], strides = [1, 1]} : vector<8x512xf32> to vector<8x128xf32>
    %cst_252 = arith.constant 5.000000e-01 : f32
    %637 = vector.broadcast %cst_252 : f32 to vector<8x128xf32>
    %638 = arith.mulf %637, %636 : vector<8x128xf32>
    %639 = math.tanh %638 : vector<8x128xf32>
    %cst_253 = arith.constant 5.000000e-01 : f32
    %640 = vector.broadcast %cst_253 : f32 to vector<8x128xf32>
    %641 = arith.mulf %640, %639 : vector<8x128xf32>
    %cst_254 = arith.constant 5.000000e-01 : f32
    %642 = vector.broadcast %cst_254 : f32 to vector<8x128xf32>
    %643 = arith.addf %641, %642 : vector<8x128xf32>
    %644 = vector.extract_strided_slice %635 {offsets = [0, 128], sizes = [8, 128], strides = [1, 1]} : vector<8x512xf32> to vector<8x128xf32>
    %cst_255 = arith.constant 5.000000e-01 : f32
    %645 = vector.broadcast %cst_255 : f32 to vector<8x128xf32>
    %646 = arith.mulf %645, %644 : vector<8x128xf32>
    %647 = math.tanh %646 : vector<8x128xf32>
    %cst_256 = arith.constant 5.000000e-01 : f32
    %648 = vector.broadcast %cst_256 : f32 to vector<8x128xf32>
    %649 = arith.mulf %648, %647 : vector<8x128xf32>
    %cst_257 = arith.constant 5.000000e-01 : f32
    %650 = vector.broadcast %cst_257 : f32 to vector<8x128xf32>
    %651 = arith.addf %649, %650 : vector<8x128xf32>
    %652 = vector.extract_strided_slice %635 {offsets = [0, 256], sizes = [8, 128], strides = [1, 1]} : vector<8x512xf32> to vector<8x128xf32>
    %653 = math.tanh %652 : vector<8x128xf32>
    %654 = vector.extract_strided_slice %635 {offsets = [0, 384], sizes = [8, 128], strides = [1, 1]} : vector<8x512xf32> to vector<8x128xf32>
    %cst_258 = arith.constant 5.000000e-01 : f32
    %655 = vector.broadcast %cst_258 : f32 to vector<8x128xf32>
    %656 = arith.mulf %655, %654 : vector<8x128xf32>
    %657 = math.tanh %656 : vector<8x128xf32>
    %cst_259 = arith.constant 5.000000e-01 : f32
    %658 = vector.broadcast %cst_259 : f32 to vector<8x128xf32>
    %659 = arith.mulf %658, %657 : vector<8x128xf32>
    %cst_260 = arith.constant 5.000000e-01 : f32
    %660 = vector.broadcast %cst_260 : f32 to vector<8x128xf32>
    %661 = arith.addf %659, %660 : vector<8x128xf32>
    %662 = arith.mulf %651, %583 : vector<8x128xf32>
    %663 = arith.mulf %643, %653 : vector<8x128xf32>
    %664 = arith.addf %662, %663 : vector<8x128xf32>
    %665 = math.tanh %664 : vector<8x128xf32>
    %666 = arith.mulf %661, %665 : vector<8x128xf32>
    %667 = arith.truncf %666 : vector<8x128xf32> to vector<8x128xbf16>
    %668 = arith.index_cast %c7_i32 : i32 to index
    %c0_261 = arith.constant 0 : index
    %c0_262 = arith.constant 0 : index
    %669 = vector.load %arg11[%668, %c0_261, %c0_262] : memref<8x8x128xbf16, #tpu.memory_space<vmem>>, vector<1x8x128xbf16>
    %670 = vector.shape_cast %669 : vector<1x8x128xbf16> to vector<8x128xbf16>
    %671 = vector.shape_cast %667 : vector<8x128xbf16> to vector<1x8x128xbf16>
    tpu.vector_store %arg11[%668, %c0_261, %c0_262], %671 {strides = array<i32>} : memref<8x8x128xbf16, #tpu.memory_space<vmem>>, vector<1x8x128xbf16>,
    %c8_i32_263 = arith.constant 8 : i32
    return
  }
  func.func @transform_0(%arg0: i32) -> (i32, i32) {
    %c0_i32 = arith.constant 0 : i32
    %c0_i32_0 = arith.constant 0 : i32
    return %arg0, %c0_i32 : i32, i32
  }
  func.func @transform_1(%arg0: i32) -> (i32, i32, i32) {
    %c0_i32 = arith.constant 0 : i32
    %c0_i32_0 = arith.constant 0 : i32
    %c0_i32_1 = arith.constant 0 : i32
    return %c0_i32, %arg0, %c0_i32_0 : i32, i32, i32
  }
  func.func @transform_2(%arg0: i32) -> (i32, i32) {
    %c0_i32 = arith.constant 0 : i32
    %c0_i32_0 = arith.constant 0 : i32
    %c0_i32_1 = arith.constant 0 : i32
    return %c0_i32, %c0_i32_0 : i32, i32
  }
  func.func @transform_3(%arg0: i32) -> (i32, i32) {
    %c0_i32 = arith.constant 0 : i32
    %c0_i32_0 = arith.constant 0 : i32
    %c0_i32_1 = arith.constant 0 : i32
    return %c0_i32, %c0_i32_0 : i32, i32
  }
  func.func @transform_4(%arg0: i32) -> (i32, i32) {
    %c0_i32 = arith.constant 0 : i32
    %c0_i32_0 = arith.constant 0 : i32
    %c0_i32_1 = arith.constant 0 : i32
    return %c0_i32, %c0_i32_0 : i32, i32
  }
  func.func @transform_5(%arg0: i32) -> (i32, i32) {
    %c0_i32 = arith.constant 0 : i32
    %c0_i32_0 = arith.constant 0 : i32
    %c0_i32_1 = arith.constant 0 : i32
    return %c0_i32, %c0_i32_0 : i32, i32
  }
  func.func @transform_6(%arg0: i32) -> (i32, i32) {
    %c0_i32 = arith.constant 0 : i32
    %c0_i32_0 = arith.constant 0 : i32
    %c0_i32_1 = arith.constant 0 : i32
    return %c0_i32, %c0_i32_0 : i32, i32
  }
  func.func @transform_7(%arg0: i32) -> (i32, i32) {
    %c0_i32 = arith.constant 0 : i32
    %c0_i32_0 = arith.constant 0 : i32
    %c0_i32_1 = arith.constant 0 : i32
    return %c0_i32, %c0_i32_0 : i32, i32
  }
  func.func @transform_8(%arg0: i32) -> (i32, i32) {
    %c0_i32 = arith.constant 0 : i32
    %c0_i32_0 = arith.constant 0 : i32
    %c0_i32_1 = arith.constant 0 : i32
    return %c0_i32, %c0_i32_0 : i32, i32
  }
  func.func @transform_9(%arg0: i32) -> (i32, i32) {
    %c0_i32 = arith.constant 0 : i32
    %c0_i32_0 = arith.constant 0 : i32
    %c0_i32_1 = arith.constant 0 : i32
    return %c0_i32, %c0_i32_0 : i32, i32
  }
  func.func @transform_10(%arg0: i32) -> (i32, i32, i32) {
    %c0_i32 = arith.constant 0 : i32
    %c0_i32_0 = arith.constant 0 : i32
    %c0_i32_1 = arith.constant 0 : i32
    return %c0_i32, %arg0, %c0_i32_0 : i32, i32, i32
  }
}

</mosaic_0001>

<llo_original>
// kernel: tpu_custom_call.1
$region0: #{tpu_custom_call.1}
  #allocation0 [shape = 'u32[]', space=smem, size = 0x4, offset = 0x4, fixed_abs, tag = 'smem constant byte address 0x4 - core index']
  #allocation1 [shape = 'u32[144,128]{1,0:T(1,128)}', space=vmem, size = 0x12000, scoped, tag = 'internal scratch']
  #allocation2 [shape = 'f32[64,512]{1,0:T(8,128)}', space=vmem, size = 0x20000, scoped, tag = 'scratch operand']
  #allocation3 [shape = 'f32[8,512]{1,0:T(8,128)}', space=vmem, size = 0x4000, scoped, tag = 'scratch operand']
  %s0 = inlined_call_operand.hbm [shape: f32[8,16], index: 0, kind: input, shape index: {}]
  %s1 = inlined_call_operand.hbm [shape: bf16[8,8,32], index: 1, kind: input, shape index: {}]
  %s2 = inlined_call_operand.hbm [shape: f32[16,128], index: 2, kind: input, shape index: {}]
  %s3 = inlined_call_operand.vmem [shape: f32[1,128], index: 3, kind: input, shape index: {}]
  %s4 = inlined_call_operand.hbm [shape: bf16[32,512], index: 4, kind: input, shape index: {}]
  %s5 = inlined_call_operand.hbm [shape: bf16[128,512], index: 5, kind: input, shape index: {}]
  %s6 = inlined_call_operand.vmem [shape: f32[1,512], index: 6, kind: input, shape index: {}]
  %s7 = inlined_call_operand.hbm [shape: bf16[128,512], index: 7, kind: input, shape index: {}]
  %s8 = inlined_call_operand.hbm [shape: bf16[256,512], index: 8, kind: input, shape index: {}]
  %s9 = inlined_call_operand.vmem [shape: f32[1,512], index: 9, kind: input, shape index: {}]
  %s10 = inlined_call_operand.hbm [shape: bf16[8,8,128], index: 10, kind: output, shape index: {}]
  %s11 = sld [smem:[#allocation0]]
  $region78: #{tpu_custom_call.1} parent=0
    _
  %s13 = ssub.s32 1, %s11
  %s14 = scalar_select 0, %s13, %s11
  $region1: #{tpu_custom_call.1} parent=0
    #allocation4 [shape = 'u8[4096]{0}', space=vmem, size = 0x1000, scoped, tag = 'input window, operand 0, single buffered']
    #allocation5 [shape = 's32[1]{0}', space=sflag, size = 0x4, scoped, tag = 'scoped memory for tpu_custom_call.1']
    #allocation6 [shape = 's32[1]{0}', space=sflag, size = 0x4, scoped, tag = 'scoped memory for tpu_custom_call.1']
    #allocation7 [shape = 'u8[16384]{0}', space=vmem, size = 0x4000, scoped, tag = 'input window, operand 1, single buffered']
    #allocation8 [shape = 's32[1]{0}', space=sflag, size = 0x4, scoped, tag = 'scoped memory for tpu_custom_call.1']
    #allocation9 [shape = 'u8[8192]{0}', space=vmem, size = 0x2000, scoped, tag = 'input window, operand 2, single buffered']
    #allocation10 [shape = 'u8[32768]{0}', space=vmem, size = 0x8000, scoped, tag = 'input window, operand 4, single buffered']
    #allocation11 [shape = 's32[1]{0}', space=sflag, size = 0x4, scoped, tag = 'scoped memory for tpu_custom_call.1']
    #allocation12 [shape = 'u8[131072]{0}', space=vmem, size = 0x20000, scoped, tag = 'input window, operand 5, single buffered']
    #allocation13 [shape = 'u8[131072]{0}', space=vmem, size = 0x20000, scoped, tag = 'input window, operand 7, single buffered']
    #allocation14 [shape = 's32[1]{0}', space=sflag, size = 0x4, scoped, tag = 'scoped memory for tpu_custom_call.1']
    #allocation15 [shape = 'u8[262144]{0}', space=vmem, size = 0x40000, scoped, tag = 'input window, operand 8, single buffered']
    #allocation16 [shape = 'u8[16384]{0}', space=vmem, size = 0x4000, scoped, tag = 'output window, operand 0, single buffered']
    %15 = vsyncpa [#allocation5], 0
    %16 = vsyncpa [#allocation8], 0
    %17 = vsyncpa [#allocation11], 0
    %18 = vsyncpa [#allocation14], 0
    %19 = vsyncpa [#allocation6], 0
    // Predicated region
    $region2: #{tpu_custom_call.1} parent=1 // pred_check
      _
    $region3: #{tpu_custom_call.1} parent=1 // pred_check_branch
      %21 = sbr.rel (0) target = $region5
    $region4: #{tpu_custom_call.1} parent=1 // pred_region
      %s23 = ssub.s32 128, 128
      %24 = vsyncadd [#allocation5], %s23
      %s26 = sshll.u32 [#allocation4], 4
      %s27 = int_to_ptr.vmem [resolvable:$true] %s26
      %29 = dma.hbm_to_vmem [thread:$0]  %s0, 128, %s27, [#allocation5]
    $region5: #{tpu_custom_call.1} parent=1 // pred_fallthru
      _
    // Predicated region
    $region6: #{tpu_custom_call.1} parent=1 // pred_check
      _
    $region7: #{tpu_custom_call.1} parent=1 // pred_check_branch
      %31 = sbr.rel (0) target = $region9
    $region8: #{tpu_custom_call.1} parent=1 // pred_region
      %s33 = ssub.s32 512, 512
      %34 = vsyncadd [#allocation8], %s33
      %s35 = sshll.u32 [#allocation7], 4
      %s36 = int_to_ptr.vmem [resolvable:$true] %s35
      %41 = dma.hbm_to_vmem [thread:$0]  %s1, 512, %s36, [#allocation8], 64, 64, 4
    $region9: #{tpu_custom_call.1} parent=1 // pred_fallthru
      _
    // Predicated region
    $region10: #{tpu_custom_call.1} parent=1 // pred_check
      _
    $region11: #{tpu_custom_call.1} parent=1 // pred_check_branch
      %43 = sbr.rel (0) target = $region13
    $region12: #{tpu_custom_call.1} parent=1 // pred_region
      %s45 = ssub.s32 256, 256
      %46 = vsyncadd [#allocation8], %s45
      %s47 = sshll.u32 [#allocation9], 4
      %s48 = int_to_ptr.vmem [resolvable:$true] %s47
      %53 = dma.hbm_to_vmem [thread:$0]  %s2, 256, %s48, [#allocation8], 128, 128, 8
    $region13: #{tpu_custom_call.1} parent=1 // pred_fallthru
      _
    // Predicated region
    $region14: #{tpu_custom_call.1} parent=1 // pred_check
      _
    $region15: #{tpu_custom_call.1} parent=1 // pred_check_branch
      %55 = sbr.rel (0) target = $region17
    $region16: #{tpu_custom_call.1} parent=1 // pred_region
      _
    $region17: #{tpu_custom_call.1} parent=1 // pred_fallthru
      _
    // Predicated region
    $region18: #{tpu_custom_call.1} parent=1 // pred_check
      _
    $region19: #{tpu_custom_call.1} parent=1 // pred_check_branch
      %57 = sbr.rel (0) target = $region21
    $region20: #{tpu_custom_call.1} parent=1 // pred_region
      %s59 = ssub.s32 1024, 1024
      %60 = vsyncadd [#allocation11], %s59
      %s61 = sshll.u32 [#allocation10], 4
      %s62 = int_to_ptr.vmem [resolvable:$true] %s61
      %67 = dma.hbm_to_vmem [thread:$0]  %s4, 1024, %s62, [#allocation11], 256, 256, 16
    $region21: #{tpu_custom_call.1} parent=1 // pred_fallthru
      _
    // Predicated region
    $region22: #{tpu_custom_call.1} parent=1 // pred_check
      _
    $region23: #{tpu_custom_call.1} parent=1 // pred_check_branch
      %69 = sbr.rel (0) target = $region25
    $region24: #{tpu_custom_call.1} parent=1 // pred_region
      %s71 = ssub.s32 4096, 4096
      %72 = vsyncadd [#allocation11], %s71
      %s73 = sshll.u32 [#allocation12], 4
      %s74 = int_to_ptr.vmem [resolvable:$true] %s73
      %79 = dma.hbm_to_vmem [thread:$0]  %s5, 4096, %s74, [#allocation11], 256, 256, 16
    $region25: #{tpu_custom_call.1} parent=1 // pred_fallthru
      _
    // Predicated region
    $region26: #{tpu_custom_call.1} parent=1 // pred_check
      _
    $region27: #{tpu_custom_call.1} parent=1 // pred_check_branch
      %81 = sbr.rel (0) target = $region29
    $region28: #{tpu_custom_call.1} parent=1 // pred_region
      _
    $region29: #{tpu_custom_call.1} parent=1 // pred_fallthru
      _
    // Predicated region
    $region30: #{tpu_custom_call.1} parent=1 // pred_check
      _
    $region31: #{tpu_custom_call.1} parent=1 // pred_check_branch
      %83 = sbr.rel (0) target = $region33
    $region32: #{tpu_custom_call.1} parent=1 // pred_region
      %s85 = ssub.s32 4096, 4096
      %86 = vsyncadd [#allocation14], %s85
      %s87 = sshll.u32 [#allocation13], 4
      %s88 = int_to_ptr.vmem [resolvable:$true] %s87
      %93 = dma.hbm_to_vmem [thread:$0]  %s7, 4096, %s88, [#allocation14], 256, 256, 16
    $region33: #{tpu_custom_call.1} parent=1 // pred_fallthru
      _
    // Predicated region
    $region34: #{tpu_custom_call.1} parent=1 // pred_check
      _
    $region35: #{tpu_custom_call.1} parent=1 // pred_check_branch
      %95 = sbr.rel (0) target = $region37
    $region36: #{tpu_custom_call.1} parent=1 // pred_region
      %s97 = ssub.s32 8192, 8192
      %98 = vsyncadd [#allocation14], %s97
      %s99 = sshll.u32 [#allocation15], 4
      %s100 = int_to_ptr.vmem [resolvable:$true] %s99
      %105 = dma.hbm_to_vmem [thread:$0]  %s8, 8192, %s100, [#allocation14], 256, 256, 16
    $region37: #{tpu_custom_call.1} parent=1 // pred_fallthru
      _
    // Predicated region
    $region38: #{tpu_custom_call.1} parent=1 // pred_check
      _
    $region39: #{tpu_custom_call.1} parent=1 // pred_check_branch
      %107 = sbr.rel (0) target = $region41
    $region40: #{tpu_custom_call.1} parent=1 // pred_region
      _
    $region41: #{tpu_custom_call.1} parent=1 // pred_fallthru
      _
    // Predicated region
    $region42: #{tpu_custom_call.1} parent=1 // pred_check
      _
    $region43: #{tpu_custom_call.1} parent=1 // pred_check_branch
      %109 = sbr.rel (0) target = $region45
    $region44: #{tpu_custom_call.1} parent=1 // pred_region
      %110 = dma.done [#allocation5], 128
    $region45: #{tpu_custom_call.1} parent=1 // pred_fallthru
      _
    // Predicated region
    $region46: #{tpu_custom_call.1} parent=1 // pred_check
      _
    $region47: #{tpu_custom_call.1} parent=1 // pred_check_branch
      %112 = sbr.rel (0) target = $region49
    $region48: #{tpu_custom_call.1} parent=1 // pred_region
      %113 = dma.done [#allocation8], 512
    $region49: #{tpu_custom_call.1} parent=1 // pred_fallthru
      _
    // Predicated region
    $region50: #{tpu_custom_call.1} parent=1 // pred_check
      _
    $region51: #{tpu_custom_call.1} parent=1 // pred_check_branch
      %115 = sbr.rel (0) target = $region53
    $region52: #{tpu_custom_call.1} parent=1 // pred_region
      %116 = dma.done [#allocation8], 256
    $region53: #{tpu_custom_call.1} parent=1 // pred_fallthru
      _
    // Predicated region
    $region54: #{tpu_custom_call.1} parent=1 // pred_check
      _
    $region55: #{tpu_custom_call.1} parent=1 // pred_check_branch
      %118 = sbr.rel (0) target = $region57
    $region56: #{tpu_custom_call.1} parent=1 // pred_region
      %119 = dma.done [#allocation11], 1024
    $region57: #{tpu_custom_call.1} parent=1 // pred_fallthru
      _
    // Predicated region
    $region58: #{tpu_custom_call.1} parent=1 // pred_check
      _
    $region59: #{tpu_custom_call.1} parent=1 // pred_check_branch
      %121 = sbr.rel (0) target = $region61
    $region60: #{tpu_custom_call.1} parent=1 // pred_region
      %122 = dma.done [#allocation11], 4096
    $region61: #{tpu_custom_call.1} parent=1 // pred_fallthru
      _
    // Predicated region
    $region62: #{tpu_custom_call.1} parent=1 // pred_check
      _
    $region63: #{tpu_custom_call.1} parent=1 // pred_check_branch
      %124 = sbr.rel (0) target = $region65
    $region64: #{tpu_custom_call.1} parent=1 // pred_region
      %125 = dma.done [#allocation14], 4096
    $region65: #{tpu_custom_call.1} parent=1 // pred_fallthru
      _
    // Predicated region
    $region66: #{tpu_custom_call.1} parent=1 // pred_check
      _
    $region67: #{tpu_custom_call.1} parent=1 // pred_check_branch
      %127 = sbr.rel (0) target = $region69
    $region68: #{tpu_custom_call.1} parent=1 // pred_region
      %128 = dma.done [#allocation14], 8192
    $region69: #{tpu_custom_call.1} parent=1 // pred_fallthru
      _
    %v130 = vld [vmem:[#allocation4] sm:$0xff]
    %v131 = vld [vmem:[#allocation9] sm:$0xff]
    %v132 = vld [vmem:[#allocation9 + $0x8] sm:$0xff]
    %v133 = vld [vmem:[%s3] sm:$0x1]
    %v135 = vlaneseq
    %v136 = vshrl.u32 %v135, 7
    %v137 = vsub.s32 0, %v136
    %v138 = vrot.slane %v133, %v137
    %vm140 = vcmask 130048
    %v142 = vsel %vm140, %v130, 0
    %144 = vmatprep.subr.mxu0 0.0
    %145 = vmatpush1.msra.mxu0 0.0
    %146 = vmatprep.subr.mxu0 0.0
    %147 = vmatpush1.msra.mxu0 0.0
    %148 = vmatprep.subr.mxu0 0.0
    %149 = vmatpush1.msra.mxu0 0.0
    %150 = vmatprep.subr.mxu0 0.0
    %151 = vmatpush1.msra.mxu0 0.0
    %152 = vmatprep.subr.mxu0 0.0
    %153 = vmatpush1.msra.mxu0 0.0
    %154 = vmatprep.subr.mxu0 0.0
    %155 = vmatpush1.msra.mxu0 0.0
    %156 = vmatprep.subr.mxu0 0.0
    %157 = vmatpush1.msra.mxu0 0.0
    %158 = vmatprep.subr.mxu0 0.0
    %159 = vmatpush1.msra.mxu0 0.0
    %160 = vmatprep.subr.mxu0 0.0
    %161 = vmatpush1.msra.mxu0 0.0
    %162 = vmatprep.subr.mxu0 0.0
    %163 = vmatpush1.msra.mxu0 0.0
    %164 = vmatprep.subr.mxu0 0.0
    %165 = vmatpush1.msra.mxu0 0.0
    %166 = vmatprep.subr.mxu0 0.0
    %167 = vmatpush1.msra.mxu0 0.0
    %168 = vmatprep.subr.mxu0 0.0
    %169 = vmatpush1.msra.mxu0 0.0
    %170 = vmatprep.subr.mxu0 0.0
    %171 = vmatpush1.msra.mxu0 0.0
    %172 = vmatprep.subr.mxu0 0.0
    %173 = vmatpush1.msra.mxu0 %v132
    %174 = vmatprep.subr.mxu0 0.0
    %175 = vmatpush1.msra.mxu0 %v131
    %176 = vmatprep.subr.mxu0 0.0
    %177 = vmatpush2.msra.mxu0 0.0
    %178 = vmatprep.subr.mxu0 0.0
    %179 = vmatpush2.msra.mxu0 0.0
    %180 = vmatprep.subr.mxu0 0.0
    %181 = vmatpush2.msra.mxu0 0.0
    %182 = vmatprep.subr.mxu0 0.0
    %183 = vmatpush2.msra.mxu0 0.0
    %184 = vmatprep.subr.mxu0 0.0
    %185 = vmatpush2.msra.mxu0 0.0
    %186 = vmatprep.subr.mxu0 0.0
    %187 = vmatpush2.msra.mxu0 0.0
    %188 = vmatprep.subr.mxu0 0.0
    %189 = vmatpush2.msra.mxu0 0.0
    %190 = vmatprep.subr.mxu0 0.0
    %191 = vmatpush2.msra.mxu0 0.0
    %192 = vmatprep.subr.mxu0 0.0
    %193 = vmatpush2.msra.mxu0 0.0
    %194 = vmatprep.subr.mxu0 0.0
    %195 = vmatpush2.msra.mxu0 0.0
    %196 = vmatprep.subr.mxu0 0.0
    %197 = vmatpush2.msra.mxu0 0.0
    %198 = vmatprep.subr.mxu0 0.0
    %199 = vmatpush2.msra.mxu0 0.0
    %200 = vmatprep.subr.mxu0 0.0
    %201 = vmatpush2.msra.mxu0 0.0
    %202 = vmatprep.subr.mxu0 0.0
    %203 = vmatpush2.msra.mxu0 0.0
    %204 = vmatprep.subr.mxu0 0.0
    %205 = vmatpush2.msra.mxu0 0.0
    %206 = vmatprep.subr.mxu0 0.0
    %207 = vmatpush2.msra.mxu0 0.0
    %208 = vmatprep.mubr.f32.mxu0 0.0
    %209 = vmatmul.mubr.f32.gmra.mxu0 %v142
    %v210 = vpop.f32.mrf.mxu0
    %v211 = vadd.f32 %v138, %v210
    %v212 = vpop.f32.mrf.mxu0
    %213 = vdwg.mxu0
    %v214 = vmax.f32 %v211, 0.0
    %v215 = vpack.c.bf16 %v214, %v214
    %v216 = vld [vmem:[#allocation13] sm:$0xff]
    %v217 = vld [vmem:[#allocation13 + $0x8] sm:$0xff]
    %v218 = vld [vmem:[#allocation13 + $0x10] sm:$0xff]
    %v219 = vld [vmem:[#allocation13 + $0x18] sm:$0xff]
    %v220 = vld [vmem:[#allocation13 + $0x20] sm:$0xff]
    %v221 = vld [vmem:[#allocation13 + $0x28] sm:$0xff]
    %v222 = vld [vmem:[#allocation13 + $0x30] sm:$0xff]
    %v223 = vld [vmem:[#allocation13 + $0x38] sm:$0xff]
    %v224 = vld [vmem:[#allocation13 + $0x40] sm:$0xff]
    %v225 = vld [vmem:[#allocation13 + $0x48] sm:$0xff]
    %v226 = vld [vmem:[#allocation13 + $0x50] sm:$0xff]
    %v227 = vld [vmem:[#allocation13 + $0x58] sm:$0xff]
    %v228 = vld [vmem:[#allocation13 + $0x60] sm:$0xff]
    %v229 = vld [vmem:[#allocation13 + $0x68] sm:$0xff]
    %v230 = vld [vmem:[#allocation13 + $0x70] sm:$0xff]
    %v231 = vld [vmem:[#allocation13 + $0x78] sm:$0xff]
    %v232 = vld [vmem:[#allocation13 + $0x80] sm:$0xff]
    %v233 = vld [vmem:[#allocation13 + $0x88] sm:$0xff]
    %v234 = vld [vmem:[#allocation13 + $0x90] sm:$0xff]
    %v235 = vld [vmem:[#allocation13 + $0x98] sm:$0xff]
    %v236 = vld [vmem:[#allocation13 + $0xa0] sm:$0xff]
    %v237 = vld [vmem:[#allocation13 + $0xa8] sm:$0xff]
    %v238 = vld [vmem:[#allocation13 + $0xb0] sm:$0xff]
    %v239 = vld [vmem:[#allocation13 + $0xb8] sm:$0xff]
    %v240 = vld [vmem:[#allocation13 + $0xc0] sm:$0xff]
    %v241 = vld [vmem:[#allocation13 + $0xc8] sm:$0xff]
    %v242 = vld [vmem:[#allocation13 + $0xd0] sm:$0xff]
    %v243 = vld [vmem:[#allocation13 + $0xd8] sm:$0xff]
    %v244 = vld [vmem:[#allocation13 + $0xe0] sm:$0xff]
    %v245 = vld [vmem:[#allocation13 + $0xe8] sm:$0xff]
    %v246 = vld [vmem:[#allocation13 + $0xf0] sm:$0xff]
    %v247 = vld [vmem:[#allocation13 + $0xf8] sm:$0xff]
    %v248 = vld [vmem:[%s9] sm:$0xf]
    %v250 = vlaneseq
    %v251 = vshrl.u32 %v250, 7
    %v252 = vsub.s32 0, %v251
    %v253 = vrot.slane %v248, %v252
    %v254 = vlaneseq
    %v255 = vshrl.u32 %v254, 7
    %v256 = vsub.s32 1, %v255
    %v257 = vrot.slane %v248, %v256
    %v258 = vlaneseq
    %v259 = vshrl.u32 %v258, 7
    %v260 = vsub.s32 2, %v259
    %v261 = vrot.slane %v248, %v260
    %v262 = vlaneseq
    %v263 = vshrl.u32 %v262, 7
    %v264 = vsub.s32 3, %v263
    %v265 = vrot.slane %v248, %v264
    %v302 = vunpack.c.l.b16 %v216
    %v303 = vunpack.c.h.b16 %v216
    %v304 = vunpack.c.l.b16 %v217
    %v305 = vunpack.c.h.b16 %v217
    %v306 = vunpack.c.l.b16 %v218
    %v307 = vunpack.c.h.b16 %v218
    %v308 = vunpack.c.l.b16 %v219
    %v309 = vunpack.c.h.b16 %v219
    %v310 = vunpack.c.l.b16 %v220
    %v311 = vunpack.c.h.b16 %v220
    %v312 = vunpack.c.l.b16 %v221
    %v313 = vunpack.c.h.b16 %v221
    %v314 = vunpack.c.l.b16 %v222
    %v315 = vunpack.c.h.b16 %v222
    %v316 = vunpack.c.l.b16 %v223
    %v317 = vunpack.c.h.b16 %v223
    %v318 = vunpack.c.l.b16 %v224
    %v319 = vunpack.c.h.b16 %v224
    %v320 = vunpack.c.l.b16 %v225
    %v321 = vunpack.c.h.b16 %v225
    %v322 = vunpack.c.l.b16 %v226
    %v323 = vunpack.c.h.b16 %v226
    %v324 = vunpack.c.l.b16 %v227
    %v325 = vunpack.c.h.b16 %v227
    %v326 = vunpack.c.l.b16 %v228
    %v327 = vunpack.c.h.b16 %v228
    %v328 = vunpack.c.l.b16 %v229
    %v329 = vunpack.c.h.b16 %v229
    %v330 = vunpack.c.l.b16 %v230
    %v331 = vunpack.c.h.b16 %v230
    %v332 = vunpack.c.l.b16 %v231
    %v333 = vunpack.c.h.b16 %v231
    %v334 = vunpack.c.l.b16 %v232
    %v335 = vunpack.c.h.b16 %v232
    %v336 = vunpack.c.l.b16 %v233
    %v337 = vunpack.c.h.b16 %v233
    %v338 = vunpack.c.l.b16 %v234
    %v339 = vunpack.c.h.b16 %v234
    %v340 = vunpack.c.l.b16 %v235
    %v341 = vunpack.c.h.b16 %v235
    %v342 = vunpack.c.l.b16 %v236
    %v343 = vunpack.c.h.b16 %v236
    %v344 = vunpack.c.l.b16 %v237
    %v345 = vunpack.c.h.b16 %v237
    %v346 = vunpack.c.l.b16 %v238
    %v347 = vunpack.c.h.b16 %v238
    %v348 = vunpack.c.l.b16 %v239
    %v349 = vunpack.c.h.b16 %v239
    %v350 = vunpack.c.l.b16 %v240
    %v351 = vunpack.c.h.b16 %v240
    %v352 = vunpack.c.l.b16 %v241
    %v353 = vunpack.c.h.b16 %v241
    %v354 = vunpack.c.l.b16 %v242
    %v355 = vunpack.c.h.b16 %v242
    %v356 = vunpack.c.l.b16 %v243
    %v357 = vunpack.c.h.b16 %v243
    %v358 = vunpack.c.l.b16 %v244
    %v359 = vunpack.c.h.b16 %v244
    %v360 = vunpack.c.l.b16 %v245
    %v361 = vunpack.c.h.b16 %v245
    %v362 = vunpack.c.l.b16 %v246
    %v363 = vunpack.c.h.b16 %v246
    %v364 = vunpack.c.l.b16 %v247
    %v365 = vunpack.c.h.b16 %v247
    %v366 = vpack.c.b16 %v306, %v302
    %v367 = vpack.c.b16 %v307, %v303
    %v368 = vpack.c.b16 %v308, %v304
    %v369 = vpack.c.b16 %v309, %v305
    %v370 = vpack.c.b16 %v314, %v310
    %v371 = vpack.c.b16 %v315, %v311
    %v372 = vpack.c.b16 %v316, %v312
    %v373 = vpack.c.b16 %v317, %v313
    %v374 = vpack.c.b16 %v322, %v318
    %v375 = vpack.c.b16 %v323, %v319
    %v376 = vpack.c.b16 %v324, %v320
    %v377 = vpack.c.b16 %v325, %v321
    %v378 = vpack.c.b16 %v330, %v326
    %v379 = vpack.c.b16 %v331, %v327
    %v380 = vpack.c.b16 %v332, %v328
    %v381 = vpack.c.b16 %v333, %v329
    %v382 = vpack.c.b16 %v338, %v334
    %v383 = vpack.c.b16 %v339, %v335
    %v384 = vpack.c.b16 %v340, %v336
    %v385 = vpack.c.b16 %v341, %v337
    %v386 = vpack.c.b16 %v346, %v342
    %v387 = vpack.c.b16 %v347, %v343
    %v388 = vpack.c.b16 %v348, %v344
    %v389 = vpack.c.b16 %v349, %v345
    %v390 = vpack.c.b16 %v354, %v350
    %v391 = vpack.c.b16 %v355, %v351
    %v392 = vpack.c.b16 %v356, %v352
    %v393 = vpack.c.b16 %v357, %v353
    %v394 = vpack.c.b16 %v362, %v358
    %v395 = vpack.c.b16 %v363, %v359
    %v396 = vpack.c.b16 %v364, %v360
    %v397 = vpack.c.b16 %v365, %v361
    %430 = vmatprep.subr.bf16.mxu0 %v395
    %431 = vmatpush1.bf16.msra.mxu0 %v394
    %432 = vmatprep.subr.bf16.mxu0 %v391
    %433 = vmatpush1.bf16.msra.mxu0 %v390
    %434 = vmatprep.subr.bf16.mxu0 %v387
    %435 = vmatpush1.bf16.msra.mxu0 %v386
    %436 = vmatprep.subr.bf16.mxu0 %v383
    %437 = vmatpush1.bf16.msra.mxu0 %v382
    %438 = vmatprep.subr.bf16.mxu0 %v379
    %439 = vmatpush1.bf16.msra.mxu0 %v378
    %440 = vmatprep.subr.bf16.mxu0 %v375
    %441 = vmatpush1.bf16.msra.mxu0 %v374
    %442 = vmatprep.subr.bf16.mxu0 %v371
    %443 = vmatpush1.bf16.msra.mxu0 %v370
    %444 = vmatprep.subr.bf16.mxu0 %v367
    %445 = vmatpush1.bf16.msra.mxu0 %v366
    %446 = vmatprep.subr.bf16.mxu0 0
    %447 = vmatpush2.bf16.msra.mxu0 0
    %448 = vmatprep.subr.bf16.mxu0 0
    %449 = vmatpush2.bf16.msra.mxu0 0
    %450 = vmatprep.subr.bf16.mxu0 0
    %451 = vmatpush2.bf16.msra.mxu0 0
    %452 = vmatprep.subr.bf16.mxu0 0
    %453 = vmatpush2.bf16.msra.mxu0 0
    %454 = vmatprep.subr.bf16.mxu0 0
    %455 = vmatpush2.bf16.msra.mxu0 0
    %456 = vmatprep.subr.bf16.mxu0 0
    %457 = vmatpush2.bf16.msra.mxu0 0
    %458 = vmatprep.subr.bf16.mxu0 0
    %459 = vmatpush2.bf16.msra.mxu0 0
    %460 = vmatprep.subr.bf16.mxu0 0
    %461 = vmatpush2.bf16.msra.mxu0 0
    %462 = vmatprep.mubr.bf16.mxu0 0
    %463 = vmatmul.mubr.bf16.gmra.mxu0 %v215
    %v464 = vpop.f32.mrf.mxu0
    %v465 = vadd.f32 %v253, %v464
    %v466 = vpop.f32.mrf.mxu0
    %v467 = vadd.f32 %v257, %v466
    %v468 = vpop.f32.mrf.mxu0
    %v469 = vpop.f32.mrf.mxu0
    %470 = vdwg.mxu0
    %471 = vmatprep.subr.bf16.mxu0 %v397
    %472 = vmatpush1.bf16.msra.mxu0 %v396
    %473 = vmatprep.subr.bf16.mxu0 %v393
    %474 = vmatpush1.bf16.msra.mxu0 %v392
    %475 = vmatprep.subr.bf16.mxu0 %v389
    %476 = vmatpush1.bf16.msra.mxu0 %v388
    %477 = vmatprep.subr.bf16.mxu0 %v385
    %478 = vmatpush1.bf16.msra.mxu0 %v384
    %479 = vmatprep.subr.bf16.mxu0 %v381
    %480 = vmatpush1.bf16.msra.mxu0 %v380
    %481 = vmatprep.subr.bf16.mxu0 %v377
    %482 = vmatpush1.bf16.msra.mxu0 %v376
    %483 = vmatprep.subr.bf16.mxu0 %v373
    %484 = vmatpush1.bf16.msra.mxu0 %v372
    %485 = vmatprep.subr.bf16.mxu0 %v369
    %486 = vmatpush1.bf16.msra.mxu0 %v368
    %487 = vmatprep.subr.bf16.mxu0 0
    %488 = vmatpush2.bf16.msra.mxu0 0
    %489 = vmatprep.subr.bf16.mxu0 0
    %490 = vmatpush2.bf16.msra.mxu0 0
    %491 = vmatprep.subr.bf16.mxu0 0
    %492 = vmatpush2.bf16.msra.mxu0 0
    %493 = vmatprep.subr.bf16.mxu0 0
    %494 = vmatpush2.bf16.msra.mxu0 0
    %495 = vmatprep.subr.bf16.mxu0 0
    %496 = vmatpush2.bf16.msra.mxu0 0
    %497 = vmatprep.subr.bf16.mxu0 0
    %498 = vmatpush2.bf16.msra.mxu0 0
    %499 = vmatprep.subr.bf16.mxu0 0
    %500 = vmatpush2.bf16.msra.mxu0 0
    %501 = vmatprep.subr.bf16.mxu0 0
    %502 = vmatpush2.bf16.msra.mxu0 0
    %503 = vmatprep.mubr.bf16.mxu0 0
    %504 = vmatmul.mubr.bf16.gmra.mxu0 %v215
    %v505 = vpop.f32.mrf.mxu0
    %v506 = vadd.f32 %v261, %v505
    %v507 = vpop.f32.mrf.mxu0
    %v508 = vadd.f32 %v265, %v507
    %v509 = vpop.f32.mrf.mxu0
    %v510 = vpop.f32.mrf.mxu0
    %511 = vdwg.mxu0
    %512 = vst [vmem:[#allocation3] sm:$0xff] %v465
    %513 = vst [vmem:[#allocation3 + $0x8] sm:$0xff] %v467
    %514 = vst [vmem:[#allocation3 + $0x10] sm:$0xff] %v506
    %515 = vst [vmem:[#allocation3 + $0x18] sm:$0xff] %v508
    %v516 = vld [vmem:[#allocation7] sm:$0xf]
    %v517 = vld [vmem:[#allocation7 + $0x4] sm:$0xf]
    %v518 = vld [vmem:[#allocation7 + $0x8] sm:$0xf]
    %v519 = vld [vmem:[#allocation7 + $0xc] sm:$0xf]
    %v520 = vld [vmem:[#allocation7 + $0x10] sm:$0xf]
    %v521 = vld [vmem:[#allocation7 + $0x14] sm:$0xf]
    %v522 = vld [vmem:[#allocation7 + $0x18] sm:$0xf]
    %v523 = vld [vmem:[#allocation7 + $0x1c] sm:$0xf]
    %v524 = vld [vmem:[#allocation10] sm:$0xff]
    %v525 = vld [vmem:[#allocation10 + $0x8] sm:$0xff]
    %v526 = vld [vmem:[#allocation10 + $0x10] sm:$0xff]
    %v527 = vld [vmem:[#allocation10 + $0x18] sm:$0xff]
    %v528 = vld [vmem:[#allocation10 + $0x20] sm:$0xff]
    %v529 = vld [vmem:[#allocation10 + $0x28] sm:$0xff]
    %v530 = vld [vmem:[#allocation10 + $0x30] sm:$0xff]
    %v531 = vld [vmem:[#allocation10 + $0x38] sm:$0xff]
    %v532 = vld [vmem:[%s6] sm:$0xf]
    %v534 = vlaneseq
    %v535 = vshrl.u32 %v534, 7
    %v536 = vsub.s32 0, %v535
    %v537 = vrot.slane %v532, %v536
    %v538 = vlaneseq
    %v539 = vshrl.u32 %v538, 7
    %v540 = vsub.s32 1, %v539
    %v541 = vrot.slane %v532, %v540
    %v542 = vlaneseq
    %v543 = vshrl.u32 %v542, 7
    %v544 = vsub.s32 2, %v543
    %v545 = vrot.slane %v532, %v544
    %v546 = vlaneseq
    %v547 = vshrl.u32 %v546, 7
    %v548 = vsub.s32 3, %v547
    %v549 = vrot.slane %v532, %v548
    %v562 = vunpack.c.l.b16 %v516
    %v563 = vunpack.c.l.b16 %v517
    %v564 = vunpack.c.l.b16 %v518
    %v565 = vunpack.c.l.b16 %v519
    %v566 = vunpack.c.l.b16 %v520
    %v567 = vunpack.c.l.b16 %v521
    %v568 = vunpack.c.l.b16 %v522
    %v569 = vunpack.c.l.b16 %v523
    %v570 = vpack.c.b16 %v563, %v562
    %v571 = vpack.c.b16 %v565, %v564
    %v572 = vpack.c.b16 %v567, %v566
    %v573 = vpack.c.b16 %v569, %v568
    %v582 = vunpack.c.l.b16 %v524
    %v583 = vunpack.c.h.b16 %v524
    %v584 = vunpack.c.l.b16 %v525
    %v585 = vunpack.c.h.b16 %v525
    %v586 = vunpack.c.l.b16 %v526
    %v587 = vunpack.c.h.b16 %v526
    %v588 = vunpack.c.l.b16 %v527
    %v589 = vunpack.c.h.b16 %v527
    %v590 = vunpack.c.l.b16 %v528
    %v591 = vunpack.c.h.b16 %v528
    %v592 = vunpack.c.l.b16 %v529
    %v593 = vunpack.c.h.b16 %v529
    %v594 = vunpack.c.l.b16 %v530
    %v595 = vunpack.c.h.b16 %v530
    %v596 = vunpack.c.l.b16 %v531
    %v597 = vunpack.c.h.b16 %v531
    %v598 = vpack.c.b16 %v586, %v582
    %v599 = vpack.c.b16 %v587, %v583
    %v600 = vpack.c.b16 %v588, %v584
    %v601 = vpack.c.b16 %v589, %v585
    %v602 = vpack.c.b16 %v594, %v590
    %v603 = vpack.c.b16 %v595, %v591
    %v604 = vpack.c.b16 %v596, %v592
    %v605 = vpack.c.b16 %v597, %v593
    %vm614 = vcmask 261120
    %v616 = vsel %vm614, %v570, 0
    %v619 = vsel %vm614, %v571, 0
    %v622 = vsel %vm614, %v572, 0
    %v625 = vsel %vm614, %v573, 0
    %627 = vmatprep.subr.bf16.mxu0 0
    %628 = vmatpush1.bf16.msra.mxu0 0
    %629 = vmatprep.subr.bf16.mxu0 0
    %630 = vmatpush1.bf16.msra.mxu0 0
    %631 = vmatprep.subr.bf16.mxu0 0
    %632 = vmatpush1.bf16.msra.mxu0 0
    %633 = vmatprep.subr.bf16.mxu0 0
    %634 = vmatpush1.bf16.msra.mxu0 0
    %635 = vmatprep.subr.bf16.mxu0 0
    %636 = vmatpush1.bf16.msra.mxu0 0
    %637 = vmatprep.subr.bf16.mxu0 0
    %638 = vmatpush1.bf16.msra.mxu0 0
    %639 = vmatprep.subr.bf16.mxu0 %v603
    %640 = vmatpush1.bf16.msra.mxu0 %v602
    %641 = vmatprep.subr.bf16.mxu0 %v599
    %642 = vmatpush1.bf16.msra.mxu0 %v598
    %643 = vmatprep.subr.bf16.mxu0 0
    %644 = vmatpush2.bf16.msra.mxu0 0
    %645 = vmatprep.subr.bf16.mxu0 0
    %646 = vmatpush2.bf16.msra.mxu0 0
    %647 = vmatprep.subr.bf16.mxu0 0
    %648 = vmatpush2.bf16.msra.mxu0 0
    %649 = vmatprep.subr.bf16.mxu0 0
    %650 = vmatpush2.bf16.msra.mxu0 0
    %651 = vmatprep.subr.bf16.mxu0 0
    %652 = vmatpush2.bf16.msra.mxu0 0
    %653 = vmatprep.subr.bf16.mxu0 0
    %654 = vmatpush2.bf16.msra.mxu0 0
    %655 = vmatprep.subr.bf16.mxu0 0
    %656 = vmatpush2.bf16.msra.mxu0 0
    %657 = vmatprep.subr.bf16.mxu0 0
    %658 = vmatpush2.bf16.msra.mxu0 0
    %659 = vmatprep.mubr.bf16.mxu0 0
    %660 = vmatmul.mubr.bf16.gmra.mxu0 %v616
    %v661 = vpop.f32.mrf.mxu0
    %v662 = vadd.f32 %v537, %v661
    %v663 = vpop.f32.mrf.mxu0
    %v664 = vadd.f32 %v541, %v663
    %v665 = vpop.f32.mrf.mxu0
    %v666 = vadd.f32 %v537, %v665
    %v667 = vpop.f32.mrf.mxu0
    %v668 = vadd.f32 %v541, %v667
    %669 = vmatprep.mubr.bf16.mxu0 0
    %670 = vmatmul.mubr.bf16.gmra.mxu0 %v619
    %v671 = vpop.f32.mrf.mxu0
    %v672 = vadd.f32 %v537, %v671
    %v673 = vpop.f32.mrf.mxu0
    %v674 = vadd.f32 %v541, %v673
    %v675 = vpop.f32.mrf.mxu0
    %v676 = vadd.f32 %v537, %v675
    %v677 = vpop.f32.mrf.mxu0
    %v678 = vadd.f32 %v541, %v677
    %679 = vmatprep.mubr.bf16.mxu0 0
    %680 = vmatmul.mubr.bf16.gmra.mxu0 %v622
    %v681 = vpop.f32.mrf.mxu0
    %v682 = vadd.f32 %v537, %v681
    %v683 = vpop.f32.mrf.mxu0
    %v684 = vadd.f32 %v541, %v683
    %v685 = vpop.f32.mrf.mxu0
    %v686 = vadd.f32 %v537, %v685
    %v687 = vpop.f32.mrf.mxu0
    %v688 = vadd.f32 %v541, %v687
    %689 = vmatprep.mubr.bf16.mxu0 0
    %690 = vmatmul.mubr.bf16.gmra.mxu0 %v625
    %v691 = vpop.f32.mrf.mxu0
    %v692 = vadd.f32 %v537, %v691
    %v693 = vpop.f32.mrf.mxu0
    %v694 = vadd.f32 %v541, %v693
    %v695 = vpop.f32.mrf.mxu0
    %v696 = vadd.f32 %v537, %v695
    %v697 = vpop.f32.mrf.mxu0
    %v698 = vadd.f32 %v541, %v697
    %699 = vdwg.mxu0
    %700 = vmatprep.subr.bf16.mxu0 0
    %701 = vmatpush1.bf16.msra.mxu0 0
    %702 = vmatprep.subr.bf16.mxu0 0
    %703 = vmatpush1.bf16.msra.mxu0 0
    %704 = vmatprep.subr.bf16.mxu0 0
    %705 = vmatpush1.bf16.msra.mxu0 0
    %706 = vmatprep.subr.bf16.mxu0 0
    %707 = vmatpush1.bf16.msra.mxu0 0
    %708 = vmatprep.subr.bf16.mxu0 0
    %709 = vmatpush1.bf16.msra.mxu0 0
    %710 = vmatprep.subr.bf16.mxu0 0
    %711 = vmatpush1.bf16.msra.mxu0 0
    %712 = vmatprep.subr.bf16.mxu0 %v605
    %713 = vmatpush1.bf16.msra.mxu0 %v604
    %714 = vmatprep.subr.bf16.mxu0 %v601
    %715 = vmatpush1.bf16.msra.mxu0 %v600
    %716 = vmatprep.subr.bf16.mxu0 0
    %717 = vmatpush2.bf16.msra.mxu0 0
    %718 = vmatprep.subr.bf16.mxu0 0
    %719 = vmatpush2.bf16.msra.mxu0 0
    %720 = vmatprep.subr.bf16.mxu0 0
    %721 = vmatpush2.bf16.msra.mxu0 0
    %722 = vmatprep.subr.bf16.mxu0 0
    %723 = vmatpush2.bf16.msra.mxu0 0
    %724 = vmatprep.subr.bf16.mxu0 0
    %725 = vmatpush2.bf16.msra.mxu0 0
    %726 = vmatprep.subr.bf16.mxu0 0
    %727 = vmatpush2.bf16.msra.mxu0 0
    %728 = vmatprep.subr.bf16.mxu0 0
    %729 = vmatpush2.bf16.msra.mxu0 0
    %730 = vmatprep.subr.bf16.mxu0 0
    %731 = vmatpush2.bf16.msra.mxu0 0
    %732 = vmatprep.mubr.bf16.mxu0 0
    %733 = vmatmul.mubr.bf16.gmra.mxu0 %v616
    %v734 = vpop.f32.mrf.mxu0
    %v735 = vadd.f32 %v545, %v734
    %v736 = vpop.f32.mrf.mxu0
    %v737 = vadd.f32 %v549, %v736
    %v738 = vpop.f32.mrf.mxu0
    %v739 = vadd.f32 %v545, %v738
    %v740 = vpop.f32.mrf.mxu0
    %v741 = vadd.f32 %v549, %v740
    %742 = vmatprep.mubr.bf16.mxu0 0
    %743 = vmatmul.mubr.bf16.gmra.mxu0 %v619
    %v744 = vpop.f32.mrf.mxu0
    %v745 = vadd.f32 %v545, %v744
    %v746 = vpop.f32.mrf.mxu0
    %v747 = vadd.f32 %v549, %v746
    %v748 = vpop.f32.mrf.mxu0
    %v749 = vadd.f32 %v545, %v748
    %v750 = vpop.f32.mrf.mxu0
    %v751 = vadd.f32 %v549, %v750
    %752 = vmatprep.mubr.bf16.mxu0 0
    %753 = vmatmul.mubr.bf16.gmra.mxu0 %v622
    %v754 = vpop.f32.mrf.mxu0
    %v755 = vadd.f32 %v545, %v754
    %v756 = vpop.f32.mrf.mxu0
    %v757 = vadd.f32 %v549, %v756
    %v758 = vpop.f32.mrf.mxu0
    %v759 = vadd.f32 %v545, %v758
    %v760 = vpop.f32.mrf.mxu0
    %v761 = vadd.f32 %v549, %v760
    %762 = vmatprep.mubr.bf16.mxu0 0
    %763 = vmatmul.mubr.bf16.gmra.mxu0 %v625
    %v764 = vpop.f32.mrf.mxu0
    %v765 = vadd.f32 %v545, %v764
    %v766 = vpop.f32.mrf.mxu0
    %v767 = vadd.f32 %v549, %v766
    %v768 = vpop.f32.mrf.mxu0
    %v769 = vadd.f32 %v545, %v768
    %v770 = vpop.f32.mrf.mxu0
    %v771 = vadd.f32 %v549, %v770
    %772 = vdwg.mxu0
    %773 = vst [vmem:[#allocation2] sm:$0xff] %v662
    %774 = vst [vmem:[#allocation2 + $0x8] sm:$0xff] %v664
    %775 = vst [vmem:[#allocation2 + $0x10] sm:$0xff] %v735
    %776 = vst [vmem:[#allocation2 + $0x18] sm:$0xff] %v737
    %777 = vst [vmem:[#allocation2 + $0x20] sm:$0xff] %v666
    %778 = vst [vmem:[#allocation2 + $0x28] sm:$0xff] %v668
    %779 = vst [vmem:[#allocation2 + $0x30] sm:$0xff] %v739
    %780 = vst [vmem:[#allocation2 + $0x38] sm:$0xff] %v741
    %781 = vst [vmem:[#allocation2 + $0x40] sm:$0xff] %v672
    %782 = vst [vmem:[#allocation2 + $0x48] sm:$0xff] %v674
    %783 = vst [vmem:[#allocation2 + $0x50] sm:$0xff] %v745
    %784 = vst [vmem:[#allocation2 + $0x58] sm:$0xff] %v747
    %785 = vst [vmem:[#allocation2 + $0x60] sm:$0xff] %v676
    %786 = vst [vmem:[#allocation2 + $0x68] sm:$0xff] %v678
    %787 = vst [vmem:[#allocation2 + $0x70] sm:$0xff] %v749
    %788 = vst [vmem:[#allocation2 + $0x78] sm:$0xff] %v751
    %789 = vst [vmem:[#allocation2 + $0x80] sm:$0xff] %v682
    %790 = vst [vmem:[#allocation2 + $0x88] sm:$0xff] %v684
    %791 = vst [vmem:[#allocation2 + $0x90] sm:$0xff] %v755
    %792 = vst [vmem:[#allocation2 + $0x98] sm:$0xff] %v757
    %793 = vst [vmem:[#allocation2 + $0xa0] sm:$0xff] %v686
    %794 = vst [vmem:[#allocation2 + $0xa8] sm:$0xff] %v688
    %795 = vst [vmem:[#allocation2 + $0xb0] sm:$0xff] %v759
    %796 = vst [vmem:[#allocation2 + $0xb8] sm:$0xff] %v761
    %797 = vst [vmem:[#allocation2 + $0xc0] sm:$0xff] %v692
    %798 = vst [vmem:[#allocation2 + $0xc8] sm:$0xff] %v694
    %799 = vst [vmem:[#allocation2 + $0xd0] sm:$0xff] %v765
    %800 = vst [vmem:[#allocation2 + $0xd8] sm:$0xff] %v767
    %801 = vst [vmem:[#allocation2 + $0xe0] sm:$0xff] %v696
    %802 = vst [vmem:[#allocation2 + $0xe8] sm:$0xff] %v698
    %803 = vst [vmem:[#allocation2 + $0xf0] sm:$0xff] %v769
    %804 = vst [vmem:[#allocation2 + $0xf8] sm:$0xff] %v771
    %s805 = smul.u32 0, 4
    %s806 = smul.addr %s805, 8
    %s807 = scalar_lea.vmem [#allocation2], %s806
    %v808 = vld [vmem:[%s807] sm:$0xff]
    %v809 = vld [vmem:[%s807 + $0x8] sm:$0xff]
    %v810 = vld [vmem:[%s807 + $0x10] sm:$0xff]
    %v811 = vld [vmem:[%s807 + $0x18] sm:$0xff]
    %v812 = vld [vmem:[#allocation12] sm:$0xff]
    %v813 = vld [vmem:[#allocation12 + $0x8] sm:$0xff]
    %v814 = vld [vmem:[#allocation12 + $0x10] sm:$0xff]
    %v815 = vld [vmem:[#allocation12 + $0x18] sm:$0xff]
    %v816 = vld [vmem:[#allocation12 + $0x20] sm:$0xff]
    %v817 = vld [vmem:[#allocation12 + $0x28] sm:$0xff]
    %v818 = vld [vmem:[#allocation12 + $0x30] sm:$0xff]
    %v819 = vld [vmem:[#allocation12 + $0x38] sm:$0xff]
    %v820 = vld [vmem:[#allocation12 + $0x40] sm:$0xff]
    %v821 = vld [vmem:[#allocation12 + $0x48] sm:$0xff]
    %v822 = vld [vmem:[#allocation12 + $0x50] sm:$0xff]
    %v823 = vld [vmem:[#allocation12 + $0x58] sm:$0xff]
    %v824 = vld [vmem:[#allocation12 + $0x60] sm:$0xff]
    %v825 = vld [vmem:[#allocation12 + $0x68] sm:$0xff]
    %v826 = vld [vmem:[#allocation12 + $0x70] sm:$0xff]
    %v827 = vld [vmem:[#allocation12 + $0x78] sm:$0xff]
    %v828 = vld [vmem:[#allocation12 + $0x80] sm:$0xff]
    %v829 = vld [vmem:[#allocation12 + $0x88] sm:$0xff]
    %v830 = vld [vmem:[#allocation12 + $0x90] sm:$0xff]
    %v831 = vld [vmem:[#allocation12 + $0x98] sm:$0xff]
    %v832 = vld [vmem:[#allocation12 + $0xa0] sm:$0xff]
    %v833 = vld [vmem:[#allocation12 + $0xa8] sm:$0xff]
    %v834 = vld [vmem:[#allocation12 + $0xb0] sm:$0xff]
    %v835 = vld [vmem:[#allocation12 + $0xb8] sm:$0xff]
    %v836 = vld [vmem:[#allocation12 + $0xc0] sm:$0xff]
    %v837 = vld [vmem:[#allocation12 + $0xc8] sm:$0xff]
    %v838 = vld [vmem:[#allocation12 + $0xd0] sm:$0xff]
    %v839 = vld [vmem:[#allocation12 + $0xd8] sm:$0xff]
    %v840 = vld [vmem:[#allocation12 + $0xe0] sm:$0xff]
    %v841 = vld [vmem:[#allocation12 + $0xe8] sm:$0xff]
    %v842 = vld [vmem:[#allocation12 + $0xf0] sm:$0xff]
    %v843 = vld [vmem:[#allocation12 + $0xf8] sm:$0xff]
    %v876 = vunpack.c.l.b16 %v812
    %v877 = vunpack.c.h.b16 %v812
    %v878 = vunpack.c.l.b16 %v813
    %v879 = vunpack.c.h.b16 %v813
    %v880 = vunpack.c.l.b16 %v814
    %v881 = vunpack.c.h.b16 %v814
    %v882 = vunpack.c.l.b16 %v815
    %v883 = vunpack.c.h.b16 %v815
    %v884 = vunpack.c.l.b16 %v816
    %v885 = vunpack.c.h.b16 %v816
    %v886 = vunpack.c.l.b16 %v817
    %v887 = vunpack.c.h.b16 %v817
    %v888 = vunpack.c.l.b16 %v818
    %v889 = vunpack.c.h.b16 %v818
    %v890 = vunpack.c.l.b16 %v819
    %v891 = vunpack.c.h.b16 %v819
    %v892 = vunpack.c.l.b16 %v820
    %v893 = vunpack.c.h.b16 %v820
    %v894 = vunpack.c.l.b16 %v821
    %v895 = vunpack.c.h.b16 %v821
    %v896 = vunpack.c.l.b16 %v822
    %v897 = vunpack.c.h.b16 %v822
    %v898 = vunpack.c.l.b16 %v823
    %v899 = vunpack.c.h.b16 %v823
    %v900 = vunpack.c.l.b16 %v824
    %v901 = vunpack.c.h.b16 %v824
    %v902 = vunpack.c.l.b16 %v825
    %v903 = vunpack.c.h.b16 %v825
    %v904 = vunpack.c.l.b16 %v826
    %v905 = vunpack.c.h.b16 %v826
    %v906 = vunpack.c.l.b16 %v827
    %v907 = vunpack.c.h.b16 %v827
    %v908 = vunpack.c.l.b16 %v828
    %v909 = vunpack.c.h.b16 %v828
    %v910 = vunpack.c.l.b16 %v829
    %v911 = vunpack.c.h.b16 %v829
    %v912 = vunpack.c.l.b16 %v830
    %v913 = vunpack.c.h.b16 %v830
    %v914 = vunpack.c.l.b16 %v831
    %v915 = vunpack.c.h.b16 %v831
    %v916 = vunpack.c.l.b16 %v832
    %v917 = vunpack.c.h.b16 %v832
    %v918 = vunpack.c.l.b16 %v833
    %v919 = vunpack.c.h.b16 %v833
    %v920 = vunpack.c.l.b16 %v834
    %v921 = vunpack.c.h.b16 %v834
    %v922 = vunpack.c.l.b16 %v835
    %v923 = vunpack.c.h.b16 %v835
    %v924 = vunpack.c.l.b16 %v836
    %v925 = vunpack.c.h.b16 %v836
    %v926 = vunpack.c.l.b16 %v837
    %v927 = vunpack.c.h.b16 %v837
    %v928 = vunpack.c.l.b16 %v838
    %v929 = vunpack.c.h.b16 %v838
    %v930 = vunpack.c.l.b16 %v839
    %v931 = vunpack.c.h.b16 %v839
    %v932 = vunpack.c.l.b16 %v840
    %v933 = vunpack.c.h.b16 %v840
    %v934 = vunpack.c.l.b16 %v841
    %v935 = vunpack.c.h.b16 %v841
    %v936 = vunpack.c.l.b16 %v842
    %v937 = vunpack.c.h.b16 %v842
    %v938 = vunpack.c.l.b16 %v843
    %v939 = vunpack.c.h.b16 %v843
    %v940 = vpack.c.b16 %v880, %v876
    %v941 = vpack.c.b16 %v881, %v877
    %v942 = vpack.c.b16 %v882, %v878
    %v943 = vpack.c.b16 %v883, %v879
    %v944 = vpack.c.b16 %v888, %v884
    %v945 = vpack.c.b16 %v889, %v885
    %v946 = vpack.c.b16 %v890, %v886
    %v947 = vpack.c.b16 %v891, %v887
    %v948 = vpack.c.b16 %v896, %v892
    %v949 = vpack.c.b16 %v897, %v893
    %v950 = vpack.c.b16 %v898, %v894
    %v951 = vpack.c.b16 %v899, %v895
    %v952 = vpack.c.b16 %v904, %v900
    %v953 = vpack.c.b16 %v905, %v901
    %v954 = vpack.c.b16 %v906, %v902
    %v955 = vpack.c.b16 %v907, %v903
    %v956 = vpack.c.b16 %v912, %v908
    %v957 = vpack.c.b16 %v913, %v909
    %v958 = vpack.c.b16 %v914, %v910
    %v959 = vpack.c.b16 %v915, %v911
    %v960 = vpack.c.b16 %v920, %v916
    %v961 = vpack.c.b16 %v921, %v917
    %v962 = vpack.c.b16 %v922, %v918
    %v963 = vpack.c.b16 %v923, %v919
    %v964 = vpack.c.b16 %v928, %v924
    %v965 = vpack.c.b16 %v929, %v925
    %v966 = vpack.c.b16 %v930, %v926
    %v967 = vpack.c.b16 %v931, %v927
    %v968 = vpack.c.b16 %v936, %v932
    %v969 = vpack.c.b16 %v937, %v933
    %v970 = vpack.c.b16 %v938, %v934
    %v971 = vpack.c.b16 %v939, %v935
    %1004 = vmatprep.subr.bf16.mxu0 %v969
    %1005 = vmatpush1.bf16.msra.mxu0 %v968
    %1006 = vmatprep.subr.bf16.mxu0 %v965
    %1007 = vmatpush1.bf16.msra.mxu0 %v964
    %1008 = vmatprep.subr.bf16.mxu0 %v961
    %1009 = vmatpush1.bf16.msra.mxu0 %v960
    %1010 = vmatprep.subr.bf16.mxu0 %v957
    %1011 = vmatpush1.bf16.msra.mxu0 %v956
    %1012 = vmatprep.subr.bf16.mxu0 %v953
    %1013 = vmatpush1.bf16.msra.mxu0 %v952
    %1014 = vmatprep.subr.bf16.mxu0 %v949
    %1015 = vmatpush1.bf16.msra.mxu0 %v948
    %1016 = vmatprep.subr.bf16.mxu0 %v945
    %1017 = vmatpush1.bf16.msra.mxu0 %v944
    %1018 = vmatprep.subr.bf16.mxu0 %v941
    %1019 = vmatpush1.bf16.msra.mxu0 %v940
    %1020 = vmatprep.subr.bf16.mxu0 0
    %1021 = vmatpush2.bf16.msra.mxu0 0
    %1022 = vmatprep.subr.bf16.mxu0 0
    %1023 = vmatpush2.bf16.msra.mxu0 0
    %1024 = vmatprep.subr.bf16.mxu0 0
    %1025 = vmatpush2.bf16.msra.mxu0 0
    %1026 = vmatprep.subr.bf16.mxu0 0
    %1027 = vmatpush2.bf16.msra.mxu0 0
    %1028 = vmatprep.subr.bf16.mxu0 0
    %1029 = vmatpush2.bf16.msra.mxu0 0
    %1030 = vmatprep.subr.bf16.mxu0 0
    %1031 = vmatpush2.bf16.msra.mxu0 0
    %1032 = vmatprep.subr.bf16.mxu0 0
    %1033 = vmatpush2.bf16.msra.mxu0 0
    %1034 = vmatprep.subr.bf16.mxu0 0
    %1035 = vmatpush2.bf16.msra.mxu0 0
    %1036 = vmatprep.mubr.bf16.mxu0 0
    %1037 = vmatmul.mubr.bf16.gmra.mxu0 0
    %v1038 = vpop.f32.mrf.mxu0
    %v1039 = vadd.f32 0.0, %v1038
    %v1040 = vpop.f32.mrf.mxu0
    %v1041 = vadd.f32 0.0, %v1040
    %v1042 = vpop.f32.mrf.mxu0
    %v1043 = vpop.f32.mrf.mxu0
    %1044 = vdwg.mxu0
    %1045 = vmatprep.subr.bf16.mxu0 %v971
    %1046 = vmatpush1.bf16.msra.mxu0 %v970
    %1047 = vmatprep.subr.bf16.mxu0 %v967
    %1048 = vmatpush1.bf16.msra.mxu0 %v966
    %1049 = vmatprep.subr.bf16.mxu0 %v963
    %1050 = vmatpush1.bf16.msra.mxu0 %v962
    %1051 = vmatprep.subr.bf16.mxu0 %v959
    %1052 = vmatpush1.bf16.msra.mxu0 %v958
    %1053 = vmatprep.subr.bf16.mxu0 %v955
    %1054 = vmatpush1.bf16.msra.mxu0 %v954
    %1055 = vmatprep.subr.bf16.mxu0 %v951
    %1056 = vmatpush1.bf16.msra.mxu0 %v950
    %1057 = vmatprep.subr.bf16.mxu0 %v947
    %1058 = vmatpush1.bf16.msra.mxu0 %v946
    %1059 = vmatprep.subr.bf16.mxu0 %v943
    %1060 = vmatpush1.bf16.msra.mxu0 %v942
    %1061 = vmatprep.subr.bf16.mxu0 0
    %1062 = vmatpush2.bf16.msra.mxu0 0
    %1063 = vmatprep.subr.bf16.mxu0 0
    %1064 = vmatpush2.bf16.msra.mxu0 0
    %1065 = vmatprep.subr.bf16.mxu0 0
    %1066 = vmatpush2.bf16.msra.mxu0 0
    %1067 = vmatprep.subr.bf16.mxu0 0
    %1068 = vmatpush2.bf16.msra.mxu0 0
    %1069 = vmatprep.subr.bf16.mxu0 0
    %1070 = vmatpush2.bf16.msra.mxu0 0
    %1071 = vmatprep.subr.bf16.mxu0 0
    %1072 = vmatpush2.bf16.msra.mxu0 0
    %1073 = vmatprep.subr.bf16.mxu0 0
    %1074 = vmatpush2.bf16.msra.mxu0 0
    %1075 = vmatprep.subr.bf16.mxu0 0
    %1076 = vmatpush2.bf16.msra.mxu0 0
    %1077 = vmatprep.mubr.bf16.mxu0 0
    %1078 = vmatmul.mubr.bf16.gmra.mxu0 0
    %v1079 = vpop.f32.mrf.mxu0
    %v1080 = vadd.f32 0.0, %v1079
    %v1081 = vpop.f32.mrf.mxu0
    %v1082 = vadd.f32 0.0, %v1081
    %v1083 = vpop.f32.mrf.mxu0
    %v1084 = vpop.f32.mrf.mxu0
    %1085 = vdwg.mxu0
    %v1086 = vadd.f32 %v808, %v1039
    %v1087 = vadd.f32 %v809, %v1041
    %v1088 = vadd.f32 %v810, %v1080
    %v1089 = vadd.f32 %v811, %v1082
    %v1090 = vmul.f32 %v1086, 0.5
    %v1091 = vtanh.pop %v1090
    %v1092 = vmul.f32 %v1091, 0.5
    %v1093 = vadd.f32 %v1092, 0.5
    %v1094 = vmul.f32 %v1087, 0.5
    %v1095 = vtanh.pop %v1094
    %v1096 = vmul.f32 %v1095, 0.5
    %v1097 = vadd.f32 %v1096, 0.5
    %v1098 = vtanh.pop %v1088
    %v1099 = vmul.f32 %v1089, 0.5
    %v1100 = vtanh.pop %v1099
    %v1101 = vmul.f32 %v1100, 0.5
    %v1102 = vadd.f32 %v1101, 0.5
    %v1103 = vmul.f32 %v1097, 0.0
    %v1104 = vmul.f32 %v1093, %v1098
    %v1105 = vadd.f32 %v1103, %v1104
    %v1106 = vtanh.pop %v1105
    %v1107 = vmul.f32 %v1102, %v1106
    %v1108 = vpack.c.bf16 %v1107, %v1107
    %v1109 = vpack.c.bf16 0.0, 0.0
    %v1110 = vld [vmem:[#allocation3] sm:$0xff]
    %v1111 = vld [vmem:[#allocation3 + $0x8] sm:$0xff]
    %v1112 = vld [vmem:[#allocation3 + $0x10] sm:$0xff]
    %v1113 = vld [vmem:[#allocation3 + $0x18] sm:$0xff]
    %v1114 = vld [vmem:[#allocation15] sm:$0xff]
    %v1115 = vld [vmem:[#allocation15 + $0x8] sm:$0xff]
    %v1116 = vld [vmem:[#allocation15 + $0x10] sm:$0xff]
    %v1117 = vld [vmem:[#allocation15 + $0x18] sm:$0xff]
    %v1118 = vld [vmem:[#allocation15 + $0x20] sm:$0xff]
    %v1119 = vld [vmem:[#allocation15 + $0x28] sm:$0xff]
    %v1120 = vld [vmem:[#allocation15 + $0x30] sm:$0xff]
    %v1121 = vld [vmem:[#allocation15 + $0x38] sm:$0xff]
    %v1122 = vld [vmem:[#allocation15 + $0x40] sm:$0xff]
    %v1123 = vld [vmem:[#allocation15 + $0x48] sm:$0xff]
    %v1124 = vld [vmem:[#allocation15 + $0x50] sm:$0xff]
    %v1125 = vld [vmem:[#allocation15 + $0x58] sm:$0xff]
    %v1126 = vld [vmem:[#allocation15 + $0x60] sm:$0xff]
    %v1127 = vld [vmem:[#allocation15 + $0x68] sm:$0xff]
    %v1128 = vld [vmem:[#allocation15 + $0x70] sm:$0xff]
    %v1129 = vld [vmem:[#allocation15 + $0x78] sm:$0xff]
    %v1130 = vld [vmem:[#allocation15 + $0x80] sm:$0xff]
    %v1131 = vld [vmem:[#allocation15 + $0x88] sm:$0xff]
    %v1132 = vld [vmem:[#allocation15 + $0x90] sm:$0xff]
    %v1133 = vld [vmem:[#allocation15 + $0x98] sm:$0xff]
    %v1134 = vld [vmem:[#allocation15 + $0xa0] sm:$0xff]
    %v1135 = vld [vmem:[#allocation15 + $0xa8] sm:$0xff]
    %v1136 = vld [vmem:[#allocation15 + $0xb0] sm:$0xff]
    %v1137 = vld [vmem:[#allocation15 + $0xb8] sm:$0xff]
    %v1138 = vld [vmem:[#allocation15 + $0xc0] sm:$0xff]
    %v1139 = vld [vmem:[#allocation15 + $0xc8] sm:$0xff]
    %v1140 = vld [vmem:[#allocation15 + $0xd0] sm:$0xff]
    %v1141 = vld [vmem:[#allocation15 + $0xd8] sm:$0xff]
    %v1142 = vld [vmem:[#allocation15 + $0xe0] sm:$0xff]
    %v1143 = vld [vmem:[#allocation15 + $0xe8] sm:$0xff]
    %v1144 = vld [vmem:[#allocation15 + $0xf0] sm:$0xff]
    %v1145 = vld [vmem:[#allocation15 + $0xf8] sm:$0xff]
    %v1146 = vld [vmem:[#allocation15 + $0x100] sm:$0xff]
    %v1147 = vld [vmem:[#allocation15 + $0x108] sm:$0xff]
    %v1148 = vld [vmem:[#allocation15 + $0x110] sm:$0xff]
    %v1149 = vld [vmem:[#allocation15 + $0x118] sm:$0xff]
    %v1150 = vld [vmem:[#allocation15 + $0x120] sm:$0xff]
    %v1151 = vld [vmem:[#allocation15 + $0x128] sm:$0xff]
    %v1152 = vld [vmem:[#allocation15 + $0x130] sm:$0xff]
    %v1153 = vld [vmem:[#allocation15 + $0x138] sm:$0xff]
    %v1154 = vld [vmem:[#allocation15 + $0x140] sm:$0xff]
    %v1155 = vld [vmem:[#allocation15 + $0x148] sm:$0xff]
    %v1156 = vld [vmem:[#allocation15 + $0x150] sm:$0xff]
    %v1157 = vld [vmem:[#allocation15 + $0x158] sm:$0xff]
    %v1158 = vld [vmem:[#allocation15 + $0x160] sm:$0xff]
    %v1159 = vld [vmem:[#allocation15 + $0x168] sm:$0xff]
    %v1160 = vld [vmem:[#allocation15 + $0x170] sm:$0xff]
    %v1161 = vld [vmem:[#allocation15 + $0x178] sm:$0xff]
    %v1162 = vld [vmem:[#allocation15 + $0x180] sm:$0xff]
    %v1163 = vld [vmem:[#allocation15 + $0x188] sm:$0xff]
    %v1164 = vld [vmem:[#allocation15 + $0x190] sm:$0xff]
    %v1165 = vld [vmem:[#allocation15 + $0x198] sm:$0xff]
    %v1166 = vld [vmem:[#allocation15 + $0x1a0] sm:$0xff]
    %v1167 = vld [vmem:[#allocation15 + $0x1a8] sm:$0xff]
    %v1168 = vld [vmem:[#allocation15 + $0x1b0] sm:$0xff]
    %v1169 = vld [vmem:[#allocation15 + $0x1b8] sm:$0xff]
    %v1170 = vld [vmem:[#allocation15 + $0x1c0] sm:$0xff]
    %v1171 = vld [vmem:[#allocation15 + $0x1c8] sm:$0xff]
    %v1172 = vld [vmem:[#allocation15 + $0x1d0] sm:$0xff]
    %v1173 = vld [vmem:[#allocation15 + $0x1d8] sm:$0xff]
    %v1174 = vld [vmem:[#allocation15 + $0x1e0] sm:$0xff]
    %v1175 = vld [vmem:[#allocation15 + $0x1e8] sm:$0xff]
    %v1176 = vld [vmem:[#allocation15 + $0x1f0] sm:$0xff]
    %v1177 = vld [vmem:[#allocation15 + $0x1f8] sm:$0xff]
    %v1242 = vunpack.c.l.b16 %v1114
    %v1243 = vunpack.c.h.b16 %v1114
    %v1244 = vunpack.c.l.b16 %v1115
    %v1245 = vunpack.c.h.b16 %v1115
    %v1246 = vunpack.c.l.b16 %v1116
    %v1247 = vunpack.c.h.b16 %v1116
    %v1248 = vunpack.c.l.b16 %v1117
    %v1249 = vunpack.c.h.b16 %v1117
    %v1250 = vunpack.c.l.b16 %v1118
    %v1251 = vunpack.c.h.b16 %v1118
    %v1252 = vunpack.c.l.b16 %v1119
    %v1253 = vunpack.c.h.b16 %v1119
    %v1254 = vunpack.c.l.b16 %v1120
    %v1255 = vunpack.c.h.b16 %v1120
    %v1256 = vunpack.c.l.b16 %v1121
    %v1257 = vunpack.c.h.b16 %v1121
    %v1258 = vunpack.c.l.b16 %v1122
    %v1259 = vunpack.c.h.b16 %v1122
    %v1260 = vunpack.c.l.b16 %v1123
    %v1261 = vunpack.c.h.b16 %v1123
    %v1262 = vunpack.c.l.b16 %v1124
    %v1263 = vunpack.c.h.b16 %v1124
    %v1264 = vunpack.c.l.b16 %v1125
    %v1265 = vunpack.c.h.b16 %v1125
    %v1266 = vunpack.c.l.b16 %v1126
    %v1267 = vunpack.c.h.b16 %v1126
    %v1268 = vunpack.c.l.b16 %v1127
    %v1269 = vunpack.c.h.b16 %v1127
    %v1270 = vunpack.c.l.b16 %v1128
    %v1271 = vunpack.c.h.b16 %v1128
    %v1272 = vunpack.c.l.b16 %v1129
    %v1273 = vunpack.c.h.b16 %v1129
    %v1274 = vunpack.c.l.b16 %v1130
    %v1275 = vunpack.c.h.b16 %v1130
    %v1276 = vunpack.c.l.b16 %v1131
    %v1277 = vunpack.c.h.b16 %v1131
    %v1278 = vunpack.c.l.b16 %v1132
    %v1279 = vunpack.c.h.b16 %v1132
    %v1280 = vunpack.c.l.b16 %v1133
    %v1281 = vunpack.c.h.b16 %v1133
    %v1282 = vunpack.c.l.b16 %v1134
    %v1283 = vunpack.c.h.b16 %v1134
    %v1284 = vunpack.c.l.b16 %v1135
    %v1285 = vunpack.c.h.b16 %v1135
    %v1286 = vunpack.c.l.b16 %v1136
    %v1287 = vunpack.c.h.b16 %v1136
    %v1288 = vunpack.c.l.b16 %v1137
    %v1289 = vunpack.c.h.b16 %v1137
    %v1290 = vunpack.c.l.b16 %v1138
    %v1291 = vunpack.c.h.b16 %v1138
    %v1292 = vunpack.c.l.b16 %v1139
    %v1293 = vunpack.c.h.b16 %v1139
    %v1294 = vunpack.c.l.b16 %v1140
    %v1295 = vunpack.c.h.b16 %v1140
    %v1296 = vunpack.c.l.b16 %v1141
    %v1297 = vunpack.c.h.b16 %v1141
    %v1298 = vunpack.c.l.b16 %v1142
    %v1299 = vunpack.c.h.b16 %v1142
    %v1300 = vunpack.c.l.b16 %v1143
    %v1301 = vunpack.c.h.b16 %v1143
    %v1302 = vunpack.c.l.b16 %v1144
    %v1303 = vunpack.c.h.b16 %v1144
    %v1304 = vunpack.c.l.b16 %v1145
    %v1305 = vunpack.c.h.b16 %v1145
    %v1306 = vunpack.c.l.b16 %v1146
    %v1307 = vunpack.c.h.b16 %v1146
    %v1308 = vunpack.c.l.b16 %v1147
    %v1309 = vunpack.c.h.b16 %v1147
    %v1310 = vunpack.c.l.b16 %v1148
    %v1311 = vunpack.c.h.b16 %v1148
    %v1312 = vunpack.c.l.b16 %v1149
    %v1313 = vunpack.c.h.b16 %v1149
    %v1314 = vunpack.c.l.b16 %v1150
    %v1315 = vunpack.c.h.b16 %v1150
    %v1316 = vunpack.c.l.b16 %v1151
    %v1317 = vunpack.c.h.b16 %v1151
    %v1318 = vunpack.c.l.b16 %v1152
    %v1319 = vunpack.c.h.b16 %v1152
    %v1320 = vunpack.c.l.b16 %v1153
    %v1321 = vunpack.c.h.b16 %v1153
    %v1322 = vunpack.c.l.b16 %v1154
    %v1323 = vunpack.c.h.b16 %v1154
    %v1324 = vunpack.c.l.b16 %v1155
    %v1325 = vunpack.c.h.b16 %v1155
    %v1326 = vunpack.c.l.b16 %v1156
    %v1327 = vunpack.c.h.b16 %v1156
    %v1328 = vunpack.c.l.b16 %v1157
    %v1329 = vunpack.c.h.b16 %v1157
    %v1330 = vunpack.c.l.b16 %v1158
    %v1331 = vunpack.c.h.b16 %v1158
    %v1332 = vunpack.c.l.b16 %v1159
    %v1333 = vunpack.c.h.b16 %v1159
    %v1334 = vunpack.c.l.b16 %v1160
    %v1335 = vunpack.c.h.b16 %v1160
    %v1336 = vunpack.c.l.b16 %v1161
    %v1337 = vunpack.c.h.b16 %v1161
    %v1338 = vunpack.c.l.b16 %v1162
    %v1339 = vunpack.c.h.b16 %v1162
    %v1340 = vunpack.c.l.b16 %v1163
    %v1341 = vunpack.c.h.b16 %v1163
    %v1342 = vunpack.c.l.b16 %v1164
    %v1343 = vunpack.c.h.b16 %v1164
    %v1344 = vunpack.c.l.b16 %v1165
    %v1345 = vunpack.c.h.b16 %v1165
    %v1346 = vunpack.c.l.b16 %v1166
    %v1347 = vunpack.c.h.b16 %v1166
    %v1348 = vunpack.c.l.b16 %v1167
    %v1349 = vunpack.c.h.b16 %v1167
    %v1350 = vunpack.c.l.b16 %v1168
    %v1351 = vunpack.c.h.b16 %v1168
    %v1352 = vunpack.c.l.b16 %v1169
    %v1353 = vunpack.c.h.b16 %v1169
    %v1354 = vunpack.c.l.b16 %v1170
    %v1355 = vunpack.c.h.b16 %v1170
    %v1356 = vunpack.c.l.b16 %v1171
    %v1357 = vunpack.c.h.b16 %v1171
    %v1358 = vunpack.c.l.b16 %v1172
    %v1359 = vunpack.c.h.b16 %v1172
    %v1360 = vunpack.c.l.b16 %v1173
    %v1361 = vunpack.c.h.b16 %v1173
    %v1362 = vunpack.c.l.b16 %v1174
    %v1363 = vunpack.c.h.b16 %v1174
    %v1364 = vunpack.c.l.b16 %v1175
    %v1365 = vunpack.c.h.b16 %v1175
    %v1366 = vunpack.c.l.b16 %v1176
    %v1367 = vunpack.c.h.b16 %v1176
    %v1368 = vunpack.c.l.b16 %v1177
    %v1369 = vunpack.c.h.b16 %v1177
    %v1370 = vpack.c.b16 %v1246, %v1242
    %v1371 = vpack.c.b16 %v1247, %v1243
    %v1372 = vpack.c.b16 %v1248, %v1244
    %v1373 = vpack.c.b16 %v1249, %v1245
    %v1374 = vpack.c.b16 %v1254, %v1250
    %v1375 = vpack.c.b16 %v1255, %v1251
    %v1376 = vpack.c.b16 %v1256, %v1252
    %v1377 = vpack.c.b16 %v1257, %v1253
    %v1378 = vpack.c.b16 %v1262, %v1258
    %v1379 = vpack.c.b16 %v1263, %v1259
    %v1380 = vpack.c.b16 %v1264, %v1260
    %v1381 = vpack.c.b16 %v1265, %v1261
    %v1382 = vpack.c.b16 %v1270, %v1266
    %v1383 = vpack.c.b16 %v1271, %v1267
    %v1384 = vpack.c.b16 %v1272, %v1268
    %v1385 = vpack.c.b16 %v1273, %v1269
    %v1386 = vpack.c.b16 %v1278, %v1274
    %v1387 = vpack.c.b16 %v1279, %v1275
    %v1388 = vpack.c.b16 %v1280, %v1276
    %v1389 = vpack.c.b16 %v1281, %v1277
    %v1390 = vpack.c.b16 %v1286, %v1282
    %v1391 = vpack.c.b16 %v1287, %v1283
    %v1392 = vpack.c.b16 %v1288, %v1284
    %v1393 = vpack.c.b16 %v1289, %v1285
    %v1394 = vpack.c.b16 %v1294, %v1290
    %v1395 = vpack.c.b16 %v1295, %v1291
    %v1396 = vpack.c.b16 %v1296, %v1292
    %v1397 = vpack.c.b16 %v1297, %v1293
    %v1398 = vpack.c.b16 %v1302, %v1298
    %v1399 = vpack.c.b16 %v1303, %v1299
    %v1400 = vpack.c.b16 %v1304, %v1300
    %v1401 = vpack.c.b16 %v1305, %v1301
    %v1402 = vpack.c.b16 %v1310, %v1306
    %v1403 = vpack.c.b16 %v1311, %v1307
    %v1404 = vpack.c.b16 %v1312, %v1308
    %v1405 = vpack.c.b16 %v1313, %v1309
    %v1406 = vpack.c.b16 %v1318, %v1314
    %v1407 = vpack.c.b16 %v1319, %v1315
    %v1408 = vpack.c.b16 %v1320, %v1316
    %v1409 = vpack.c.b16 %v1321, %v1317
    %v1410 = vpack.c.b16 %v1326, %v1322
    %v1411 = vpack.c.b16 %v1327, %v1323
    %v1412 = vpack.c.b16 %v1328, %v1324
    %v1413 = vpack.c.b16 %v1329, %v1325
    %v1414 = vpack.c.b16 %v1334, %v1330
    %v1415 = vpack.c.b16 %v1335, %v1331
    %v1416 = vpack.c.b16 %v1336, %v1332
    %v1417 = vpack.c.b16 %v1337, %v1333
    %v1418 = vpack.c.b16 %v1342, %v1338
    %v1419 = vpack.c.b16 %v1343, %v1339
    %v1420 = vpack.c.b16 %v1344, %v1340
    %v1421 = vpack.c.b16 %v1345, %v1341
    %v1422 = vpack.c.b16 %v1350, %v1346
    %v1423 = vpack.c.b16 %v1351, %v1347
    %v1424 = vpack.c.b16 %v1352, %v1348
    %v1425 = vpack.c.b16 %v1353, %v1349
    %v1426 = vpack.c.b16 %v1358, %v1354
    %v1427 = vpack.c.b16 %v1359, %v1355
    %v1428 = vpack.c.b16 %v1360, %v1356
    %v1429 = vpack.c.b16 %v1361, %v1357
    %v1430 = vpack.c.b16 %v1366, %v1362
    %v1431 = vpack.c.b16 %v1367, %v1363
    %v1432 = vpack.c.b16 %v1368, %v1364
    %v1433 = vpack.c.b16 %v1369, %v1365
    %1498 = vmatprep.subr.bf16.mxu0 %v1399
    %1499 = vmatpush1.bf16.msra.mxu0 %v1398
    %1500 = vmatprep.subr.bf16.mxu0 %v1395
    %1501 = vmatpush1.bf16.msra.mxu0 %v1394
    %1502 = vmatprep.subr.bf16.mxu0 %v1391
    %1503 = vmatpush1.bf16.msra.mxu0 %v1390
    %1504 = vmatprep.subr.bf16.mxu0 %v1387
    %1505 = vmatpush1.bf16.msra.mxu0 %v1386
    %1506 = vmatprep.subr.bf16.mxu0 %v1383
    %1507 = vmatpush1.bf16.msra.mxu0 %v1382
    %1508 = vmatprep.subr.bf16.mxu0 %v1379
    %1509 = vmatpush1.bf16.msra.mxu0 %v1378
    %1510 = vmatprep.subr.bf16.mxu0 %v1375
    %1511 = vmatpush1.bf16.msra.mxu0 %v1374
    %1512 = vmatprep.subr.bf16.mxu0 %v1371
    %1513 = vmatpush1.bf16.msra.mxu0 %v1370
    %1514 = vmatprep.subr.bf16.mxu0 %v1431
    %1515 = vmatpush2.bf16.msra.mxu0 %v1430
    %1516 = vmatprep.subr.bf16.mxu0 %v1427
    %1517 = vmatpush2.bf16.msra.mxu0 %v1426
    %1518 = vmatprep.subr.bf16.mxu0 %v1423
    %1519 = vmatpush2.bf16.msra.mxu0 %v1422
    %1520 = vmatprep.subr.bf16.mxu0 %v1419
    %1521 = vmatpush2.bf16.msra.mxu0 %v1418
    %1522 = vmatprep.subr.bf16.mxu0 %v1415
    %1523 = vmatpush2.bf16.msra.mxu0 %v1414
    %1524 = vmatprep.subr.bf16.mxu0 %v1411
    %1525 = vmatpush2.bf16.msra.mxu0 %v1410
    %1526 = vmatprep.subr.bf16.mxu0 %v1407
    %1527 = vmatpush2.bf16.msra.mxu0 %v1406
    %1528 = vmatprep.subr.bf16.mxu0 %v1403
    %1529 = vmatpush2.bf16.msra.mxu0 %v1402
    %1530 = vmatprep.mubr.bf16.mxu0 %v1109
    %1531 = vmatmul.mubr.bf16.gmra.mxu0 %v1108
    %v1532 = vpop.f32.mrf.mxu0
    %v1533 = vadd.f32 0.0, %v1532
    %v1534 = vpop.f32.mrf.mxu0
    %v1535 = vadd.f32 0.0, %v1534
    %v1536 = vpop.f32.mrf.mxu0
    %v1537 = vpop.f32.mrf.mxu0
    %1538 = vdwg.mxu0
    %1539 = vmatprep.subr.bf16.mxu0 %v1401
    %1540 = vmatpush1.bf16.msra.mxu0 %v1400
    %1541 = vmatprep.subr.bf16.mxu0 %v1397
    %1542 = vmatpush1.bf16.msra.mxu0 %v1396
    %1543 = vmatprep.subr.bf16.mxu0 %v1393
    %1544 = vmatpush1.bf16.msra.mxu0 %v1392
    %1545 = vmatprep.subr.bf16.mxu0 %v1389
    %1546 = vmatpush1.bf16.msra.mxu0 %v1388
    %1547 = vmatprep.subr.bf16.mxu0 %v1385
    %1548 = vmatpush1.bf16.msra.mxu0 %v1384
    %1549 = vmatprep.subr.bf16.mxu0 %v1381
    %1550 = vmatpush1.bf16.msra.mxu0 %v1380
    %1551 = vmatprep.subr.bf16.mxu0 %v1377
    %1552 = vmatpush1.bf16.msra.mxu0 %v1376
    %1553 = vmatprep.subr.bf16.mxu0 %v1373
    %1554 = vmatpush1.bf16.msra.mxu0 %v1372
    %1555 = vmatprep.subr.bf16.mxu0 %v1433
    %1556 = vmatpush2.bf16.msra.mxu0 %v1432
    %1557 = vmatprep.subr.bf16.mxu0 %v1429
    %1558 = vmatpush2.bf16.msra.mxu0 %v1428
    %1559 = vmatprep.subr.bf16.mxu0 %v1425
    %1560 = vmatpush2.bf16.msra.mxu0 %v1424
    %1561 = vmatprep.subr.bf16.mxu0 %v1421
    %1562 = vmatpush2.bf16.msra.mxu0 %v1420
    %1563 = vmatprep.subr.bf16.mxu0 %v1417
    %1564 = vmatpush2.bf16.msra.mxu0 %v1416
    %1565 = vmatprep.subr.bf16.mxu0 %v1413
    %1566 = vmatpush2.bf16.msra.mxu0 %v1412
    %1567 = vmatprep.subr.bf16.mxu0 %v1409
    %1568 = vmatpush2.bf16.msra.mxu0 %v1408
    %1569 = vmatprep.subr.bf16.mxu0 %v1405
    %1570 = vmatpush2.bf16.msra.mxu0 %v1404
    %1571 = vmatprep.mubr.bf16.mxu0 %v1109
    %1572 = vmatmul.mubr.bf16.gmra.mxu0 %v1108
    %v1573 = vpop.f32.mrf.mxu0
    %v1574 = vadd.f32 0.0, %v1573
    %v1575 = vpop.f32.mrf.mxu0
    %v1576 = vadd.f32 0.0, %v1575
    %v1577 = vpop.f32.mrf.mxu0
    %v1578 = vpop.f32.mrf.mxu0
    %1579 = vdwg.mxu0
    %v1580 = vadd.f32 %v1110, %v1533
    %v1581 = vadd.f32 %v1111, %v1535
    %v1582 = vadd.f32 %v1112, %v1574
    %v1583 = vadd.f32 %v1113, %v1576
    %v1584 = vmul.f32 %v1580, 0.5
    %v1585 = vtanh.pop %v1584
    %v1586 = vmul.f32 %v1585, 0.5
    %v1587 = vadd.f32 %v1586, 0.5
    %v1588 = vmul.f32 %v1581, 0.5
    %v1589 = vtanh.pop %v1588
    %v1590 = vmul.f32 %v1589, 0.5
    %v1591 = vadd.f32 %v1590, 0.5
    %v1592 = vtanh.pop %v1582
    %v1593 = vmul.f32 %v1583, 0.5
    %v1594 = vtanh.pop %v1593
    %v1595 = vmul.f32 %v1594, 0.5
    %v1596 = vadd.f32 %v1595, 0.5
    %v1597 = vmul.f32 %v1591, 0.0
    %v1598 = vmul.f32 %v1587, %v1592
    %v1599 = vadd.f32 %v1597, %v1598
    %v1600 = vtanh.pop %v1599
    %v1601 = vmul.f32 %v1596, %v1600
    %v1602 = vpack.c.bf16 %v1601, %v1601
    %1603 = vst [vmem:[#allocation16] sm:$0xf] %v1602
    %s1604 = smul.u32 1, 4
    %s1605 = smul.addr %s1604, 8
    %s1606 = scalar_lea.vmem [#allocation2], %s1605
    %v1607 = vld [vmem:[%s1606] sm:$0xff]
    %v1608 = vld [vmem:[%s1606 + $0x8] sm:$0xff]
    %v1609 = vld [vmem:[%s1606 + $0x10] sm:$0xff]
    %v1610 = vld [vmem:[%s1606 + $0x18] sm:$0xff]
    %v1611 = vld [vmem:[#allocation12] sm:$0xff]
    %v1612 = vld [vmem:[#allocation12 + $0x8] sm:$0xff]
    %v1613 = vld [vmem:[#allocation12 + $0x10] sm:$0xff]
    %v1614 = vld [vmem:[#allocation12 + $0x18] sm:$0xff]
    %v1615 = vld [vmem:[#allocation12 + $0x20] sm:$0xff]
    %v1616 = vld [vmem:[#allocation12 + $0x28] sm:$0xff]
    %v1617 = vld [vmem:[#allocation12 + $0x30] sm:$0xff]
    %v1618 = vld [vmem:[#allocation12 + $0x38] sm:$0xff]
    %v1619 = vld [vmem:[#allocation12 + $0x40] sm:$0xff]
    %v1620 = vld [vmem:[#allocation12 + $0x48] sm:$0xff]
    %v1621 = vld [vmem:[#allocation12 + $0x50] sm:$0xff]
    %v1622 = vld [vmem:[#allocation12 + $0x58] sm:$0xff]
    %v1623 = vld [vmem:[#allocation12 + $0x60] sm:$0xff]
    %v1624 = vld [vmem:[#allocation12 + $0x68] sm:$0xff]
    %v1625 = vld [vmem:[#allocation12 + $0x70] sm:$0xff]
    %v1626 = vld [vmem:[#allocation12 + $0x78] sm:$0xff]
    %v1627 = vld [vmem:[#allocation12 + $0x80] sm:$0xff]
    %v1628 = vld [vmem:[#allocation12 + $0x88] sm:$0xff]
    %v1629 = vld [vmem:[#allocation12 + $0x90] sm:$0xff]
    %v1630 = vld [vmem:[#allocation12 + $0x98] sm:$0xff]
    %v1631 = vld [vmem:[#allocation12 + $0xa0] sm:$0xff]
    %v1632 = vld [vmem:[#allocation12 + $0xa8] sm:$0xff]
    %v1633 = vld [vmem:[#allocation12 + $0xb0] sm:$0xff]
    %v1634 = vld [vmem:[#allocation12 + $0xb8] sm:$0xff]
    %v1635 = vld [vmem:[#allocation12 + $0xc0] sm:$0xff]
    %v1636 = vld [vmem:[#allocation12 + $0xc8] sm:$0xff]
    %v1637 = vld [vmem:[#allocation12 + $0xd0] sm:$0xff]
    %v1638 = vld [vmem:[#allocation12 + $0xd8] sm:$0xff]
    %v1639 = vld [vmem:[#allocation12 + $0xe0] sm:$0xff]
    %v1640 = vld [vmem:[#allocation12 + $0xe8] sm:$0xff]
    %v1641 = vld [vmem:[#allocation12 + $0xf0] sm:$0xff]
    %v1642 = vld [vmem:[#allocation12 + $0xf8] sm:$0xff]
    %v1675 = vunpack.c.l.b16 %v1611
    %v1676 = vunpack.c.h.b16 %v1611
    %v1677 = vunpack.c.l.b16 %v1612
    %v1678 = vunpack.c.h.b16 %v1612
    %v1679 = vunpack.c.l.b16 %v1613
    %v1680 = vunpack.c.h.b16 %v1613
    %v1681 = vunpack.c.l.b16 %v1614
    %v1682 = vunpack.c.h.b16 %v1614
    %v1683 = vunpack.c.l.b16 %v1615
    %v1684 = vunpack.c.h.b16 %v1615
    %v1685 = vunpack.c.l.b16 %v1616
    %v1686 = vunpack.c.h.b16 %v1616
    %v1687 = vunpack.c.l.b16 %v1617
    %v1688 = vunpack.c.h.b16 %v1617
    %v1689 = vunpack.c.l.b16 %v1618
    %v1690 = vunpack.c.h.b16 %v1618
    %v1691 = vunpack.c.l.b16 %v1619
    %v1692 = vunpack.c.h.b16 %v1619
    %v1693 = vunpack.c.l.b16 %v1620
    %v1694 = vunpack.c.h.b16 %v1620
    %v1695 = vunpack.c.l.b16 %v1621
    %v1696 = vunpack.c.h.b16 %v1621
    %v1697 = vunpack.c.l.b16 %v1622
    %v1698 = vunpack.c.h.b16 %v1622
    %v1699 = vunpack.c.l.b16 %v1623
    %v1700 = vunpack.c.h.b16 %v1623
    %v1701 = vunpack.c.l.b16 %v1624
    %v1702 = vunpack.c.h.b16 %v1624
    %v1703 = vunpack.c.l.b16 %v1625
    %v1704 = vunpack.c.h.b16 %v1625
    %v1705 = vunpack.c.l.b16 %v1626
    %v1706 = vunpack.c.h.b16 %v1626
    %v1707 = vunpack.c.l.b16 %v1627
    %v1708 = vunpack.c.h.b16 %v1627
    %v1709 = vunpack.c.l.b16 %v1628
    %v1710 = vunpack.c.h.b16 %v1628
    %v1711 = vunpack.c.l.b16 %v1629
    %v1712 = vunpack.c.h.b16 %v1629
    %v1713 = vunpack.c.l.b16 %v1630
    %v1714 = vunpack.c.h.b16 %v1630
    %v1715 = vunpack.c.l.b16 %v1631
    %v1716 = vunpack.c.h.b16 %v1631
    %v1717 = vunpack.c.l.b16 %v1632
    %v1718 = vunpack.c.h.b16 %v1632
    %v1719 = vunpack.c.l.b16 %v1633
    %v1720 = vunpack.c.h.b16 %v1633
    %v1721 = vunpack.c.l.b16 %v1634
    %v1722 = vunpack.c.h.b16 %v1634
    %v1723 = vunpack.c.l.b16 %v1635
    %v1724 = vunpack.c.h.b16 %v1635
    %v1725 = vunpack.c.l.b16 %v1636
    %v1726 = vunpack.c.h.b16 %v1636
    %v1727 = vunpack.c.l.b16 %v1637
    %v1728 = vunpack.c.h.b16 %v1637
    %v1729 = vunpack.c.l.b16 %v1638
    %v1730 = vunpack.c.h.b16 %v1638
    %v1731 = vunpack.c.l.b16 %v1639
    %v1732 = vunpack.c.h.b16 %v1639
    %v1733 = vunpack.c.l.b16 %v1640
    %v1734 = vunpack.c.h.b16 %v1640
    %v1735 = vunpack.c.l.b16 %v1641
    %v1736 = vunpack.c.h.b16 %v1641
    %v1737 = vunpack.c.l.b16 %v1642
    %v1738 = vunpack.c.h.b16 %v1642
    %v1739 = vpack.c.b16 %v1679, %v1675
    %v1740 = vpack.c.b16 %v1680, %v1676
    %v1741 = vpack.c.b16 %v1681, %v1677
    %v1742 = vpack.c.b16 %v1682, %v1678
    %v1743 = vpack.c.b16 %v1687, %v1683
    %v1744 = vpack.c.b16 %v1688, %v1684
    %v1745 = vpack.c.b16 %v1689, %v1685
    %v1746 = vpack.c.b16 %v1690, %v1686
    %v1747 = vpack.c.b16 %v1695, %v1691
    %v1748 = vpack.c.b16 %v1696, %v1692
    %v1749 = vpack.c.b16 %v1697, %v1693
    %v1750 = vpack.c.b16 %v1698, %v1694
    %v1751 = vpack.c.b16 %v1703, %v1699
    %v1752 = vpack.c.b16 %v1704, %v1700
    %v1753 = vpack.c.b16 %v1705, %v1701
    %v1754 = vpack.c.b16 %v1706, %v1702
    %v1755 = vpack.c.b16 %v1711, %v1707
    %v1756 = vpack.c.b16 %v1712, %v1708
    %v1757 = vpack.c.b16 %v1713, %v1709
    %v1758 = vpack.c.b16 %v1714, %v1710
    %v1759 = vpack.c.b16 %v1719, %v1715
    %v1760 = vpack.c.b16 %v1720, %v1716
    %v1761 = vpack.c.b16 %v1721, %v1717
    %v1762 = vpack.c.b16 %v1722, %v1718
    %v1763 = vpack.c.b16 %v1727, %v1723
    %v1764 = vpack.c.b16 %v1728, %v1724
    %v1765 = vpack.c.b16 %v1729, %v1725
    %v1766 = vpack.c.b16 %v1730, %v1726
    %v1767 = vpack.c.b16 %v1735, %v1731
    %v1768 = vpack.c.b16 %v1736, %v1732
    %v1769 = vpack.c.b16 %v1737, %v1733
    %v1770 = vpack.c.b16 %v1738, %v1734
    %1803 = vmatprep.subr.bf16.mxu0 %v1768
    %1804 = vmatpush1.bf16.msra.mxu0 %v1767
    %1805 = vmatprep.subr.bf16.mxu0 %v1764
    %1806 = vmatpush1.bf16.msra.mxu0 %v1763
    %1807 = vmatprep.subr.bf16.mxu0 %v1760
    %1808 = vmatpush1.bf16.msra.mxu0 %v1759
    %1809 = vmatprep.subr.bf16.mxu0 %v1756
    %1810 = vmatpush1.bf16.msra.mxu0 %v1755
    %1811 = vmatprep.subr.bf16.mxu0 %v1752
    %1812 = vmatpush1.bf16.msra.mxu0 %v1751
    %1813 = vmatprep.subr.bf16.mxu0 %v1748
    %1814 = vmatpush1.bf16.msra.mxu0 %v1747
    %1815 = vmatprep.subr.bf16.mxu0 %v1744
    %1816 = vmatpush1.bf16.msra.mxu0 %v1743
    %1817 = vmatprep.subr.bf16.mxu0 %v1740
    %1818 = vmatpush1.bf16.msra.mxu0 %v1739
    %1819 = vmatprep.subr.bf16.mxu0 0
    %1820 = vmatpush2.bf16.msra.mxu0 0
    %1821 = vmatprep.subr.bf16.mxu0 0
    %1822 = vmatpush2.bf16.msra.mxu0 0
    %1823 = vmatprep.subr.bf16.mxu0 0
    %1824 = vmatpush2.bf16.msra.mxu0 0
    %1825 = vmatprep.subr.bf16.mxu0 0
    %1826 = vmatpush2.bf16.msra.mxu0 0
    %1827 = vmatprep.subr.bf16.mxu0 0
    %1828 = vmatpush2.bf16.msra.mxu0 0
    %1829 = vmatprep.subr.bf16.mxu0 0
    %1830 = vmatpush2.bf16.msra.mxu0 0
    %1831 = vmatprep.subr.bf16.mxu0 0
    %1832 = vmatpush2.bf16.msra.mxu0 0
    %1833 = vmatprep.subr.bf16.mxu0 0
    %1834 = vmatpush2.bf16.msra.mxu0 0
    %1835 = vmatprep.mubr.bf16.mxu0 0
    %1836 = vmatmul.mubr.bf16.gmra.mxu0 %v1108
    %v1837 = vpop.f32.mrf.mxu0
    %v1838 = vadd.f32 0.0, %v1837
    %v1839 = vpop.f32.mrf.mxu0
    %v1840 = vadd.f32 0.0, %v1839
    %v1841 = vpop.f32.mrf.mxu0
    %v1842 = vpop.f32.mrf.mxu0
    %1843 = vdwg.mxu0
    %1844 = vmatprep.subr.bf16.mxu0 %v1770
    %1845 = vmatpush1.bf16.msra.mxu0 %v1769
    %1846 = vmatprep.subr.bf16.mxu0 %v1766
    %1847 = vmatpush1.bf16.msra.mxu0 %v1765
    %1848 = vmatprep.subr.bf16.mxu0 %v1762
    %1849 = vmatpush1.bf16.msra.mxu0 %v1761
    %1850 = vmatprep.subr.bf16.mxu0 %v1758
    %1851 = vmatpush1.bf16.msra.mxu0 %v1757
    %1852 = vmatprep.subr.bf16.mxu0 %v1754
    %1853 = vmatpush1.bf16.msra.mxu0 %v1753
    %1854 = vmatprep.subr.bf16.mxu0 %v1750
    %1855 = vmatpush1.bf16.msra.mxu0 %v1749
    %1856 = vmatprep.subr.bf16.mxu0 %v1746
    %1857 = vmatpush1.bf16.msra.mxu0 %v1745
    %1858 = vmatprep.subr.bf16.mxu0 %v1742
    %1859 = vmatpush1.bf16.msra.mxu0 %v1741
    %1860 = vmatprep.subr.bf16.mxu0 0
    %1861 = vmatpush2.bf16.msra.mxu0 0
    %1862 = vmatprep.subr.bf16.mxu0 0
    %1863 = vmatpush2.bf16.msra.mxu0 0
    %1864 = vmatprep.subr.bf16.mxu0 0
    %1865 = vmatpush2.bf16.msra.mxu0 0
    %1866 = vmatprep.subr.bf16.mxu0 0
    %1867 = vmatpush2.bf16.msra.mxu0 0
    %1868 = vmatprep.subr.bf16.mxu0 0
    %1869 = vmatpush2.bf16.msra.mxu0 0
    %1870 = vmatprep.subr.bf16.mxu0 0
    %1871 = vmatpush2.bf16.msra.mxu0 0
    %1872 = vmatprep.subr.bf16.mxu0 0
    %1873 = vmatpush2.bf16.msra.mxu0 0
    %1874 = vmatprep.subr.bf16.mxu0 0
    %1875 = vmatpush2.bf16.msra.mxu0 0
    %1876 = vmatprep.mubr.bf16.mxu0 0
    %1877 = vmatmul.mubr.bf16.gmra.mxu0 %v1108
    %v1878 = vpop.f32.mrf.mxu0
    %v1879 = vadd.f32 0.0, %v1878
    %v1880 = vpop.f32.mrf.mxu0
    %v1881 = vadd.f32 0.0, %v1880
    %v1882 = vpop.f32.mrf.mxu0
    %v1883 = vpop.f32.mrf.mxu0
    %1884 = vdwg.mxu0
    %v1885 = vadd.f32 %v1607, %v1838
    %v1886 = vadd.f32 %v1608, %v1840
    %v1887 = vadd.f32 %v1609, %v1879
    %v1888 = vadd.f32 %v1610, %v1881
    %v1889 = vmul.f32 %v1885, 0.5
    %v1890 = vtanh.pop %v1889
    %v1891 = vmul.f32 %v1890, 0.5
    %v1892 = vadd.f32 %v1891, 0.5
    %v1893 = vmul.f32 %v1886, 0.5
    %v1894 = vtanh.pop %v1893
    %v1895 = vmul.f32 %v1894, 0.5
    %v1896 = vadd.f32 %v1895, 0.5
    %v1897 = vtanh.pop %v1887
    %v1898 = vmul.f32 %v1888, 0.5
    %v1899 = vtanh.pop %v1898
    %v1900 = vmul.f32 %v1899, 0.5
    %v1901 = vadd.f32 %v1900, 0.5
    %v1902 = vmul.f32 %v1896, %v1105
    %v1903 = vmul.f32 %v1892, %v1897
    %v1904 = vadd.f32 %v1902, %v1903
    %v1905 = vtanh.pop %v1904
    %v1906 = vmul.f32 %v1901, %v1905
    %v1907 = vpack.c.bf16 %v1906, %v1906
    %v1908 = vld [vmem:[#allocation3] sm:$0xff]
    %v1909 = vld [vmem:[#allocation3 + $0x8] sm:$0xff]
    %v1910 = vld [vmem:[#allocation3 + $0x10] sm:$0xff]
    %v1911 = vld [vmem:[#allocation3 + $0x18] sm:$0xff]
    %v1912 = vld [vmem:[#allocation15] sm:$0xff]
    %v1913 = vld [vmem:[#allocation15 + $0x8] sm:$0xff]
    %v1914 = vld [vmem:[#allocation15 + $0x10] sm:$0xff]
    %v1915 = vld [vmem:[#allocation15 + $0x18] sm:$0xff]
    %v1916 = vld [vmem:[#allocation15 + $0x20] sm:$0xff]
    %v1917 = vld [vmem:[#allocation15 + $0x28] sm:$0xff]
    %v1918 = vld [vmem:[#allocation15 + $0x30] sm:$0xff]
    %v1919 = vld [vmem:[#allocation15 + $0x38] sm:$0xff]
    %v1920 = vld [vmem:[#allocation15 + $0x40] sm:$0xff]
    %v1921 = vld [vmem:[#allocation15 + $0x48] sm:$0xff]
    %v1922 = vld [vmem:[#allocation15 + $0x50] sm:$0xff]
    %v1923 = vld [vmem:[#allocation15 + $0x58] sm:$0xff]
    %v1924 = vld [vmem:[#allocation15 + $0x60] sm:$0xff]
    %v1925 = vld [vmem:[#allocation15 + $0x68] sm:$0xff]
    %v1926 = vld [vmem:[#allocation15 + $0x70] sm:$0xff]
    %v1927 = vld [vmem:[#allocation15 + $0x78] sm:$0xff]
    %v1928 = vld [vmem:[#allocation15 + $0x80] sm:$0xff]
    %v1929 = vld [vmem:[#allocation15 + $0x88] sm:$0xff]
    %v1930 = vld [vmem:[#allocation15 + $0x90] sm:$0xff]
    %v1931 = vld [vmem:[#allocation15 + $0x98] sm:$0xff]
    %v1932 = vld [vmem:[#allocation15 + $0xa0] sm:$0xff]
    %v1933 = vld [vmem:[#allocation15 + $0xa8] sm:$0xff]
    %v1934 = vld [vmem:[#allocation15 + $0xb0] sm:$0xff]
    %v1935 = vld [vmem:[#allocation15 + $0xb8] sm:$0xff]
    %v1936 = vld [vmem:[#allocation15 + $0xc0] sm:$0xff]
    %v1937 = vld [vmem:[#allocation15 + $0xc8] sm:$0xff]
    %v1938 = vld [vmem:[#allocation15 + $0xd0] sm:$0xff]
    %v1939 = vld [vmem:[#allocation15 + $0xd8] sm:$0xff]
    %v1940 = vld [vmem:[#allocation15 + $0xe0] sm:$0xff]
    %v1941 = vld [vmem:[#allocation15 + $0xe8] sm:$0xff]
    %v1942 = vld [vmem:[#allocation15 + $0xf0] sm:$0xff]
    %v1943 = vld [vmem:[#allocation15 + $0xf8] sm:$0xff]
    %v1944 = vld [vmem:[#allocation15 + $0x100] sm:$0xff]
    %v1945 = vld [vmem:[#allocation15 + $0x108] sm:$0xff]
    %v1946 = vld [vmem:[#allocation15 + $0x110] sm:$0xff]
    %v1947 = vld [vmem:[#allocation15 + $0x118] sm:$0xff]
    %v1948 = vld [vmem:[#allocation15 + $0x120] sm:$0xff]
    %v1949 = vld [vmem:[#allocation15 + $0x128] sm:$0xff]
    %v1950 = vld [vmem:[#allocation15 + $0x130] sm:$0xff]
    %v1951 = vld [vmem:[#allocation15 + $0x138] sm:$0xff]
    %v1952 = vld [vmem:[#allocation15 + $0x140] sm:$0xff]
    %v1953 = vld [vmem:[#allocation15 + $0x148] sm:$0xff]
    %v1954 = vld [vmem:[#allocation15 + $0x150] sm:$0xff]
    %v1955 = vld [vmem:[#allocation15 + $0x158] sm:$0xff]
    %v1956 = vld [vmem:[#allocation15 + $0x160] sm:$0xff]
    %v1957 = vld [vmem:[#allocation15 + $0x168] sm:$0xff]
    %v1958 = vld [vmem:[#allocation15 + $0x170] sm:$0xff]
    %v1959 = vld [vmem:[#allocation15 + $0x178] sm:$0xff]
    %v1960 = vld [vmem:[#allocation15 + $0x180] sm:$0xff]
    %v1961 = vld [vmem:[#allocation15 + $0x188] sm:$0xff]
    %v1962 = vld [vmem:[#allocation15 + $0x190] sm:$0xff]
    %v1963 = vld [vmem:[#allocation15 + $0x198] sm:$0xff]
    %v1964 = vld [vmem:[#allocation15 + $0x1a0] sm:$0xff]
    %v1965 = vld [vmem:[#allocation15 + $0x1a8] sm:$0xff]
    %v1966 = vld [vmem:[#allocation15 + $0x1b0] sm:$0xff]
    %v1967 = vld [vmem:[#allocation15 + $0x1b8] sm:$0xff]
    %v1968 = vld [vmem:[#allocation15 + $0x1c0] sm:$0xff]
    %v1969 = vld [vmem:[#allocation15 + $0x1c8] sm:$0xff]
    %v1970 = vld [vmem:[#allocation15 + $0x1d0] sm:$0xff]
    %v1971 = vld [vmem:[#allocation15 + $0x1d8] sm:$0xff]
    %v1972 = vld [vmem:[#allocation15 + $0x1e0] sm:$0xff]
    %v1973 = vld [vmem:[#allocation15 + $0x1e8] sm:$0xff]
    %v1974 = vld [vmem:[#allocation15 + $0x1f0] sm:$0xff]
    %v1975 = vld [vmem:[#allocation15 + $0x1f8] sm:$0xff]
    %v2040 = vunpack.c.l.b16 %v1912
    %v2041 = vunpack.c.h.b16 %v1912
    %v2042 = vunpack.c.l.b16 %v1913
    %v2043 = vunpack.c.h.b16 %v1913
    %v2044 = vunpack.c.l.b16 %v1914
    %v2045 = vunpack.c.h.b16 %v1914
    %v2046 = vunpack.c.l.b16 %v1915
    %v2047 = vunpack.c.h.b16 %v1915
    %v2048 = vunpack.c.l.b16 %v1916
    %v2049 = vunpack.c.h.b16 %v1916
    %v2050 = vunpack.c.l.b16 %v1917
    %v2051 = vunpack.c.h.b16 %v1917
    %v2052 = vunpack.c.l.b16 %v1918
    %v2053 = vunpack.c.h.b16 %v1918
    %v2054 = vunpack.c.l.b16 %v1919
    %v2055 = vunpack.c.h.b16 %v1919
    %v2056 = vunpack.c.l.b16 %v1920
    %v2057 = vunpack.c.h.b16 %v1920
    %v2058 = vunpack.c.l.b16 %v1921
    %v2059 = vunpack.c.h.b16 %v1921
    %v2060 = vunpack.c.l.b16 %v1922
    %v2061 = vunpack.c.h.b16 %v1922
    %v2062 = vunpack.c.l.b16 %v1923
    %v2063 = vunpack.c.h.b16 %v1923
    %v2064 = vunpack.c.l.b16 %v1924
    %v2065 = vunpack.c.h.b16 %v1924
    %v2066 = vunpack.c.l.b16 %v1925
    %v2067 = vunpack.c.h.b16 %v1925
    %v2068 = vunpack.c.l.b16 %v1926
    %v2069 = vunpack.c.h.b16 %v1926
    %v2070 = vunpack.c.l.b16 %v1927
    %v2071 = vunpack.c.h.b16 %v1927
    %v2072 = vunpack.c.l.b16 %v1928
    %v2073 = vunpack.c.h.b16 %v1928
    %v2074 = vunpack.c.l.b16 %v1929
    %v2075 = vunpack.c.h.b16 %v1929
    %v2076 = vunpack.c.l.b16 %v1930
    %v2077 = vunpack.c.h.b16 %v1930
    %v2078 = vunpack.c.l.b16 %v1931
    %v2079 = vunpack.c.h.b16 %v1931
    %v2080 = vunpack.c.l.b16 %v1932
    %v2081 = vunpack.c.h.b16 %v1932
    %v2082 = vunpack.c.l.b16 %v1933
    %v2083 = vunpack.c.h.b16 %v1933
    %v2084 = vunpack.c.l.b16 %v1934
    %v2085 = vunpack.c.h.b16 %v1934
    %v2086 = vunpack.c.l.b16 %v1935
    %v2087 = vunpack.c.h.b16 %v1935
    %v2088 = vunpack.c.l.b16 %v1936
    %v2089 = vunpack.c.h.b16 %v1936
    %v2090 = vunpack.c.l.b16 %v1937
    %v2091 = vunpack.c.h.b16 %v1937
    %v2092 = vunpack.c.l.b16 %v1938
    %v2093 = vunpack.c.h.b16 %v1938
    %v2094 = vunpack.c.l.b16 %v1939
    %v2095 = vunpack.c.h.b16 %v1939
    %v2096 = vunpack.c.l.b16 %v1940
    %v2097 = vunpack.c.h.b16 %v1940
    %v2098 = vunpack.c.l.b16 %v1941
    %v2099 = vunpack.c.h.b16 %v1941
    %v2100 = vunpack.c.l.b16 %v1942
    %v2101 = vunpack.c.h.b16 %v1942
    %v2102 = vunpack.c.l.b16 %v1943
    %v2103 = vunpack.c.h.b16 %v1943
    %v2104 = vunpack.c.l.b16 %v1944
    %v2105 = vunpack.c.h.b16 %v1944
    %v2106 = vunpack.c.l.b16 %v1945
    %v2107 = vunpack.c.h.b16 %v1945
    %v2108 = vunpack.c.l.b16 %v1946
    %v2109 = vunpack.c.h.b16 %v1946
    %v2110 = vunpack.c.l.b16 %v1947
    %v2111 = vunpack.c.h.b16 %v1947
    %v2112 = vunpack.c.l.b16 %v1948
    %v2113 = vunpack.c.h.b16 %v1948
    %v2114 = vunpack.c.l.b16 %v1949
    %v2115 = vunpack.c.h.b16 %v1949
    %v2116 = vunpack.c.l.b16 %v1950
    %v2117 = vunpack.c.h.b16 %v1950
    %v2118 = vunpack.c.l.b16 %v1951
    %v2119 = vunpack.c.h.b16 %v1951
    %v2120 = vunpack.c.l.b16 %v1952
    %v2121 = vunpack.c.h.b16 %v1952
    %v2122 = vunpack.c.l.b16 %v1953
    %v2123 = vunpack.c.h.b16 %v1953
    %v2124 = vunpack.c.l.b16 %v1954
    %v2125 = vunpack.c.h.b16 %v1954
    %v2126 = vunpack.c.l.b16 %v1955
    %v2127 = vunpack.c.h.b16 %v1955
    %v2128 = vunpack.c.l.b16 %v1956
    %v2129 = vunpack.c.h.b16 %v1956
    %v2130 = vunpack.c.l.b16 %v1957
    %v2131 = vunpack.c.h.b16 %v1957
    %v2132 = vunpack.c.l.b16 %v1958
    %v2133 = vunpack.c.h.b16 %v1958
    %v2134 = vunpack.c.l.b16 %v1959
    %v2135 = vunpack.c.h.b16 %v1959
    %v2136 = vunpack.c.l.b16 %v1960
    %v2137 = vunpack.c.h.b16 %v1960
    %v2138 = vunpack.c.l.b16 %v1961
    %v2139 = vunpack.c.h.b16 %v1961
    %v2140 = vunpack.c.l.b16 %v1962
    %v2141 = vunpack.c.h.b16 %v1962
    %v2142 = vunpack.c.l.b16 %v1963
    %v2143 = vunpack.c.h.b16 %v1963
    %v2144 = vunpack.c.l.b16 %v1964
    %v2145 = vunpack.c.h.b16 %v1964
    %v2146 = vunpack.c.l.b16 %v1965
    %v2147 = vunpack.c.h.b16 %v1965
    %v2148 = vunpack.c.l.b16 %v1966
    %v2149 = vunpack.c.h.b16 %v1966
    %v2150 = vunpack.c.l.b16 %v1967
    %v2151 = vunpack.c.h.b16 %v1967
    %v2152 = vunpack.c.l.b16 %v1968
    %v2153 = vunpack.c.h.b16 %v1968
    %v2154 = vunpack.c.l.b16 %v1969
    %v2155 = vunpack.c.h.b16 %v1969
    %v2156 = vunpack.c.l.b16 %v1970
    %v2157 = vunpack.c.h.b16 %v1970
    %v2158 = vunpack.c.l.b16 %v1971
    %v2159 = vunpack.c.h.b16 %v1971
    %v2160 = vunpack.c.l.b16 %v1972
    %v2161 = vunpack.c.h.b16 %v1972
    %v2162 = vunpack.c.l.b16 %v1973
    %v2163 = vunpack.c.h.b16 %v1973
    %v2164 = vunpack.c.l.b16 %v1974
    %v2165 = vunpack.c.h.b16 %v1974
    %v2166 = vunpack.c.l.b16 %v1975
    %v2167 = vunpack.c.h.b16 %v1975
    %v2168 = vpack.c.b16 %v2044, %v2040
    %v2169 = vpack.c.b16 %v2045, %v2041
    %v2170 = vpack.c.b16 %v2046, %v2042
    %v2171 = vpack.c.b16 %v2047, %v2043
    %v2172 = vpack.c.b16 %v2052, %v2048
    %v2173 = vpack.c.b16 %v2053, %v2049
    %v2174 = vpack.c.b16 %v2054, %v2050
    %v2175 = vpack.c.b16 %v2055, %v2051
    %v2176 = vpack.c.b16 %v2060, %v2056
    %v2177 = vpack.c.b16 %v2061, %v2057
    %v2178 = vpack.c.b16 %v2062, %v2058
    %v2179 = vpack.c.b16 %v2063, %v2059
    %v2180 = vpack.c.b16 %v2068, %v2064
    %v2181 = vpack.c.b16 %v2069, %v2065
    %v2182 = vpack.c.b16 %v2070, %v2066
    %v2183 = vpack.c.b16 %v2071, %v2067
    %v2184 = vpack.c.b16 %v2076, %v2072
    %v2185 = vpack.c.b16 %v2077, %v2073
    %v2186 = vpack.c.b16 %v2078, %v2074
    %v2187 = vpack.c.b16 %v2079, %v2075
    %v2188 = vpack.c.b16 %v2084, %v2080
    %v2189 = vpack.c.b16 %v2085, %v2081
    %v2190 = vpack.c.b16 %v2086, %v2082
    %v2191 = vpack.c.b16 %v2087, %v2083
    %v2192 = vpack.c.b16 %v2092, %v2088
    %v2193 = vpack.c.b16 %v2093, %v2089
    %v2194 = vpack.c.b16 %v2094, %v2090
    %v2195 = vpack.c.b16 %v2095, %v2091
    %v2196 = vpack.c.b16 %v2100, %v2096
    %v2197 = vpack.c.b16 %v2101, %v2097
    %v2198 = vpack.c.b16 %v2102, %v2098
    %v2199 = vpack.c.b16 %v2103, %v2099
    %v2200 = vpack.c.b16 %v2108, %v2104
    %v2201 = vpack.c.b16 %v2109, %v2105
    %v2202 = vpack.c.b16 %v2110, %v2106
    %v2203 = vpack.c.b16 %v2111, %v2107
    %v2204 = vpack.c.b16 %v2116, %v2112
    %v2205 = vpack.c.b16 %v2117, %v2113
    %v2206 = vpack.c.b16 %v2118, %v2114
    %v2207 = vpack.c.b16 %v2119, %v2115
    %v2208 = vpack.c.b16 %v2124, %v2120
    %v2209 = vpack.c.b16 %v2125, %v2121
    %v2210 = vpack.c.b16 %v2126, %v2122
    %v2211 = vpack.c.b16 %v2127, %v2123
    %v2212 = vpack.c.b16 %v2132, %v2128
    %v2213 = vpack.c.b16 %v2133, %v2129
    %v2214 = vpack.c.b16 %v2134, %v2130
    %v2215 = vpack.c.b16 %v2135, %v2131
    %v2216 = vpack.c.b16 %v2140, %v2136
    %v2217 = vpack.c.b16 %v2141, %v2137
    %v2218 = vpack.c.b16 %v2142, %v2138
    %v2219 = vpack.c.b16 %v2143, %v2139
    %v2220 = vpack.c.b16 %v2148, %v2144
    %v2221 = vpack.c.b16 %v2149, %v2145
    %v2222 = vpack.c.b16 %v2150, %v2146
    %v2223 = vpack.c.b16 %v2151, %v2147
    %v2224 = vpack.c.b16 %v2156, %v2152
    %v2225 = vpack.c.b16 %v2157, %v2153
    %v2226 = vpack.c.b16 %v2158, %v2154
    %v2227 = vpack.c.b16 %v2159, %v2155
    %v2228 = vpack.c.b16 %v2164, %v2160
    %v2229 = vpack.c.b16 %v2165, %v2161
    %v2230 = vpack.c.b16 %v2166, %v2162
    %v2231 = vpack.c.b16 %v2167, %v2163
    %2296 = vmatprep.subr.bf16.mxu0 %v2197
    %2297 = vmatpush1.bf16.msra.mxu0 %v2196
    %2298 = vmatprep.subr.bf16.mxu0 %v2193
    %2299 = vmatpush1.bf16.msra.mxu0 %v2192
    %2300 = vmatprep.subr.bf16.mxu0 %v2189
    %2301 = vmatpush1.bf16.msra.mxu0 %v2188
    %2302 = vmatprep.subr.bf16.mxu0 %v2185
    %2303 = vmatpush1.bf16.msra.mxu0 %v2184
    %2304 = vmatprep.subr.bf16.mxu0 %v2181
    %2305 = vmatpush1.bf16.msra.mxu0 %v2180
    %2306 = vmatprep.subr.bf16.mxu0 %v2177
    %2307 = vmatpush1.bf16.msra.mxu0 %v2176
    %2308 = vmatprep.subr.bf16.mxu0 %v2173
    %2309 = vmatpush1.bf16.msra.mxu0 %v2172
    %2310 = vmatprep.subr.bf16.mxu0 %v2169
    %2311 = vmatpush1.bf16.msra.mxu0 %v2168
    %2312 = vmatprep.subr.bf16.mxu0 %v2229
    %2313 = vmatpush2.bf16.msra.mxu0 %v2228
    %2314 = vmatprep.subr.bf16.mxu0 %v2225
    %2315 = vmatpush2.bf16.msra.mxu0 %v2224
    %2316 = vmatprep.subr.bf16.mxu0 %v2221
    %2317 = vmatpush2.bf16.msra.mxu0 %v2220
    %2318 = vmatprep.subr.bf16.mxu0 %v2217
    %2319 = vmatpush2.bf16.msra.mxu0 %v2216
    %2320 = vmatprep.subr.bf16.mxu0 %v2213
    %2321 = vmatpush2.bf16.msra.mxu0 %v2212
    %2322 = vmatprep.subr.bf16.mxu0 %v2209
    %2323 = vmatpush2.bf16.msra.mxu0 %v2208
    %2324 = vmatprep.subr.bf16.mxu0 %v2205
    %2325 = vmatpush2.bf16.msra.mxu0 %v2204
    %2326 = vmatprep.subr.bf16.mxu0 %v2201
    %2327 = vmatpush2.bf16.msra.mxu0 %v2200
    %2328 = vmatprep.mubr.bf16.mxu0 %v1602
    %2329 = vmatmul.mubr.bf16.gmra.mxu0 %v1907
    %v2330 = vpop.f32.mrf.mxu0
    %v2331 = vadd.f32 0.0, %v2330
    %v2332 = vpop.f32.mrf.mxu0
    %v2333 = vadd.f32 0.0, %v2332
    %v2334 = vpop.f32.mrf.mxu0
    %v2335 = vpop.f32.mrf.mxu0
    %2336 = vdwg.mxu0
    %2337 = vmatprep.subr.bf16.mxu0 %v2199
    %2338 = vmatpush1.bf16.msra.mxu0 %v2198
    %2339 = vmatprep.subr.bf16.mxu0 %v2195
    %2340 = vmatpush1.bf16.msra.mxu0 %v2194
    %2341 = vmatprep.subr.bf16.mxu0 %v2191
    %2342 = vmatpush1.bf16.msra.mxu0 %v2190
    %2343 = vmatprep.subr.bf16.mxu0 %v2187
    %2344 = vmatpush1.bf16.msra.mxu0 %v2186
    %2345 = vmatprep.subr.bf16.mxu0 %v2183
    %2346 = vmatpush1.bf16.msra.mxu0 %v2182
    %2347 = vmatprep.subr.bf16.mxu0 %v2179
    %2348 = vmatpush1.bf16.msra.mxu0 %v2178
    %2349 = vmatprep.subr.bf16.mxu0 %v2175
    %2350 = vmatpush1.bf16.msra.mxu0 %v2174
    %2351 = vmatprep.subr.bf16.mxu0 %v2171
    %2352 = vmatpush1.bf16.msra.mxu0 %v2170
    %2353 = vmatprep.subr.bf16.mxu0 %v2231
    %2354 = vmatpush2.bf16.msra.mxu0 %v2230
    %2355 = vmatprep.subr.bf16.mxu0 %v2227
    %2356 = vmatpush2.bf16.msra.mxu0 %v2226
    %2357 = vmatprep.subr.bf16.mxu0 %v2223
    %2358 = vmatpush2.bf16.msra.mxu0 %v2222
    %2359 = vmatprep.subr.bf16.mxu0 %v2219
    %2360 = vmatpush2.bf16.msra.mxu0 %v2218
    %2361 = vmatprep.subr.bf16.mxu0 %v2215
    %2362 = vmatpush2.bf16.msra.mxu0 %v2214
    %2363 = vmatprep.subr.bf16.mxu0 %v2211
    %2364 = vmatpush2.bf16.msra.mxu0 %v2210
    %2365 = vmatprep.subr.bf16.mxu0 %v2207
    %2366 = vmatpush2.bf16.msra.mxu0 %v2206
    %2367 = vmatprep.subr.bf16.mxu0 %v2203
    %2368 = vmatpush2.bf16.msra.mxu0 %v2202
    %2369 = vmatprep.mubr.bf16.mxu0 %v1602
    %2370 = vmatmul.mubr.bf16.gmra.mxu0 %v1907
    %v2371 = vpop.f32.mrf.mxu0
    %v2372 = vadd.f32 0.0, %v2371
    %v2373 = vpop.f32.mrf.mxu0
    %v2374 = vadd.f32 0.0, %v2373
    %v2375 = vpop.f32.mrf.mxu0
    %v2376 = vpop.f32.mrf.mxu0
    %2377 = vdwg.mxu0
    %v2378 = vadd.f32 %v1908, %v2331
    %v2379 = vadd.f32 %v1909, %v2333
    %v2380 = vadd.f32 %v1910, %v2372
    %v2381 = vadd.f32 %v1911, %v2374
    %v2382 = vmul.f32 %v2378, 0.5
    %v2383 = vtanh.pop %v2382
    %v2384 = vmul.f32 %v2383, 0.5
    %v2385 = vadd.f32 %v2384, 0.5
    %v2386 = vmul.f32 %v2379, 0.5
    %v2387 = vtanh.pop %v2386
    %v2388 = vmul.f32 %v2387, 0.5
    %v2389 = vadd.f32 %v2388, 0.5
    %v2390 = vtanh.pop %v2380
    %v2391 = vmul.f32 %v2381, 0.5
    %v2392 = vtanh.pop %v2391
    %v2393 = vmul.f32 %v2392, 0.5
    %v2394 = vadd.f32 %v2393, 0.5
    %v2395 = vmul.f32 %v2389, %v1599
    %v2396 = vmul.f32 %v2385, %v2390
    %v2397 = vadd.f32 %v2395, %v2396
    %v2398 = vtanh.pop %v2397
    %v2399 = vmul.f32 %v2394, %v2398
    %v2400 = vpack.c.bf16 %v2399, %v2399
    %s2401 = scalar_lea.vmem [#allocation16], 4
    %2402 = vst [vmem:[%s2401] sm:$0xf] %v2400
    %s2403 = smul.u32 2, 4
    %s2404 = smul.addr %s2403, 8
    %s2405 = scalar_lea.vmem [#allocation2], %s2404
    %v2406 = vld [vmem:[%s2405] sm:$0xff]
    %v2407 = vld [vmem:[%s2405 + $0x8] sm:$0xff]
    %v2408 = vld [vmem:[%s2405 + $0x10] sm:$0xff]
    %v2409 = vld [vmem:[%s2405 + $0x18] sm:$0xff]
    %v2410 = vld [vmem:[#allocation12] sm:$0xff]
    %v2411 = vld [vmem:[#allocation12 + $0x8] sm:$0xff]
    %v2412 = vld [vmem:[#allocation12 + $0x10] sm:$0xff]
    %v2413 = vld [vmem:[#allocation12 + $0x18] sm:$0xff]
    %v2414 = vld [vmem:[#allocation12 + $0x20] sm:$0xff]
    %v2415 = vld [vmem:[#allocation12 + $0x28] sm:$0xff]
    %v2416 = vld [vmem:[#allocation12 + $0x30] sm:$0xff]
    %v2417 = vld [vmem:[#allocation12 + $0x38] sm:$0xff]
    %v2418 = vld [vmem:[#allocation12 + $0x40] sm:$0xff]
    %v2419 = vld [vmem:[#allocation12 + $0x48] sm:$0xff]
    %v2420 = vld [vmem:[#allocation12 + $0x50] sm:$0xff]
    %v2421 = vld [vmem:[#allocation12 + $0x58] sm:$0xff]
    %v2422 = vld [vmem:[#allocation12 + $0x60] sm:$0xff]
    %v2423 = vld [vmem:[#allocation12 + $0x68] sm:$0xff]
    %v2424 = vld [vmem:[#allocation12 + $0x70] sm:$0xff]
    %v2425 = vld [vmem:[#allocation12 + $0x78] sm:$0xff]
    %v2426 = vld [vmem:[#allocation12 + $0x80] sm:$0xff]
    %v2427 = vld [vmem:[#allocation12 + $0x88] sm:$0xff]
    %v2428 = vld [vmem:[#allocation12 + $0x90] sm:$0xff]
    %v2429 = vld [vmem:[#allocation12 + $0x98] sm:$0xff]
    %v2430 = vld [vmem:[#allocation12 + $0xa0] sm:$0xff]
    %v2431 = vld [vmem:[#allocation12 + $0xa8] sm:$0xff]
    %v2432 = vld [vmem:[#allocation12 + $0xb0] sm:$0xff]
    %v2433 = vld [vmem:[#allocation12 + $0xb8] sm:$0xff]
    %v2434 = vld [vmem:[#allocation12 + $0xc0] sm:$0xff]
    %v2435 = vld [vmem:[#allocation12 + $0xc8] sm:$0xff]
    %v2436 = vld [vmem:[#allocation12 + $0xd0] sm:$0xff]
    %v2437 = vld [vmem:[#allocation12 + $0xd8] sm:$0xff]
    %v2438 = vld [vmem:[#allocation12 + $0xe0] sm:$0xff]
    %v2439 = vld [vmem:[#allocation12 + $0xe8] sm:$0xff]
    %v2440 = vld [vmem:[#allocation12 + $0xf0] sm:$0xff]
    %v2441 = vld [vmem:[#allocation12 + $0xf8] sm:$0xff]
    %v2474 = vunpack.c.l.b16 %v2410
    %v2475 = vunpack.c.h.b16 %v2410
    %v2476 = vunpack.c.l.b16 %v2411
    %v2477 = vunpack.c.h.b16 %v2411
    %v2478 = vunpack.c.l.b16 %v2412
    %v2479 = vunpack.c.h.b16 %v2412
    %v2480 = vunpack.c.l.b16 %v2413
    %v2481 = vunpack.c.h.b16 %v2413
    %v2482 = vunpack.c.l.b16 %v2414
    %v2483 = vunpack.c.h.b16 %v2414
    %v2484 = vunpack.c.l.b16 %v2415
    %v2485 = vunpack.c.h.b16 %v2415
    %v2486 = vunpack.c.l.b16 %v2416
    %v2487 = vunpack.c.h.b16 %v2416
    %v2488 = vunpack.c.l.b16 %v2417
    %v2489 = vunpack.c.h.b16 %v2417
    %v2490 = vunpack.c.l.b16 %v2418
    %v2491 = vunpack.c.h.b16 %v2418
    %v2492 = vunpack.c.l.b16 %v2419
    %v2493 = vunpack.c.h.b16 %v2419
    %v2494 = vunpack.c.l.b16 %v2420
    %v2495 = vunpack.c.h.b16 %v2420
    %v2496 = vunpack.c.l.b16 %v2421
    %v2497 = vunpack.c.h.b16 %v2421
    %v2498 = vunpack.c.l.b16 %v2422
    %v2499 = vunpack.c.h.b16 %v2422
    %v2500 = vunpack.c.l.b16 %v2423
    %v2501 = vunpack.c.h.b16 %v2423
    %v2502 = vunpack.c.l.b16 %v2424
    %v2503 = vunpack.c.h.b16 %v2424
    %v2504 = vunpack.c.l.b16 %v2425
    %v2505 = vunpack.c.h.b16 %v2425
    %v2506 = vunpack.c.l.b16 %v2426
    %v2507 = vunpack.c.h.b16 %v2426
    %v2508 = vunpack.c.l.b16 %v2427
    %v2509 = vunpack.c.h.b16 %v2427
    %v2510 = vunpack.c.l.b16 %v2428
    %v2511 = vunpack.c.h.b16 %v2428
    %v2512 = vunpack.c.l.b16 %v2429
    %v2513 = vunpack.c.h.b16 %v2429
    %v2514 = vunpack.c.l.b16 %v2430
    %v2515 = vunpack.c.h.b16 %v2430
    %v2516 = vunpack.c.l.b16 %v2431
    %v2517 = vunpack.c.h.b16 %v2431
    %v2518 = vunpack.c.l.b16 %v2432
    %v2519 = vunpack.c.h.b16 %v2432
    %v2520 = vunpack.c.l.b16 %v2433
    %v2521 = vunpack.c.h.b16 %v2433
    %v2522 = vunpack.c.l.b16 %v2434
    %v2523 = vunpack.c.h.b16 %v2434
    %v2524 = vunpack.c.l.b16 %v2435
    %v2525 = vunpack.c.h.b16 %v2435
    %v2526 = vunpack.c.l.b16 %v2436
    %v2527 = vunpack.c.h.b16 %v2436
    %v2528 = vunpack.c.l.b16 %v2437
    %v2529 = vunpack.c.h.b16 %v2437
    %v2530 = vunpack.c.l.b16 %v2438
    %v2531 = vunpack.c.h.b16 %v2438
    %v2532 = vunpack.c.l.b16 %v2439
    %v2533 = vunpack.c.h.b16 %v2439
    %v2534 = vunpack.c.l.b16 %v2440
    %v2535 = vunpack.c.h.b16 %v2440
    %v2536 = vunpack.c.l.b16 %v2441
    %v2537 = vunpack.c.h.b16 %v2441
    %v2538 = vpack.c.b16 %v2478, %v2474
    %v2539 = vpack.c.b16 %v2479, %v2475
    %v2540 = vpack.c.b16 %v2480, %v2476
    %v2541 = vpack.c.b16 %v2481, %v2477
    %v2542 = vpack.c.b16 %v2486, %v2482
    %v2543 = vpack.c.b16 %v2487, %v2483
    %v2544 = vpack.c.b16 %v2488, %v2484
    %v2545 = vpack.c.b16 %v2489, %v2485
    %v2546 = vpack.c.b16 %v2494, %v2490
    %v2547 = vpack.c.b16 %v2495, %v2491
    %v2548 = vpack.c.b16 %v2496, %v2492
    %v2549 = vpack.c.b16 %v2497, %v2493
    %v2550 = vpack.c.b16 %v2502, %v2498
    %v2551 = vpack.c.b16 %v2503, %v2499
    %v2552 = vpack.c.b16 %v2504, %v2500
    %v2553 = vpack.c.b16 %v2505, %v2501
    %v2554 = vpack.c.b16 %v2510, %v2506
    %v2555 = vpack.c.b16 %v2511, %v2507
    %v2556 = vpack.c.b16 %v2512, %v2508
    %v2557 = vpack.c.b16 %v2513, %v2509
    %v2558 = vpack.c.b16 %v2518, %v2514
    %v2559 = vpack.c.b16 %v2519, %v2515
    %v2560 = vpack.c.b16 %v2520, %v2516
    %v2561 = vpack.c.b16 %v2521, %v2517
    %v2562 = vpack.c.b16 %v2526, %v2522
    %v2563 = vpack.c.b16 %v2527, %v2523
    %v2564 = vpack.c.b16 %v2528, %v2524
    %v2565 = vpack.c.b16 %v2529, %v2525
    %v2566 = vpack.c.b16 %v2534, %v2530
    %v2567 = vpack.c.b16 %v2535, %v2531
    %v2568 = vpack.c.b16 %v2536, %v2532
    %v2569 = vpack.c.b16 %v2537, %v2533
    %2602 = vmatprep.subr.bf16.mxu0 %v2567
    %2603 = vmatpush1.bf16.msra.mxu0 %v2566
    %2604 = vmatprep.subr.bf16.mxu0 %v2563
    %2605 = vmatpush1.bf16.msra.mxu0 %v2562
    %2606 = vmatprep.subr.bf16.mxu0 %v2559
    %2607 = vmatpush1.bf16.msra.mxu0 %v2558
    %2608 = vmatprep.subr.bf16.mxu0 %v2555
    %2609 = vmatpush1.bf16.msra.mxu0 %v2554
    %2610 = vmatprep.subr.bf16.mxu0 %v2551
    %2611 = vmatpush1.bf16.msra.mxu0 %v2550
    %2612 = vmatprep.subr.bf16.mxu0 %v2547
    %2613 = vmatpush1.bf16.msra.mxu0 %v2546
    %2614 = vmatprep.subr.bf16.mxu0 %v2543
    %2615 = vmatpush1.bf16.msra.mxu0 %v2542
    %2616 = vmatprep.subr.bf16.mxu0 %v2539
    %2617 = vmatpush1.bf16.msra.mxu0 %v2538
    %2618 = vmatprep.subr.bf16.mxu0 0
    %2619 = vmatpush2.bf16.msra.mxu0 0
    %2620 = vmatprep.subr.bf16.mxu0 0
    %2621 = vmatpush2.bf16.msra.mxu0 0
    %2622 = vmatprep.subr.bf16.mxu0 0
    %2623 = vmatpush2.bf16.msra.mxu0 0
    %2624 = vmatprep.subr.bf16.mxu0 0
    %2625 = vmatpush2.bf16.msra.mxu0 0
    %2626 = vmatprep.subr.bf16.mxu0 0
    %2627 = vmatpush2.bf16.msra.mxu0 0
    %2628 = vmatprep.subr.bf16.mxu0 0
    %2629 = vmatpush2.bf16.msra.mxu0 0
    %2630 = vmatprep.subr.bf16.mxu0 0
    %2631 = vmatpush2.bf16.msra.mxu0 0
    %2632 = vmatprep.subr.bf16.mxu0 0
    %2633 = vmatpush2.bf16.msra.mxu0 0
    %2634 = vmatprep.mubr.bf16.mxu0 0
    %2635 = vmatmul.mubr.bf16.gmra.mxu0 %v1907
    %v2636 = vpop.f32.mrf.mxu0
    %v2637 = vadd.f32 0.0, %v2636
    %v2638 = vpop.f32.mrf.mxu0
    %v2639 = vadd.f32 0.0, %v2638
    %v2640 = vpop.f32.mrf.mxu0
    %v2641 = vpop.f32.mrf.mxu0
    %2642 = vdwg.mxu0
    %2643 = vmatprep.subr.bf16.mxu0 %v2569
    %2644 = vmatpush1.bf16.msra.mxu0 %v2568
    %2645 = vmatprep.subr.bf16.mxu0 %v2565
    %2646 = vmatpush1.bf16.msra.mxu0 %v2564
    %2647 = vmatprep.subr.bf16.mxu0 %v2561
    %2648 = vmatpush1.bf16.msra.mxu0 %v2560
    %2649 = vmatprep.subr.bf16.mxu0 %v2557
    %2650 = vmatpush1.bf16.msra.mxu0 %v2556
    %2651 = vmatprep.subr.bf16.mxu0 %v2553
    %2652 = vmatpush1.bf16.msra.mxu0 %v2552
    %2653 = vmatprep.subr.bf16.mxu0 %v2549
    %2654 = vmatpush1.bf16.msra.mxu0 %v2548
    %2655 = vmatprep.subr.bf16.mxu0 %v2545
    %2656 = vmatpush1.bf16.msra.mxu0 %v2544
    %2657 = vmatprep.subr.bf16.mxu0 %v2541
    %2658 = vmatpush1.bf16.msra.mxu0 %v2540
    %2659 = vmatprep.subr.bf16.mxu0 0
    %2660 = vmatpush2.bf16.msra.mxu0 0
    %2661 = vmatprep.subr.bf16.mxu0 0
    %2662 = vmatpush2.bf16.msra.mxu0 0
    %2663 = vmatprep.subr.bf16.mxu0 0
    %2664 = vmatpush2.bf16.msra.mxu0 0
    %2665 = vmatprep.subr.bf16.mxu0 0
    %2666 = vmatpush2.bf16.msra.mxu0 0
    %2667 = vmatprep.subr.bf16.mxu0 0
    %2668 = vmatpush2.bf16.msra.mxu0 0
    %2669 = vmatprep.subr.bf16.mxu0 0
    %2670 = vmatpush2.bf16.msra.mxu0 0
    %2671 = vmatprep.subr.bf16.mxu0 0
    %2672 = vmatpush2.bf16.msra.mxu0 0
    %2673 = vmatprep.subr.bf16.mxu0 0
    %2674 = vmatpush2.bf16.msra.mxu0 0
    %2675 = vmatprep.mubr.bf16.mxu0 0
    %2676 = vmatmul.mubr.bf16.gmra.mxu0 %v1907
    %v2677 = vpop.f32.mrf.mxu0
    %v2678 = vadd.f32 0.0, %v2677
    %v2679 = vpop.f32.mrf.mxu0
    %v2680 = vadd.f32 0.0, %v2679
    %v2681 = vpop.f32.mrf.mxu0
    %v2682 = vpop.f32.mrf.mxu0
    %2683 = vdwg.mxu0
    %v2684 = vadd.f32 %v2406, %v2637
    %v2685 = vadd.f32 %v2407, %v2639
    %v2686 = vadd.f32 %v2408, %v2678
    %v2687 = vadd.f32 %v2409, %v2680
    %v2688 = vmul.f32 %v2684, 0.5
    %v2689 = vtanh.pop %v2688
    %v2690 = vmul.f32 %v2689, 0.5
    %v2691 = vadd.f32 %v2690, 0.5
    %v2692 = vmul.f32 %v2685, 0.5
    %v2693 = vtanh.pop %v2692
    %v2694 = vmul.f32 %v2693, 0.5
    %v2695 = vadd.f32 %v2694, 0.5
    %v2696 = vtanh.pop %v2686
    %v2697 = vmul.f32 %v2687, 0.5
    %v2698 = vtanh.pop %v2697
    %v2699 = vmul.f32 %v2698, 0.5
    %v2700 = vadd.f32 %v2699, 0.5
    %v2701 = vmul.f32 %v2695, %v1904
    %v2702 = vmul.f32 %v2691, %v2696
    %v2703 = vadd.f32 %v2701, %v2702
    %v2704 = vtanh.pop %v2703
    %v2705 = vmul.f32 %v2700, %v2704
    %v2706 = vpack.c.bf16 %v2705, %v2705
    %v2707 = vld [vmem:[#allocation3] sm:$0xff]
    %v2708 = vld [vmem:[#allocation3 + $0x8] sm:$0xff]
    %v2709 = vld [vmem:[#allocation3 + $0x10] sm:$0xff]
    %v2710 = vld [vmem:[#allocation3 + $0x18] sm:$0xff]
    %v2711 = vld [vmem:[#allocation15] sm:$0xff]
    %v2712 = vld [vmem:[#allocation15 + $0x8] sm:$0xff]
    %v2713 = vld [vmem:[#allocation15 + $0x10] sm:$0xff]
    %v2714 = vld [vmem:[#allocation15 + $0x18] sm:$0xff]
    %v2715 = vld [vmem:[#allocation15 + $0x20] sm:$0xff]
    %v2716 = vld [vmem:[#allocation15 + $0x28] sm:$0xff]
    %v2717 = vld [vmem:[#allocation15 + $0x30] sm:$0xff]
    %v2718 = vld [vmem:[#allocation15 + $0x38] sm:$0xff]
    %v2719 = vld [vmem:[#allocation15 + $0x40] sm:$0xff]
    %v2720 = vld [vmem:[#allocation15 + $0x48] sm:$0xff]
    %v2721 = vld [vmem:[#allocation15 + $0x50] sm:$0xff]
    %v2722 = vld [vmem:[#allocation15 + $0x58] sm:$0xff]
    %v2723 = vld [vmem:[#allocation15 + $0x60] sm:$0xff]
    %v2724 = vld [vmem:[#allocation15 + $0x68] sm:$0xff]
    %v2725 = vld [vmem:[#allocation15 + $0x70] sm:$0xff]
    %v2726 = vld [vmem:[#allocation15 + $0x78] sm:$0xff]
    %v2727 = vld [vmem:[#allocation15 + $0x80] sm:$0xff]
    %v2728 = vld [vmem:[#allocation15 + $0x88] sm:$0xff]
    %v2729 = vld [vmem:[#allocation15 + $0x90] sm:$0xff]
    %v2730 = vld [vmem:[#allocation15 + $0x98] sm:$0xff]
    %v2731 = vld [vmem:[#allocation15 + $0xa0] sm:$0xff]
    %v2732 = vld [vmem:[#allocation15 + $0xa8] sm:$0xff]
    %v2733 = vld [vmem:[#allocation15 + $0xb0] sm:$0xff]
    %v2734 = vld [vmem:[#allocation15 + $0xb8] sm:$0xff]
    %v2735 = vld [vmem:[#allocation15 + $0xc0] sm:$0xff]
    %v2736 = vld [vmem:[#allocation15 + $0xc8] sm:$0xff]
    %v2737 = vld [vmem:[#allocation15 + $0xd0] sm:$0xff]
    %v2738 = vld [vmem:[#allocation15 + $0xd8] sm:$0xff]
    %v2739 = vld [vmem:[#allocation15 + $0xe0] sm:$0xff]
    %v2740 = vld [vmem:[#allocation15 + $0xe8] sm:$0xff]
    %v2741 = vld [vmem:[#allocation15 + $0xf0] sm:$0xff]
    %v2742 = vld [vmem:[#allocation15 + $0xf8] sm:$0xff]
    %v2743 = vld [vmem:[#allocation15 + $0x100] sm:$0xff]
    %v2744 = vld [vmem:[#allocation15 + $0x108] sm:$0xff]
    %v2745 = vld [vmem:[#allocation15 + $0x110] sm:$0xff]
    %v2746 = vld [vmem:[#allocation15 + $0x118] sm:$0xff]
    %v2747 = vld [vmem:[#allocation15 + $0x120] sm:$0xff]
    %v2748 = vld [vmem:[#allocation15 + $0x128] sm:$0xff]
    %v2749 = vld [vmem:[#allocation15 + $0x130] sm:$0xff]
    %v2750 = vld [vmem:[#allocation15 + $0x138] sm:$0xff]
    %v2751 = vld [vmem:[#allocation15 + $0x140] sm:$0xff]
    %v2752 = vld [vmem:[#allocation15 + $0x148] sm:$0xff]
    %v2753 = vld [vmem:[#allocation15 + $0x150] sm:$0xff]
    %v2754 = vld [vmem:[#allocation15 + $0x158] sm:$0xff]
    %v2755 = vld [vmem:[#allocation15 + $0x160] sm:$0xff]
    %v2756 = vld [vmem:[#allocation15 + $0x168] sm:$0xff]
    %v2757 = vld [vmem:[#allocation15 + $0x170] sm:$0xff]
    %v2758 = vld [vmem:[#allocation15 + $0x178] sm:$0xff]
    %v2759 = vld [vmem:[#allocation15 + $0x180] sm:$0xff]
    %v2760 = vld [vmem:[#allocation15 + $0x188] sm:$0xff]
    %v2761 = vld [vmem:[#allocation15 + $0x190] sm:$0xff]
    %v2762 = vld [vmem:[#allocation15 + $0x198] sm:$0xff]
    %v2763 = vld [vmem:[#allocation15 + $0x1a0] sm:$0xff]
    %v2764 = vld [vmem:[#allocation15 + $0x1a8] sm:$0xff]
    %v2765 = vld [vmem:[#allocation15 + $0x1b0] sm:$0xff]
    %v2766 = vld [vmem:[#allocation15 + $0x1b8] sm:$0xff]
    %v2767 = vld [vmem:[#allocation15 + $0x1c0] sm:$0xff]
    %v2768 = vld [vmem:[#allocation15 + $0x1c8] sm:$0xff]
    %v2769 = vld [vmem:[#allocation15 + $0x1d0] sm:$0xff]
    %v2770 = vld [vmem:[#allocation15 + $0x1d8] sm:$0xff]
    %v2771 = vld [vmem:[#allocation15 + $0x1e0] sm:$0xff]
    %v2772 = vld [vmem:[#allocation15 + $0x1e8] sm:$0xff]
    %v2773 = vld [vmem:[#allocation15 + $0x1f0] sm:$0xff]
    %v2774 = vld [vmem:[#allocation15 + $0x1f8] sm:$0xff]
    %v2839 = vunpack.c.l.b16 %v2711
    %v2840 = vunpack.c.h.b16 %v2711
    %v2841 = vunpack.c.l.b16 %v2712
    %v2842 = vunpack.c.h.b16 %v2712
    %v2843 = vunpack.c.l.b16 %v2713
    %v2844 = vunpack.c.h.b16 %v2713
    %v2845 = vunpack.c.l.b16 %v2714
    %v2846 = vunpack.c.h.b16 %v2714
    %v2847 = vunpack.c.l.b16 %v2715
    %v2848 = vunpack.c.h.b16 %v2715
    %v2849 = vunpack.c.l.b16 %v2716
    %v2850 = vunpack.c.h.b16 %v2716
    %v2851 = vunpack.c.l.b16 %v2717
    %v2852 = vunpack.c.h.b16 %v2717
    %v2853 = vunpack.c.l.b16 %v2718
    %v2854 = vunpack.c.h.b16 %v2718
    %v2855 = vunpack.c.l.b16 %v2719
    %v2856 = vunpack.c.h.b16 %v2719
    %v2857 = vunpack.c.l.b16 %v2720
    %v2858 = vunpack.c.h.b16 %v2720
    %v2859 = vunpack.c.l.b16 %v2721
    %v2860 = vunpack.c.h.b16 %v2721
    %v2861 = vunpack.c.l.b16 %v2722
    %v2862 = vunpack.c.h.b16 %v2722
    %v2863 = vunpack.c.l.b16 %v2723
    %v2864 = vunpack.c.h.b16 %v2723
    %v2865 = vunpack.c.l.b16 %v2724
    %v2866 = vunpack.c.h.b16 %v2724
    %v2867 = vunpack.c.l.b16 %v2725
    %v2868 = vunpack.c.h.b16 %v2725
    %v2869 = vunpack.c.l.b16 %v2726
    %v2870 = vunpack.c.h.b16 %v2726
    %v2871 = vunpack.c.l.b16 %v2727
    %v2872 = vunpack.c.h.b16 %v2727
    %v2873 = vunpack.c.l.b16 %v2728
    %v2874 = vunpack.c.h.b16 %v2728
    %v2875 = vunpack.c.l.b16 %v2729
    %v2876 = vunpack.c.h.b16 %v2729
    %v2877 = vunpack.c.l.b16 %v2730
    %v2878 = vunpack.c.h.b16 %v2730
    %v2879 = vunpack.c.l.b16 %v2731
    %v2880 = vunpack.c.h.b16 %v2731
    %v2881 = vunpack.c.l.b16 %v2732
    %v2882 = vunpack.c.h.b16 %v2732
    %v2883 = vunpack.c.l.b16 %v2733
    %v2884 = vunpack.c.h.b16 %v2733
    %v2885 = vunpack.c.l.b16 %v2734
    %v2886 = vunpack.c.h.b16 %v2734
    %v2887 = vunpack.c.l.b16 %v2735
    %v2888 = vunpack.c.h.b16 %v2735
    %v2889 = vunpack.c.l.b16 %v2736
    %v2890 = vunpack.c.h.b16 %v2736
    %v2891 = vunpack.c.l.b16 %v2737
    %v2892 = vunpack.c.h.b16 %v2737
    %v2893 = vunpack.c.l.b16 %v2738
    %v2894 = vunpack.c.h.b16 %v2738
    %v2895 = vunpack.c.l.b16 %v2739
    %v2896 = vunpack.c.h.b16 %v2739
    %v2897 = vunpack.c.l.b16 %v2740
    %v2898 = vunpack.c.h.b16 %v2740
    %v2899 = vunpack.c.l.b16 %v2741
    %v2900 = vunpack.c.h.b16 %v2741
    %v2901 = vunpack.c.l.b16 %v2742
    %v2902 = vunpack.c.h.b16 %v2742
    %v2903 = vunpack.c.l.b16 %v2743
    %v2904 = vunpack.c.h.b16 %v2743
    %v2905 = vunpack.c.l.b16 %v2744
    %v2906 = vunpack.c.h.b16 %v2744
    %v2907 = vunpack.c.l.b16 %v2745
    %v2908 = vunpack.c.h.b16 %v2745
    %v2909 = vunpack.c.l.b16 %v2746
    %v2910 = vunpack.c.h.b16 %v2746
    %v2911 = vunpack.c.l.b16 %v2747
    %v2912 = vunpack.c.h.b16 %v2747
    %v2913 = vunpack.c.l.b16 %v2748
    %v2914 = vunpack.c.h.b16 %v2748
    %v2915 = vunpack.c.l.b16 %v2749
    %v2916 = vunpack.c.h.b16 %v2749
    %v2917 = vunpack.c.l.b16 %v2750
    %v2918 = vunpack.c.h.b16 %v2750
    %v2919 = vunpack.c.l.b16 %v2751
    %v2920 = vunpack.c.h.b16 %v2751
    %v2921 = vunpack.c.l.b16 %v2752
    %v2922 = vunpack.c.h.b16 %v2752
    %v2923 = vunpack.c.l.b16 %v2753
    %v2924 = vunpack.c.h.b16 %v2753
    %v2925 = vunpack.c.l.b16 %v2754
    %v2926 = vunpack.c.h.b16 %v2754
    %v2927 = vunpack.c.l.b16 %v2755
    %v2928 = vunpack.c.h.b16 %v2755
    %v2929 = vunpack.c.l.b16 %v2756
    %v2930 = vunpack.c.h.b16 %v2756
    %v2931 = vunpack.c.l.b16 %v2757
    %v2932 = vunpack.c.h.b16 %v2757
    %v2933 = vunpack.c.l.b16 %v2758
    %v2934 = vunpack.c.h.b16 %v2758
    %v2935 = vunpack.c.l.b16 %v2759
    %v2936 = vunpack.c.h.b16 %v2759
    %v2937 = vunpack.c.l.b16 %v2760
    %v2938 = vunpack.c.h.b16 %v2760
    %v2939 = vunpack.c.l.b16 %v2761
    %v2940 = vunpack.c.h.b16 %v2761
    %v2941 = vunpack.c.l.b16 %v2762
    %v2942 = vunpack.c.h.b16 %v2762
    %v2943 = vunpack.c.l.b16 %v2763
    %v2944 = vunpack.c.h.b16 %v2763
    %v2945 = vunpack.c.l.b16 %v2764
    %v2946 = vunpack.c.h.b16 %v2764
    %v2947 = vunpack.c.l.b16 %v2765
    %v2948 = vunpack.c.h.b16 %v2765
    %v2949 = vunpack.c.l.b16 %v2766
    %v2950 = vunpack.c.h.b16 %v2766
    %v2951 = vunpack.c.l.b16 %v2767
    %v2952 = vunpack.c.h.b16 %v2767
    %v2953 = vunpack.c.l.b16 %v2768
    %v2954 = vunpack.c.h.b16 %v2768
    %v2955 = vunpack.c.l.b16 %v2769
    %v2956 = vunpack.c.h.b16 %v2769
    %v2957 = vunpack.c.l.b16 %v2770
    %v2958 = vunpack.c.h.b16 %v2770
    %v2959 = vunpack.c.l.b16 %v2771
    %v2960 = vunpack.c.h.b16 %v2771
    %v2961 = vunpack.c.l.b16 %v2772
    %v2962 = vunpack.c.h.b16 %v2772
    %v2963 = vunpack.c.l.b16 %v2773
    %v2964 = vunpack.c.h.b16 %v2773
    %v2965 = vunpack.c.l.b16 %v2774
    %v2966 = vunpack.c.h.b16 %v2774
    %v2967 = vpack.c.b16 %v2843, %v2839
    %v2968 = vpack.c.b16 %v2844, %v2840
    %v2969 = vpack.c.b16 %v2845, %v2841
    %v2970 = vpack.c.b16 %v2846, %v2842
    %v2971 = vpack.c.b16 %v2851, %v2847
    %v2972 = vpack.c.b16 %v2852, %v2848
    %v2973 = vpack.c.b16 %v2853, %v2849
    %v2974 = vpack.c.b16 %v2854, %v2850
    %v2975 = vpack.c.b16 %v2859, %v2855
    %v2976 = vpack.c.b16 %v2860, %v2856
    %v2977 = vpack.c.b16 %v2861, %v2857
    %v2978 = vpack.c.b16 %v2862, %v2858
    %v2979 = vpack.c.b16 %v2867, %v2863
    %v2980 = vpack.c.b16 %v2868, %v2864
    %v2981 = vpack.c.b16 %v2869, %v2865
    %v2982 = vpack.c.b16 %v2870, %v2866
    %v2983 = vpack.c.b16 %v2875, %v2871
    %v2984 = vpack.c.b16 %v2876, %v2872
    %v2985 = vpack.c.b16 %v2877, %v2873
    %v2986 = vpack.c.b16 %v2878, %v2874
    %v2987 = vpack.c.b16 %v2883, %v2879
    %v2988 = vpack.c.b16 %v2884, %v2880
    %v2989 = vpack.c.b16 %v2885, %v2881
    %v2990 = vpack.c.b16 %v2886, %v2882
    %v2991 = vpack.c.b16 %v2891, %v2887
    %v2992 = vpack.c.b16 %v2892, %v2888
    %v2993 = vpack.c.b16 %v2893, %v2889
    %v2994 = vpack.c.b16 %v2894, %v2890
    %v2995 = vpack.c.b16 %v2899, %v2895
    %v2996 = vpack.c.b16 %v2900, %v2896
    %v2997 = vpack.c.b16 %v2901, %v2897
    %v2998 = vpack.c.b16 %v2902, %v2898
    %v2999 = vpack.c.b16 %v2907, %v2903
    %v3000 = vpack.c.b16 %v2908, %v2904
    %v3001 = vpack.c.b16 %v2909, %v2905
    %v3002 = vpack.c.b16 %v2910, %v2906
    %v3003 = vpack.c.b16 %v2915, %v2911
    %v3004 = vpack.c.b16 %v2916, %v2912
    %v3005 = vpack.c.b16 %v2917, %v2913
    %v3006 = vpack.c.b16 %v2918, %v2914
    %v3007 = vpack.c.b16 %v2923, %v2919
    %v3008 = vpack.c.b16 %v2924, %v2920
    %v3009 = vpack.c.b16 %v2925, %v2921
    %v3010 = vpack.c.b16 %v2926, %v2922
    %v3011 = vpack.c.b16 %v2931, %v2927
    %v3012 = vpack.c.b16 %v2932, %v2928
    %v3013 = vpack.c.b16 %v2933, %v2929
    %v3014 = vpack.c.b16 %v2934, %v2930
    %v3015 = vpack.c.b16 %v2939, %v2935
    %v3016 = vpack.c.b16 %v2940, %v2936
    %v3017 = vpack.c.b16 %v2941, %v2937
    %v3018 = vpack.c.b16 %v2942, %v2938
    %v3019 = vpack.c.b16 %v2947, %v2943
    %v3020 = vpack.c.b16 %v2948, %v2944
    %v3021 = vpack.c.b16 %v2949, %v2945
    %v3022 = vpack.c.b16 %v2950, %v2946
    %v3023 = vpack.c.b16 %v2955, %v2951
    %v3024 = vpack.c.b16 %v2956, %v2952
    %v3025 = vpack.c.b16 %v2957, %v2953
    %v3026 = vpack.c.b16 %v2958, %v2954
    %v3027 = vpack.c.b16 %v2963, %v2959
    %v3028 = vpack.c.b16 %v2964, %v2960
    %v3029 = vpack.c.b16 %v2965, %v2961
    %v3030 = vpack.c.b16 %v2966, %v2962
    %3095 = vmatprep.subr.bf16.mxu0 %v2996
    %3096 = vmatpush1.bf16.msra.mxu0 %v2995
    %3097 = vmatprep.subr.bf16.mxu0 %v2992
    %3098 = vmatpush1.bf16.msra.mxu0 %v2991
    %3099 = vmatprep.subr.bf16.mxu0 %v2988
    %3100 = vmatpush1.bf16.msra.mxu0 %v2987
    %3101 = vmatprep.subr.bf16.mxu0 %v2984
    %3102 = vmatpush1.bf16.msra.mxu0 %v2983
    %3103 = vmatprep.subr.bf16.mxu0 %v2980
    %3104 = vmatpush1.bf16.msra.mxu0 %v2979
    %3105 = vmatprep.subr.bf16.mxu0 %v2976
    %3106 = vmatpush1.bf16.msra.mxu0 %v2975
    %3107 = vmatprep.subr.bf16.mxu0 %v2972
    %3108 = vmatpush1.bf16.msra.mxu0 %v2971
    %3109 = vmatprep.subr.bf16.mxu0 %v2968
    %3110 = vmatpush1.bf16.msra.mxu0 %v2967
    %3111 = vmatprep.subr.bf16.mxu0 %v3028
    %3112 = vmatpush2.bf16.msra.mxu0 %v3027
    %3113 = vmatprep.subr.bf16.mxu0 %v3024
    %3114 = vmatpush2.bf16.msra.mxu0 %v3023
    %3115 = vmatprep.subr.bf16.mxu0 %v3020
    %3116 = vmatpush2.bf16.msra.mxu0 %v3019
    %3117 = vmatprep.subr.bf16.mxu0 %v3016
    %3118 = vmatpush2.bf16.msra.mxu0 %v3015
    %3119 = vmatprep.subr.bf16.mxu0 %v3012
    %3120 = vmatpush2.bf16.msra.mxu0 %v3011
    %3121 = vmatprep.subr.bf16.mxu0 %v3008
    %3122 = vmatpush2.bf16.msra.mxu0 %v3007
    %3123 = vmatprep.subr.bf16.mxu0 %v3004
    %3124 = vmatpush2.bf16.msra.mxu0 %v3003
    %3125 = vmatprep.subr.bf16.mxu0 %v3000
    %3126 = vmatpush2.bf16.msra.mxu0 %v2999
    %3127 = vmatprep.mubr.bf16.mxu0 %v2400
    %3128 = vmatmul.mubr.bf16.gmra.mxu0 %v2706
    %v3129 = vpop.f32.mrf.mxu0
    %v3130 = vadd.f32 0.0, %v3129
    %v3131 = vpop.f32.mrf.mxu0
    %v3132 = vadd.f32 0.0, %v3131
    %v3133 = vpop.f32.mrf.mxu0
    %v3134 = vpop.f32.mrf.mxu0
    %3135 = vdwg.mxu0
    %3136 = vmatprep.subr.bf16.mxu0 %v2998
    %3137 = vmatpush1.bf16.msra.mxu0 %v2997
    %3138 = vmatprep.subr.bf16.mxu0 %v2994
    %3139 = vmatpush1.bf16.msra.mxu0 %v2993
    %3140 = vmatprep.subr.bf16.mxu0 %v2990
    %3141 = vmatpush1.bf16.msra.mxu0 %v2989
    %3142 = vmatprep.subr.bf16.mxu0 %v2986
    %3143 = vmatpush1.bf16.msra.mxu0 %v2985
    %3144 = vmatprep.subr.bf16.mxu0 %v2982
    %3145 = vmatpush1.bf16.msra.mxu0 %v2981
    %3146 = vmatprep.subr.bf16.mxu0 %v2978
    %3147 = vmatpush1.bf16.msra.mxu0 %v2977
    %3148 = vmatprep.subr.bf16.mxu0 %v2974
    %3149 = vmatpush1.bf16.msra.mxu0 %v2973
    %3150 = vmatprep.subr.bf16.mxu0 %v2970
    %3151 = vmatpush1.bf16.msra.mxu0 %v2969
    %3152 = vmatprep.subr.bf16.mxu0 %v3030
    %3153 = vmatpush2.bf16.msra.mxu0 %v3029
    %3154 = vmatprep.subr.bf16.mxu0 %v3026
    %3155 = vmatpush2.bf16.msra.mxu0 %v3025
    %3156 = vmatprep.subr.bf16.mxu0 %v3022
    %3157 = vmatpush2.bf16.msra.mxu0 %v3021
    %3158 = vmatprep.subr.bf16.mxu0 %v3018
    %3159 = vmatpush2.bf16.msra.mxu0 %v3017
    %3160 = vmatprep.subr.bf16.mxu0 %v3014
    %3161 = vmatpush2.bf16.msra.mxu0 %v3013
    %3162 = vmatprep.subr.bf16.mxu0 %v3010
    %3163 = vmatpush2.bf16.msra.mxu0 %v3009
    %3164 = vmatprep.subr.bf16.mxu0 %v3006
    %3165 = vmatpush2.bf16.msra.mxu0 %v3005
    %3166 = vmatprep.subr.bf16.mxu0 %v3002
    %3167 = vmatpush2.bf16.msra.mxu0 %v3001
    %3168 = vmatprep.mubr.bf16.mxu0 %v2400
    %3169 = vmatmul.mubr.bf16.gmra.mxu0 %v2706
    %v3170 = vpop.f32.mrf.mxu0
    %v3171 = vadd.f32 0.0, %v3170
    %v3172 = vpop.f32.mrf.mxu0
    %v3173 = vadd.f32 0.0, %v3172
    %v3174 = vpop.f32.mrf.mxu0
    %v3175 = vpop.f32.mrf.mxu0
    %3176 = vdwg.mxu0
    %v3177 = vadd.f32 %v2707, %v3130
    %v3178 = vadd.f32 %v2708, %v3132
    %v3179 = vadd.f32 %v2709, %v3171
    %v3180 = vadd.f32 %v2710, %v3173
    %v3181 = vmul.f32 %v3177, 0.5
    %v3182 = vtanh.pop %v3181
    %v3183 = vmul.f32 %v3182, 0.5
    %v3184 = vadd.f32 %v3183, 0.5
    %v3185 = vmul.f32 %v3178, 0.5
    %v3186 = vtanh.pop %v3185
    %v3187 = vmul.f32 %v3186, 0.5
    %v3188 = vadd.f32 %v3187, 0.5
    %v3189 = vtanh.pop %v3179
    %v3190 = vmul.f32 %v3180, 0.5
    %v3191 = vtanh.pop %v3190
    %v3192 = vmul.f32 %v3191, 0.5
    %v3193 = vadd.f32 %v3192, 0.5
    %v3194 = vmul.f32 %v3188, %v2397
    %v3195 = vmul.f32 %v3184, %v3189
    %v3196 = vadd.f32 %v3194, %v3195
    %v3197 = vtanh.pop %v3196
    %v3198 = vmul.f32 %v3193, %v3197
    %v3199 = vpack.c.bf16 %v3198, %v3198
    %s3200 = scalar_lea.vmem [#allocation16], 8
    %3201 = vst [vmem:[%s3200] sm:$0xf] %v3199
    %s3202 = smul.u32 3, 4
    %s3203 = smul.addr %s3202, 8
    %s3204 = scalar_lea.vmem [#allocation2], %s3203
    %v3205 = vld [vmem:[%s3204] sm:$0xff]
    %v3206 = vld [vmem:[%s3204 + $0x8] sm:$0xff]
    %v3207 = vld [vmem:[%s3204 + $0x10] sm:$0xff]
    %v3208 = vld [vmem:[%s3204 + $0x18] sm:$0xff]
    %v3209 = vld [vmem:[#allocation12] sm:$0xff]
    %v3210 = vld [vmem:[#allocation12 + $0x8] sm:$0xff]
    %v3211 = vld [vmem:[#allocation12 + $0x10] sm:$0xff]
    %v3212 = vld [vmem:[#allocation12 + $0x18] sm:$0xff]
    %v3213 = vld [vmem:[#allocation12 + $0x20] sm:$0xff]
    %v3214 = vld [vmem:[#allocation12 + $0x28] sm:$0xff]
    %v3215 = vld [vmem:[#allocation12 + $0x30] sm:$0xff]
    %v3216 = vld [vmem:[#allocation12 + $0x38] sm:$0xff]
    %v3217 = vld [vmem:[#allocation12 + $0x40] sm:$0xff]
    %v3218 = vld [vmem:[#allocation12 + $0x48] sm:$0xff]
    %v3219 = vld [vmem:[#allocation12 + $0x50] sm:$0xff]
    %v3220 = vld [vmem:[#allocation12 + $0x58] sm:$0xff]
    %v3221 = vld [vmem:[#allocation12 + $0x60] sm:$0xff]
    %v3222 = vld [vmem:[#allocation12 + $0x68] sm:$0xff]
    %v3223 = vld [vmem:[#allocation12 + $0x70] sm:$0xff]
    %v3224 = vld [vmem:[#allocation12 + $0x78] sm:$0xff]
    %v3225 = vld [vmem:[#allocation12 + $0x80] sm:$0xff]
    %v3226 = vld [vmem:[#allocation12 + $0x88] sm:$0xff]
    %v3227 = vld [vmem:[#allocation12 + $0x90] sm:$0xff]
    %v3228 = vld [vmem:[#allocation12 + $0x98] sm:$0xff]
    %v3229 = vld [vmem:[#allocation12 + $0xa0] sm:$0xff]
    %v3230 = vld [vmem:[#allocation12 + $0xa8] sm:$0xff]
    %v3231 = vld [vmem:[#allocation12 + $0xb0] sm:$0xff]
    %v3232 = vld [vmem:[#allocation12 + $0xb8] sm:$0xff]
    %v3233 = vld [vmem:[#allocation12 + $0xc0] sm:$0xff]
    %v3234 = vld [vmem:[#allocation12 + $0xc8] sm:$0xff]
    %v3235 = vld [vmem:[#allocation12 + $0xd0] sm:$0xff]
    %v3236 = vld [vmem:[#allocation12 + $0xd8] sm:$0xff]
    %v3237 = vld [vmem:[#allocation12 + $0xe0] sm:$0xff]
    %v3238 = vld [vmem:[#allocation12 + $0xe8] sm:$0xff]
    %v3239 = vld [vmem:[#allocation12 + $0xf0] sm:$0xff]
    %v3240 = vld [vmem:[#allocation12 + $0xf8] sm:$0xff]
    %v3273 = vunpack.c.l.b16 %v3209
    %v3274 = vunpack.c.h.b16 %v3209
    %v3275 = vunpack.c.l.b16 %v3210
    %v3276 = vunpack.c.h.b16 %v3210
    %v3277 = vunpack.c.l.b16 %v3211
    %v3278 = vunpack.c.h.b16 %v3211
    %v3279 = vunpack.c.l.b16 %v3212
    %v3280 = vunpack.c.h.b16 %v3212
    %v3281 = vunpack.c.l.b16 %v3213
    %v3282 = vunpack.c.h.b16 %v3213
    %v3283 = vunpack.c.l.b16 %v3214
    %v3284 = vunpack.c.h.b16 %v3214
    %v3285 = vunpack.c.l.b16 %v3215
    %v3286 = vunpack.c.h.b16 %v3215
    %v3287 = vunpack.c.l.b16 %v3216
    %v3288 = vunpack.c.h.b16 %v3216
    %v3289 = vunpack.c.l.b16 %v3217
    %v3290 = vunpack.c.h.b16 %v3217
    %v3291 = vunpack.c.l.b16 %v3218
    %v3292 = vunpack.c.h.b16 %v3218
    %v3293 = vunpack.c.l.b16 %v3219
    %v3294 = vunpack.c.h.b16 %v3219
    %v3295 = vunpack.c.l.b16 %v3220
    %v3296 = vunpack.c.h.b16 %v3220
    %v3297 = vunpack.c.l.b16 %v3221
    %v3298 = vunpack.c.h.b16 %v3221
    %v3299 = vunpack.c.l.b16 %v3222
    %v3300 = vunpack.c.h.b16 %v3222
    %v3301 = vunpack.c.l.b16 %v3223
    %v3302 = vunpack.c.h.b16 %v3223
    %v3303 = vunpack.c.l.b16 %v3224
    %v3304 = vunpack.c.h.b16 %v3224
    %v3305 = vunpack.c.l.b16 %v3225
    %v3306 = vunpack.c.h.b16 %v3225
    %v3307 = vunpack.c.l.b16 %v3226
    %v3308 = vunpack.c.h.b16 %v3226
    %v3309 = vunpack.c.l.b16 %v3227
    %v3310 = vunpack.c.h.b16 %v3227
    %v3311 = vunpack.c.l.b16 %v3228
    %v3312 = vunpack.c.h.b16 %v3228
    %v3313 = vunpack.c.l.b16 %v3229
    %v3314 = vunpack.c.h.b16 %v3229
    %v3315 = vunpack.c.l.b16 %v3230
    %v3316 = vunpack.c.h.b16 %v3230
    %v3317 = vunpack.c.l.b16 %v3231
    %v3318 = vunpack.c.h.b16 %v3231
    %v3319 = vunpack.c.l.b16 %v3232
    %v3320 = vunpack.c.h.b16 %v3232
    %v3321 = vunpack.c.l.b16 %v3233
    %v3322 = vunpack.c.h.b16 %v3233
    %v3323 = vunpack.c.l.b16 %v3234
    %v3324 = vunpack.c.h.b16 %v3234
    %v3325 = vunpack.c.l.b16 %v3235
    %v3326 = vunpack.c.h.b16 %v3235
    %v3327 = vunpack.c.l.b16 %v3236
    %v3328 = vunpack.c.h.b16 %v3236
    %v3329 = vunpack.c.l.b16 %v3237
    %v3330 = vunpack.c.h.b16 %v3237
    %v3331 = vunpack.c.l.b16 %v3238
    %v3332 = vunpack.c.h.b16 %v3238
    %v3333 = vunpack.c.l.b16 %v3239
    %v3334 = vunpack.c.h.b16 %v3239
    %v3335 = vunpack.c.l.b16 %v3240
    %v3336 = vunpack.c.h.b16 %v3240
    %v3337 = vpack.c.b16 %v3277, %v3273
    %v3338 = vpack.c.b16 %v3278, %v3274
    %v3339 = vpack.c.b16 %v3279, %v3275
    %v3340 = vpack.c.b16 %v3280, %v3276
    %v3341 = vpack.c.b16 %v3285, %v3281
    %v3342 = vpack.c.b16 %v3286, %v3282
    %v3343 = vpack.c.b16 %v3287, %v3283
    %v3344 = vpack.c.b16 %v3288, %v3284
    %v3345 = vpack.c.b16 %v3293, %v3289
    %v3346 = vpack.c.b16 %v3294, %v3290
    %v3347 = vpack.c.b16 %v3295, %v3291
    %v3348 = vpack.c.b16 %v3296, %v3292
    %v3349 = vpack.c.b16 %v3301, %v3297
    %v3350 = vpack.c.b16 %v3302, %v3298
    %v3351 = vpack.c.b16 %v3303, %v3299
    %v3352 = vpack.c.b16 %v3304, %v3300
    %v3353 = vpack.c.b16 %v3309, %v3305
    %v3354 = vpack.c.b16 %v3310, %v3306
    %v3355 = vpack.c.b16 %v3311, %v3307
    %v3356 = vpack.c.b16 %v3312, %v3308
    %v3357 = vpack.c.b16 %v3317, %v3313
    %v3358 = vpack.c.b16 %v3318, %v3314
    %v3359 = vpack.c.b16 %v3319, %v3315
    %v3360 = vpack.c.b16 %v3320, %v3316
    %v3361 = vpack.c.b16 %v3325, %v3321
    %v3362 = vpack.c.b16 %v3326, %v3322
    %v3363 = vpack.c.b16 %v3327, %v3323
    %v3364 = vpack.c.b16 %v3328, %v3324
    %v3365 = vpack.c.b16 %v3333, %v3329
    %v3366 = vpack.c.b16 %v3334, %v3330
    %v3367 = vpack.c.b16 %v3335, %v3331
    %v3368 = vpack.c.b16 %v3336, %v3332
    %3401 = vmatprep.subr.bf16.mxu0 %v3366
    %3402 = vmatpush1.bf16.msra.mxu0 %v3365
    %3403 = vmatprep.subr.bf16.mxu0 %v3362
    %3404 = vmatpush1.bf16.msra.mxu0 %v3361
    %3405 = vmatprep.subr.bf16.mxu0 %v3358
    %3406 = vmatpush1.bf16.msra.mxu0 %v3357
    %3407 = vmatprep.subr.bf16.mxu0 %v3354
    %3408 = vmatpush1.bf16.msra.mxu0 %v3353
    %3409 = vmatprep.subr.bf16.mxu0 %v3350
    %3410 = vmatpush1.bf16.msra.mxu0 %v3349
    %3411 = vmatprep.subr.bf16.mxu0 %v3346
    %3412 = vmatpush1.bf16.msra.mxu0 %v3345
    %3413 = vmatprep.subr.bf16.mxu0 %v3342
    %3414 = vmatpush1.bf16.msra.mxu0 %v3341
    %3415 = vmatprep.subr.bf16.mxu0 %v3338
    %3416 = vmatpush1.bf16.msra.mxu0 %v3337
    %3417 = vmatprep.subr.bf16.mxu0 0
    %3418 = vmatpush2.bf16.msra.mxu0 0
    %3419 = vmatprep.subr.bf16.mxu0 0
    %3420 = vmatpush2.bf16.msra.mxu0 0
    %3421 = vmatprep.subr.bf16.mxu0 0
    %3422 = vmatpush2.bf16.msra.mxu0 0
    %3423 = vmatprep.subr.bf16.mxu0 0
    %3424 = vmatpush2.bf16.msra.mxu0 0
    %3425 = vmatprep.subr.bf16.mxu0 0
    %3426 = vmatpush2.bf16.msra.mxu0 0
    %3427 = vmatprep.subr.bf16.mxu0 0
    %3428 = vmatpush2.bf16.msra.mxu0 0
    %3429 = vmatprep.subr.bf16.mxu0 0
    %3430 = vmatpush2.bf16.msra.mxu0 0
    %3431 = vmatprep.subr.bf16.mxu0 0
    %3432 = vmatpush2.bf16.msra.mxu0 0
    %3433 = vmatprep.mubr.bf16.mxu0 0
    %3434 = vmatmul.mubr.bf16.gmra.mxu0 %v2706
    %v3435 = vpop.f32.mrf.mxu0
    %v3436 = vadd.f32 0.0, %v3435
    %v3437 = vpop.f32.mrf.mxu0
    %v3438 = vadd.f32 0.0, %v3437
    %v3439 = vpop.f32.mrf.mxu0
    %v3440 = vpop.f32.mrf.mxu0
    %3441 = vdwg.mxu0
    %3442 = vmatprep.subr.bf16.mxu0 %v3368
    %3443 = vmatpush1.bf16.msra.mxu0 %v3367
    %3444 = vmatprep.subr.bf16.mxu0 %v3364
    %3445 = vmatpush1.bf16.msra.mxu0 %v3363
    %3446 = vmatprep.subr.bf16.mxu0 %v3360
    %3447 = vmatpush1.bf16.msra.mxu0 %v3359
    %3448 = vmatprep.subr.bf16.mxu0 %v3356
    %3449 = vmatpush1.bf16.msra.mxu0 %v3355
    %3450 = vmatprep.subr.bf16.mxu0 %v3352
    %3451 = vmatpush1.bf16.msra.mxu0 %v3351
    %3452 = vmatprep.subr.bf16.mxu0 %v3348
    %3453 = vmatpush1.bf16.msra.mxu0 %v3347
    %3454 = vmatprep.subr.bf16.mxu0 %v3344
    %3455 = vmatpush1.bf16.msra.mxu0 %v3343
    %3456 = vmatprep.subr.bf16.mxu0 %v3340
    %3457 = vmatpush1.bf16.msra.mxu0 %v3339
    %3458 = vmatprep.subr.bf16.mxu0 0
    %3459 = vmatpush2.bf16.msra.mxu0 0
    %3460 = vmatprep.subr.bf16.mxu0 0
    %3461 = vmatpush2.bf16.msra.mxu0 0
    %3462 = vmatprep.subr.bf16.mxu0 0
    %3463 = vmatpush2.bf16.msra.mxu0 0
    %3464 = vmatprep.subr.bf16.mxu0 0
    %3465 = vmatpush2.bf16.msra.mxu0 0
    %3466 = vmatprep.subr.bf16.mxu0 0
    %3467 = vmatpush2.bf16.msra.mxu0 0
    %3468 = vmatprep.subr.bf16.mxu0 0
    %3469 = vmatpush2.bf16.msra.mxu0 0
    %3470 = vmatprep.subr.bf16.mxu0 0
    %3471 = vmatpush2.bf16.msra.mxu0 0
    %3472 = vmatprep.subr.bf16.mxu0 0
    %3473 = vmatpush2.bf16.msra.mxu0 0
    %3474 = vmatprep.mubr.bf16.mxu0 0
    %3475 = vmatmul.mubr.bf16.gmra.mxu0 %v2706
    %v3476 = vpop.f32.mrf.mxu0
    %v3477 = vadd.f32 0.0, %v3476
    %v3478 = vpop.f32.mrf.mxu0
    %v3479 = vadd.f32 0.0, %v3478
    %v3480 = vpop.f32.mrf.mxu0
    %v3481 = vpop.f32.mrf.mxu0
    %3482 = vdwg.mxu0
    %v3483 = vadd.f32 %v3205, %v3436
    %v3484 = vadd.f32 %v3206, %v3438
    %v3485 = vadd.f32 %v3207, %v3477
    %v3486 = vadd.f32 %v3208, %v3479
    %v3487 = vmul.f32 %v3483, 0.5
    %v3488 = vtanh.pop %v3487
    %v3489 = vmul.f32 %v3488, 0.5
    %v3490 = vadd.f32 %v3489, 0.5
    %v3491 = vmul.f32 %v3484, 0.5
    %v3492 = vtanh.pop %v3491
    %v3493 = vmul.f32 %v3492, 0.5
    %v3494 = vadd.f32 %v3493, 0.5
    %v3495 = vtanh.pop %v3485
    %v3496 = vmul.f32 %v3486, 0.5
    %v3497 = vtanh.pop %v3496
    %v3498 = vmul.f32 %v3497, 0.5
    %v3499 = vadd.f32 %v3498, 0.5
    %v3500 = vmul.f32 %v3494, %v2703
    %v3501 = vmul.f32 %v3490, %v3495
    %v3502 = vadd.f32 %v3500, %v3501
    %v3503 = vtanh.pop %v3502
    %v3504 = vmul.f32 %v3499, %v3503
    %v3505 = vpack.c.bf16 %v3504, %v3504
    %v3506 = vld [vmem:[#allocation3] sm:$0xff]
    %v3507 = vld [vmem:[#allocation3 + $0x8] sm:$0xff]
    %v3508 = vld [vmem:[#allocation3 + $0x10] sm:$0xff]
    %v3509 = vld [vmem:[#allocation3 + $0x18] sm:$0xff]
    %v3510 = vld [vmem:[#allocation15] sm:$0xff]
    %v3511 = vld [vmem:[#allocation15 + $0x8] sm:$0xff]
    %v3512 = vld [vmem:[#allocation15 + $0x10] sm:$0xff]
    %v3513 = vld [vmem:[#allocation15 + $0x18] sm:$0xff]
    %v3514 = vld [vmem:[#allocation15 + $0x20] sm:$0xff]
    %v3515 = vld [vmem:[#allocation15 + $0x28] sm:$0xff]
    %v3516 = vld [vmem:[#allocation15 + $0x30] sm:$0xff]
    %v3517 = vld [vmem:[#allocation15 + $0x38] sm:$0xff]
    %v3518 = vld [vmem:[#allocation15 + $0x40] sm:$0xff]
    %v3519 = vld [vmem:[#allocation15 + $0x48] sm:$0xff]
    %v3520 = vld [vmem:[#allocation15 + $0x50] sm:$0xff]
    %v3521 = vld [vmem:[#allocation15 + $0x58] sm:$0xff]
    %v3522 = vld [vmem:[#allocation15 + $0x60] sm:$0xff]
    %v3523 = vld [vmem:[#allocation15 + $0x68] sm:$0xff]
    %v3524 = vld [vmem:[#allocation15 + $0x70] sm:$0xff]
    %v3525 = vld [vmem:[#allocation15 + $0x78] sm:$0xff]
    %v3526 = vld [vmem:[#allocation15 + $0x80] sm:$0xff]
    %v3527 = vld [vmem:[#allocation15 + $0x88] sm:$0xff]
    %v3528 = vld [vmem:[#allocation15 + $0x90] sm:$0xff]
    %v3529 = vld [vmem:[#allocation15 + $0x98] sm:$0xff]
    %v3530 = vld [vmem:[#allocation15 + $0xa0] sm:$0xff]
    %v3531 = vld [vmem:[#allocation15 + $0xa8] sm:$0xff]
    %v3532 = vld [vmem:[#allocation15 + $0xb0] sm:$0xff]
    %v3533 = vld [vmem:[#allocation15 + $0xb8] sm:$0xff]
    %v3534 = vld [vmem:[#allocation15 + $0xc0] sm:$0xff]
    %v3535 = vld [vmem:[#allocation15 + $0xc8] sm:$0xff]
    %v3536 = vld [vmem:[#allocation15 + $0xd0] sm:$0xff]
    %v3537 = vld [vmem:[#allocation15 + $0xd8] sm:$0xff]
    %v3538 = vld [vmem:[#allocation15 + $0xe0] sm:$0xff]
    %v3539 = vld [vmem:[#allocation15 + $0xe8] sm:$0xff]
    %v3540 = vld [vmem:[#allocation15 + $0xf0] sm:$0xff]
    %v3541 = vld [vmem:[#allocation15 + $0xf8] sm:$0xff]
    %v3542 = vld [vmem:[#allocation15 + $0x100] sm:$0xff]
    %v3543 = vld [vmem:[#allocation15 + $0x108] sm:$0xff]
    %v3544 = vld [vmem:[#allocation15 + $0x110] sm:$0xff]
    %v3545 = vld [vmem:[#allocation15 + $0x118] sm:$0xff]
    %v3546 = vld [vmem:[#allocation15 + $0x120] sm:$0xff]
    %v3547 = vld [vmem:[#allocation15 + $0x128] sm:$0xff]
    %v3548 = vld [vmem:[#allocation15 + $0x130] sm:$0xff]
    %v3549 = vld [vmem:[#allocation15 + $0x138] sm:$0xff]
    %v3550 = vld [vmem:[#allocation15 + $0x140] sm:$0xff]
    %v3551 = vld [vmem:[#allocation15 + $0x148] sm:$0xff]
    %v3552 = vld [vmem:[#allocation15 + $0x150] sm:$0xff]
    %v3553 = vld [vmem:[#allocation15 + $0x158] sm:$0xff]
    %v3554 = vld [vmem:[#allocation15 + $0x160] sm:$0xff]
    %v3555 = vld [vmem:[#allocation15 + $0x168] sm:$0xff]
    %v3556 = vld [vmem:[#allocation15 + $0x170] sm:$0xff]
    %v3557 = vld [vmem:[#allocation15 + $0x178] sm:$0xff]
    %v3558 = vld [vmem:[#allocation15 + $0x180] sm:$0xff]
    %v3559 = vld [vmem:[#allocation15 + $0x188] sm:$0xff]
    %v3560 = vld [vmem:[#allocation15 + $0x190] sm:$0xff]
    %v3561 = vld [vmem:[#allocation15 + $0x198] sm:$0xff]
    %v3562 = vld [vmem:[#allocation15 + $0x1a0] sm:$0xff]
    %v3563 = vld [vmem:[#allocation15 + $0x1a8] sm:$0xff]
    %v3564 = vld [vmem:[#allocation15 + $0x1b0] sm:$0xff]
    %v3565 = vld [vmem:[#allocation15 + $0x1b8] sm:$0xff]
    %v3566 = vld [vmem:[#allocation15 + $0x1c0] sm:$0xff]
    %v3567 = vld [vmem:[#allocation15 + $0x1c8] sm:$0xff]
    %v3568 = vld [vmem:[#allocation15 + $0x1d0] sm:$0xff]
    %v3569 = vld [vmem:[#allocation15 + $0x1d8] sm:$0xff]
    %v3570 = vld [vmem:[#allocation15 + $0x1e0] sm:$0xff]
    %v3571 = vld [vmem:[#allocation15 + $0x1e8] sm:$0xff]
    %v3572 = vld [vmem:[#allocation15 + $0x1f0] sm:$0xff]
    %v3573 = vld [vmem:[#allocation15 + $0x1f8] sm:$0xff]
    %v3638 = vunpack.c.l.b16 %v3510
    %v3639 = vunpack.c.h.b16 %v3510
    %v3640 = vunpack.c.l.b16 %v3511
    %v3641 = vunpack.c.h.b16 %v3511
    %v3642 = vunpack.c.l.b16 %v3512
    %v3643 = vunpack.c.h.b16 %v3512
    %v3644 = vunpack.c.l.b16 %v3513
    %v3645 = vunpack.c.h.b16 %v3513
    %v3646 = vunpack.c.l.b16 %v3514
    %v3647 = vunpack.c.h.b16 %v3514
    %v3648 = vunpack.c.l.b16 %v3515
    %v3649 = vunpack.c.h.b16 %v3515
    %v3650 = vunpack.c.l.b16 %v3516
    %v3651 = vunpack.c.h.b16 %v3516
    %v3652 = vunpack.c.l.b16 %v3517
    %v3653 = vunpack.c.h.b16 %v3517
    %v3654 = vunpack.c.l.b16 %v3518
    %v3655 = vunpack.c.h.b16 %v3518
    %v3656 = vunpack.c.l.b16 %v3519
    %v3657 = vunpack.c.h.b16 %v3519
    %v3658 = vunpack.c.l.b16 %v3520
    %v3659 = vunpack.c.h.b16 %v3520
    %v3660 = vunpack.c.l.b16 %v3521
    %v3661 = vunpack.c.h.b16 %v3521
    %v3662 = vunpack.c.l.b16 %v3522
    %v3663 = vunpack.c.h.b16 %v3522
    %v3664 = vunpack.c.l.b16 %v3523
    %v3665 = vunpack.c.h.b16 %v3523
    %v3666 = vunpack.c.l.b16 %v3524
    %v3667 = vunpack.c.h.b16 %v3524
    %v3668 = vunpack.c.l.b16 %v3525
    %v3669 = vunpack.c.h.b16 %v3525
    %v3670 = vunpack.c.l.b16 %v3526
    %v3671 = vunpack.c.h.b16 %v3526
    %v3672 = vunpack.c.l.b16 %v3527
    %v3673 = vunpack.c.h.b16 %v3527
    %v3674 = vunpack.c.l.b16 %v3528
    %v3675 = vunpack.c.h.b16 %v3528
    %v3676 = vunpack.c.l.b16 %v3529
    %v3677 = vunpack.c.h.b16 %v3529
    %v3678 = vunpack.c.l.b16 %v3530
    %v3679 = vunpack.c.h.b16 %v3530
    %v3680 = vunpack.c.l.b16 %v3531
    %v3681 = vunpack.c.h.b16 %v3531
    %v3682 = vunpack.c.l.b16 %v3532
    %v3683 = vunpack.c.h.b16 %v3532
    %v3684 = vunpack.c.l.b16 %v3533
    %v3685 = vunpack.c.h.b16 %v3533
    %v3686 = vunpack.c.l.b16 %v3534
    %v3687 = vunpack.c.h.b16 %v3534
    %v3688 = vunpack.c.l.b16 %v3535
    %v3689 = vunpack.c.h.b16 %v3535
    %v3690 = vunpack.c.l.b16 %v3536
    %v3691 = vunpack.c.h.b16 %v3536
    %v3692 = vunpack.c.l.b16 %v3537
    %v3693 = vunpack.c.h.b16 %v3537
    %v3694 = vunpack.c.l.b16 %v3538
    %v3695 = vunpack.c.h.b16 %v3538
    %v3696 = vunpack.c.l.b16 %v3539
    %v3697 = vunpack.c.h.b16 %v3539
    %v3698 = vunpack.c.l.b16 %v3540
    %v3699 = vunpack.c.h.b16 %v3540
    %v3700 = vunpack.c.l.b16 %v3541
    %v3701 = vunpack.c.h.b16 %v3541
    %v3702 = vunpack.c.l.b16 %v3542
    %v3703 = vunpack.c.h.b16 %v3542
    %v3704 = vunpack.c.l.b16 %v3543
    %v3705 = vunpack.c.h.b16 %v3543
    %v3706 = vunpack.c.l.b16 %v3544
    %v3707 = vunpack.c.h.b16 %v3544
    %v3708 = vunpack.c.l.b16 %v3545
    %v3709 = vunpack.c.h.b16 %v3545
    %v3710 = vunpack.c.l.b16 %v3546
    %v3711 = vunpack.c.h.b16 %v3546
    %v3712 = vunpack.c.l.b16 %v3547
    %v3713 = vunpack.c.h.b16 %v3547
    %v3714 = vunpack.c.l.b16 %v3548
    %v3715 = vunpack.c.h.b16 %v3548
    %v3716 = vunpack.c.l.b16 %v3549
    %v3717 = vunpack.c.h.b16 %v3549
    %v3718 = vunpack.c.l.b16 %v3550
    %v3719 = vunpack.c.h.b16 %v3550
    %v3720 = vunpack.c.l.b16 %v3551
    %v3721 = vunpack.c.h.b16 %v3551
    %v3722 = vunpack.c.l.b16 %v3552
    %v3723 = vunpack.c.h.b16 %v3552
    %v3724 = vunpack.c.l.b16 %v3553
    %v3725 = vunpack.c.h.b16 %v3553
    %v3726 = vunpack.c.l.b16 %v3554
    %v3727 = vunpack.c.h.b16 %v3554
    %v3728 = vunpack.c.l.b16 %v3555
    %v3729 = vunpack.c.h.b16 %v3555
    %v3730 = vunpack.c.l.b16 %v3556
    %v3731 = vunpack.c.h.b16 %v3556
    %v3732 = vunpack.c.l.b16 %v3557
    %v3733 = vunpack.c.h.b16 %v3557
    %v3734 = vunpack.c.l.b16 %v3558
    %v3735 = vunpack.c.h.b16 %v3558
    %v3736 = vunpack.c.l.b16 %v3559
    %v3737 = vunpack.c.h.b16 %v3559
    %v3738 = vunpack.c.l.b16 %v3560
    %v3739 = vunpack.c.h.b16 %v3560
    %v3740 = vunpack.c.l.b16 %v3561
    %v3741 = vunpack.c.h.b16 %v3561
    %v3742 = vunpack.c.l.b16 %v3562
    %v3743 = vunpack.c.h.b16 %v3562
    %v3744 = vunpack.c.l.b16 %v3563
    %v3745 = vunpack.c.h.b16 %v3563
    %v3746 = vunpack.c.l.b16 %v3564
    %v3747 = vunpack.c.h.b16 %v3564
    %v3748 = vunpack.c.l.b16 %v3565
    %v3749 = vunpack.c.h.b16 %v3565
    %v3750 = vunpack.c.l.b16 %v3566
    %v3751 = vunpack.c.h.b16 %v3566
    %v3752 = vunpack.c.l.b16 %v3567
    %v3753 = vunpack.c.h.b16 %v3567
    %v3754 = vunpack.c.l.b16 %v3568
    %v3755 = vunpack.c.h.b16 %v3568
    %v3756 = vunpack.c.l.b16 %v3569
    %v3757 = vunpack.c.h.b16 %v3569
    %v3758 = vunpack.c.l.b16 %v3570
    %v3759 = vunpack.c.h.b16 %v3570
    %v3760 = vunpack.c.l.b16 %v3571
    %v3761 = vunpack.c.h.b16 %v3571
    %v3762 = vunpack.c.l.b16 %v3572
    %v3763 = vunpack.c.h.b16 %v3572
    %v3764 = vunpack.c.l.b16 %v3573
    %v3765 = vunpack.c.h.b16 %v3573
    %v3766 = vpack.c.b16 %v3642, %v3638
    %v3767 = vpack.c.b16 %v3643, %v3639
    %v3768 = vpack.c.b16 %v3644, %v3640
    %v3769 = vpack.c.b16 %v3645, %v3641
    %v3770 = vpack.c.b16 %v3650, %v3646
    %v3771 = vpack.c.b16 %v3651, %v3647
    %v3772 = vpack.c.b16 %v3652, %v3648
    %v3773 = vpack.c.b16 %v3653, %v3649
    %v3774 = vpack.c.b16 %v3658, %v3654
    %v3775 = vpack.c.b16 %v3659, %v3655
    %v3776 = vpack.c.b16 %v3660, %v3656
    %v3777 = vpack.c.b16 %v3661, %v3657
    %v3778 = vpack.c.b16 %v3666, %v3662
    %v3779 = vpack.c.b16 %v3667, %v3663
    %v3780 = vpack.c.b16 %v3668, %v3664
    %v3781 = vpack.c.b16 %v3669, %v3665
    %v3782 = vpack.c.b16 %v3674, %v3670
    %v3783 = vpack.c.b16 %v3675, %v3671
    %v3784 = vpack.c.b16 %v3676, %v3672
    %v3785 = vpack.c.b16 %v3677, %v3673
    %v3786 = vpack.c.b16 %v3682, %v3678
    %v3787 = vpack.c.b16 %v3683, %v3679
    %v3788 = vpack.c.b16 %v3684, %v3680
    %v3789 = vpack.c.b16 %v3685, %v3681
    %v3790 = vpack.c.b16 %v3690, %v3686
    %v3791 = vpack.c.b16 %v3691, %v3687
    %v3792 = vpack.c.b16 %v3692, %v3688
    %v3793 = vpack.c.b16 %v3693, %v3689
    %v3794 = vpack.c.b16 %v3698, %v3694
    %v3795 = vpack.c.b16 %v3699, %v3695
    %v3796 = vpack.c.b16 %v3700, %v3696
    %v3797 = vpack.c.b16 %v3701, %v3697
    %v3798 = vpack.c.b16 %v3706, %v3702
    %v3799 = vpack.c.b16 %v3707, %v3703
    %v3800 = vpack.c.b16 %v3708, %v3704
    %v3801 = vpack.c.b16 %v3709, %v3705
    %v3802 = vpack.c.b16 %v3714, %v3710
    %v3803 = vpack.c.b16 %v3715, %v3711
    %v3804 = vpack.c.b16 %v3716, %v3712
    %v3805 = vpack.c.b16 %v3717, %v3713
    %v3806 = vpack.c.b16 %v3722, %v3718
    %v3807 = vpack.c.b16 %v3723, %v3719
    %v3808 = vpack.c.b16 %v3724, %v3720
    %v3809 = vpack.c.b16 %v3725, %v3721
    %v3810 = vpack.c.b16 %v3730, %v3726
    %v3811 = vpack.c.b16 %v3731, %v3727
    %v3812 = vpack.c.b16 %v3732, %v3728
    %v3813 = vpack.c.b16 %v3733, %v3729
    %v3814 = vpack.c.b16 %v3738, %v3734
    %v3815 = vpack.c.b16 %v3739, %v3735
    %v3816 = vpack.c.b16 %v3740, %v3736
    %v3817 = vpack.c.b16 %v3741, %v3737
    %v3818 = vpack.c.b16 %v3746, %v3742
    %v3819 = vpack.c.b16 %v3747, %v3743
    %v3820 = vpack.c.b16 %v3748, %v3744
    %v3821 = vpack.c.b16 %v3749, %v3745
    %v3822 = vpack.c.b16 %v3754, %v3750
    %v3823 = vpack.c.b16 %v3755, %v3751
    %v3824 = vpack.c.b16 %v3756, %v3752
    %v3825 = vpack.c.b16 %v3757, %v3753
    %v3826 = vpack.c.b16 %v3762, %v3758
    %v3827 = vpack.c.b16 %v3763, %v3759
    %v3828 = vpack.c.b16 %v3764, %v3760
    %v3829 = vpack.c.b16 %v3765, %v3761
    %3894 = vmatprep.subr.bf16.mxu0 %v3795
    %3895 = vmatpush1.bf16.msra.mxu0 %v3794
    %3896 = vmatprep.subr.bf16.mxu0 %v3791
    %3897 = vmatpush1.bf16.msra.mxu0 %v3790
    %3898 = vmatprep.subr.bf16.mxu0 %v3787
    %3899 = vmatpush1.bf16.msra.mxu0 %v3786
    %3900 = vmatprep.subr.bf16.mxu0 %v3783
    %3901 = vmatpush1.bf16.msra.mxu0 %v3782
    %3902 = vmatprep.subr.bf16.mxu0 %v3779
    %3903 = vmatpush1.bf16.msra.mxu0 %v3778
    %3904 = vmatprep.subr.bf16.mxu0 %v3775
    %3905 = vmatpush1.bf16.msra.mxu0 %v3774
    %3906 = vmatprep.subr.bf16.mxu0 %v3771
    %3907 = vmatpush1.bf16.msra.mxu0 %v3770
    %3908 = vmatprep.subr.bf16.mxu0 %v3767
    %3909 = vmatpush1.bf16.msra.mxu0 %v3766
    %3910 = vmatprep.subr.bf16.mxu0 %v3827
    %3911 = vmatpush2.bf16.msra.mxu0 %v3826
    %3912 = vmatprep.subr.bf16.mxu0 %v3823
    %3913 = vmatpush2.bf16.msra.mxu0 %v3822
    %3914 = vmatprep.subr.bf16.mxu0 %v3819
    %3915 = vmatpush2.bf16.msra.mxu0 %v3818
    %3916 = vmatprep.subr.bf16.mxu0 %v3815
    %3917 = vmatpush2.bf16.msra.mxu0 %v3814
    %3918 = vmatprep.subr.bf16.mxu0 %v3811
    %3919 = vmatpush2.bf16.msra.mxu0 %v3810
    %3920 = vmatprep.subr.bf16.mxu0 %v3807
    %3921 = vmatpush2.bf16.msra.mxu0 %v3806
    %3922 = vmatprep.subr.bf16.mxu0 %v3803
    %3923 = vmatpush2.bf16.msra.mxu0 %v3802
    %3924 = vmatprep.subr.bf16.mxu0 %v3799
    %3925 = vmatpush2.bf16.msra.mxu0 %v3798
    %3926 = vmatprep.mubr.bf16.mxu0 %v3199
    %3927 = vmatmul.mubr.bf16.gmra.mxu0 %v3505
    %v3928 = vpop.f32.mrf.mxu0
    %v3929 = vadd.f32 0.0, %v3928
    %v3930 = vpop.f32.mrf.mxu0
    %v3931 = vadd.f32 0.0, %v3930
    %v3932 = vpop.f32.mrf.mxu0
    %v3933 = vpop.f32.mrf.mxu0
    %3934 = vdwg.mxu0
    %3935 = vmatprep.subr.bf16.mxu0 %v3797
    %3936 = vmatpush1.bf16.msra.mxu0 %v3796
    %3937 = vmatprep.subr.bf16.mxu0 %v3793
    %3938 = vmatpush1.bf16.msra.mxu0 %v3792
    %3939 = vmatprep.subr.bf16.mxu0 %v3789
    %3940 = vmatpush1.bf16.msra.mxu0 %v3788
    %3941 = vmatprep.subr.bf16.mxu0 %v3785
    %3942 = vmatpush1.bf16.msra.mxu0 %v3784
    %3943 = vmatprep.subr.bf16.mxu0 %v3781
    %3944 = vmatpush1.bf16.msra.mxu0 %v3780
    %3945 = vmatprep.subr.bf16.mxu0 %v3777
    %3946 = vmatpush1.bf16.msra.mxu0 %v3776
    %3947 = vmatprep.subr.bf16.mxu0 %v3773
    %3948 = vmatpush1.bf16.msra.mxu0 %v3772
    %3949 = vmatprep.subr.bf16.mxu0 %v3769
    %3950 = vmatpush1.bf16.msra.mxu0 %v3768
    %3951 = vmatprep.subr.bf16.mxu0 %v3829
    %3952 = vmatpush2.bf16.msra.mxu0 %v3828
    %3953 = vmatprep.subr.bf16.mxu0 %v3825
    %3954 = vmatpush2.bf16.msra.mxu0 %v3824
    %3955 = vmatprep.subr.bf16.mxu0 %v3821
    %3956 = vmatpush2.bf16.msra.mxu0 %v3820
    %3957 = vmatprep.subr.bf16.mxu0 %v3817
    %3958 = vmatpush2.bf16.msra.mxu0 %v3816
    %3959 = vmatprep.subr.bf16.mxu0 %v3813
    %3960 = vmatpush2.bf16.msra.mxu0 %v3812
    %3961 = vmatprep.subr.bf16.mxu0 %v3809
    %3962 = vmatpush2.bf16.msra.mxu0 %v3808
    %3963 = vmatprep.subr.bf16.mxu0 %v3805
    %3964 = vmatpush2.bf16.msra.mxu0 %v3804
    %3965 = vmatprep.subr.bf16.mxu0 %v3801
    %3966 = vmatpush2.bf16.msra.mxu0 %v3800
    %3967 = vmatprep.mubr.bf16.mxu0 %v3199
    %3968 = vmatmul.mubr.bf16.gmra.mxu0 %v3505
    %v3969 = vpop.f32.mrf.mxu0
    %v3970 = vadd.f32 0.0, %v3969
    %v3971 = vpop.f32.mrf.mxu0
    %v3972 = vadd.f32 0.0, %v3971
    %v3973 = vpop.f32.mrf.mxu0
    %v3974 = vpop.f32.mrf.mxu0
    %3975 = vdwg.mxu0
    %v3976 = vadd.f32 %v3506, %v3929
    %v3977 = vadd.f32 %v3507, %v3931
    %v3978 = vadd.f32 %v3508, %v3970
    %v3979 = vadd.f32 %v3509, %v3972
    %v3980 = vmul.f32 %v3976, 0.5
    %v3981 = vtanh.pop %v3980
    %v3982 = vmul.f32 %v3981, 0.5
    %v3983 = vadd.f32 %v3982, 0.5
    %v3984 = vmul.f32 %v3977, 0.5
    %v3985 = vtanh.pop %v3984
    %v3986 = vmul.f32 %v3985, 0.5
    %v3987 = vadd.f32 %v3986, 0.5
    %v3988 = vtanh.pop %v3978
    %v3989 = vmul.f32 %v3979, 0.5
    %v3990 = vtanh.pop %v3989
    %v3991 = vmul.f32 %v3990, 0.5
    %v3992 = vadd.f32 %v3991, 0.5
    %v3993 = vmul.f32 %v3987, %v3196
    %v3994 = vmul.f32 %v3983, %v3988
    %v3995 = vadd.f32 %v3993, %v3994
    %v3996 = vtanh.pop %v3995
    %v3997 = vmul.f32 %v3992, %v3996
    %v3998 = vpack.c.bf16 %v3997, %v3997
    %s3999 = scalar_lea.vmem [#allocation16], 12
    %4000 = vst [vmem:[%s3999] sm:$0xf] %v3998
    %s4001 = smul.u32 4, 4
    %s4002 = smul.addr %s4001, 8
    %s4003 = scalar_lea.vmem [#allocation2], %s4002
    %v4004 = vld [vmem:[%s4003] sm:$0xff]
    %v4005 = vld [vmem:[%s4003 + $0x8] sm:$0xff]
    %v4006 = vld [vmem:[%s4003 + $0x10] sm:$0xff]
    %v4007 = vld [vmem:[%s4003 + $0x18] sm:$0xff]
    %v4008 = vld [vmem:[#allocation12] sm:$0xff]
    %v4009 = vld [vmem:[#allocation12 + $0x8] sm:$0xff]
    %v4010 = vld [vmem:[#allocation12 + $0x10] sm:$0xff]
    %v4011 = vld [vmem:[#allocation12 + $0x18] sm:$0xff]
    %v4012 = vld [vmem:[#allocation12 + $0x20] sm:$0xff]
    %v4013 = vld [vmem:[#allocation12 + $0x28] sm:$0xff]
    %v4014 = vld [vmem:[#allocation12 + $0x30] sm:$0xff]
    %v4015 = vld [vmem:[#allocation12 + $0x38] sm:$0xff]
    %v4016 = vld [vmem:[#allocation12 + $0x40] sm:$0xff]
    %v4017 = vld [vmem:[#allocation12 + $0x48] sm:$0xff]
    %v4018 = vld [vmem:[#allocation12 + $0x50] sm:$0xff]
    %v4019 = vld [vmem:[#allocation12 + $0x58] sm:$0xff]
    %v4020 = vld [vmem:[#allocation12 + $0x60] sm:$0xff]
    %v4021 = vld [vmem:[#allocation12 + $0x68] sm:$0xff]
    %v4022 = vld [vmem:[#allocation12 + $0x70] sm:$0xff]
    %v4023 = vld [vmem:[#allocation12 + $0x78] sm:$0xff]
    %v4024 = vld [vmem:[#allocation12 + $0x80] sm:$0xff]
    %v4025 = vld [vmem:[#allocation12 + $0x88] sm:$0xff]
    %v4026 = vld [vmem:[#allocation12 + $0x90] sm:$0xff]
    %v4027 = vld [vmem:[#allocation12 + $0x98] sm:$0xff]
    %v4028 = vld [vmem:[#allocation12 + $0xa0] sm:$0xff]
    %v4029 = vld [vmem:[#allocation12 + $0xa8] sm:$0xff]
    %v4030 = vld [vmem:[#allocation12 + $0xb0] sm:$0xff]
    %v4031 = vld [vmem:[#allocation12 + $0xb8] sm:$0xff]
    %v4032 = vld [vmem:[#allocation12 + $0xc0] sm:$0xff]
    %v4033 = vld [vmem:[#allocation12 + $0xc8] sm:$0xff]
    %v4034 = vld [vmem:[#allocation12 + $0xd0] sm:$0xff]
    %v4035 = vld [vmem:[#allocation12 + $0xd8] sm:$0xff]
    %v4036 = vld [vmem:[#allocation12 + $0xe0] sm:$0xff]
    %v4037 = vld [vmem:[#allocation12 + $0xe8] sm:$0xff]
    %v4038 = vld [vmem:[#allocation12 + $0xf0] sm:$0xff]
    %v4039 = vld [vmem:[#allocation12 + $0xf8] sm:$0xff]
    %v4072 = vunpack.c.l.b16 %v4008
    %v4073 = vunpack.c.h.b16 %v4008
    %v4074 = vunpack.c.l.b16 %v4009
    %v4075 = vunpack.c.h.b16 %v4009
    %v4076 = vunpack.c.l.b16 %v4010
    %v4077 = vunpack.c.h.b16 %v4010
    %v4078 = vunpack.c.l.b16 %v4011
    %v4079 = vunpack.c.h.b16 %v4011
    %v4080 = vunpack.c.l.b16 %v4012
    %v4081 = vunpack.c.h.b16 %v4012
    %v4082 = vunpack.c.l.b16 %v4013
    %v4083 = vunpack.c.h.b16 %v4013
    %v4084 = vunpack.c.l.b16 %v4014
    %v4085 = vunpack.c.h.b16 %v4014
    %v4086 = vunpack.c.l.b16 %v4015
    %v4087 = vunpack.c.h.b16 %v4015
    %v4088 = vunpack.c.l.b16 %v4016
    %v4089 = vunpack.c.h.b16 %v4016
    %v4090 = vunpack.c.l.b16 %v4017
    %v4091 = vunpack.c.h.b16 %v4017
    %v4092 = vunpack.c.l.b16 %v4018
    %v4093 = vunpack.c.h.b16 %v4018
    %v4094 = vunpack.c.l.b16 %v4019
    %v4095 = vunpack.c.h.b16 %v4019
    %v4096 = vunpack.c.l.b16 %v4020
    %v4097 = vunpack.c.h.b16 %v4020
    %v4098 = vunpack.c.l.b16 %v4021
    %v4099 = vunpack.c.h.b16 %v4021
    %v4100 = vunpack.c.l.b16 %v4022
    %v4101 = vunpack.c.h.b16 %v4022
    %v4102 = vunpack.c.l.b16 %v4023
    %v4103 = vunpack.c.h.b16 %v4023
    %v4104 = vunpack.c.l.b16 %v4024
    %v4105 = vunpack.c.h.b16 %v4024
    %v4106 = vunpack.c.l.b16 %v4025
    %v4107 = vunpack.c.h.b16 %v4025
    %v4108 = vunpack.c.l.b16 %v4026
    %v4109 = vunpack.c.h.b16 %v4026
    %v4110 = vunpack.c.l.b16 %v4027
    %v4111 = vunpack.c.h.b16 %v4027
    %v4112 = vunpack.c.l.b16 %v4028
    %v4113 = vunpack.c.h.b16 %v4028
    %v4114 = vunpack.c.l.b16 %v4029
    %v4115 = vunpack.c.h.b16 %v4029
    %v4116 = vunpack.c.l.b16 %v4030
    %v4117 = vunpack.c.h.b16 %v4030
    %v4118 = vunpack.c.l.b16 %v4031
    %v4119 = vunpack.c.h.b16 %v4031
    %v4120 = vunpack.c.l.b16 %v4032
    %v4121 = vunpack.c.h.b16 %v4032
    %v4122 = vunpack.c.l.b16 %v4033
    %v4123 = vunpack.c.h.b16 %v4033
    %v4124 = vunpack.c.l.b16 %v4034
    %v4125 = vunpack.c.h.b16 %v4034
    %v4126 = vunpack.c.l.b16 %v4035
    %v4127 = vunpack.c.h.b16 %v4035
    %v4128 = vunpack.c.l.b16 %v4036
    %v4129 = vunpack.c.h.b16 %v4036
    %v4130 = vunpack.c.l.b16 %v4037
    %v4131 = vunpack.c.h.b16 %v4037
    %v4132 = vunpack.c.l.b16 %v4038
    %v4133 = vunpack.c.h.b16 %v4038
    %v4134 = vunpack.c.l.b16 %v4039
    %v4135 = vunpack.c.h.b16 %v4039
    %v4136 = vpack.c.b16 %v4076, %v4072
    %v4137 = vpack.c.b16 %v4077, %v4073
    %v4138 = vpack.c.b16 %v4078, %v4074
    %v4139 = vpack.c.b16 %v4079, %v4075
    %v4140 = vpack.c.b16 %v4084, %v4080
    %v4141 = vpack.c.b16 %v4085, %v4081
    %v4142 = vpack.c.b16 %v4086, %v4082
    %v4143 = vpack.c.b16 %v4087, %v4083
    %v4144 = vpack.c.b16 %v4092, %v4088
    %v4145 = vpack.c.b16 %v4093, %v4089
    %v4146 = vpack.c.b16 %v4094, %v4090
    %v4147 = vpack.c.b16 %v4095, %v4091
    %v4148 = vpack.c.b16 %v4100, %v4096
    %v4149 = vpack.c.b16 %v4101, %v4097
    %v4150 = vpack.c.b16 %v4102, %v4098
    %v4151 = vpack.c.b16 %v4103, %v4099
    %v4152 = vpack.c.b16 %v4108, %v4104
    %v4153 = vpack.c.b16 %v4109, %v4105
    %v4154 = vpack.c.b16 %v4110, %v4106
    %v4155 = vpack.c.b16 %v4111, %v4107
    %v4156 = vpack.c.b16 %v4116, %v4112
    %v4157 = vpack.c.b16 %v4117, %v4113
    %v4158 = vpack.c.b16 %v4118, %v4114
    %v4159 = vpack.c.b16 %v4119, %v4115
    %v4160 = vpack.c.b16 %v4124, %v4120
    %v4161 = vpack.c.b16 %v4125, %v4121
    %v4162 = vpack.c.b16 %v4126, %v4122
    %v4163 = vpack.c.b16 %v4127, %v4123
    %v4164 = vpack.c.b16 %v4132, %v4128
    %v4165 = vpack.c.b16 %v4133, %v4129
    %v4166 = vpack.c.b16 %v4134, %v4130
    %v4167 = vpack.c.b16 %v4135, %v4131
    %4200 = vmatprep.subr.bf16.mxu0 %v4165
    %4201 = vmatpush1.bf16.msra.mxu0 %v4164
    %4202 = vmatprep.subr.bf16.mxu0 %v4161
    %4203 = vmatpush1.bf16.msra.mxu0 %v4160
    %4204 = vmatprep.subr.bf16.mxu0 %v4157
    %4205 = vmatpush1.bf16.msra.mxu0 %v4156
    %4206 = vmatprep.subr.bf16.mxu0 %v4153
    %4207 = vmatpush1.bf16.msra.mxu0 %v4152
    %4208 = vmatprep.subr.bf16.mxu0 %v4149
    %4209 = vmatpush1.bf16.msra.mxu0 %v4148
    %4210 = vmatprep.subr.bf16.mxu0 %v4145
    %4211 = vmatpush1.bf16.msra.mxu0 %v4144
    %4212 = vmatprep.subr.bf16.mxu0 %v4141
    %4213 = vmatpush1.bf16.msra.mxu0 %v4140
    %4214 = vmatprep.subr.bf16.mxu0 %v4137
    %4215 = vmatpush1.bf16.msra.mxu0 %v4136
    %4216 = vmatprep.subr.bf16.mxu0 0
    %4217 = vmatpush2.bf16.msra.mxu0 0
    %4218 = vmatprep.subr.bf16.mxu0 0
    %4219 = vmatpush2.bf16.msra.mxu0 0
    %4220 = vmatprep.subr.bf16.mxu0 0
    %4221 = vmatpush2.bf16.msra.mxu0 0
    %4222 = vmatprep.subr.bf16.mxu0 0
    %4223 = vmatpush2.bf16.msra.mxu0 0
    %4224 = vmatprep.subr.bf16.mxu0 0
    %4225 = vmatpush2.bf16.msra.mxu0 0
    %4226 = vmatprep.subr.bf16.mxu0 0
    %4227 = vmatpush2.bf16.msra.mxu0 0
    %4228 = vmatprep.subr.bf16.mxu0 0
    %4229 = vmatpush2.bf16.msra.mxu0 0
    %4230 = vmatprep.subr.bf16.mxu0 0
    %4231 = vmatpush2.bf16.msra.mxu0 0
    %4232 = vmatprep.mubr.bf16.mxu0 0
    %4233 = vmatmul.mubr.bf16.gmra.mxu0 %v3505
    %v4234 = vpop.f32.mrf.mxu0
    %v4235 = vadd.f32 0.0, %v4234
    %v4236 = vpop.f32.mrf.mxu0
    %v4237 = vadd.f32 0.0, %v4236
    %v4238 = vpop.f32.mrf.mxu0
    %v4239 = vpop.f32.mrf.mxu0
    %4240 = vdwg.mxu0
    %4241 = vmatprep.subr.bf16.mxu0 %v4167
    %4242 = vmatpush1.bf16.msra.mxu0 %v4166
    %4243 = vmatprep.subr.bf16.mxu0 %v4163
    %4244 = vmatpush1.bf16.msra.mxu0 %v4162
    %4245 = vmatprep.subr.bf16.mxu0 %v4159
    %4246 = vmatpush1.bf16.msra.mxu0 %v4158
    %4247 = vmatprep.subr.bf16.mxu0 %v4155
    %4248 = vmatpush1.bf16.msra.mxu0 %v4154
    %4249 = vmatprep.subr.bf16.mxu0 %v4151
    %4250 = vmatpush1.bf16.msra.mxu0 %v4150
    %4251 = vmatprep.subr.bf16.mxu0 %v4147
    %4252 = vmatpush1.bf16.msra.mxu0 %v4146
    %4253 = vmatprep.subr.bf16.mxu0 %v4143
    %4254 = vmatpush1.bf16.msra.mxu0 %v4142
    %4255 = vmatprep.subr.bf16.mxu0 %v4139
    %4256 = vmatpush1.bf16.msra.mxu0 %v4138
    %4257 = vmatprep.subr.bf16.mxu0 0
    %4258 = vmatpush2.bf16.msra.mxu0 0
    %4259 = vmatprep.subr.bf16.mxu0 0
    %4260 = vmatpush2.bf16.msra.mxu0 0
    %4261 = vmatprep.subr.bf16.mxu0 0
    %4262 = vmatpush2.bf16.msra.mxu0 0
    %4263 = vmatprep.subr.bf16.mxu0 0
    %4264 = vmatpush2.bf16.msra.mxu0 0
    %4265 = vmatprep.subr.bf16.mxu0 0
    %4266 = vmatpush2.bf16.msra.mxu0 0
    %4267 = vmatprep.subr.bf16.mxu0 0
    %4268 = vmatpush2.bf16.msra.mxu0 0
    %4269 = vmatprep.subr.bf16.mxu0 0
    %4270 = vmatpush2.bf16.msra.mxu0 0
    %4271 = vmatprep.subr.bf16.mxu0 0
    %4272 = vmatpush2.bf16.msra.mxu0 0
    %4273 = vmatprep.mubr.bf16.mxu0 0
    %4274 = vmatmul.mubr.bf16.gmra.mxu0 %v3505
    %v4275 = vpop.f32.mrf.mxu0
    %v4276 = vadd.f32 0.0, %v4275
    %v4277 = vpop.f32.mrf.mxu0
    %v4278 = vadd.f32 0.0, %v4277
    %v4279 = vpop.f32.mrf.mxu0
    %v4280 = vpop.f32.mrf.mxu0
    %4281 = vdwg.mxu0
    %v4282 = vadd.f32 %v4004, %v4235
    %v4283 = vadd.f32 %v4005, %v4237
    %v4284 = vadd.f32 %v4006, %v4276
    %v4285 = vadd.f32 %v4007, %v4278
    %v4286 = vmul.f32 %v4282, 0.5
    %v4287 = vtanh.pop %v4286
    %v4288 = vmul.f32 %v4287, 0.5
    %v4289 = vadd.f32 %v4288, 0.5
    %v4290 = vmul.f32 %v4283, 0.5
    %v4291 = vtanh.pop %v4290
    %v4292 = vmul.f32 %v4291, 0.5
    %v4293 = vadd.f32 %v4292, 0.5
    %v4294 = vtanh.pop %v4284
    %v4295 = vmul.f32 %v4285, 0.5
    %v4296 = vtanh.pop %v4295
    %v4297 = vmul.f32 %v4296, 0.5
    %v4298 = vadd.f32 %v4297, 0.5
    %v4299 = vmul.f32 %v4293, %v3502
    %v4300 = vmul.f32 %v4289, %v4294
    %v4301 = vadd.f32 %v4299, %v4300
    %v4302 = vtanh.pop %v4301
    %v4303 = vmul.f32 %v4298, %v4302
    %v4304 = vpack.c.bf16 %v4303, %v4303
    %v4305 = vld [vmem:[#allocation3] sm:$0xff]
    %v4306 = vld [vmem:[#allocation3 + $0x8] sm:$0xff]
    %v4307 = vld [vmem:[#allocation3 + $0x10] sm:$0xff]
    %v4308 = vld [vmem:[#allocation3 + $0x18] sm:$0xff]
    %v4309 = vld [vmem:[#allocation15] sm:$0xff]
    %v4310 = vld [vmem:[#allocation15 + $0x8] sm:$0xff]
    %v4311 = vld [vmem:[#allocation15 + $0x10] sm:$0xff]
    %v4312 = vld [vmem:[#allocation15 + $0x18] sm:$0xff]
    %v4313 = vld [vmem:[#allocation15 + $0x20] sm:$0xff]
    %v4314 = vld [vmem:[#allocation15 + $0x28] sm:$0xff]
    %v4315 = vld [vmem:[#allocation15 + $0x30] sm:$0xff]
    %v4316 = vld [vmem:[#allocation15 + $0x38] sm:$0xff]
    %v4317 = vld [vmem:[#allocation15 + $0x40] sm:$0xff]
    %v4318 = vld [vmem:[#allocation15 + $0x48] sm:$0xff]
    %v4319 = vld [vmem:[#allocation15 + $0x50] sm:$0xff]
    %v4320 = vld [vmem:[#allocation15 + $0x58] sm:$0xff]
    %v4321 = vld [vmem:[#allocation15 + $0x60] sm:$0xff]
    %v4322 = vld [vmem:[#allocation15 + $0x68] sm:$0xff]
    %v4323 = vld [vmem:[#allocation15 + $0x70] sm:$0xff]
    %v4324 = vld [vmem:[#allocation15 + $0x78] sm:$0xff]
    %v4325 = vld [vmem:[#allocation15 + $0x80] sm:$0xff]
    %v4326 = vld [vmem:[#allocation15 + $0x88] sm:$0xff]
    %v4327 = vld [vmem:[#allocation15 + $0x90] sm:$0xff]
    %v4328 = vld [vmem:[#allocation15 + $0x98] sm:$0xff]
    %v4329 = vld [vmem:[#allocation15 + $0xa0] sm:$0xff]
    %v4330 = vld [vmem:[#allocation15 + $0xa8] sm:$0xff]
    %v4331 = vld [vmem:[#allocation15 + $0xb0] sm:$0xff]
    %v4332 = vld [vmem:[#allocation15 + $0xb8] sm:$0xff]
    %v4333 = vld [vmem:[#allocation15 + $0xc0] sm:$0xff]
    %v4334 = vld [vmem:[#allocation15 + $0xc8] sm:$0xff]
    %v4335 = vld [vmem:[#allocation15 + $0xd0] sm:$0xff]
    %v4336 = vld [vmem:[#allocation15 + $0xd8] sm:$0xff]
    %v4337 = vld [vmem:[#allocation15 + $0xe0] sm:$0xff]
    %v4338 = vld [vmem:[#allocation15 + $0xe8] sm:$0xff]
    %v4339 = vld [vmem:[#allocation15 + $0xf0] sm:$0xff]
    %v4340 = vld [vmem:[#allocation15 + $0xf8] sm:$0xff]
    %v4341 = vld [vmem:[#allocation15 + $0x100] sm:$0xff]
    %v4342 = vld [vmem:[#allocation15 + $0x108] sm:$0xff]
    %v4343 = vld [vmem:[#allocation15 + $0x110] sm:$0xff]
    %v4344 = vld [vmem:[#allocation15 + $0x118] sm:$0xff]
    %v4345 = vld [vmem:[#allocation15 + $0x120] sm:$0xff]
    %v4346 = vld [vmem:[#allocation15 + $0x128] sm:$0xff]
    %v4347 = vld [vmem:[#allocation15 + $0x130] sm:$0xff]
    %v4348 = vld [vmem:[#allocation15 + $0x138] sm:$0xff]
    %v4349 = vld [vmem:[#allocation15 + $0x140] sm:$0xff]
    %v4350 = vld [vmem:[#allocation15 + $0x148] sm:$0xff]
    %v4351 = vld [vmem:[#allocation15 + $0x150] sm:$0xff]
    %v4352 = vld [vmem:[#allocation15 + $0x158] sm:$0xff]
    %v4353 = vld [vmem:[#allocation15 + $0x160] sm:$0xff]
    %v4354 = vld [vmem:[#allocation15 + $0x168] sm:$0xff]
    %v4355 = vld [vmem:[#allocation15 + $0x170] sm:$0xff]
    %v4356 = vld [vmem:[#allocation15 + $0x178] sm:$0xff]
    %v4357 = vld [vmem:[#allocation15 + $0x180] sm:$0xff]
    %v4358 = vld [vmem:[#allocation15 + $0x188] sm:$0xff]
    %v4359 = vld [vmem:[#allocation15 + $0x190] sm:$0xff]
    %v4360 = vld [vmem:[#allocation15 + $0x198] sm:$0xff]
    %v4361 = vld [vmem:[#allocation15 + $0x1a0] sm:$0xff]
    %v4362 = vld [vmem:[#allocation15 + $0x1a8] sm:$0xff]
    %v4363 = vld [vmem:[#allocation15 + $0x1b0] sm:$0xff]
    %v4364 = vld [vmem:[#allocation15 + $0x1b8] sm:$0xff]
    %v4365 = vld [vmem:[#allocation15 + $0x1c0] sm:$0xff]
    %v4366 = vld [vmem:[#allocation15 + $0x1c8] sm:$0xff]
    %v4367 = vld [vmem:[#allocation15 + $0x1d0] sm:$0xff]
    %v4368 = vld [vmem:[#allocation15 + $0x1d8] sm:$0xff]
    %v4369 = vld [vmem:[#allocation15 + $0x1e0] sm:$0xff]
    %v4370 = vld [vmem:[#allocation15 + $0x1e8] sm:$0xff]
    %v4371 = vld [vmem:[#allocation15 + $0x1f0] sm:$0xff]
    %v4372 = vld [vmem:[#allocation15 + $0x1f8] sm:$0xff]
    %v4437 = vunpack.c.l.b16 %v4309
    %v4438 = vunpack.c.h.b16 %v4309
    %v4439 = vunpack.c.l.b16 %v4310
    %v4440 = vunpack.c.h.b16 %v4310
    %v4441 = vunpack.c.l.b16 %v4311
    %v4442 = vunpack.c.h.b16 %v4311
    %v4443 = vunpack.c.l.b16 %v4312
    %v4444 = vunpack.c.h.b16 %v4312
    %v4445 = vunpack.c.l.b16 %v4313
    %v4446 = vunpack.c.h.b16 %v4313
    %v4447 = vunpack.c.l.b16 %v4314
    %v4448 = vunpack.c.h.b16 %v4314
    %v4449 = vunpack.c.l.b16 %v4315
    %v4450 = vunpack.c.h.b16 %v4315
    %v4451 = vunpack.c.l.b16 %v4316
    %v4452 = vunpack.c.h.b16 %v4316
    %v4453 = vunpack.c.l.b16 %v4317
    %v4454 = vunpack.c.h.b16 %v4317
    %v4455 = vunpack.c.l.b16 %v4318
    %v4456 = vunpack.c.h.b16 %v4318
    %v4457 = vunpack.c.l.b16 %v4319
    %v4458 = vunpack.c.h.b16 %v4319
    %v4459 = vunpack.c.l.b16 %v4320
    %v4460 = vunpack.c.h.b16 %v4320
    %v4461 = vunpack.c.l.b16 %v4321
    %v4462 = vunpack.c.h.b16 %v4321
    %v4463 = vunpack.c.l.b16 %v4322
    %v4464 = vunpack.c.h.b16 %v4322
    %v4465 = vunpack.c.l.b16 %v4323
    %v4466 = vunpack.c.h.b16 %v4323
    %v4467 = vunpack.c.l.b16 %v4324
    %v4468 = vunpack.c.h.b16 %v4324
    %v4469 = vunpack.c.l.b16 %v4325
    %v4470 = vunpack.c.h.b16 %v4325
    %v4471 = vunpack.c.l.b16 %v4326
    %v4472 = vunpack.c.h.b16 %v4326
    %v4473 = vunpack.c.l.b16 %v4327
    %v4474 = vunpack.c.h.b16 %v4327
    %v4475 = vunpack.c.l.b16 %v4328
    %v4476 = vunpack.c.h.b16 %v4328
    %v4477 = vunpack.c.l.b16 %v4329
    %v4478 = vunpack.c.h.b16 %v4329
    %v4479 = vunpack.c.l.b16 %v4330
    %v4480 = vunpack.c.h.b16 %v4330
    %v4481 = vunpack.c.l.b16 %v4331
    %v4482 = vunpack.c.h.b16 %v4331
    %v4483 = vunpack.c.l.b16 %v4332
    %v4484 = vunpack.c.h.b16 %v4332
    %v4485 = vunpack.c.l.b16 %v4333
    %v4486 = vunpack.c.h.b16 %v4333
    %v4487 = vunpack.c.l.b16 %v4334
    %v4488 = vunpack.c.h.b16 %v4334
    %v4489 = vunpack.c.l.b16 %v4335
    %v4490 = vunpack.c.h.b16 %v4335
    %v4491 = vunpack.c.l.b16 %v4336
    %v4492 = vunpack.c.h.b16 %v4336
    %v4493 = vunpack.c.l.b16 %v4337
    %v4494 = vunpack.c.h.b16 %v4337
    %v4495 = vunpack.c.l.b16 %v4338
    %v4496 = vunpack.c.h.b16 %v4338
    %v4497 = vunpack.c.l.b16 %v4339
    %v4498 = vunpack.c.h.b16 %v4339
    %v4499 = vunpack.c.l.b16 %v4340
    %v4500 = vunpack.c.h.b16 %v4340
    %v4501 = vunpack.c.l.b16 %v4341
    %v4502 = vunpack.c.h.b16 %v4341
    %v4503 = vunpack.c.l.b16 %v4342
    %v4504 = vunpack.c.h.b16 %v4342
    %v4505 = vunpack.c.l.b16 %v4343
    %v4506 = vunpack.c.h.b16 %v4343
    %v4507 = vunpack.c.l.b16 %v4344
    %v4508 = vunpack.c.h.b16 %v4344
    %v4509 = vunpack.c.l.b16 %v4345
    %v4510 = vunpack.c.h.b16 %v4345
    %v4511 = vunpack.c.l.b16 %v4346
    %v4512 = vunpack.c.h.b16 %v4346
    %v4513 = vunpack.c.l.b16 %v4347
    %v4514 = vunpack.c.h.b16 %v4347
    %v4515 = vunpack.c.l.b16 %v4348
    %v4516 = vunpack.c.h.b16 %v4348
    %v4517 = vunpack.c.l.b16 %v4349
    %v4518 = vunpack.c.h.b16 %v4349
    %v4519 = vunpack.c.l.b16 %v4350
    %v4520 = vunpack.c.h.b16 %v4350
    %v4521 = vunpack.c.l.b16 %v4351
    %v4522 = vunpack.c.h.b16 %v4351
    %v4523 = vunpack.c.l.b16 %v4352
    %v4524 = vunpack.c.h.b16 %v4352
    %v4525 = vunpack.c.l.b16 %v4353
    %v4526 = vunpack.c.h.b16 %v4353
    %v4527 = vunpack.c.l.b16 %v4354
    %v4528 = vunpack.c.h.b16 %v4354
    %v4529 = vunpack.c.l.b16 %v4355
    %v4530 = vunpack.c.h.b16 %v4355
    %v4531 = vunpack.c.l.b16 %v4356
    %v4532 = vunpack.c.h.b16 %v4356
    %v4533 = vunpack.c.l.b16 %v4357
    %v4534 = vunpack.c.h.b16 %v4357
    %v4535 = vunpack.c.l.b16 %v4358
    %v4536 = vunpack.c.h.b16 %v4358
    %v4537 = vunpack.c.l.b16 %v4359
    %v4538 = vunpack.c.h.b16 %v4359
    %v4539 = vunpack.c.l.b16 %v4360
    %v4540 = vunpack.c.h.b16 %v4360
    %v4541 = vunpack.c.l.b16 %v4361
    %v4542 = vunpack.c.h.b16 %v4361
    %v4543 = vunpack.c.l.b16 %v4362
    %v4544 = vunpack.c.h.b16 %v4362
    %v4545 = vunpack.c.l.b16 %v4363
    %v4546 = vunpack.c.h.b16 %v4363
    %v4547 = vunpack.c.l.b16 %v4364
    %v4548 = vunpack.c.h.b16 %v4364
    %v4549 = vunpack.c.l.b16 %v4365
    %v4550 = vunpack.c.h.b16 %v4365
    %v4551 = vunpack.c.l.b16 %v4366
    %v4552 = vunpack.c.h.b16 %v4366
    %v4553 = vunpack.c.l.b16 %v4367
    %v4554 = vunpack.c.h.b16 %v4367
    %v4555 = vunpack.c.l.b16 %v4368
    %v4556 = vunpack.c.h.b16 %v4368
    %v4557 = vunpack.c.l.b16 %v4369
    %v4558 = vunpack.c.h.b16 %v4369
    %v4559 = vunpack.c.l.b16 %v4370
    %v4560 = vunpack.c.h.b16 %v4370
    %v4561 = vunpack.c.l.b16 %v4371
    %v4562 = vunpack.c.h.b16 %v4371
    %v4563 = vunpack.c.l.b16 %v4372
    %v4564 = vunpack.c.h.b16 %v4372
    %v4565 = vpack.c.b16 %v4441, %v4437
    %v4566 = vpack.c.b16 %v4442, %v4438
    %v4567 = vpack.c.b16 %v4443, %v4439
    %v4568 = vpack.c.b16 %v4444, %v4440
    %v4569 = vpack.c.b16 %v4449, %v4445
    %v4570 = vpack.c.b16 %v4450, %v4446
    %v4571 = vpack.c.b16 %v4451, %v4447
    %v4572 = vpack.c.b16 %v4452, %v4448
    %v4573 = vpack.c.b16 %v4457, %v4453
    %v4574 = vpack.c.b16 %v4458, %v4454
    %v4575 = vpack.c.b16 %v4459, %v4455
    %v4576 = vpack.c.b16 %v4460, %v4456
    %v4577 = vpack.c.b16 %v4465, %v4461
    %v4578 = vpack.c.b16 %v4466, %v4462
    %v4579 = vpack.c.b16 %v4467, %v4463
    %v4580 = vpack.c.b16 %v4468, %v4464
    %v4581 = vpack.c.b16 %v4473, %v4469
    %v4582 = vpack.c.b16 %v4474, %v4470
    %v4583 = vpack.c.b16 %v4475, %v4471
    %v4584 = vpack.c.b16 %v4476, %v4472
    %v4585 = vpack.c.b16 %v4481, %v4477
    %v4586 = vpack.c.b16 %v4482, %v4478
    %v4587 = vpack.c.b16 %v4483, %v4479
    %v4588 = vpack.c.b16 %v4484, %v4480
    %v4589 = vpack.c.b16 %v4489, %v4485
    %v4590 = vpack.c.b16 %v4490, %v4486
    %v4591 = vpack.c.b16 %v4491, %v4487
    %v4592 = vpack.c.b16 %v4492, %v4488
    %v4593 = vpack.c.b16 %v4497, %v4493
    %v4594 = vpack.c.b16 %v4498, %v4494
    %v4595 = vpack.c.b16 %v4499, %v4495
    %v4596 = vpack.c.b16 %v4500, %v4496
    %v4597 = vpack.c.b16 %v4505, %v4501
    %v4598 = vpack.c.b16 %v4506, %v4502
    %v4599 = vpack.c.b16 %v4507, %v4503
    %v4600 = vpack.c.b16 %v4508, %v4504
    %v4601 = vpack.c.b16 %v4513, %v4509
    %v4602 = vpack.c.b16 %v4514, %v4510
    %v4603 = vpack.c.b16 %v4515, %v4511
    %v4604 = vpack.c.b16 %v4516, %v4512
    %v4605 = vpack.c.b16 %v4521, %v4517
    %v4606 = vpack.c.b16 %v4522, %v4518
    %v4607 = vpack.c.b16 %v4523, %v4519
    %v4608 = vpack.c.b16 %v4524, %v4520
    %v4609 = vpack.c.b16 %v4529, %v4525
    %v4610 = vpack.c.b16 %v4530, %v4526
    %v4611 = vpack.c.b16 %v4531, %v4527
    %v4612 = vpack.c.b16 %v4532, %v4528
    %v4613 = vpack.c.b16 %v4537, %v4533
    %v4614 = vpack.c.b16 %v4538, %v4534
    %v4615 = vpack.c.b16 %v4539, %v4535
    %v4616 = vpack.c.b16 %v4540, %v4536
    %v4617 = vpack.c.b16 %v4545, %v4541
    %v4618 = vpack.c.b16 %v4546, %v4542
    %v4619 = vpack.c.b16 %v4547, %v4543
    %v4620 = vpack.c.b16 %v4548, %v4544
    %v4621 = vpack.c.b16 %v4553, %v4549
    %v4622 = vpack.c.b16 %v4554, %v4550
    %v4623 = vpack.c.b16 %v4555, %v4551
    %v4624 = vpack.c.b16 %v4556, %v4552
    %v4625 = vpack.c.b16 %v4561, %v4557
    %v4626 = vpack.c.b16 %v4562, %v4558
    %v4627 = vpack.c.b16 %v4563, %v4559
    %v4628 = vpack.c.b16 %v4564, %v4560
    %4693 = vmatprep.subr.bf16.mxu0 %v4594
    %4694 = vmatpush1.bf16.msra.mxu0 %v4593
    %4695 = vmatprep.subr.bf16.mxu0 %v4590
    %4696 = vmatpush1.bf16.msra.mxu0 %v4589
    %4697 = vmatprep.subr.bf16.mxu0 %v4586
    %4698 = vmatpush1.bf16.msra.mxu0 %v4585
    %4699 = vmatprep.subr.bf16.mxu0 %v4582
    %4700 = vmatpush1.bf16.msra.mxu0 %v4581
    %4701 = vmatprep.subr.bf16.mxu0 %v4578
    %4702 = vmatpush1.bf16.msra.mxu0 %v4577
    %4703 = vmatprep.subr.bf16.mxu0 %v4574
    %4704 = vmatpush1.bf16.msra.mxu0 %v4573
    %4705 = vmatprep.subr.bf16.mxu0 %v4570
    %4706 = vmatpush1.bf16.msra.mxu0 %v4569
    %4707 = vmatprep.subr.bf16.mxu0 %v4566
    %4708 = vmatpush1.bf16.msra.mxu0 %v4565
    %4709 = vmatprep.subr.bf16.mxu0 %v4626
    %4710 = vmatpush2.bf16.msra.mxu0 %v4625
    %4711 = vmatprep.subr.bf16.mxu0 %v4622
    %4712 = vmatpush2.bf16.msra.mxu0 %v4621
    %4713 = vmatprep.subr.bf16.mxu0 %v4618
    %4714 = vmatpush2.bf16.msra.mxu0 %v4617
    %4715 = vmatprep.subr.bf16.mxu0 %v4614
    %4716 = vmatpush2.bf16.msra.mxu0 %v4613
    %4717 = vmatprep.subr.bf16.mxu0 %v4610
    %4718 = vmatpush2.bf16.msra.mxu0 %v4609
    %4719 = vmatprep.subr.bf16.mxu0 %v4606
    %4720 = vmatpush2.bf16.msra.mxu0 %v4605
    %4721 = vmatprep.subr.bf16.mxu0 %v4602
    %4722 = vmatpush2.bf16.msra.mxu0 %v4601
    %4723 = vmatprep.subr.bf16.mxu0 %v4598
    %4724 = vmatpush2.bf16.msra.mxu0 %v4597
    %4725 = vmatprep.mubr.bf16.mxu0 %v3998
    %4726 = vmatmul.mubr.bf16.gmra.mxu0 %v4304
    %v4727 = vpop.f32.mrf.mxu0
    %v4728 = vadd.f32 0.0, %v4727
    %v4729 = vpop.f32.mrf.mxu0
    %v4730 = vadd.f32 0.0, %v4729
    %v4731 = vpop.f32.mrf.mxu0
    %v4732 = vpop.f32.mrf.mxu0
    %4733 = vdwg.mxu0
    %4734 = vmatprep.subr.bf16.mxu0 %v4596
    %4735 = vmatpush1.bf16.msra.mxu0 %v4595
    %4736 = vmatprep.subr.bf16.mxu0 %v4592
    %4737 = vmatpush1.bf16.msra.mxu0 %v4591
    %4738 = vmatprep.subr.bf16.mxu0 %v4588
    %4739 = vmatpush1.bf16.msra.mxu0 %v4587
    %4740 = vmatprep.subr.bf16.mxu0 %v4584
    %4741 = vmatpush1.bf16.msra.mxu0 %v4583
    %4742 = vmatprep.subr.bf16.mxu0 %v4580
    %4743 = vmatpush1.bf16.msra.mxu0 %v4579
    %4744 = vmatprep.subr.bf16.mxu0 %v4576
    %4745 = vmatpush1.bf16.msra.mxu0 %v4575
    %4746 = vmatprep.subr.bf16.mxu0 %v4572
    %4747 = vmatpush1.bf16.msra.mxu0 %v4571
    %4748 = vmatprep.subr.bf16.mxu0 %v4568
    %4749 = vmatpush1.bf16.msra.mxu0 %v4567
    %4750 = vmatprep.subr.bf16.mxu0 %v4628
    %4751 = vmatpush2.bf16.msra.mxu0 %v4627
    %4752 = vmatprep.subr.bf16.mxu0 %v4624
    %4753 = vmatpush2.bf16.msra.mxu0 %v4623
    %4754 = vmatprep.subr.bf16.mxu0 %v4620
    %4755 = vmatpush2.bf16.msra.mxu0 %v4619
    %4756 = vmatprep.subr.bf16.mxu0 %v4616
    %4757 = vmatpush2.bf16.msra.mxu0 %v4615
    %4758 = vmatprep.subr.bf16.mxu0 %v4612
    %4759 = vmatpush2.bf16.msra.mxu0 %v4611
    %4760 = vmatprep.subr.bf16.mxu0 %v4608
    %4761 = vmatpush2.bf16.msra.mxu0 %v4607
    %4762 = vmatprep.subr.bf16.mxu0 %v4604
    %4763 = vmatpush2.bf16.msra.mxu0 %v4603
    %4764 = vmatprep.subr.bf16.mxu0 %v4600
    %4765 = vmatpush2.bf16.msra.mxu0 %v4599
    %4766 = vmatprep.mubr.bf16.mxu0 %v3998
    %4767 = vmatmul.mubr.bf16.gmra.mxu0 %v4304
    %v4768 = vpop.f32.mrf.mxu0
    %v4769 = vadd.f32 0.0, %v4768
    %v4770 = vpop.f32.mrf.mxu0
    %v4771 = vadd.f32 0.0, %v4770
    %v4772 = vpop.f32.mrf.mxu0
    %v4773 = vpop.f32.mrf.mxu0
    %4774 = vdwg.mxu0
    %v4775 = vadd.f32 %v4305, %v4728
    %v4776 = vadd.f32 %v4306, %v4730
    %v4777 = vadd.f32 %v4307, %v4769
    %v4778 = vadd.f32 %v4308, %v4771
    %v4779 = vmul.f32 %v4775, 0.5
    %v4780 = vtanh.pop %v4779
    %v4781 = vmul.f32 %v4780, 0.5
    %v4782 = vadd.f32 %v4781, 0.5
    %v4783 = vmul.f32 %v4776, 0.5
    %v4784 = vtanh.pop %v4783
    %v4785 = vmul.f32 %v4784, 0.5
    %v4786 = vadd.f32 %v4785, 0.5
    %v4787 = vtanh.pop %v4777
    %v4788 = vmul.f32 %v4778, 0.5
    %v4789 = vtanh.pop %v4788
    %v4790 = vmul.f32 %v4789, 0.5
    %v4791 = vadd.f32 %v4790, 0.5
    %v4792 = vmul.f32 %v4786, %v3995
    %v4793 = vmul.f32 %v4782, %v4787
    %v4794 = vadd.f32 %v4792, %v4793
    %v4795 = vtanh.pop %v4794
    %v4796 = vmul.f32 %v4791, %v4795
    %v4797 = vpack.c.bf16 %v4796, %v4796
    %s4798 = scalar_lea.vmem [#allocation16], 16
    %4799 = vst [vmem:[%s4798] sm:$0xf] %v4797
    %s4800 = smul.u32 5, 4
    %s4801 = smul.addr %s4800, 8
    %s4802 = scalar_lea.vmem [#allocation2], %s4801
    %v4803 = vld [vmem:[%s4802] sm:$0xff]
    %v4804 = vld [vmem:[%s4802 + $0x8] sm:$0xff]
    %v4805 = vld [vmem:[%s4802 + $0x10] sm:$0xff]
    %v4806 = vld [vmem:[%s4802 + $0x18] sm:$0xff]
    %v4807 = vld [vmem:[#allocation12] sm:$0xff]
    %v4808 = vld [vmem:[#allocation12 + $0x8] sm:$0xff]
    %v4809 = vld [vmem:[#allocation12 + $0x10] sm:$0xff]
    %v4810 = vld [vmem:[#allocation12 + $0x18] sm:$0xff]
    %v4811 = vld [vmem:[#allocation12 + $0x20] sm:$0xff]
    %v4812 = vld [vmem:[#allocation12 + $0x28] sm:$0xff]
    %v4813 = vld [vmem:[#allocation12 + $0x30] sm:$0xff]
    %v4814 = vld [vmem:[#allocation12 + $0x38] sm:$0xff]
    %v4815 = vld [vmem:[#allocation12 + $0x40] sm:$0xff]
    %v4816 = vld [vmem:[#allocation12 + $0x48] sm:$0xff]
    %v4817 = vld [vmem:[#allocation12 + $0x50] sm:$0xff]
    %v4818 = vld [vmem:[#allocation12 + $0x58] sm:$0xff]
    %v4819 = vld [vmem:[#allocation12 + $0x60] sm:$0xff]
    %v4820 = vld [vmem:[#allocation12 + $0x68] sm:$0xff]
    %v4821 = vld [vmem:[#allocation12 + $0x70] sm:$0xff]
    %v4822 = vld [vmem:[#allocation12 + $0x78] sm:$0xff]
    %v4823 = vld [vmem:[#allocation12 + $0x80] sm:$0xff]
    %v4824 = vld [vmem:[#allocation12 + $0x88] sm:$0xff]
    %v4825 = vld [vmem:[#allocation12 + $0x90] sm:$0xff]
    %v4826 = vld [vmem:[#allocation12 + $0x98] sm:$0xff]
    %v4827 = vld [vmem:[#allocation12 + $0xa0] sm:$0xff]
    %v4828 = vld [vmem:[#allocation12 + $0xa8] sm:$0xff]
    %v4829 = vld [vmem:[#allocation12 + $0xb0] sm:$0xff]
    %v4830 = vld [vmem:[#allocation12 + $0xb8] sm:$0xff]
    %v4831 = vld [vmem:[#allocation12 + $0xc0] sm:$0xff]
    %v4832 = vld [vmem:[#allocation12 + $0xc8] sm:$0xff]
    %v4833 = vld [vmem:[#allocation12 + $0xd0] sm:$0xff]
    %v4834 = vld [vmem:[#allocation12 + $0xd8] sm:$0xff]
    %v4835 = vld [vmem:[#allocation12 + $0xe0] sm:$0xff]
    %v4836 = vld [vmem:[#allocation12 + $0xe8] sm:$0xff]
    %v4837 = vld [vmem:[#allocation12 + $0xf0] sm:$0xff]
    %v4838 = vld [vmem:[#allocation12 + $0xf8] sm:$0xff]
    %v4871 = vunpack.c.l.b16 %v4807
    %v4872 = vunpack.c.h.b16 %v4807
    %v4873 = vunpack.c.l.b16 %v4808
    %v4874 = vunpack.c.h.b16 %v4808
    %v4875 = vunpack.c.l.b16 %v4809
    %v4876 = vunpack.c.h.b16 %v4809
    %v4877 = vunpack.c.l.b16 %v4810
    %v4878 = vunpack.c.h.b16 %v4810
    %v4879 = vunpack.c.l.b16 %v4811
    %v4880 = vunpack.c.h.b16 %v4811
    %v4881 = vunpack.c.l.b16 %v4812
    %v4882 = vunpack.c.h.b16 %v4812
    %v4883 = vunpack.c.l.b16 %v4813
    %v4884 = vunpack.c.h.b16 %v4813
    %v4885 = vunpack.c.l.b16 %v4814
    %v4886 = vunpack.c.h.b16 %v4814
    %v4887 = vunpack.c.l.b16 %v4815
    %v4888 = vunpack.c.h.b16 %v4815
    %v4889 = vunpack.c.l.b16 %v4816
    %v4890 = vunpack.c.h.b16 %v4816
    %v4891 = vunpack.c.l.b16 %v4817
    %v4892 = vunpack.c.h.b16 %v4817
    %v4893 = vunpack.c.l.b16 %v4818
    %v4894 = vunpack.c.h.b16 %v4818
    %v4895 = vunpack.c.l.b16 %v4819
    %v4896 = vunpack.c.h.b16 %v4819
    %v4897 = vunpack.c.l.b16 %v4820
    %v4898 = vunpack.c.h.b16 %v4820
    %v4899 = vunpack.c.l.b16 %v4821
    %v4900 = vunpack.c.h.b16 %v4821
    %v4901 = vunpack.c.l.b16 %v4822
    %v4902 = vunpack.c.h.b16 %v4822
    %v4903 = vunpack.c.l.b16 %v4823
    %v4904 = vunpack.c.h.b16 %v4823
    %v4905 = vunpack.c.l.b16 %v4824
    %v4906 = vunpack.c.h.b16 %v4824
    %v4907 = vunpack.c.l.b16 %v4825
    %v4908 = vunpack.c.h.b16 %v4825
    %v4909 = vunpack.c.l.b16 %v4826
    %v4910 = vunpack.c.h.b16 %v4826
    %v4911 = vunpack.c.l.b16 %v4827
    %v4912 = vunpack.c.h.b16 %v4827
    %v4913 = vunpack.c.l.b16 %v4828
    %v4914 = vunpack.c.h.b16 %v4828
    %v4915 = vunpack.c.l.b16 %v4829
    %v4916 = vunpack.c.h.b16 %v4829
    %v4917 = vunpack.c.l.b16 %v4830
    %v4918 = vunpack.c.h.b16 %v4830
    %v4919 = vunpack.c.l.b16 %v4831
    %v4920 = vunpack.c.h.b16 %v4831
    %v4921 = vunpack.c.l.b16 %v4832
    %v4922 = vunpack.c.h.b16 %v4832
    %v4923 = vunpack.c.l.b16 %v4833
    %v4924 = vunpack.c.h.b16 %v4833
    %v4925 = vunpack.c.l.b16 %v4834
    %v4926 = vunpack.c.h.b16 %v4834
    %v4927 = vunpack.c.l.b16 %v4835
    %v4928 = vunpack.c.h.b16 %v4835
    %v4929 = vunpack.c.l.b16 %v4836
    %v4930 = vunpack.c.h.b16 %v4836
    %v4931 = vunpack.c.l.b16 %v4837
    %v4932 = vunpack.c.h.b16 %v4837
    %v4933 = vunpack.c.l.b16 %v4838
    %v4934 = vunpack.c.h.b16 %v4838
    %v4935 = vpack.c.b16 %v4875, %v4871
    %v4936 = vpack.c.b16 %v4876, %v4872
    %v4937 = vpack.c.b16 %v4877, %v4873
    %v4938 = vpack.c.b16 %v4878, %v4874
    %v4939 = vpack.c.b16 %v4883, %v4879
    %v4940 = vpack.c.b16 %v4884, %v4880
    %v4941 = vpack.c.b16 %v4885, %v4881
    %v4942 = vpack.c.b16 %v4886, %v4882
    %v4943 = vpack.c.b16 %v4891, %v4887
    %v4944 = vpack.c.b16 %v4892, %v4888
    %v4945 = vpack.c.b16 %v4893, %v4889
    %v4946 = vpack.c.b16 %v4894, %v4890
    %v4947 = vpack.c.b16 %v4899, %v4895
    %v4948 = vpack.c.b16 %v4900, %v4896
    %v4949 = vpack.c.b16 %v4901, %v4897
    %v4950 = vpack.c.b16 %v4902, %v4898
    %v4951 = vpack.c.b16 %v4907, %v4903
    %v4952 = vpack.c.b16 %v4908, %v4904
    %v4953 = vpack.c.b16 %v4909, %v4905
    %v4954 = vpack.c.b16 %v4910, %v4906
    %v4955 = vpack.c.b16 %v4915, %v4911
    %v4956 = vpack.c.b16 %v4916, %v4912
    %v4957 = vpack.c.b16 %v4917, %v4913
    %v4958 = vpack.c.b16 %v4918, %v4914
    %v4959 = vpack.c.b16 %v4923, %v4919
    %v4960 = vpack.c.b16 %v4924, %v4920
    %v4961 = vpack.c.b16 %v4925, %v4921
    %v4962 = vpack.c.b16 %v4926, %v4922
    %v4963 = vpack.c.b16 %v4931, %v4927
    %v4964 = vpack.c.b16 %v4932, %v4928
    %v4965 = vpack.c.b16 %v4933, %v4929
    %v4966 = vpack.c.b16 %v4934, %v4930
    %4999 = vmatprep.subr.bf16.mxu0 %v4964
    %5000 = vmatpush1.bf16.msra.mxu0 %v4963
    %5001 = vmatprep.subr.bf16.mxu0 %v4960
    %5002 = vmatpush1.bf16.msra.mxu0 %v4959
    %5003 = vmatprep.subr.bf16.mxu0 %v4956
    %5004 = vmatpush1.bf16.msra.mxu0 %v4955
    %5005 = vmatprep.subr.bf16.mxu0 %v4952
    %5006 = vmatpush1.bf16.msra.mxu0 %v4951
    %5007 = vmatprep.subr.bf16.mxu0 %v4948
    %5008 = vmatpush1.bf16.msra.mxu0 %v4947
    %5009 = vmatprep.subr.bf16.mxu0 %v4944
    %5010 = vmatpush1.bf16.msra.mxu0 %v4943
    %5011 = vmatprep.subr.bf16.mxu0 %v4940
    %5012 = vmatpush1.bf16.msra.mxu0 %v4939
    %5013 = vmatprep.subr.bf16.mxu0 %v4936
    %5014 = vmatpush1.bf16.msra.mxu0 %v4935
    %5015 = vmatprep.subr.bf16.mxu0 0
    %5016 = vmatpush2.bf16.msra.mxu0 0
    %5017 = vmatprep.subr.bf16.mxu0 0
    %5018 = vmatpush2.bf16.msra.mxu0 0
    %5019 = vmatprep.subr.bf16.mxu0 0
    %5020 = vmatpush2.bf16.msra.mxu0 0
    %5021 = vmatprep.subr.bf16.mxu0 0
    %5022 = vmatpush2.bf16.msra.mxu0 0
    %5023 = vmatprep.subr.bf16.mxu0 0
    %5024 = vmatpush2.bf16.msra.mxu0 0
    %5025 = vmatprep.subr.bf16.mxu0 0
    %5026 = vmatpush2.bf16.msra.mxu0 0
    %5027 = vmatprep.subr.bf16.mxu0 0
    %5028 = vmatpush2.bf16.msra.mxu0 0
    %5029 = vmatprep.subr.bf16.mxu0 0
    %5030 = vmatpush2.bf16.msra.mxu0 0
    %5031 = vmatprep.mubr.bf16.mxu0 0
    %5032 = vmatmul.mubr.bf16.gmra.mxu0 %v4304
    %v5033 = vpop.f32.mrf.mxu0
    %v5034 = vadd.f32 0.0, %v5033
    %v5035 = vpop.f32.mrf.mxu0
    %v5036 = vadd.f32 0.0, %v5035
    %v5037 = vpop.f32.mrf.mxu0
    %v5038 = vpop.f32.mrf.mxu0
    %5039 = vdwg.mxu0
    %5040 = vmatprep.subr.bf16.mxu0 %v4966
    %5041 = vmatpush1.bf16.msra.mxu0 %v4965
    %5042 = vmatprep.subr.bf16.mxu0 %v4962
    %5043 = vmatpush1.bf16.msra.mxu0 %v4961
    %5044 = vmatprep.subr.bf16.mxu0 %v4958
    %5045 = vmatpush1.bf16.msra.mxu0 %v4957
    %5046 = vmatprep.subr.bf16.mxu0 %v4954
    %5047 = vmatpush1.bf16.msra.mxu0 %v4953
    %5048 = vmatprep.subr.bf16.mxu0 %v4950
    %5049 = vmatpush1.bf16.msra.mxu0 %v4949
    %5050 = vmatprep.subr.bf16.mxu0 %v4946
    %5051 = vmatpush1.bf16.msra.mxu0 %v4945
    %5052 = vmatprep.subr.bf16.mxu0 %v4942
    %5053 = vmatpush1.bf16.msra.mxu0 %v4941
    %5054 = vmatprep.subr.bf16.mxu0 %v4938
    %5055 = vmatpush1.bf16.msra.mxu0 %v4937
    %5056 = vmatprep.subr.bf16.mxu0 0
    %5057 = vmatpush2.bf16.msra.mxu0 0
    %5058 = vmatprep.subr.bf16.mxu0 0
    %5059 = vmatpush2.bf16.msra.mxu0 0
    %5060 = vmatprep.subr.bf16.mxu0 0
    %5061 = vmatpush2.bf16.msra.mxu0 0
    %5062 = vmatprep.subr.bf16.mxu0 0
    %5063 = vmatpush2.bf16.msra.mxu0 0
    %5064 = vmatprep.subr.bf16.mxu0 0
    %5065 = vmatpush2.bf16.msra.mxu0 0
    %5066 = vmatprep.subr.bf16.mxu0 0
    %5067 = vmatpush2.bf16.msra.mxu0 0
    %5068 = vmatprep.subr.bf16.mxu0 0
    %5069 = vmatpush2.bf16.msra.mxu0 0
    %5070 = vmatprep.subr.bf16.mxu0 0
    %5071 = vmatpush2.bf16.msra.mxu0 0
    %5072 = vmatprep.mubr.bf16.mxu0 0
    %5073 = vmatmul.mubr.bf16.gmra.mxu0 %v4304
    %v5074 = vpop.f32.mrf.mxu0
    %v5075 = vadd.f32 0.0, %v5074
    %v5076 = vpop.f32.mrf.mxu0
    %v5077 = vadd.f32 0.0, %v5076
    %v5078 = vpop.f32.mrf.mxu0
    %v5079 = vpop.f32.mrf.mxu0
    %5080 = vdwg.mxu0
    %v5081 = vadd.f32 %v4803, %v5034
    %v5082 = vadd.f32 %v4804, %v5036
    %v5083 = vadd.f32 %v4805, %v5075
    %v5084 = vadd.f32 %v4806, %v5077
    %v5085 = vmul.f32 %v5081, 0.5
    %v5086 = vtanh.pop %v5085
    %v5087 = vmul.f32 %v5086, 0.5
    %v5088 = vadd.f32 %v5087, 0.5
    %v5089 = vmul.f32 %v5082, 0.5
    %v5090 = vtanh.pop %v5089
    %v5091 = vmul.f32 %v5090, 0.5
    %v5092 = vadd.f32 %v5091, 0.5
    %v5093 = vtanh.pop %v5083
    %v5094 = vmul.f32 %v5084, 0.5
    %v5095 = vtanh.pop %v5094
    %v5096 = vmul.f32 %v5095, 0.5
    %v5097 = vadd.f32 %v5096, 0.5
    %v5098 = vmul.f32 %v5092, %v4301
    %v5099 = vmul.f32 %v5088, %v5093
    %v5100 = vadd.f32 %v5098, %v5099
    %v5101 = vtanh.pop %v5100
    %v5102 = vmul.f32 %v5097, %v5101
    %v5103 = vpack.c.bf16 %v5102, %v5102
    %v5104 = vld [vmem:[#allocation3] sm:$0xff]
    %v5105 = vld [vmem:[#allocation3 + $0x8] sm:$0xff]
    %v5106 = vld [vmem:[#allocation3 + $0x10] sm:$0xff]
    %v5107 = vld [vmem:[#allocation3 + $0x18] sm:$0xff]
    %v5108 = vld [vmem:[#allocation15] sm:$0xff]
    %v5109 = vld [vmem:[#allocation15 + $0x8] sm:$0xff]
    %v5110 = vld [vmem:[#allocation15 + $0x10] sm:$0xff]
    %v5111 = vld [vmem:[#allocation15 + $0x18] sm:$0xff]
    %v5112 = vld [vmem:[#allocation15 + $0x20] sm:$0xff]
    %v5113 = vld [vmem:[#allocation15 + $0x28] sm:$0xff]
    %v5114 = vld [vmem:[#allocation15 + $0x30] sm:$0xff]
    %v5115 = vld [vmem:[#allocation15 + $0x38] sm:$0xff]
    %v5116 = vld [vmem:[#allocation15 + $0x40] sm:$0xff]
    %v5117 = vld [vmem:[#allocation15 + $0x48] sm:$0xff]
    %v5118 = vld [vmem:[#allocation15 + $0x50] sm:$0xff]
    %v5119 = vld [vmem:[#allocation15 + $0x58] sm:$0xff]
    %v5120 = vld [vmem:[#allocation15 + $0x60] sm:$0xff]
    %v5121 = vld [vmem:[#allocation15 + $0x68] sm:$0xff]
    %v5122 = vld [vmem:[#allocation15 + $0x70] sm:$0xff]
    %v5123 = vld [vmem:[#allocation15 + $0x78] sm:$0xff]
    %v5124 = vld [vmem:[#allocation15 + $0x80] sm:$0xff]
    %v5125 = vld [vmem:[#allocation15 + $0x88] sm:$0xff]
    %v5126 = vld [vmem:[#allocation15 + $0x90] sm:$0xff]
    %v5127 = vld [vmem:[#allocation15 + $0x98] sm:$0xff]
    %v5128 = vld [vmem:[#allocation15 + $0xa0] sm:$0xff]
    %v5129 = vld [vmem:[#allocation15 + $0xa8] sm:$0xff]
    %v5130 = vld [vmem:[#allocation15 + $0xb0] sm:$0xff]
    %v5131 = vld [vmem:[#allocation15 + $0xb8] sm:$0xff]
    %v5132 = vld [vmem:[#allocation15 + $0xc0] sm:$0xff]
    %v5133 = vld [vmem:[#allocation15 + $0xc8] sm:$0xff]
    %v5134 = vld [vmem:[#allocation15 + $0xd0] sm:$0xff]
    %v5135 = vld [vmem:[#allocation15 + $0xd8] sm:$0xff]
    %v5136 = vld [vmem:[#allocation15 + $0xe0] sm:$0xff]
    %v5137 = vld [vmem:[#allocation15 + $0xe8] sm:$0xff]
    %v5138 = vld [vmem:[#allocation15 + $0xf0] sm:$0xff]
    %v5139 = vld [vmem:[#allocation15 + $0xf8] sm:$0xff]
    %v5140 = vld [vmem:[#allocation15 + $0x100] sm:$0xff]
    %v5141 = vld [vmem:[#allocation15 + $0x108] sm:$0xff]
    %v5142 = vld [vmem:[#allocation15 + $0x110] sm:$0xff]
    %v5143 = vld [vmem:[#allocation15 + $0x118] sm:$0xff]
    %v5144 = vld [vmem:[#allocation15 + $0x120] sm:$0xff]
    %v5145 = vld [vmem:[#allocation15 + $0x128] sm:$0xff]
    %v5146 = vld [vmem:[#allocation15 + $0x130] sm:$0xff]
    %v5147 = vld [vmem:[#allocation15 + $0x138] sm:$0xff]
    %v5148 = vld [vmem:[#allocation15 + $0x140] sm:$0xff]
    %v5149 = vld [vmem:[#allocation15 + $0x148] sm:$0xff]
    %v5150 = vld [vmem:[#allocation15 + $0x150] sm:$0xff]
    %v5151 = vld [vmem:[#allocation15 + $0x158] sm:$0xff]
    %v5152 = vld [vmem:[#allocation15 + $0x160] sm:$0xff]
    %v5153 = vld [vmem:[#allocation15 + $0x168] sm:$0xff]
    %v5154 = vld [vmem:[#allocation15 + $0x170] sm:$0xff]
    %v5155 = vld [vmem:[#allocation15 + $0x178] sm:$0xff]
    %v5156 = vld [vmem:[#allocation15 + $0x180] sm:$0xff]
    %v5157 = vld [vmem:[#allocation15 + $0x188] sm:$0xff]
    %v5158 = vld [vmem:[#allocation15 + $0x190] sm:$0xff]
    %v5159 = vld [vmem:[#allocation15 + $0x198] sm:$0xff]
    %v5160 = vld [vmem:[#allocation15 + $0x1a0] sm:$0xff]
    %v5161 = vld [vmem:[#allocation15 + $0x1a8] sm:$0xff]
    %v5162 = vld [vmem:[#allocation15 + $0x1b0] sm:$0xff]
    %v5163 = vld [vmem:[#allocation15 + $0x1b8] sm:$0xff]
    %v5164 = vld [vmem:[#allocation15 + $0x1c0] sm:$0xff]
    %v5165 = vld [vmem:[#allocation15 + $0x1c8] sm:$0xff]
    %v5166 = vld [vmem:[#allocation15 + $0x1d0] sm:$0xff]
    %v5167 = vld [vmem:[#allocation15 + $0x1d8] sm:$0xff]
    %v5168 = vld [vmem:[#allocation15 + $0x1e0] sm:$0xff]
    %v5169 = vld [vmem:[#allocation15 + $0x1e8] sm:$0xff]
    %v5170 = vld [vmem:[#allocation15 + $0x1f0] sm:$0xff]
    %v5171 = vld [vmem:[#allocation15 + $0x1f8] sm:$0xff]
    %v5236 = vunpack.c.l.b16 %v5108
    %v5237 = vunpack.c.h.b16 %v5108
    %v5238 = vunpack.c.l.b16 %v5109
    %v5239 = vunpack.c.h.b16 %v5109
    %v5240 = vunpack.c.l.b16 %v5110
    %v5241 = vunpack.c.h.b16 %v5110
    %v5242 = vunpack.c.l.b16 %v5111
    %v5243 = vunpack.c.h.b16 %v5111
    %v5244 = vunpack.c.l.b16 %v5112
    %v5245 = vunpack.c.h.b16 %v5112
    %v5246 = vunpack.c.l.b16 %v5113
    %v5247 = vunpack.c.h.b16 %v5113
    %v5248 = vunpack.c.l.b16 %v5114
    %v5249 = vunpack.c.h.b16 %v5114
    %v5250 = vunpack.c.l.b16 %v5115
    %v5251 = vunpack.c.h.b16 %v5115
    %v5252 = vunpack.c.l.b16 %v5116
    %v5253 = vunpack.c.h.b16 %v5116
    %v5254 = vunpack.c.l.b16 %v5117
    %v5255 = vunpack.c.h.b16 %v5117
    %v5256 = vunpack.c.l.b16 %v5118
    %v5257 = vunpack.c.h.b16 %v5118
    %v5258 = vunpack.c.l.b16 %v5119
    %v5259 = vunpack.c.h.b16 %v5119
    %v5260 = vunpack.c.l.b16 %v5120
    %v5261 = vunpack.c.h.b16 %v5120
    %v5262 = vunpack.c.l.b16 %v5121
    %v5263 = vunpack.c.h.b16 %v5121
    %v5264 = vunpack.c.l.b16 %v5122
    %v5265 = vunpack.c.h.b16 %v5122
    %v5266 = vunpack.c.l.b16 %v5123
    %v5267 = vunpack.c.h.b16 %v5123
    %v5268 = vunpack.c.l.b16 %v5124
    %v5269 = vunpack.c.h.b16 %v5124
    %v5270 = vunpack.c.l.b16 %v5125
    %v5271 = vunpack.c.h.b16 %v5125
    %v5272 = vunpack.c.l.b16 %v5126
    %v5273 = vunpack.c.h.b16 %v5126
    %v5274 = vunpack.c.l.b16 %v5127
    %v5275 = vunpack.c.h.b16 %v5127
    %v5276 = vunpack.c.l.b16 %v5128
    %v5277 = vunpack.c.h.b16 %v5128
    %v5278 = vunpack.c.l.b16 %v5129
    %v5279 = vunpack.c.h.b16 %v5129
    %v5280 = vunpack.c.l.b16 %v5130
    %v5281 = vunpack.c.h.b16 %v5130
    %v5282 = vunpack.c.l.b16 %v5131
    %v5283 = vunpack.c.h.b16 %v5131
    %v5284 = vunpack.c.l.b16 %v5132
    %v5285 = vunpack.c.h.b16 %v5132
    %v5286 = vunpack.c.l.b16 %v5133
    %v5287 = vunpack.c.h.b16 %v5133
    %v5288 = vunpack.c.l.b16 %v5134
    %v5289 = vunpack.c.h.b16 %v5134
    %v5290 = vunpack.c.l.b16 %v5135
    %v5291 = vunpack.c.h.b16 %v5135
    %v5292 = vunpack.c.l.b16 %v5136
    %v5293 = vunpack.c.h.b16 %v5136
    %v5294 = vunpack.c.l.b16 %v5137
    %v5295 = vunpack.c.h.b16 %v5137
    %v5296 = vunpack.c.l.b16 %v5138
    %v5297 = vunpack.c.h.b16 %v5138
    %v5298 = vunpack.c.l.b16 %v5139
    %v5299 = vunpack.c.h.b16 %v5139
    %v5300 = vunpack.c.l.b16 %v5140
    %v5301 = vunpack.c.h.b16 %v5140
    %v5302 = vunpack.c.l.b16 %v5141
    %v5303 = vunpack.c.h.b16 %v5141
    %v5304 = vunpack.c.l.b16 %v5142
    %v5305 = vunpack.c.h.b16 %v5142
    %v5306 = vunpack.c.l.b16 %v5143
    %v5307 = vunpack.c.h.b16 %v5143
    %v5308 = vunpack.c.l.b16 %v5144
    %v5309 = vunpack.c.h.b16 %v5144
    %v5310 = vunpack.c.l.b16 %v5145
    %v5311 = vunpack.c.h.b16 %v5145
    %v5312 = vunpack.c.l.b16 %v5146
    %v5313 = vunpack.c.h.b16 %v5146
    %v5314 = vunpack.c.l.b16 %v5147
    %v5315 = vunpack.c.h.b16 %v5147
    %v5316 = vunpack.c.l.b16 %v5148
    %v5317 = vunpack.c.h.b16 %v5148
    %v5318 = vunpack.c.l.b16 %v5149
    %v5319 = vunpack.c.h.b16 %v5149
    %v5320 = vunpack.c.l.b16 %v5150
    %v5321 = vunpack.c.h.b16 %v5150
    %v5322 = vunpack.c.l.b16 %v5151
    %v5323 = vunpack.c.h.b16 %v5151
    %v5324 = vunpack.c.l.b16 %v5152
    %v5325 = vunpack.c.h.b16 %v5152
    %v5326 = vunpack.c.l.b16 %v5153
    %v5327 = vunpack.c.h.b16 %v5153
    %v5328 = vunpack.c.l.b16 %v5154
    %v5329 = vunpack.c.h.b16 %v5154
    %v5330 = vunpack.c.l.b16 %v5155
    %v5331 = vunpack.c.h.b16 %v5155
    %v5332 = vunpack.c.l.b16 %v5156
    %v5333 = vunpack.c.h.b16 %v5156
    %v5334 = vunpack.c.l.b16 %v5157
    %v5335 = vunpack.c.h.b16 %v5157
    %v5336 = vunpack.c.l.b16 %v5158
    %v5337 = vunpack.c.h.b16 %v5158
    %v5338 = vunpack.c.l.b16 %v5159
    %v5339 = vunpack.c.h.b16 %v5159
    %v5340 = vunpack.c.l.b16 %v5160
    %v5341 = vunpack.c.h.b16 %v5160
    %v5342 = vunpack.c.l.b16 %v5161
    %v5343 = vunpack.c.h.b16 %v5161
    %v5344 = vunpack.c.l.b16 %v5162
    %v5345 = vunpack.c.h.b16 %v5162
    %v5346 = vunpack.c.l.b16 %v5163
    %v5347 = vunpack.c.h.b16 %v5163
    %v5348 = vunpack.c.l.b16 %v5164
    %v5349 = vunpack.c.h.b16 %v5164
    %v5350 = vunpack.c.l.b16 %v5165
    %v5351 = vunpack.c.h.b16 %v5165
    %v5352 = vunpack.c.l.b16 %v5166
    %v5353 = vunpack.c.h.b16 %v5166
    %v5354 = vunpack.c.l.b16 %v5167
    %v5355 = vunpack.c.h.b16 %v5167
    %v5356 = vunpack.c.l.b16 %v5168
    %v5357 = vunpack.c.h.b16 %v5168
    %v5358 = vunpack.c.l.b16 %v5169
    %v5359 = vunpack.c.h.b16 %v5169
    %v5360 = vunpack.c.l.b16 %v5170
    %v5361 = vunpack.c.h.b16 %v5170
    %v5362 = vunpack.c.l.b16 %v5171
    %v5363 = vunpack.c.h.b16 %v5171
    %v5364 = vpack.c.b16 %v5240, %v5236
    %v5365 = vpack.c.b16 %v5241, %v5237
    %v5366 = vpack.c.b16 %v5242, %v5238
    %v5367 = vpack.c.b16 %v5243, %v5239
    %v5368 = vpack.c.b16 %v5248, %v5244
    %v5369 = vpack.c.b16 %v5249, %v5245
    %v5370 = vpack.c.b16 %v5250, %v5246
    %v5371 = vpack.c.b16 %v5251, %v5247
    %v5372 = vpack.c.b16 %v5256, %v5252
    %v5373 = vpack.c.b16 %v5257, %v5253
    %v5374 = vpack.c.b16 %v5258, %v5254
    %v5375 = vpack.c.b16 %v5259, %v5255
    %v5376 = vpack.c.b16 %v5264, %v5260
    %v5377 = vpack.c.b16 %v5265, %v5261
    %v5378 = vpack.c.b16 %v5266, %v5262
    %v5379 = vpack.c.b16 %v5267, %v5263
    %v5380 = vpack.c.b16 %v5272, %v5268
    %v5381 = vpack.c.b16 %v5273, %v5269
    %v5382 = vpack.c.b16 %v5274, %v5270
    %v5383 = vpack.c.b16 %v5275, %v5271
    %v5384 = vpack.c.b16 %v5280, %v5276
    %v5385 = vpack.c.b16 %v5281, %v5277
    %v5386 = vpack.c.b16 %v5282, %v5278
    %v5387 = vpack.c.b16 %v5283, %v5279
    %v5388 = vpack.c.b16 %v5288, %v5284
    %v5389 = vpack.c.b16 %v5289, %v5285
    %v5390 = vpack.c.b16 %v5290, %v5286
    %v5391 = vpack.c.b16 %v5291, %v5287
    %v5392 = vpack.c.b16 %v5296, %v5292
    %v5393 = vpack.c.b16 %v5297, %v5293
    %v5394 = vpack.c.b16 %v5298, %v5294
    %v5395 = vpack.c.b16 %v5299, %v5295
    %v5396 = vpack.c.b16 %v5304, %v5300
    %v5397 = vpack.c.b16 %v5305, %v5301
    %v5398 = vpack.c.b16 %v5306, %v5302
    %v5399 = vpack.c.b16 %v5307, %v5303
    %v5400 = vpack.c.b16 %v5312, %v5308
    %v5401 = vpack.c.b16 %v5313, %v5309
    %v5402 = vpack.c.b16 %v5314, %v5310
    %v5403 = vpack.c.b16 %v5315, %v5311
    %v5404 = vpack.c.b16 %v5320, %v5316
    %v5405 = vpack.c.b16 %v5321, %v5317
    %v5406 = vpack.c.b16 %v5322, %v5318
    %v5407 = vpack.c.b16 %v5323, %v5319
    %v5408 = vpack.c.b16 %v5328, %v5324
    %v5409 = vpack.c.b16 %v5329, %v5325
    %v5410 = vpack.c.b16 %v5330, %v5326
    %v5411 = vpack.c.b16 %v5331, %v5327
    %v5412 = vpack.c.b16 %v5336, %v5332
    %v5413 = vpack.c.b16 %v5337, %v5333
    %v5414 = vpack.c.b16 %v5338, %v5334
    %v5415 = vpack.c.b16 %v5339, %v5335
    %v5416 = vpack.c.b16 %v5344, %v5340
    %v5417 = vpack.c.b16 %v5345, %v5341
    %v5418 = vpack.c.b16 %v5346, %v5342
    %v5419 = vpack.c.b16 %v5347, %v5343
    %v5420 = vpack.c.b16 %v5352, %v5348
    %v5421 = vpack.c.b16 %v5353, %v5349
    %v5422 = vpack.c.b16 %v5354, %v5350
    %v5423 = vpack.c.b16 %v5355, %v5351
    %v5424 = vpack.c.b16 %v5360, %v5356
    %v5425 = vpack.c.b16 %v5361, %v5357
    %v5426 = vpack.c.b16 %v5362, %v5358
    %v5427 = vpack.c.b16 %v5363, %v5359
    %5492 = vmatprep.subr.bf16.mxu0 %v5393
    %5493 = vmatpush1.bf16.msra.mxu0 %v5392
    %5494 = vmatprep.subr.bf16.mxu0 %v5389
    %5495 = vmatpush1.bf16.msra.mxu0 %v5388
    %5496 = vmatprep.subr.bf16.mxu0 %v5385
    %5497 = vmatpush1.bf16.msra.mxu0 %v5384
    %5498 = vmatprep.subr.bf16.mxu0 %v5381
    %5499 = vmatpush1.bf16.msra.mxu0 %v5380
    %5500 = vmatprep.subr.bf16.mxu0 %v5377
    %5501 = vmatpush1.bf16.msra.mxu0 %v5376
    %5502 = vmatprep.subr.bf16.mxu0 %v5373
    %5503 = vmatpush1.bf16.msra.mxu0 %v5372
    %5504 = vmatprep.subr.bf16.mxu0 %v5369
    %5505 = vmatpush1.bf16.msra.mxu0 %v5368
    %5506 = vmatprep.subr.bf16.mxu0 %v5365
    %5507 = vmatpush1.bf16.msra.mxu0 %v5364
    %5508 = vmatprep.subr.bf16.mxu0 %v5425
    %5509 = vmatpush2.bf16.msra.mxu0 %v5424
    %5510 = vmatprep.subr.bf16.mxu0 %v5421
    %5511 = vmatpush2.bf16.msra.mxu0 %v5420
    %5512 = vmatprep.subr.bf16.mxu0 %v5417
    %5513 = vmatpush2.bf16.msra.mxu0 %v5416
    %5514 = vmatprep.subr.bf16.mxu0 %v5413
    %5515 = vmatpush2.bf16.msra.mxu0 %v5412
    %5516 = vmatprep.subr.bf16.mxu0 %v5409
    %5517 = vmatpush2.bf16.msra.mxu0 %v5408
    %5518 = vmatprep.subr.bf16.mxu0 %v5405
    %5519 = vmatpush2.bf16.msra.mxu0 %v5404
    %5520 = vmatprep.subr.bf16.mxu0 %v5401
    %5521 = vmatpush2.bf16.msra.mxu0 %v5400
    %5522 = vmatprep.subr.bf16.mxu0 %v5397
    %5523 = vmatpush2.bf16.msra.mxu0 %v5396
    %5524 = vmatprep.mubr.bf16.mxu0 %v4797
    %5525 = vmatmul.mubr.bf16.gmra.mxu0 %v5103
    %v5526 = vpop.f32.mrf.mxu0
    %v5527 = vadd.f32 0.0, %v5526
    %v5528 = vpop.f32.mrf.mxu0
    %v5529 = vadd.f32 0.0, %v5528
    %v5530 = vpop.f32.mrf.mxu0
    %v5531 = vpop.f32.mrf.mxu0
    %5532 = vdwg.mxu0
    %5533 = vmatprep.subr.bf16.mxu0 %v5395
    %5534 = vmatpush1.bf16.msra.mxu0 %v5394
    %5535 = vmatprep.subr.bf16.mxu0 %v5391
    %5536 = vmatpush1.bf16.msra.mxu0 %v5390
    %5537 = vmatprep.subr.bf16.mxu0 %v5387
    %5538 = vmatpush1.bf16.msra.mxu0 %v5386
    %5539 = vmatprep.subr.bf16.mxu0 %v5383
    %5540 = vmatpush1.bf16.msra.mxu0 %v5382
    %5541 = vmatprep.subr.bf16.mxu0 %v5379
    %5542 = vmatpush1.bf16.msra.mxu0 %v5378
    %5543 = vmatprep.subr.bf16.mxu0 %v5375
    %5544 = vmatpush1.bf16.msra.mxu0 %v5374
    %5545 = vmatprep.subr.bf16.mxu0 %v5371
    %5546 = vmatpush1.bf16.msra.mxu0 %v5370
    %5547 = vmatprep.subr.bf16.mxu0 %v5367
    %5548 = vmatpush1.bf16.msra.mxu0 %v5366
    %5549 = vmatprep.subr.bf16.mxu0 %v5427
    %5550 = vmatpush2.bf16.msra.mxu0 %v5426
    %5551 = vmatprep.subr.bf16.mxu0 %v5423
    %5552 = vmatpush2.bf16.msra.mxu0 %v5422
    %5553 = vmatprep.subr.bf16.mxu0 %v5419
    %5554 = vmatpush2.bf16.msra.mxu0 %v5418
    %5555 = vmatprep.subr.bf16.mxu0 %v5415
    %5556 = vmatpush2.bf16.msra.mxu0 %v5414
    %5557 = vmatprep.subr.bf16.mxu0 %v5411
    %5558 = vmatpush2.bf16.msra.mxu0 %v5410
    %5559 = vmatprep.subr.bf16.mxu0 %v5407
    %5560 = vmatpush2.bf16.msra.mxu0 %v5406
    %5561 = vmatprep.subr.bf16.mxu0 %v5403
    %5562 = vmatpush2.bf16.msra.mxu0 %v5402
    %5563 = vmatprep.subr.bf16.mxu0 %v5399
    %5564 = vmatpush2.bf16.msra.mxu0 %v5398
    %5565 = vmatprep.mubr.bf16.mxu0 %v4797
    %5566 = vmatmul.mubr.bf16.gmra.mxu0 %v5103
    %v5567 = vpop.f32.mrf.mxu0
    %v5568 = vadd.f32 0.0, %v5567
    %v5569 = vpop.f32.mrf.mxu0
    %v5570 = vadd.f32 0.0, %v5569
    %v5571 = vpop.f32.mrf.mxu0
    %v5572 = vpop.f32.mrf.mxu0
    %5573 = vdwg.mxu0
    %v5574 = vadd.f32 %v5104, %v5527
    %v5575 = vadd.f32 %v5105, %v5529
    %v5576 = vadd.f32 %v5106, %v5568
    %v5577 = vadd.f32 %v5107, %v5570
    %v5578 = vmul.f32 %v5574, 0.5
    %v5579 = vtanh.pop %v5578
    %v5580 = vmul.f32 %v5579, 0.5
    %v5581 = vadd.f32 %v5580, 0.5
    %v5582 = vmul.f32 %v5575, 0.5
    %v5583 = vtanh.pop %v5582
    %v5584 = vmul.f32 %v5583, 0.5
    %v5585 = vadd.f32 %v5584, 0.5
    %v5586 = vtanh.pop %v5576
    %v5587 = vmul.f32 %v5577, 0.5
    %v5588 = vtanh.pop %v5587
    %v5589 = vmul.f32 %v5588, 0.5
    %v5590 = vadd.f32 %v5589, 0.5
    %v5591 = vmul.f32 %v5585, %v4794
    %v5592 = vmul.f32 %v5581, %v5586
    %v5593 = vadd.f32 %v5591, %v5592
    %v5594 = vtanh.pop %v5593
    %v5595 = vmul.f32 %v5590, %v5594
    %v5596 = vpack.c.bf16 %v5595, %v5595
    %s5597 = scalar_lea.vmem [#allocation16], 20
    %5598 = vst [vmem:[%s5597] sm:$0xf] %v5596
    %s5599 = smul.u32 6, 4
    %s5600 = smul.addr %s5599, 8
    %s5601 = scalar_lea.vmem [#allocation2], %s5600
    %v5602 = vld [vmem:[%s5601] sm:$0xff]
    %v5603 = vld [vmem:[%s5601 + $0x8] sm:$0xff]
    %v5604 = vld [vmem:[%s5601 + $0x10] sm:$0xff]
    %v5605 = vld [vmem:[%s5601 + $0x18] sm:$0xff]
    %v5606 = vld [vmem:[#allocation12] sm:$0xff]
    %v5607 = vld [vmem:[#allocation12 + $0x8] sm:$0xff]
    %v5608 = vld [vmem:[#allocation12 + $0x10] sm:$0xff]
    %v5609 = vld [vmem:[#allocation12 + $0x18] sm:$0xff]
    %v5610 = vld [vmem:[#allocation12 + $0x20] sm:$0xff]
    %v5611 = vld [vmem:[#allocation12 + $0x28] sm:$0xff]
    %v5612 = vld [vmem:[#allocation12 + $0x30] sm:$0xff]
    %v5613 = vld [vmem:[#allocation12 + $0x38] sm:$0xff]
    %v5614 = vld [vmem:[#allocation12 + $0x40] sm:$0xff]
    %v5615 = vld [vmem:[#allocation12 + $0x48] sm:$0xff]
    %v5616 = vld [vmem:[#allocation12 + $0x50] sm:$0xff]
    %v5617 = vld [vmem:[#allocation12 + $0x58] sm:$0xff]
    %v5618 = vld [vmem:[#allocation12 + $0x60] sm:$0xff]
    %v5619 = vld [vmem:[#allocation12 + $0x68] sm:$0xff]
    %v5620 = vld [vmem:[#allocation12 + $0x70] sm:$0xff]
    %v5621 = vld [vmem:[#allocation12 + $0x78] sm:$0xff]
    %v5622 = vld [vmem:[#allocation12 + $0x80] sm:$0xff]
    %v5623 = vld [vmem:[#allocation12 + $0x88] sm:$0xff]
    %v5624 = vld [vmem:[#allocation12 + $0x90] sm:$0xff]
    %v5625 = vld [vmem:[#allocation12 + $0x98] sm:$0xff]
    %v5626 = vld [vmem:[#allocation12 + $0xa0] sm:$0xff]
    %v5627 = vld [vmem:[#allocation12 + $0xa8] sm:$0xff]
    %v5628 = vld [vmem:[#allocation12 + $0xb0] sm:$0xff]
    %v5629 = vld [vmem:[#allocation12 + $0xb8] sm:$0xff]
    %v5630 = vld [vmem:[#allocation12 + $0xc0] sm:$0xff]
    %v5631 = vld [vmem:[#allocation12 + $0xc8] sm:$0xff]
    %v5632 = vld [vmem:[#allocation12 + $0xd0] sm:$0xff]
    %v5633 = vld [vmem:[#allocation12 + $0xd8] sm:$0xff]
    %v5634 = vld [vmem:[#allocation12 + $0xe0] sm:$0xff]
    %v5635 = vld [vmem:[#allocation12 + $0xe8] sm:$0xff]
    %v5636 = vld [vmem:[#allocation12 + $0xf0] sm:$0xff]
    %v5637 = vld [vmem:[#allocation12 + $0xf8] sm:$0xff]
    %v5670 = vunpack.c.l.b16 %v5606
    %v5671 = vunpack.c.h.b16 %v5606
    %v5672 = vunpack.c.l.b16 %v5607
    %v5673 = vunpack.c.h.b16 %v5607
    %v5674 = vunpack.c.l.b16 %v5608
    %v5675 = vunpack.c.h.b16 %v5608
    %v5676 = vunpack.c.l.b16 %v5609
    %v5677 = vunpack.c.h.b16 %v5609
    %v5678 = vunpack.c.l.b16 %v5610
    %v5679 = vunpack.c.h.b16 %v5610
    %v5680 = vunpack.c.l.b16 %v5611
    %v5681 = vunpack.c.h.b16 %v5611
    %v5682 = vunpack.c.l.b16 %v5612
    %v5683 = vunpack.c.h.b16 %v5612
    %v5684 = vunpack.c.l.b16 %v5613
    %v5685 = vunpack.c.h.b16 %v5613
    %v5686 = vunpack.c.l.b16 %v5614
    %v5687 = vunpack.c.h.b16 %v5614
    %v5688 = vunpack.c.l.b16 %v5615
    %v5689 = vunpack.c.h.b16 %v5615
    %v5690 = vunpack.c.l.b16 %v5616
    %v5691 = vunpack.c.h.b16 %v5616
    %v5692 = vunpack.c.l.b16 %v5617
    %v5693 = vunpack.c.h.b16 %v5617
    %v5694 = vunpack.c.l.b16 %v5618
    %v5695 = vunpack.c.h.b16 %v5618
    %v5696 = vunpack.c.l.b16 %v5619
    %v5697 = vunpack.c.h.b16 %v5619
    %v5698 = vunpack.c.l.b16 %v5620
    %v5699 = vunpack.c.h.b16 %v5620
    %v5700 = vunpack.c.l.b16 %v5621
    %v5701 = vunpack.c.h.b16 %v5621
    %v5702 = vunpack.c.l.b16 %v5622
    %v5703 = vunpack.c.h.b16 %v5622
    %v5704 = vunpack.c.l.b16 %v5623
    %v5705 = vunpack.c.h.b16 %v5623
    %v5706 = vunpack.c.l.b16 %v5624
    %v5707 = vunpack.c.h.b16 %v5624
    %v5708 = vunpack.c.l.b16 %v5625
    %v5709 = vunpack.c.h.b16 %v5625
    %v5710 = vunpack.c.l.b16 %v5626
    %v5711 = vunpack.c.h.b16 %v5626
    %v5712 = vunpack.c.l.b16 %v5627
    %v5713 = vunpack.c.h.b16 %v5627
    %v5714 = vunpack.c.l.b16 %v5628
    %v5715 = vunpack.c.h.b16 %v5628
    %v5716 = vunpack.c.l.b16 %v5629
    %v5717 = vunpack.c.h.b16 %v5629
    %v5718 = vunpack.c.l.b16 %v5630
    %v5719 = vunpack.c.h.b16 %v5630
    %v5720 = vunpack.c.l.b16 %v5631
    %v5721 = vunpack.c.h.b16 %v5631
    %v5722 = vunpack.c.l.b16 %v5632
    %v5723 = vunpack.c.h.b16 %v5632
    %v5724 = vunpack.c.l.b16 %v5633
    %v5725 = vunpack.c.h.b16 %v5633
    %v5726 = vunpack.c.l.b16 %v5634
    %v5727 = vunpack.c.h.b16 %v5634
    %v5728 = vunpack.c.l.b16 %v5635
    %v5729 = vunpack.c.h.b16 %v5635
    %v5730 = vunpack.c.l.b16 %v5636
    %v5731 = vunpack.c.h.b16 %v5636
    %v5732 = vunpack.c.l.b16 %v5637
    %v5733 = vunpack.c.h.b16 %v5637
    %v5734 = vpack.c.b16 %v5674, %v5670
    %v5735 = vpack.c.b16 %v5675, %v5671
    %v5736 = vpack.c.b16 %v5676, %v5672
    %v5737 = vpack.c.b16 %v5677, %v5673
    %v5738 = vpack.c.b16 %v5682, %v5678
    %v5739 = vpack.c.b16 %v5683, %v5679
    %v5740 = vpack.c.b16 %v5684, %v5680
    %v5741 = vpack.c.b16 %v5685, %v5681
    %v5742 = vpack.c.b16 %v5690, %v5686
    %v5743 = vpack.c.b16 %v5691, %v5687
    %v5744 = vpack.c.b16 %v5692, %v5688
    %v5745 = vpack.c.b16 %v5693, %v5689
    %v5746 = vpack.c.b16 %v5698, %v5694
    %v5747 = vpack.c.b16 %v5699, %v5695
    %v5748 = vpack.c.b16 %v5700, %v5696
    %v5749 = vpack.c.b16 %v5701, %v5697
    %v5750 = vpack.c.b16 %v5706, %v5702
    %v5751 = vpack.c.b16 %v5707, %v5703
    %v5752 = vpack.c.b16 %v5708, %v5704
    %v5753 = vpack.c.b16 %v5709, %v5705
    %v5754 = vpack.c.b16 %v5714, %v5710
    %v5755 = vpack.c.b16 %v5715, %v5711
    %v5756 = vpack.c.b16 %v5716, %v5712
    %v5757 = vpack.c.b16 %v5717, %v5713
    %v5758 = vpack.c.b16 %v5722, %v5718
    %v5759 = vpack.c.b16 %v5723, %v5719
    %v5760 = vpack.c.b16 %v5724, %v5720
    %v5761 = vpack.c.b16 %v5725, %v5721
    %v5762 = vpack.c.b16 %v5730, %v5726
    %v5763 = vpack.c.b16 %v5731, %v5727
    %v5764 = vpack.c.b16 %v5732, %v5728
    %v5765 = vpack.c.b16 %v5733, %v5729
    %5798 = vmatprep.subr.bf16.mxu0 %v5763
    %5799 = vmatpush1.bf16.msra.mxu0 %v5762
    %5800 = vmatprep.subr.bf16.mxu0 %v5759
    %5801 = vmatpush1.bf16.msra.mxu0 %v5758
    %5802 = vmatprep.subr.bf16.mxu0 %v5755
    %5803 = vmatpush1.bf16.msra.mxu0 %v5754
    %5804 = vmatprep.subr.bf16.mxu0 %v5751
    %5805 = vmatpush1.bf16.msra.mxu0 %v5750
    %5806 = vmatprep.subr.bf16.mxu0 %v5747
    %5807 = vmatpush1.bf16.msra.mxu0 %v5746
    %5808 = vmatprep.subr.bf16.mxu0 %v5743
    %5809 = vmatpush1.bf16.msra.mxu0 %v5742
    %5810 = vmatprep.subr.bf16.mxu0 %v5739
    %5811 = vmatpush1.bf16.msra.mxu0 %v5738
    %5812 = vmatprep.subr.bf16.mxu0 %v5735
    %5813 = vmatpush1.bf16.msra.mxu0 %v5734
    %5814 = vmatprep.subr.bf16.mxu0 0
    %5815 = vmatpush2.bf16.msra.mxu0 0
    %5816 = vmatprep.subr.bf16.mxu0 0
    %5817 = vmatpush2.bf16.msra.mxu0 0
    %5818 = vmatprep.subr.bf16.mxu0 0
    %5819 = vmatpush2.bf16.msra.mxu0 0
    %5820 = vmatprep.subr.bf16.mxu0 0
    %5821 = vmatpush2.bf16.msra.mxu0 0
    %5822 = vmatprep.subr.bf16.mxu0 0
    %5823 = vmatpush2.bf16.msra.mxu0 0
    %5824 = vmatprep.subr.bf16.mxu0 0
    %5825 = vmatpush2.bf16.msra.mxu0 0
    %5826 = vmatprep.subr.bf16.mxu0 0
    %5827 = vmatpush2.bf16.msra.mxu0 0
    %5828 = vmatprep.subr.bf16.mxu0 0
    %5829 = vmatpush2.bf16.msra.mxu0 0
    %5830 = vmatprep.mubr.bf16.mxu0 0
    %5831 = vmatmul.mubr.bf16.gmra.mxu0 %v5103
    %v5832 = vpop.f32.mrf.mxu0
    %v5833 = vadd.f32 0.0, %v5832
    %v5834 = vpop.f32.mrf.mxu0
    %v5835 = vadd.f32 0.0, %v5834
    %v5836 = vpop.f32.mrf.mxu0
    %v5837 = vpop.f32.mrf.mxu0
    %5838 = vdwg.mxu0
    %5839 = vmatprep.subr.bf16.mxu0 %v5765
    %5840 = vmatpush1.bf16.msra.mxu0 %v5764
    %5841 = vmatprep.subr.bf16.mxu0 %v5761
    %5842 = vmatpush1.bf16.msra.mxu0 %v5760
    %5843 = vmatprep.subr.bf16.mxu0 %v5757
    %5844 = vmatpush1.bf16.msra.mxu0 %v5756
    %5845 = vmatprep.subr.bf16.mxu0 %v5753
    %5846 = vmatpush1.bf16.msra.mxu0 %v5752
    %5847 = vmatprep.subr.bf16.mxu0 %v5749
    %5848 = vmatpush1.bf16.msra.mxu0 %v5748
    %5849 = vmatprep.subr.bf16.mxu0 %v5745
    %5850 = vmatpush1.bf16.msra.mxu0 %v5744
    %5851 = vmatprep.subr.bf16.mxu0 %v5741
    %5852 = vmatpush1.bf16.msra.mxu0 %v5740
    %5853 = vmatprep.subr.bf16.mxu0 %v5737
    %5854 = vmatpush1.bf16.msra.mxu0 %v5736
    %5855 = vmatprep.subr.bf16.mxu0 0
    %5856 = vmatpush2.bf16.msra.mxu0 0
    %5857 = vmatprep.subr.bf16.mxu0 0
    %5858 = vmatpush2.bf16.msra.mxu0 0
    %5859 = vmatprep.subr.bf16.mxu0 0
    %5860 = vmatpush2.bf16.msra.mxu0 0
    %5861 = vmatprep.subr.bf16.mxu0 0
    %5862 = vmatpush2.bf16.msra.mxu0 0
    %5863 = vmatprep.subr.bf16.mxu0 0
    %5864 = vmatpush2.bf16.msra.mxu0 0
    %5865 = vmatprep.subr.bf16.mxu0 0
    %5866 = vmatpush2.bf16.msra.mxu0 0
    %5867 = vmatprep.subr.bf16.mxu0 0
    %5868 = vmatpush2.bf16.msra.mxu0 0
    %5869 = vmatprep.subr.bf16.mxu0 0
    %5870 = vmatpush2.bf16.msra.mxu0 0
    %5871 = vmatprep.mubr.bf16.mxu0 0
    %5872 = vmatmul.mubr.bf16.gmra.mxu0 %v5103
    %v5873 = vpop.f32.mrf.mxu0
    %v5874 = vadd.f32 0.0, %v5873
    %v5875 = vpop.f32.mrf.mxu0
    %v5876 = vadd.f32 0.0, %v5875
    %v5877 = vpop.f32.mrf.mxu0
    %v5878 = vpop.f32.mrf.mxu0
    %5879 = vdwg.mxu0
    %v5880 = vadd.f32 %v5602, %v5833
    %v5881 = vadd.f32 %v5603, %v5835
    %v5882 = vadd.f32 %v5604, %v5874
    %v5883 = vadd.f32 %v5605, %v5876
    %v5884 = vmul.f32 %v5880, 0.5
    %v5885 = vtanh.pop %v5884
    %v5886 = vmul.f32 %v5885, 0.5
    %v5887 = vadd.f32 %v5886, 0.5
    %v5888 = vmul.f32 %v5881, 0.5
    %v5889 = vtanh.pop %v5888
    %v5890 = vmul.f32 %v5889, 0.5
    %v5891 = vadd.f32 %v5890, 0.5
    %v5892 = vtanh.pop %v5882
    %v5893 = vmul.f32 %v5883, 0.5
    %v5894 = vtanh.pop %v5893
    %v5895 = vmul.f32 %v5894, 0.5
    %v5896 = vadd.f32 %v5895, 0.5
    %v5897 = vmul.f32 %v5891, %v5100
    %v5898 = vmul.f32 %v5887, %v5892
    %v5899 = vadd.f32 %v5897, %v5898
    %v5900 = vtanh.pop %v5899
    %v5901 = vmul.f32 %v5896, %v5900
    %v5902 = vpack.c.bf16 %v5901, %v5901
    %v5903 = vld [vmem:[#allocation3] sm:$0xff]
    %v5904 = vld [vmem:[#allocation3 + $0x8] sm:$0xff]
    %v5905 = vld [vmem:[#allocation3 + $0x10] sm:$0xff]
    %v5906 = vld [vmem:[#allocation3 + $0x18] sm:$0xff]
    %v5907 = vld [vmem:[#allocation15] sm:$0xff]
    %v5908 = vld [vmem:[#allocation15 + $0x8] sm:$0xff]
    %v5909 = vld [vmem:[#allocation15 + $0x10] sm:$0xff]
    %v5910 = vld [vmem:[#allocation15 + $0x18] sm:$0xff]
    %v5911 = vld [vmem:[#allocation15 + $0x20] sm:$0xff]
    %v5912 = vld [vmem:[#allocation15 + $0x28] sm:$0xff]
    %v5913 = vld [vmem:[#allocation15 + $0x30] sm:$0xff]
    %v5914 = vld [vmem:[#allocation15 + $0x38] sm:$0xff]
    %v5915 = vld [vmem:[#allocation15 + $0x40] sm:$0xff]
    %v5916 = vld [vmem:[#allocation15 + $0x48] sm:$0xff]
    %v5917 = vld [vmem:[#allocation15 + $0x50] sm:$0xff]
    %v5918 = vld [vmem:[#allocation15 + $0x58] sm:$0xff]
    %v5919 = vld [vmem:[#allocation15 + $0x60] sm:$0xff]
    %v5920 = vld [vmem:[#allocation15 + $0x68] sm:$0xff]
    %v5921 = vld [vmem:[#allocation15 + $0x70] sm:$0xff]
    %v5922 = vld [vmem:[#allocation15 + $0x78] sm:$0xff]
    %v5923 = vld [vmem:[#allocation15 + $0x80] sm:$0xff]
    %v5924 = vld [vmem:[#allocation15 + $0x88] sm:$0xff]
    %v5925 = vld [vmem:[#allocation15 + $0x90] sm:$0xff]
    %v5926 = vld [vmem:[#allocation15 + $0x98] sm:$0xff]
    %v5927 = vld [vmem:[#allocation15 + $0xa0] sm:$0xff]
    %v5928 = vld [vmem:[#allocation15 + $0xa8] sm:$0xff]
    %v5929 = vld [vmem:[#allocation15 + $0xb0] sm:$0xff]
    %v5930 = vld [vmem:[#allocation15 + $0xb8] sm:$0xff]
    %v5931 = vld [vmem:[#allocation15 + $0xc0] sm:$0xff]
    %v5932 = vld [vmem:[#allocation15 + $0xc8] sm:$0xff]
    %v5933 = vld [vmem:[#allocation15 + $0xd0] sm:$0xff]
    %v5934 = vld [vmem:[#allocation15 + $0xd8] sm:$0xff]
    %v5935 = vld [vmem:[#allocation15 + $0xe0] sm:$0xff]
    %v5936 = vld [vmem:[#allocation15 + $0xe8] sm:$0xff]
    %v5937 = vld [vmem:[#allocation15 + $0xf0] sm:$0xff]
    %v5938 = vld [vmem:[#allocation15 + $0xf8] sm:$0xff]
    %v5939 = vld [vmem:[#allocation15 + $0x100] sm:$0xff]
    %v5940 = vld [vmem:[#allocation15 + $0x108] sm:$0xff]
    %v5941 = vld [vmem:[#allocation15 + $0x110] sm:$0xff]
    %v5942 = vld [vmem:[#allocation15 + $0x118] sm:$0xff]
    %v5943 = vld [vmem:[#allocation15 + $0x120] sm:$0xff]
    %v5944 = vld [vmem:[#allocation15 + $0x128] sm:$0xff]
    %v5945 = vld [vmem:[#allocation15 + $0x130] sm:$0xff]
    %v5946 = vld [vmem:[#allocation15 + $0x138] sm:$0xff]
    %v5947 = vld [vmem:[#allocation15 + $0x140] sm:$0xff]
    %v5948 = vld [vmem:[#allocation15 + $0x148] sm:$0xff]
    %v5949 = vld [vmem:[#allocation15 + $0x150] sm:$0xff]
    %v5950 = vld [vmem:[#allocation15 + $0x158] sm:$0xff]
    %v5951 = vld [vmem:[#allocation15 + $0x160] sm:$0xff]
    %v5952 = vld [vmem:[#allocation15 + $0x168] sm:$0xff]
    %v5953 = vld [vmem:[#allocation15 + $0x170] sm:$0xff]
    %v5954 = vld [vmem:[#allocation15 + $0x178] sm:$0xff]
    %v5955 = vld [vmem:[#allocation15 + $0x180] sm:$0xff]
    %v5956 = vld [vmem:[#allocation15 + $0x188] sm:$0xff]
    %v5957 = vld [vmem:[#allocation15 + $0x190] sm:$0xff]
    %v5958 = vld [vmem:[#allocation15 + $0x198] sm:$0xff]
    %v5959 = vld [vmem:[#allocation15 + $0x1a0] sm:$0xff]
    %v5960 = vld [vmem:[#allocation15 + $0x1a8] sm:$0xff]
    %v5961 = vld [vmem:[#allocation15 + $0x1b0] sm:$0xff]
    %v5962 = vld [vmem:[#allocation15 + $0x1b8] sm:$0xff]
    %v5963 = vld [vmem:[#allocation15 + $0x1c0] sm:$0xff]
    %v5964 = vld [vmem:[#allocation15 + $0x1c8] sm:$0xff]
    %v5965 = vld [vmem:[#allocation15 + $0x1d0] sm:$0xff]
    %v5966 = vld [vmem:[#allocation15 + $0x1d8] sm:$0xff]
    %v5967 = vld [vmem:[#allocation15 + $0x1e0] sm:$0xff]
    %v5968 = vld [vmem:[#allocation15 + $0x1e8] sm:$0xff]
    %v5969 = vld [vmem:[#allocation15 + $0x1f0] sm:$0xff]
    %v5970 = vld [vmem:[#allocation15 + $0x1f8] sm:$0xff]
    %v6035 = vunpack.c.l.b16 %v5907
    %v6036 = vunpack.c.h.b16 %v5907
    %v6037 = vunpack.c.l.b16 %v5908
    %v6038 = vunpack.c.h.b16 %v5908
    %v6039 = vunpack.c.l.b16 %v5909
    %v6040 = vunpack.c.h.b16 %v5909
    %v6041 = vunpack.c.l.b16 %v5910
    %v6042 = vunpack.c.h.b16 %v5910
    %v6043 = vunpack.c.l.b16 %v5911
    %v6044 = vunpack.c.h.b16 %v5911
    %v6045 = vunpack.c.l.b16 %v5912
    %v6046 = vunpack.c.h.b16 %v5912
    %v6047 = vunpack.c.l.b16 %v5913
    %v6048 = vunpack.c.h.b16 %v5913
    %v6049 = vunpack.c.l.b16 %v5914
    %v6050 = vunpack.c.h.b16 %v5914
    %v6051 = vunpack.c.l.b16 %v5915
    %v6052 = vunpack.c.h.b16 %v5915
    %v6053 = vunpack.c.l.b16 %v5916
    %v6054 = vunpack.c.h.b16 %v5916
    %v6055 = vunpack.c.l.b16 %v5917
    %v6056 = vunpack.c.h.b16 %v5917
    %v6057 = vunpack.c.l.b16 %v5918
    %v6058 = vunpack.c.h.b16 %v5918
    %v6059 = vunpack.c.l.b16 %v5919
    %v6060 = vunpack.c.h.b16 %v5919
    %v6061 = vunpack.c.l.b16 %v5920
    %v6062 = vunpack.c.h.b16 %v5920
    %v6063 = vunpack.c.l.b16 %v5921
    %v6064 = vunpack.c.h.b16 %v5921
    %v6065 = vunpack.c.l.b16 %v5922
    %v6066 = vunpack.c.h.b16 %v5922
    %v6067 = vunpack.c.l.b16 %v5923
    %v6068 = vunpack.c.h.b16 %v5923
    %v6069 = vunpack.c.l.b16 %v5924
    %v6070 = vunpack.c.h.b16 %v5924
    %v6071 = vunpack.c.l.b16 %v5925
    %v6072 = vunpack.c.h.b16 %v5925
    %v6073 = vunpack.c.l.b16 %v5926
    %v6074 = vunpack.c.h.b16 %v5926
    %v6075 = vunpack.c.l.b16 %v5927
    %v6076 = vunpack.c.h.b16 %v5927
    %v6077 = vunpack.c.l.b16 %v5928
    %v6078 = vunpack.c.h.b16 %v5928
    %v6079 = vunpack.c.l.b16 %v5929
    %v6080 = vunpack.c.h.b16 %v5929
    %v6081 = vunpack.c.l.b16 %v5930
    %v6082 = vunpack.c.h.b16 %v5930
    %v6083 = vunpack.c.l.b16 %v5931
    %v6084 = vunpack.c.h.b16 %v5931
    %v6085 = vunpack.c.l.b16 %v5932
    %v6086 = vunpack.c.h.b16 %v5932
    %v6087 = vunpack.c.l.b16 %v5933
    %v6088 = vunpack.c.h.b16 %v5933
    %v6089 = vunpack.c.l.b16 %v5934
    %v6090 = vunpack.c.h.b16 %v5934
    %v6091 = vunpack.c.l.b16 %v5935
    %v6092 = vunpack.c.h.b16 %v5935
    %v6093 = vunpack.c.l.b16 %v5936
    %v6094 = vunpack.c.h.b16 %v5936
    %v6095 = vunpack.c.l.b16 %v5937
    %v6096 = vunpack.c.h.b16 %v5937
    %v6097 = vunpack.c.l.b16 %v5938
    %v6098 = vunpack.c.h.b16 %v5938
    %v6099 = vunpack.c.l.b16 %v5939
    %v6100 = vunpack.c.h.b16 %v5939
    %v6101 = vunpack.c.l.b16 %v5940
    %v6102 = vunpack.c.h.b16 %v5940
    %v6103 = vunpack.c.l.b16 %v5941
    %v6104 = vunpack.c.h.b16 %v5941
    %v6105 = vunpack.c.l.b16 %v5942
    %v6106 = vunpack.c.h.b16 %v5942
    %v6107 = vunpack.c.l.b16 %v5943
    %v6108 = vunpack.c.h.b16 %v5943
    %v6109 = vunpack.c.l.b16 %v5944
    %v6110 = vunpack.c.h.b16 %v5944
    %v6111 = vunpack.c.l.b16 %v5945
    %v6112 = vunpack.c.h.b16 %v5945
    %v6113 = vunpack.c.l.b16 %v5946
    %v6114 = vunpack.c.h.b16 %v5946
    %v6115 = vunpack.c.l.b16 %v5947
    %v6116 = vunpack.c.h.b16 %v5947
    %v6117 = vunpack.c.l.b16 %v5948
    %v6118 = vunpack.c.h.b16 %v5948
    %v6119 = vunpack.c.l.b16 %v5949
    %v6120 = vunpack.c.h.b16 %v5949
    %v6121 = vunpack.c.l.b16 %v5950
    %v6122 = vunpack.c.h.b16 %v5950
    %v6123 = vunpack.c.l.b16 %v5951
    %v6124 = vunpack.c.h.b16 %v5951
    %v6125 = vunpack.c.l.b16 %v5952
    %v6126 = vunpack.c.h.b16 %v5952
    %v6127 = vunpack.c.l.b16 %v5953
    %v6128 = vunpack.c.h.b16 %v5953
    %v6129 = vunpack.c.l.b16 %v5954
    %v6130 = vunpack.c.h.b16 %v5954
    %v6131 = vunpack.c.l.b16 %v5955
    %v6132 = vunpack.c.h.b16 %v5955
    %v6133 = vunpack.c.l.b16 %v5956
    %v6134 = vunpack.c.h.b16 %v5956
    %v6135 = vunpack.c.l.b16 %v5957
    %v6136 = vunpack.c.h.b16 %v5957
    %v6137 = vunpack.c.l.b16 %v5958
    %v6138 = vunpack.c.h.b16 %v5958
    %v6139 = vunpack.c.l.b16 %v5959
    %v6140 = vunpack.c.h.b16 %v5959
    %v6141 = vunpack.c.l.b16 %v5960
    %v6142 = vunpack.c.h.b16 %v5960
    %v6143 = vunpack.c.l.b16 %v5961
    %v6144 = vunpack.c.h.b16 %v5961
    %v6145 = vunpack.c.l.b16 %v5962
    %v6146 = vunpack.c.h.b16 %v5962
    %v6147 = vunpack.c.l.b16 %v5963
    %v6148 = vunpack.c.h.b16 %v5963
    %v6149 = vunpack.c.l.b16 %v5964
    %v6150 = vunpack.c.h.b16 %v5964
    %v6151 = vunpack.c.l.b16 %v5965
    %v6152 = vunpack.c.h.b16 %v5965
    %v6153 = vunpack.c.l.b16 %v5966
    %v6154 = vunpack.c.h.b16 %v5966
    %v6155 = vunpack.c.l.b16 %v5967
    %v6156 = vunpack.c.h.b16 %v5967
    %v6157 = vunpack.c.l.b16 %v5968
    %v6158 = vunpack.c.h.b16 %v5968
    %v6159 = vunpack.c.l.b16 %v5969
    %v6160 = vunpack.c.h.b16 %v5969
    %v6161 = vunpack.c.l.b16 %v5970
    %v6162 = vunpack.c.h.b16 %v5970
    %v6163 = vpack.c.b16 %v6039, %v6035
    %v6164 = vpack.c.b16 %v6040, %v6036
    %v6165 = vpack.c.b16 %v6041, %v6037
    %v6166 = vpack.c.b16 %v6042, %v6038
    %v6167 = vpack.c.b16 %v6047, %v6043
    %v6168 = vpack.c.b16 %v6048, %v6044
    %v6169 = vpack.c.b16 %v6049, %v6045
    %v6170 = vpack.c.b16 %v6050, %v6046
    %v6171 = vpack.c.b16 %v6055, %v6051
    %v6172 = vpack.c.b16 %v6056, %v6052
    %v6173 = vpack.c.b16 %v6057, %v6053
    %v6174 = vpack.c.b16 %v6058, %v6054
    %v6175 = vpack.c.b16 %v6063, %v6059
    %v6176 = vpack.c.b16 %v6064, %v6060
    %v6177 = vpack.c.b16 %v6065, %v6061
    %v6178 = vpack.c.b16 %v6066, %v6062
    %v6179 = vpack.c.b16 %v6071, %v6067
    %v6180 = vpack.c.b16 %v6072, %v6068
    %v6181 = vpack.c.b16 %v6073, %v6069
    %v6182 = vpack.c.b16 %v6074, %v6070
    %v6183 = vpack.c.b16 %v6079, %v6075
    %v6184 = vpack.c.b16 %v6080, %v6076
    %v6185 = vpack.c.b16 %v6081, %v6077
    %v6186 = vpack.c.b16 %v6082, %v6078
    %v6187 = vpack.c.b16 %v6087, %v6083
    %v6188 = vpack.c.b16 %v6088, %v6084
    %v6189 = vpack.c.b16 %v6089, %v6085
    %v6190 = vpack.c.b16 %v6090, %v6086
    %v6191 = vpack.c.b16 %v6095, %v6091
    %v6192 = vpack.c.b16 %v6096, %v6092
    %v6193 = vpack.c.b16 %v6097, %v6093
    %v6194 = vpack.c.b16 %v6098, %v6094
    %v6195 = vpack.c.b16 %v6103, %v6099
    %v6196 = vpack.c.b16 %v6104, %v6100
    %v6197 = vpack.c.b16 %v6105, %v6101
    %v6198 = vpack.c.b16 %v6106, %v6102
    %v6199 = vpack.c.b16 %v6111, %v6107
    %v6200 = vpack.c.b16 %v6112, %v6108
    %v6201 = vpack.c.b16 %v6113, %v6109
    %v6202 = vpack.c.b16 %v6114, %v6110
    %v6203 = vpack.c.b16 %v6119, %v6115
    %v6204 = vpack.c.b16 %v6120, %v6116
    %v6205 = vpack.c.b16 %v6121, %v6117
    %v6206 = vpack.c.b16 %v6122, %v6118
    %v6207 = vpack.c.b16 %v6127, %v6123
    %v6208 = vpack.c.b16 %v6128, %v6124
    %v6209 = vpack.c.b16 %v6129, %v6125
    %v6210 = vpack.c.b16 %v6130, %v6126
    %v6211 = vpack.c.b16 %v6135, %v6131
    %v6212 = vpack.c.b16 %v6136, %v6132
    %v6213 = vpack.c.b16 %v6137, %v6133
    %v6214 = vpack.c.b16 %v6138, %v6134
    %v6215 = vpack.c.b16 %v6143, %v6139
    %v6216 = vpack.c.b16 %v6144, %v6140
    %v6217 = vpack.c.b16 %v6145, %v6141
    %v6218 = vpack.c.b16 %v6146, %v6142
    %v6219 = vpack.c.b16 %v6151, %v6147
    %v6220 = vpack.c.b16 %v6152, %v6148
    %v6221 = vpack.c.b16 %v6153, %v6149
    %v6222 = vpack.c.b16 %v6154, %v6150
    %v6223 = vpack.c.b16 %v6159, %v6155
    %v6224 = vpack.c.b16 %v6160, %v6156
    %v6225 = vpack.c.b16 %v6161, %v6157
    %v6226 = vpack.c.b16 %v6162, %v6158
    %6291 = vmatprep.subr.bf16.mxu0 %v6192
    %6292 = vmatpush1.bf16.msra.mxu0 %v6191
    %6293 = vmatprep.subr.bf16.mxu0 %v6188
    %6294 = vmatpush1.bf16.msra.mxu0 %v6187
    %6295 = vmatprep.subr.bf16.mxu0 %v6184
    %6296 = vmatpush1.bf16.msra.mxu0 %v6183
    %6297 = vmatprep.subr.bf16.mxu0 %v6180
    %6298 = vmatpush1.bf16.msra.mxu0 %v6179
    %6299 = vmatprep.subr.bf16.mxu0 %v6176
    %6300 = vmatpush1.bf16.msra.mxu0 %v6175
    %6301 = vmatprep.subr.bf16.mxu0 %v6172
    %6302 = vmatpush1.bf16.msra.mxu0 %v6171
    %6303 = vmatprep.subr.bf16.mxu0 %v6168
    %6304 = vmatpush1.bf16.msra.mxu0 %v6167
    %6305 = vmatprep.subr.bf16.mxu0 %v6164
    %6306 = vmatpush1.bf16.msra.mxu0 %v6163
    %6307 = vmatprep.subr.bf16.mxu0 %v6224
    %6308 = vmatpush2.bf16.msra.mxu0 %v6223
    %6309 = vmatprep.subr.bf16.mxu0 %v6220
    %6310 = vmatpush2.bf16.msra.mxu0 %v6219
    %6311 = vmatprep.subr.bf16.mxu0 %v6216
    %6312 = vmatpush2.bf16.msra.mxu0 %v6215
    %6313 = vmatprep.subr.bf16.mxu0 %v6212
    %6314 = vmatpush2.bf16.msra.mxu0 %v6211
    %6315 = vmatprep.subr.bf16.mxu0 %v6208
    %6316 = vmatpush2.bf16.msra.mxu0 %v6207
    %6317 = vmatprep.subr.bf16.mxu0 %v6204
    %6318 = vmatpush2.bf16.msra.mxu0 %v6203
    %6319 = vmatprep.subr.bf16.mxu0 %v6200
    %6320 = vmatpush2.bf16.msra.mxu0 %v6199
    %6321 = vmatprep.subr.bf16.mxu0 %v6196
    %6322 = vmatpush2.bf16.msra.mxu0 %v6195
    %6323 = vmatprep.mubr.bf16.mxu0 %v5596
    %6324 = vmatmul.mubr.bf16.gmra.mxu0 %v5902
    %v6325 = vpop.f32.mrf.mxu0
    %v6326 = vadd.f32 0.0, %v6325
    %v6327 = vpop.f32.mrf.mxu0
    %v6328 = vadd.f32 0.0, %v6327
    %v6329 = vpop.f32.mrf.mxu0
    %v6330 = vpop.f32.mrf.mxu0
    %6331 = vdwg.mxu0
    %6332 = vmatprep.subr.bf16.mxu0 %v6194
    %6333 = vmatpush1.bf16.msra.mxu0 %v6193
    %6334 = vmatprep.subr.bf16.mxu0 %v6190
    %6335 = vmatpush1.bf16.msra.mxu0 %v6189
    %6336 = vmatprep.subr.bf16.mxu0 %v6186
    %6337 = vmatpush1.bf16.msra.mxu0 %v6185
    %6338 = vmatprep.subr.bf16.mxu0 %v6182
    %6339 = vmatpush1.bf16.msra.mxu0 %v6181
    %6340 = vmatprep.subr.bf16.mxu0 %v6178
    %6341 = vmatpush1.bf16.msra.mxu0 %v6177
    %6342 = vmatprep.subr.bf16.mxu0 %v6174
    %6343 = vmatpush1.bf16.msra.mxu0 %v6173
    %6344 = vmatprep.subr.bf16.mxu0 %v6170
    %6345 = vmatpush1.bf16.msra.mxu0 %v6169
    %6346 = vmatprep.subr.bf16.mxu0 %v6166
    %6347 = vmatpush1.bf16.msra.mxu0 %v6165
    %6348 = vmatprep.subr.bf16.mxu0 %v6226
    %6349 = vmatpush2.bf16.msra.mxu0 %v6225
    %6350 = vmatprep.subr.bf16.mxu0 %v6222
    %6351 = vmatpush2.bf16.msra.mxu0 %v6221
    %6352 = vmatprep.subr.bf16.mxu0 %v6218
    %6353 = vmatpush2.bf16.msra.mxu0 %v6217
    %6354 = vmatprep.subr.bf16.mxu0 %v6214
    %6355 = vmatpush2.bf16.msra.mxu0 %v6213
    %6356 = vmatprep.subr.bf16.mxu0 %v6210
    %6357 = vmatpush2.bf16.msra.mxu0 %v6209
    %6358 = vmatprep.subr.bf16.mxu0 %v6206
    %6359 = vmatpush2.bf16.msra.mxu0 %v6205
    %6360 = vmatprep.subr.bf16.mxu0 %v6202
    %6361 = vmatpush2.bf16.msra.mxu0 %v6201
    %6362 = vmatprep.subr.bf16.mxu0 %v6198
    %6363 = vmatpush2.bf16.msra.mxu0 %v6197
    %6364 = vmatprep.mubr.bf16.mxu0 %v5596
    %6365 = vmatmul.mubr.bf16.gmra.mxu0 %v5902
    %v6366 = vpop.f32.mrf.mxu0
    %v6367 = vadd.f32 0.0, %v6366
    %v6368 = vpop.f32.mrf.mxu0
    %v6369 = vadd.f32 0.0, %v6368
    %v6370 = vpop.f32.mrf.mxu0
    %v6371 = vpop.f32.mrf.mxu0
    %6372 = vdwg.mxu0
    %v6373 = vadd.f32 %v5903, %v6326
    %v6374 = vadd.f32 %v5904, %v6328
    %v6375 = vadd.f32 %v5905, %v6367
    %v6376 = vadd.f32 %v5906, %v6369
    %v6377 = vmul.f32 %v6373, 0.5
    %v6378 = vtanh.pop %v6377
    %v6379 = vmul.f32 %v6378, 0.5
    %v6380 = vadd.f32 %v6379, 0.5
    %v6381 = vmul.f32 %v6374, 0.5
    %v6382 = vtanh.pop %v6381
    %v6383 = vmul.f32 %v6382, 0.5
    %v6384 = vadd.f32 %v6383, 0.5
    %v6385 = vtanh.pop %v6375
    %v6386 = vmul.f32 %v6376, 0.5
    %v6387 = vtanh.pop %v6386
    %v6388 = vmul.f32 %v6387, 0.5
    %v6389 = vadd.f32 %v6388, 0.5
    %v6390 = vmul.f32 %v6384, %v5593
    %v6391 = vmul.f32 %v6380, %v6385
    %v6392 = vadd.f32 %v6390, %v6391
    %v6393 = vtanh.pop %v6392
    %v6394 = vmul.f32 %v6389, %v6393
    %v6395 = vpack.c.bf16 %v6394, %v6394
    %s6396 = scalar_lea.vmem [#allocation16], 24
    %6397 = vst [vmem:[%s6396] sm:$0xf] %v6395
    %s6398 = smul.u32 7, 4
    %s6399 = smul.addr %s6398, 8
    %s6400 = scalar_lea.vmem [#allocation2], %s6399
    %v6401 = vld [vmem:[%s6400] sm:$0xff]
    %v6402 = vld [vmem:[%s6400 + $0x8] sm:$0xff]
    %v6403 = vld [vmem:[%s6400 + $0x10] sm:$0xff]
    %v6404 = vld [vmem:[%s6400 + $0x18] sm:$0xff]
    %v6405 = vld [vmem:[#allocation12] sm:$0xff]
    %v6406 = vld [vmem:[#allocation12 + $0x8] sm:$0xff]
    %v6407 = vld [vmem:[#allocation12 + $0x10] sm:$0xff]
    %v6408 = vld [vmem:[#allocation12 + $0x18] sm:$0xff]
    %v6409 = vld [vmem:[#allocation12 + $0x20] sm:$0xff]
    %v6410 = vld [vmem:[#allocation12 + $0x28] sm:$0xff]
    %v6411 = vld [vmem:[#allocation12 + $0x30] sm:$0xff]
    %v6412 = vld [vmem:[#allocation12 + $0x38] sm:$0xff]
    %v6413 = vld [vmem:[#allocation12 + $0x40] sm:$0xff]
    %v6414 = vld [vmem:[#allocation12 + $0x48] sm:$0xff]
    %v6415 = vld [vmem:[#allocation12 + $0x50] sm:$0xff]
    %v6416 = vld [vmem:[#allocation12 + $0x58] sm:$0xff]
    %v6417 = vld [vmem:[#allocation12 + $0x60] sm:$0xff]
    %v6418 = vld [vmem:[#allocation12 + $0x68] sm:$0xff]
    %v6419 = vld [vmem:[#allocation12 + $0x70] sm:$0xff]
    %v6420 = vld [vmem:[#allocation12 + $0x78] sm:$0xff]
    %v6421 = vld [vmem:[#allocation12 + $0x80] sm:$0xff]
    %v6422 = vld [vmem:[#allocation12 + $0x88] sm:$0xff]
    %v6423 = vld [vmem:[#allocation12 + $0x90] sm:$0xff]
    %v6424 = vld [vmem:[#allocation12 + $0x98] sm:$0xff]
    %v6425 = vld [vmem:[#allocation12 + $0xa0] sm:$0xff]
    %v6426 = vld [vmem:[#allocation12 + $0xa8] sm:$0xff]
    %v6427 = vld [vmem:[#allocation12 + $0xb0] sm:$0xff]
    %v6428 = vld [vmem:[#allocation12 + $0xb8] sm:$0xff]
    %v6429 = vld [vmem:[#allocation12 + $0xc0] sm:$0xff]
    %v6430 = vld [vmem:[#allocation12 + $0xc8] sm:$0xff]
    %v6431 = vld [vmem:[#allocation12 + $0xd0] sm:$0xff]
    %v6432 = vld [vmem:[#allocation12 + $0xd8] sm:$0xff]
    %v6433 = vld [vmem:[#allocation12 + $0xe0] sm:$0xff]
    %v6434 = vld [vmem:[#allocation12 + $0xe8] sm:$0xff]
    %v6435 = vld [vmem:[#allocation12 + $0xf0] sm:$0xff]
    %v6436 = vld [vmem:[#allocation12 + $0xf8] sm:$0xff]
    %v6469 = vunpack.c.l.b16 %v6405
    %v6470 = vunpack.c.h.b16 %v6405
    %v6471 = vunpack.c.l.b16 %v6406
    %v6472 = vunpack.c.h.b16 %v6406
    %v6473 = vunpack.c.l.b16 %v6407
    %v6474 = vunpack.c.h.b16 %v6407
    %v6475 = vunpack.c.l.b16 %v6408
    %v6476 = vunpack.c.h.b16 %v6408
    %v6477 = vunpack.c.l.b16 %v6409
    %v6478 = vunpack.c.h.b16 %v6409
    %v6479 = vunpack.c.l.b16 %v6410
    %v6480 = vunpack.c.h.b16 %v6410
    %v6481 = vunpack.c.l.b16 %v6411
    %v6482 = vunpack.c.h.b16 %v6411
    %v6483 = vunpack.c.l.b16 %v6412
    %v6484 = vunpack.c.h.b16 %v6412
    %v6485 = vunpack.c.l.b16 %v6413
    %v6486 = vunpack.c.h.b16 %v6413
    %v6487 = vunpack.c.l.b16 %v6414
    %v6488 = vunpack.c.h.b16 %v6414
    %v6489 = vunpack.c.l.b16 %v6415
    %v6490 = vunpack.c.h.b16 %v6415
    %v6491 = vunpack.c.l.b16 %v6416
    %v6492 = vunpack.c.h.b16 %v6416
    %v6493 = vunpack.c.l.b16 %v6417
    %v6494 = vunpack.c.h.b16 %v6417
    %v6495 = vunpack.c.l.b16 %v6418
    %v6496 = vunpack.c.h.b16 %v6418
    %v6497 = vunpack.c.l.b16 %v6419
    %v6498 = vunpack.c.h.b16 %v6419
    %v6499 = vunpack.c.l.b16 %v6420
    %v6500 = vunpack.c.h.b16 %v6420
    %v6501 = vunpack.c.l.b16 %v6421
    %v6502 = vunpack.c.h.b16 %v6421
    %v6503 = vunpack.c.l.b16 %v6422
    %v6504 = vunpack.c.h.b16 %v6422
    %v6505 = vunpack.c.l.b16 %v6423
    %v6506 = vunpack.c.h.b16 %v6423
    %v6507 = vunpack.c.l.b16 %v6424
    %v6508 = vunpack.c.h.b16 %v6424
    %v6509 = vunpack.c.l.b16 %v6425
    %v6510 = vunpack.c.h.b16 %v6425
    %v6511 = vunpack.c.l.b16 %v6426
    %v6512 = vunpack.c.h.b16 %v6426
    %v6513 = vunpack.c.l.b16 %v6427
    %v6514 = vunpack.c.h.b16 %v6427
    %v6515 = vunpack.c.l.b16 %v6428
    %v6516 = vunpack.c.h.b16 %v6428
    %v6517 = vunpack.c.l.b16 %v6429
    %v6518 = vunpack.c.h.b16 %v6429
    %v6519 = vunpack.c.l.b16 %v6430
    %v6520 = vunpack.c.h.b16 %v6430
    %v6521 = vunpack.c.l.b16 %v6431
    %v6522 = vunpack.c.h.b16 %v6431
    %v6523 = vunpack.c.l.b16 %v6432
    %v6524 = vunpack.c.h.b16 %v6432
    %v6525 = vunpack.c.l.b16 %v6433
    %v6526 = vunpack.c.h.b16 %v6433
    %v6527 = vunpack.c.l.b16 %v6434
    %v6528 = vunpack.c.h.b16 %v6434
    %v6529 = vunpack.c.l.b16 %v6435
    %v6530 = vunpack.c.h.b16 %v6435
    %v6531 = vunpack.c.l.b16 %v6436
    %v6532 = vunpack.c.h.b16 %v6436
    %v6533 = vpack.c.b16 %v6473, %v6469
    %v6534 = vpack.c.b16 %v6474, %v6470
    %v6535 = vpack.c.b16 %v6475, %v6471
    %v6536 = vpack.c.b16 %v6476, %v6472
    %v6537 = vpack.c.b16 %v6481, %v6477
    %v6538 = vpack.c.b16 %v6482, %v6478
    %v6539 = vpack.c.b16 %v6483, %v6479
    %v6540 = vpack.c.b16 %v6484, %v6480
    %v6541 = vpack.c.b16 %v6489, %v6485
    %v6542 = vpack.c.b16 %v6490, %v6486
    %v6543 = vpack.c.b16 %v6491, %v6487
    %v6544 = vpack.c.b16 %v6492, %v6488
    %v6545 = vpack.c.b16 %v6497, %v6493
    %v6546 = vpack.c.b16 %v6498, %v6494
    %v6547 = vpack.c.b16 %v6499, %v6495
    %v6548 = vpack.c.b16 %v6500, %v6496
    %v6549 = vpack.c.b16 %v6505, %v6501
    %v6550 = vpack.c.b16 %v6506, %v6502
    %v6551 = vpack.c.b16 %v6507, %v6503
    %v6552 = vpack.c.b16 %v6508, %v6504
    %v6553 = vpack.c.b16 %v6513, %v6509
    %v6554 = vpack.c.b16 %v6514, %v6510
    %v6555 = vpack.c.b16 %v6515, %v6511
    %v6556 = vpack.c.b16 %v6516, %v6512
    %v6557 = vpack.c.b16 %v6521, %v6517
    %v6558 = vpack.c.b16 %v6522, %v6518
    %v6559 = vpack.c.b16 %v6523, %v6519
    %v6560 = vpack.c.b16 %v6524, %v6520
    %v6561 = vpack.c.b16 %v6529, %v6525
    %v6562 = vpack.c.b16 %v6530, %v6526
    %v6563 = vpack.c.b16 %v6531, %v6527
    %v6564 = vpack.c.b16 %v6532, %v6528
    %6597 = vmatprep.subr.bf16.mxu0 %v6562
    %6598 = vmatpush1.bf16.msra.mxu0 %v6561
    %6599 = vmatprep.subr.bf16.mxu0 %v6558
    %6600 = vmatpush1.bf16.msra.mxu0 %v6557
    %6601 = vmatprep.subr.bf16.mxu0 %v6554
    %6602 = vmatpush1.bf16.msra.mxu0 %v6553
    %6603 = vmatprep.subr.bf16.mxu0 %v6550
    %6604 = vmatpush1.bf16.msra.mxu0 %v6549
    %6605 = vmatprep.subr.bf16.mxu0 %v6546
    %6606 = vmatpush1.bf16.msra.mxu0 %v6545
    %6607 = vmatprep.subr.bf16.mxu0 %v6542
    %6608 = vmatpush1.bf16.msra.mxu0 %v6541
    %6609 = vmatprep.subr.bf16.mxu0 %v6538
    %6610 = vmatpush1.bf16.msra.mxu0 %v6537
    %6611 = vmatprep.subr.bf16.mxu0 %v6534
    %6612 = vmatpush1.bf16.msra.mxu0 %v6533
    %6613 = vmatprep.subr.bf16.mxu0 0
    %6614 = vmatpush2.bf16.msra.mxu0 0
    %6615 = vmatprep.subr.bf16.mxu0 0
    %6616 = vmatpush2.bf16.msra.mxu0 0
    %6617 = vmatprep.subr.bf16.mxu0 0
    %6618 = vmatpush2.bf16.msra.mxu0 0
    %6619 = vmatprep.subr.bf16.mxu0 0
    %6620 = vmatpush2.bf16.msra.mxu0 0
    %6621 = vmatprep.subr.bf16.mxu0 0
    %6622 = vmatpush2.bf16.msra.mxu0 0
    %6623 = vmatprep.subr.bf16.mxu0 0
    %6624 = vmatpush2.bf16.msra.mxu0 0
    %6625 = vmatprep.subr.bf16.mxu0 0
    %6626 = vmatpush2.bf16.msra.mxu0 0
    %6627 = vmatprep.subr.bf16.mxu0 0
    %6628 = vmatpush2.bf16.msra.mxu0 0
    %6629 = vmatprep.mubr.bf16.mxu0 0
    %6630 = vmatmul.mubr.bf16.gmra.mxu0 %v5902
    %v6631 = vpop.f32.mrf.mxu0
    %v6632 = vadd.f32 0.0, %v6631
    %v6633 = vpop.f32.mrf.mxu0
    %v6634 = vadd.f32 0.0, %v6633
    %v6635 = vpop.f32.mrf.mxu0
    %v6636 = vpop.f32.mrf.mxu0
    %6637 = vdwg.mxu0
    %6638 = vmatprep.subr.bf16.mxu0 %v6564
    %6639 = vmatpush1.bf16.msra.mxu0 %v6563
    %6640 = vmatprep.subr.bf16.mxu0 %v6560
    %6641 = vmatpush1.bf16.msra.mxu0 %v6559
    %6642 = vmatprep.subr.bf16.mxu0 %v6556
    %6643 = vmatpush1.bf16.msra.mxu0 %v6555
    %6644 = vmatprep.subr.bf16.mxu0 %v6552
    %6645 = vmatpush1.bf16.msra.mxu0 %v6551
    %6646 = vmatprep.subr.bf16.mxu0 %v6548
    %6647 = vmatpush1.bf16.msra.mxu0 %v6547
    %6648 = vmatprep.subr.bf16.mxu0 %v6544
    %6649 = vmatpush1.bf16.msra.mxu0 %v6543
    %6650 = vmatprep.subr.bf16.mxu0 %v6540
    %6651 = vmatpush1.bf16.msra.mxu0 %v6539
    %6652 = vmatprep.subr.bf16.mxu0 %v6536
    %6653 = vmatpush1.bf16.msra.mxu0 %v6535
    %6654 = vmatprep.subr.bf16.mxu0 0
    %6655 = vmatpush2.bf16.msra.mxu0 0
    %6656 = vmatprep.subr.bf16.mxu0 0
    %6657 = vmatpush2.bf16.msra.mxu0 0
    %6658 = vmatprep.subr.bf16.mxu0 0
    %6659 = vmatpush2.bf16.msra.mxu0 0
    %6660 = vmatprep.subr.bf16.mxu0 0
    %6661 = vmatpush2.bf16.msra.mxu0 0
    %6662 = vmatprep.subr.bf16.mxu0 0
    %6663 = vmatpush2.bf16.msra.mxu0 0
    %6664 = vmatprep.subr.bf16.mxu0 0
    %6665 = vmatpush2.bf16.msra.mxu0 0
    %6666 = vmatprep.subr.bf16.mxu0 0
    %6667 = vmatpush2.bf16.msra.mxu0 0
    %6668 = vmatprep.subr.bf16.mxu0 0
    %6669 = vmatpush2.bf16.msra.mxu0 0
    %6670 = vmatprep.mubr.bf16.mxu0 0
    %6671 = vmatmul.mubr.bf16.gmra.mxu0 %v5902
    %v6672 = vpop.f32.mrf.mxu0
    %v6673 = vadd.f32 0.0, %v6672
    %v6674 = vpop.f32.mrf.mxu0
    %v6675 = vadd.f32 0.0, %v6674
    %v6676 = vpop.f32.mrf.mxu0
    %v6677 = vpop.f32.mrf.mxu0
    %6678 = vdwg.mxu0
    %v6679 = vadd.f32 %v6401, %v6632
    %v6680 = vadd.f32 %v6402, %v6634
    %v6681 = vadd.f32 %v6403, %v6673
    %v6682 = vadd.f32 %v6404, %v6675
    %v6683 = vmul.f32 %v6679, 0.5
    %v6684 = vtanh.pop %v6683
    %v6685 = vmul.f32 %v6684, 0.5
    %v6686 = vadd.f32 %v6685, 0.5
    %v6687 = vmul.f32 %v6680, 0.5
    %v6688 = vtanh.pop %v6687
    %v6689 = vmul.f32 %v6688, 0.5
    %v6690 = vadd.f32 %v6689, 0.5
    %v6691 = vtanh.pop %v6681
    %v6692 = vmul.f32 %v6682, 0.5
    %v6693 = vtanh.pop %v6692
    %v6694 = vmul.f32 %v6693, 0.5
    %v6695 = vadd.f32 %v6694, 0.5
    %v6696 = vmul.f32 %v6690, %v5899
    %v6697 = vmul.f32 %v6686, %v6691
    %v6698 = vadd.f32 %v6696, %v6697
    %v6699 = vtanh.pop %v6698
    %v6700 = vmul.f32 %v6695, %v6699
    %v6701 = vpack.c.bf16 %v6700, %v6700
    %v6702 = vld [vmem:[#allocation3] sm:$0xff]
    %v6703 = vld [vmem:[#allocation3 + $0x8] sm:$0xff]
    %v6704 = vld [vmem:[#allocation3 + $0x10] sm:$0xff]
    %v6705 = vld [vmem:[#allocation3 + $0x18] sm:$0xff]
    %v6706 = vld [vmem:[#allocation15] sm:$0xff]
    %v6707 = vld [vmem:[#allocation15 + $0x8] sm:$0xff]
    %v6708 = vld [vmem:[#allocation15 + $0x10] sm:$0xff]
    %v6709 = vld [vmem:[#allocation15 + $0x18] sm:$0xff]
    %v6710 = vld [vmem:[#allocation15 + $0x20] sm:$0xff]
    %v6711 = vld [vmem:[#allocation15 + $0x28] sm:$0xff]
    %v6712 = vld [vmem:[#allocation15 + $0x30] sm:$0xff]
    %v6713 = vld [vmem:[#allocation15 + $0x38] sm:$0xff]
    %v6714 = vld [vmem:[#allocation15 + $0x40] sm:$0xff]
    %v6715 = vld [vmem:[#allocation15 + $0x48] sm:$0xff]
    %v6716 = vld [vmem:[#allocation15 + $0x50] sm:$0xff]
    %v6717 = vld [vmem:[#allocation15 + $0x58] sm:$0xff]
    %v6718 = vld [vmem:[#allocation15 + $0x60] sm:$0xff]
    %v6719 = vld [vmem:[#allocation15 + $0x68] sm:$0xff]
    %v6720 = vld [vmem:[#allocation15 + $0x70] sm:$0xff]
    %v6721 = vld [vmem:[#allocation15 + $0x78] sm:$0xff]
    %v6722 = vld [vmem:[#allocation15 + $0x80] sm:$0xff]
    %v6723 = vld [vmem:[#allocation15 + $0x88] sm:$0xff]
    %v6724 = vld [vmem:[#allocation15 + $0x90] sm:$0xff]
    %v6725 = vld [vmem:[#allocation15 + $0x98] sm:$0xff]
    %v6726 = vld [vmem:[#allocation15 + $0xa0] sm:$0xff]
    %v6727 = vld [vmem:[#allocation15 + $0xa8] sm:$0xff]
    %v6728 = vld [vmem:[#allocation15 + $0xb0] sm:$0xff]
    %v6729 = vld [vmem:[#allocation15 + $0xb8] sm:$0xff]
    %v6730 = vld [vmem:[#allocation15 + $0xc0] sm:$0xff]
    %v6731 = vld [vmem:[#allocation15 + $0xc8] sm:$0xff]
    %v6732 = vld [vmem:[#allocation15 + $0xd0] sm:$0xff]
    %v6733 = vld [vmem:[#allocation15 + $0xd8] sm:$0xff]
    %v6734 = vld [vmem:[#allocation15 + $0xe0] sm:$0xff]
    %v6735 = vld [vmem:[#allocation15 + $0xe8] sm:$0xff]
    %v6736 = vld [vmem:[#allocation15 + $0xf0] sm:$0xff]
    %v6737 = vld [vmem:[#allocation15 + $0xf8] sm:$0xff]
    %v6738 = vld [vmem:[#allocation15 + $0x100] sm:$0xff]
    %v6739 = vld [vmem:[#allocation15 + $0x108] sm:$0xff]
    %v6740 = vld [vmem:[#allocation15 + $0x110] sm:$0xff]
    %v6741 = vld [vmem:[#allocation15 + $0x118] sm:$0xff]
    %v6742 = vld [vmem:[#allocation15 + $0x120] sm:$0xff]
    %v6743 = vld [vmem:[#allocation15 + $0x128] sm:$0xff]
    %v6744 = vld [vmem:[#allocation15 + $0x130] sm:$0xff]
    %v6745 = vld [vmem:[#allocation15 + $0x138] sm:$0xff]
    %v6746 = vld [vmem:[#allocation15 + $0x140] sm:$0xff]
    %v6747 = vld [vmem:[#allocation15 + $0x148] sm:$0xff]
    %v6748 = vld [vmem:[#allocation15 + $0x150] sm:$0xff]
    %v6749 = vld [vmem:[#allocation15 + $0x158] sm:$0xff]
    %v6750 = vld [vmem:[#allocation15 + $0x160] sm:$0xff]
    %v6751 = vld [vmem:[#allocation15 + $0x168] sm:$0xff]
    %v6752 = vld [vmem:[#allocation15 + $0x170] sm:$0xff]
    %v6753 = vld [vmem:[#allocation15 + $0x178] sm:$0xff]
    %v6754 = vld [vmem:[#allocation15 + $0x180] sm:$0xff]
    %v6755 = vld [vmem:[#allocation15 + $0x188] sm:$0xff]
    %v6756 = vld [vmem:[#allocation15 + $0x190] sm:$0xff]
    %v6757 = vld [vmem:[#allocation15 + $0x198] sm:$0xff]
    %v6758 = vld [vmem:[#allocation15 + $0x1a0] sm:$0xff]
    %v6759 = vld [vmem:[#allocation15 + $0x1a8] sm:$0xff]
    %v6760 = vld [vmem:[#allocation15 + $0x1b0] sm:$0xff]
    %v6761 = vld [vmem:[#allocation15 + $0x1b8] sm:$0xff]
    %v6762 = vld [vmem:[#allocation15 + $0x1c0] sm:$0xff]
    %v6763 = vld [vmem:[#allocation15 + $0x1c8] sm:$0xff]
    %v6764 = vld [vmem:[#allocation15 + $0x1d0] sm:$0xff]
    %v6765 = vld [vmem:[#allocation15 + $0x1d8] sm:$0xff]
    %v6766 = vld [vmem:[#allocation15 + $0x1e0] sm:$0xff]
    %v6767 = vld [vmem:[#allocation15 + $0x1e8] sm:$0xff]
    %v6768 = vld [vmem:[#allocation15 + $0x1f0] sm:$0xff]
    %v6769 = vld [vmem:[#allocation15 + $0x1f8] sm:$0xff]
    %v6834 = vunpack.c.l.b16 %v6706
    %v6835 = vunpack.c.h.b16 %v6706
    %v6836 = vunpack.c.l.b16 %v6707
    %v6837 = vunpack.c.h.b16 %v6707
    %v6838 = vunpack.c.l.b16 %v6708
    %v6839 = vunpack.c.h.b16 %v6708
    %v6840 = vunpack.c.l.b16 %v6709
    %v6841 = vunpack.c.h.b16 %v6709
    %v6842 = vunpack.c.l.b16 %v6710
    %v6843 = vunpack.c.h.b16 %v6710
    %v6844 = vunpack.c.l.b16 %v6711
    %v6845 = vunpack.c.h.b16 %v6711
    %v6846 = vunpack.c.l.b16 %v6712
    %v6847 = vunpack.c.h.b16 %v6712
    %v6848 = vunpack.c.l.b16 %v6713
    %v6849 = vunpack.c.h.b16 %v6713
    %v6850 = vunpack.c.l.b16 %v6714
    %v6851 = vunpack.c.h.b16 %v6714
    %v6852 = vunpack.c.l.b16 %v6715
    %v6853 = vunpack.c.h.b16 %v6715
    %v6854 = vunpack.c.l.b16 %v6716
    %v6855 = vunpack.c.h.b16 %v6716
    %v6856 = vunpack.c.l.b16 %v6717
    %v6857 = vunpack.c.h.b16 %v6717
    %v6858 = vunpack.c.l.b16 %v6718
    %v6859 = vunpack.c.h.b16 %v6718
    %v6860 = vunpack.c.l.b16 %v6719
    %v6861 = vunpack.c.h.b16 %v6719
    %v6862 = vunpack.c.l.b16 %v6720
    %v6863 = vunpack.c.h.b16 %v6720
    %v6864 = vunpack.c.l.b16 %v6721
    %v6865 = vunpack.c.h.b16 %v6721
    %v6866 = vunpack.c.l.b16 %v6722
    %v6867 = vunpack.c.h.b16 %v6722
    %v6868 = vunpack.c.l.b16 %v6723
    %v6869 = vunpack.c.h.b16 %v6723
    %v6870 = vunpack.c.l.b16 %v6724
    %v6871 = vunpack.c.h.b16 %v6724
    %v6872 = vunpack.c.l.b16 %v6725
    %v6873 = vunpack.c.h.b16 %v6725
    %v6874 = vunpack.c.l.b16 %v6726
    %v6875 = vunpack.c.h.b16 %v6726
    %v6876 = vunpack.c.l.b16 %v6727
    %v6877 = vunpack.c.h.b16 %v6727
    %v6878 = vunpack.c.l.b16 %v6728
    %v6879 = vunpack.c.h.b16 %v6728
    %v6880 = vunpack.c.l.b16 %v6729
    %v6881 = vunpack.c.h.b16 %v6729
    %v6882 = vunpack.c.l.b16 %v6730
    %v6883 = vunpack.c.h.b16 %v6730
    %v6884 = vunpack.c.l.b16 %v6731
    %v6885 = vunpack.c.h.b16 %v6731
    %v6886 = vunpack.c.l.b16 %v6732
    %v6887 = vunpack.c.h.b16 %v6732
    %v6888 = vunpack.c.l.b16 %v6733
    %v6889 = vunpack.c.h.b16 %v6733
    %v6890 = vunpack.c.l.b16 %v6734
    %v6891 = vunpack.c.h.b16 %v6734
    %v6892 = vunpack.c.l.b16 %v6735
    %v6893 = vunpack.c.h.b16 %v6735
    %v6894 = vunpack.c.l.b16 %v6736
    %v6895 = vunpack.c.h.b16 %v6736
    %v6896 = vunpack.c.l.b16 %v6737
    %v6897 = vunpack.c.h.b16 %v6737
    %v6898 = vunpack.c.l.b16 %v6738
    %v6899 = vunpack.c.h.b16 %v6738
    %v6900 = vunpack.c.l.b16 %v6739
    %v6901 = vunpack.c.h.b16 %v6739
    %v6902 = vunpack.c.l.b16 %v6740
    %v6903 = vunpack.c.h.b16 %v6740
    %v6904 = vunpack.c.l.b16 %v6741
    %v6905 = vunpack.c.h.b16 %v6741
    %v6906 = vunpack.c.l.b16 %v6742
    %v6907 = vunpack.c.h.b16 %v6742
    %v6908 = vunpack.c.l.b16 %v6743
    %v6909 = vunpack.c.h.b16 %v6743
    %v6910 = vunpack.c.l.b16 %v6744
    %v6911 = vunpack.c.h.b16 %v6744
    %v6912 = vunpack.c.l.b16 %v6745
    %v6913 = vunpack.c.h.b16 %v6745
    %v6914 = vunpack.c.l.b16 %v6746
    %v6915 = vunpack.c.h.b16 %v6746
    %v6916 = vunpack.c.l.b16 %v6747
    %v6917 = vunpack.c.h.b16 %v6747
    %v6918 = vunpack.c.l.b16 %v6748
    %v6919 = vunpack.c.h.b16 %v6748
    %v6920 = vunpack.c.l.b16 %v6749
    %v6921 = vunpack.c.h.b16 %v6749
    %v6922 = vunpack.c.l.b16 %v6750
    %v6923 = vunpack.c.h.b16 %v6750
    %v6924 = vunpack.c.l.b16 %v6751
    %v6925 = vunpack.c.h.b16 %v6751
    %v6926 = vunpack.c.l.b16 %v6752
    %v6927 = vunpack.c.h.b16 %v6752
    %v6928 = vunpack.c.l.b16 %v6753
    %v6929 = vunpack.c.h.b16 %v6753
    %v6930 = vunpack.c.l.b16 %v6754
    %v6931 = vunpack.c.h.b16 %v6754
    %v6932 = vunpack.c.l.b16 %v6755
    %v6933 = vunpack.c.h.b16 %v6755
    %v6934 = vunpack.c.l.b16 %v6756
    %v6935 = vunpack.c.h.b16 %v6756
    %v6936 = vunpack.c.l.b16 %v6757
    %v6937 = vunpack.c.h.b16 %v6757
    %v6938 = vunpack.c.l.b16 %v6758
    %v6939 = vunpack.c.h.b16 %v6758
    %v6940 = vunpack.c.l.b16 %v6759
    %v6941 = vunpack.c.h.b16 %v6759
    %v6942 = vunpack.c.l.b16 %v6760
    %v6943 = vunpack.c.h.b16 %v6760
    %v6944 = vunpack.c.l.b16 %v6761
    %v6945 = vunpack.c.h.b16 %v6761
    %v6946 = vunpack.c.l.b16 %v6762
    %v6947 = vunpack.c.h.b16 %v6762
    %v6948 = vunpack.c.l.b16 %v6763
    %v6949 = vunpack.c.h.b16 %v6763
    %v6950 = vunpack.c.l.b16 %v6764
    %v6951 = vunpack.c.h.b16 %v6764
    %v6952 = vunpack.c.l.b16 %v6765
    %v6953 = vunpack.c.h.b16 %v6765
    %v6954 = vunpack.c.l.b16 %v6766
    %v6955 = vunpack.c.h.b16 %v6766
    %v6956 = vunpack.c.l.b16 %v6767
    %v6957 = vunpack.c.h.b16 %v6767
    %v6958 = vunpack.c.l.b16 %v6768
    %v6959 = vunpack.c.h.b16 %v6768
    %v6960 = vunpack.c.l.b16 %v6769
    %v6961 = vunpack.c.h.b16 %v6769
    %v6962 = vpack.c.b16 %v6838, %v6834
    %v6963 = vpack.c.b16 %v6839, %v6835
    %v6964 = vpack.c.b16 %v6840, %v6836
    %v6965 = vpack.c.b16 %v6841, %v6837
    %v6966 = vpack.c.b16 %v6846, %v6842
    %v6967 = vpack.c.b16 %v6847, %v6843
    %v6968 = vpack.c.b16 %v6848, %v6844
    %v6969 = vpack.c.b16 %v6849, %v6845
    %v6970 = vpack.c.b16 %v6854, %v6850
    %v6971 = vpack.c.b16 %v6855, %v6851
    %v6972 = vpack.c.b16 %v6856, %v6852
    %v6973 = vpack.c.b16 %v6857, %v6853
    %v6974 = vpack.c.b16 %v6862, %v6858
    %v6975 = vpack.c.b16 %v6863, %v6859
    %v6976 = vpack.c.b16 %v6864, %v6860
    %v6977 = vpack.c.b16 %v6865, %v6861
    %v6978 = vpack.c.b16 %v6870, %v6866
    %v6979 = vpack.c.b16 %v6871, %v6867
    %v6980 = vpack.c.b16 %v6872, %v6868
    %v6981 = vpack.c.b16 %v6873, %v6869
    %v6982 = vpack.c.b16 %v6878, %v6874
    %v6983 = vpack.c.b16 %v6879, %v6875
    %v6984 = vpack.c.b16 %v6880, %v6876
    %v6985 = vpack.c.b16 %v6881, %v6877
    %v6986 = vpack.c.b16 %v6886, %v6882
    %v6987 = vpack.c.b16 %v6887, %v6883
    %v6988 = vpack.c.b16 %v6888, %v6884
    %v6989 = vpack.c.b16 %v6889, %v6885
    %v6990 = vpack.c.b16 %v6894, %v6890
    %v6991 = vpack.c.b16 %v6895, %v6891
    %v6992 = vpack.c.b16 %v6896, %v6892
    %v6993 = vpack.c.b16 %v6897, %v6893
    %v6994 = vpack.c.b16 %v6902, %v6898
    %v6995 = vpack.c.b16 %v6903, %v6899
    %v6996 = vpack.c.b16 %v6904, %v6900
    %v6997 = vpack.c.b16 %v6905, %v6901
    %v6998 = vpack.c.b16 %v6910, %v6906
    %v6999 = vpack.c.b16 %v6911, %v6907
    %v7000 = vpack.c.b16 %v6912, %v6908
    %v7001 = vpack.c.b16 %v6913, %v6909
    %v7002 = vpack.c.b16 %v6918, %v6914
    %v7003 = vpack.c.b16 %v6919, %v6915
    %v7004 = vpack.c.b16 %v6920, %v6916
    %v7005 = vpack.c.b16 %v6921, %v6917
    %v7006 = vpack.c.b16 %v6926, %v6922
    %v7007 = vpack.c.b16 %v6927, %v6923
    %v7008 = vpack.c.b16 %v6928, %v6924
    %v7009 = vpack.c.b16 %v6929, %v6925
    %v7010 = vpack.c.b16 %v6934, %v6930
    %v7011 = vpack.c.b16 %v6935, %v6931
    %v7012 = vpack.c.b16 %v6936, %v6932
    %v7013 = vpack.c.b16 %v6937, %v6933
    %v7014 = vpack.c.b16 %v6942, %v6938
    %v7015 = vpack.c.b16 %v6943, %v6939
    %v7016 = vpack.c.b16 %v6944, %v6940
    %v7017 = vpack.c.b16 %v6945, %v6941
    %v7018 = vpack.c.b16 %v6950, %v6946
    %v7019 = vpack.c.b16 %v6951, %v6947
    %v7020 = vpack.c.b16 %v6952, %v6948
    %v7021 = vpack.c.b16 %v6953, %v6949
    %v7022 = vpack.c.b16 %v6958, %v6954
    %v7023 = vpack.c.b16 %v6959, %v6955
    %v7024 = vpack.c.b16 %v6960, %v6956
    %v7025 = vpack.c.b16 %v6961, %v6957
    %7090 = vmatprep.subr.bf16.mxu0 %v6991
    %7091 = vmatpush1.bf16.msra.mxu0 %v6990
    %7092 = vmatprep.subr.bf16.mxu0 %v6987
    %7093 = vmatpush1.bf16.msra.mxu0 %v6986
    %7094 = vmatprep.subr.bf16.mxu0 %v6983
    %7095 = vmatpush1.bf16.msra.mxu0 %v6982
    %7096 = vmatprep.subr.bf16.mxu0 %v6979
    %7097 = vmatpush1.bf16.msra.mxu0 %v6978
    %7098 = vmatprep.subr.bf16.mxu0 %v6975
    %7099 = vmatpush1.bf16.msra.mxu0 %v6974
    %7100 = vmatprep.subr.bf16.mxu0 %v6971
    %7101 = vmatpush1.bf16.msra.mxu0 %v6970
    %7102 = vmatprep.subr.bf16.mxu0 %v6967
    %7103 = vmatpush1.bf16.msra.mxu0 %v6966
    %7104 = vmatprep.subr.bf16.mxu0 %v6963
    %7105 = vmatpush1.bf16.msra.mxu0 %v6962
    %7106 = vmatprep.subr.bf16.mxu0 %v7023
    %7107 = vmatpush2.bf16.msra.mxu0 %v7022
    %7108 = vmatprep.subr.bf16.mxu0 %v7019
    %7109 = vmatpush2.bf16.msra.mxu0 %v7018
    %7110 = vmatprep.subr.bf16.mxu0 %v7015
    %7111 = vmatpush2.bf16.msra.mxu0 %v7014
    %7112 = vmatprep.subr.bf16.mxu0 %v7011
    %7113 = vmatpush2.bf16.msra.mxu0 %v7010
    %7114 = vmatprep.subr.bf16.mxu0 %v7007
    %7115 = vmatpush2.bf16.msra.mxu0 %v7006
    %7116 = vmatprep.subr.bf16.mxu0 %v7003
    %7117 = vmatpush2.bf16.msra.mxu0 %v7002
    %7118 = vmatprep.subr.bf16.mxu0 %v6999
    %7119 = vmatpush2.bf16.msra.mxu0 %v6998
    %7120 = vmatprep.subr.bf16.mxu0 %v6995
    %7121 = vmatpush2.bf16.msra.mxu0 %v6994
    %7122 = vmatprep.mubr.bf16.mxu0 %v6395
    %7123 = vmatmul.mubr.bf16.gmra.mxu0 %v6701
    %v7124 = vpop.f32.mrf.mxu0
    %v7125 = vadd.f32 0.0, %v7124
    %v7126 = vpop.f32.mrf.mxu0
    %v7127 = vadd.f32 0.0, %v7126
    %v7128 = vpop.f32.mrf.mxu0
    %v7129 = vpop.f32.mrf.mxu0
    %7130 = vdwg.mxu0
    %7131 = vmatprep.subr.bf16.mxu0 %v6993
    %7132 = vmatpush1.bf16.msra.mxu0 %v6992
    %7133 = vmatprep.subr.bf16.mxu0 %v6989
    %7134 = vmatpush1.bf16.msra.mxu0 %v6988
    %7135 = vmatprep.subr.bf16.mxu0 %v6985
    %7136 = vmatpush1.bf16.msra.mxu0 %v6984
    %7137 = vmatprep.subr.bf16.mxu0 %v6981
    %7138 = vmatpush1.bf16.msra.mxu0 %v6980
    %7139 = vmatprep.subr.bf16.mxu0 %v6977
    %7140 = vmatpush1.bf16.msra.mxu0 %v6976
    %7141 = vmatprep.subr.bf16.mxu0 %v6973
    %7142 = vmatpush1.bf16.msra.mxu0 %v6972
    %7143 = vmatprep.subr.bf16.mxu0 %v6969
    %7144 = vmatpush1.bf16.msra.mxu0 %v6968
    %7145 = vmatprep.subr.bf16.mxu0 %v6965
    %7146 = vmatpush1.bf16.msra.mxu0 %v6964
    %7147 = vmatprep.subr.bf16.mxu0 %v7025
    %7148 = vmatpush2.bf16.msra.mxu0 %v7024
    %7149 = vmatprep.subr.bf16.mxu0 %v7021
    %7150 = vmatpush2.bf16.msra.mxu0 %v7020
    %7151 = vmatprep.subr.bf16.mxu0 %v7017
    %7152 = vmatpush2.bf16.msra.mxu0 %v7016
    %7153 = vmatprep.subr.bf16.mxu0 %v7013
    %7154 = vmatpush2.bf16.msra.mxu0 %v7012
    %7155 = vmatprep.subr.bf16.mxu0 %v7009
    %7156 = vmatpush2.bf16.msra.mxu0 %v7008
    %7157 = vmatprep.subr.bf16.mxu0 %v7005
    %7158 = vmatpush2.bf16.msra.mxu0 %v7004
    %7159 = vmatprep.subr.bf16.mxu0 %v7001
    %7160 = vmatpush2.bf16.msra.mxu0 %v7000
    %7161 = vmatprep.subr.bf16.mxu0 %v6997
    %7162 = vmatpush2.bf16.msra.mxu0 %v6996
    %7163 = vmatprep.mubr.bf16.mxu0 %v6395
    %7164 = vmatmul.mubr.bf16.gmra.mxu0 %v6701
    %v7165 = vpop.f32.mrf.mxu0
    %v7166 = vadd.f32 0.0, %v7165
    %v7167 = vpop.f32.mrf.mxu0
    %v7168 = vadd.f32 0.0, %v7167
    %v7169 = vpop.f32.mrf.mxu0
    %v7170 = vpop.f32.mrf.mxu0
    %7171 = vdwg.mxu0
    %v7172 = vadd.f32 %v6702, %v7125
    %v7173 = vadd.f32 %v6703, %v7127
    %v7174 = vadd.f32 %v6704, %v7166
    %v7175 = vadd.f32 %v6705, %v7168
    %v7176 = vmul.f32 %v7172, 0.5
    %v7177 = vtanh.pop %v7176
    %v7178 = vmul.f32 %v7177, 0.5
    %v7179 = vadd.f32 %v7178, 0.5
    %v7180 = vmul.f32 %v7173, 0.5
    %v7181 = vtanh.pop %v7180
    %v7182 = vmul.f32 %v7181, 0.5
    %v7183 = vadd.f32 %v7182, 0.5
    %v7184 = vtanh.pop %v7174
    %v7185 = vmul.f32 %v7175, 0.5
    %v7186 = vtanh.pop %v7185
    %v7187 = vmul.f32 %v7186, 0.5
    %v7188 = vadd.f32 %v7187, 0.5
    %v7189 = vmul.f32 %v7183, %v6392
    %v7190 = vmul.f32 %v7179, %v7184
    %v7191 = vadd.f32 %v7189, %v7190
    %v7192 = vtanh.pop %v7191
    %v7193 = vmul.f32 %v7188, %v7192
    %v7194 = vpack.c.bf16 %v7193, %v7193
    %s7195 = scalar_lea.vmem [#allocation16], 28
    %7196 = vst [vmem:[%s7195] sm:$0xf] %v7194
    // Predicated region
    $region70: #{tpu_custom_call.1} parent=1 // pred_check
      _
    $region71: #{tpu_custom_call.1} parent=1 // pred_check_branch
      %7198 = sbr.rel (0) target = $region73
    $region72: #{tpu_custom_call.1} parent=1 // pred_region
      %s7200 = ssub.s32 512, 512
      %7201 = vsyncadd [#allocation6], %s7200
      %s7202 = sshll.u32 [#allocation16], 4
      %s7203 = int_to_ptr.vmem [resolvable:$true] %s7202
      %7208 = dma.vmem_to_hbm [thread:$0]  %s7203, 512, %s10, [#allocation6], 64, 64, 4
    $region73: #{tpu_custom_call.1} parent=1 // pred_fallthru
      _
    // Predicated region
    $region74: #{tpu_custom_call.1} parent=1 // pred_check
      _
    $region75: #{tpu_custom_call.1} parent=1 // pred_check_branch
      %7210 = sbr.rel (0) target = $region77
    $region76: #{tpu_custom_call.1} parent=1 // pred_region
      %7211 = dma.done [#allocation6], 512
    $region77: #{tpu_custom_call.1} parent=1 // pred_fallthru
      _
    %7212 = vsyncpa [#allocation5], 1
    %7213 = vsyncpa [#allocation8], 1
    %7214 = vsyncpa [#allocation11], 1
    %7215 = vsyncpa [#allocation14], 1
    %7216 = vsyncpa [#allocation6], 1

</llo_original>
